<compile_context>
chip_gen: v5e
topology: v5e:2x2
jax: 0.10.0
libtpu: 0.0.40
codegen_flags: <defaults>
</compile_context>

<pallas_src>
import jax
import jax.numpy as jnp
from jax.experimental import pallas as pl
from jax.experimental.pallas import tpu as pltpu

EPS = 1e-5
NEG_INF = -1e30
HIGH = jax.lax.Precision.HIGHEST      # reference path only


# ----------------------------------------------------------------------------
# Fused Pallas kernel
# ----------------------------------------------------------------------------
def _fused_classifier2_kernel(x1_ref, x2_ref, w1_ref, sb1_ref,
                              w2_ref, sb2_ref, wl_ref, bl_ref,
                              o_ref, h_ref):
    # x1_ref : (4, 4, 5, 5, B, 128) bf16  mod-4 phase-split x1 with 1-px zero halo
    #          x1_ref[ry, rx, 1+u, 1+v, b, :] = x1[b, 4u+ry, 4v+rx, :]
    # x2_ref : (2, 2, 4, 4, B, 256) f32   mod-2 phase-split residual
    # w1_ref : (9, 128, 256) bf16 ; sb1_ref : (2, 256) f32  folded BN (scale, bias)
    # w2_ref : (9, 256, 64)  bf16 ; sb2_ref : (2, 64)  f32
    # wl_ref : (16, 64, NPAD) bf16 ; bl_ref : (1, NPAD) f32  (pad lanes = -1e30)
    # o_ref  : (B, NPAD) f32 ;  h_ref : VMEM scratch (2, 2, 5, 5, B, 256) bf16
    B = x2_ref.shape[4]
    C1 = x1_ref.shape[-1]          # 128
    C2 = x2_ref.shape[-1]          # 256
    C3 = w2_ref.shape[-1]          # 64
    NP = wl_ref.shape[-1]          # padded class dim (multiple of 128)
    M = 16 * B                     # rows per phase block (= conv2 rows)

    # Zero the scratch once so the 1-element top/left halo reads as zero-pad.
    h_ref[...] = jnp.zeros(h_ref.shape, h_ref.dtype)

    # ---- Unit1: conv(128->256, k3 s2 p1) + folded BN + ReLU, then + X2 ------
    # Computed per OUTPUT phase (qi, qj) so that Unit2 can later read plain
    # contiguous windows from the phase-laid-out scratch (no strided access).
    for qi in range(2):
        for qj in range(2):
            acc = jnp.zeros((M, C2), jnp.float32)
            for ky in range(3):
                dy = 2 * qi + ky - 1
                ry, oy = (dy, 1) if dy >= 0 else (dy + 4, 0)
                for kx in range(3):
                    dx = 2 * qj + kx - 1
                    rx, ox = (dx, 1) if dx >= 0 else (dx + 4, 0)
                    lhs = x1_ref[ry, rx, oy:oy + 4, ox:ox + 4, :, :]
                    lhs = lhs.reshape(M, C1)                  # rows (u, v, b)
                    acc = acc + jnp.dot(lhs, w1_ref[ky * 3 + kx],
                                        preferred_element_type=jnp.float32)
            h = acc * sb1_ref[0:1, :] + sb1_ref[1:2, :]
            h = jnp.maximum(h, 0.0) + x2_ref[qi, qj].reshape(M, C2)
            h_ref[qi, qj, 1:5, 1:5, :, :] = (
                h.astype(h_ref.dtype).reshape(4, 4, B, C2))

    # ---- Unit2: conv(256->64, k3 s2 p1) + folded BN + ReLU ------------------
    acc2 = jnp.zeros((M, C3), jnp.float32)
    for ky in range(3):
        pi, oy = (1, 0) if ky == 0 else (ky - 1, 1)
        for kx in range(3):
            pj, ox = (1, 0) if kx == 0 else (kx - 1, 1)
            lhs = h_ref[pi, pj, oy:oy + 4, ox:ox + 4, :, :].reshape(M, C2)
            acc2 = acc2 + jnp.dot(lhs, w2_ref[ky * 3 + kx],
                                  preferred_element_type=jnp.float32)
    y = jnp.maximum(acc2 * sb2_ref[0:1, :] + sb2_ref[1:2, :], 0.0)
    y = y.astype(jnp.bfloat16)                                 # rows (m, n, b)

    # ---- Linear(4*4*64 -> kinds) + softmax, fused ---------------------------
    logits = jnp.zeros((B, NP), jnp.float32)
    for s in range(16):                                        # s = m*4 + n
        logits = logits + jnp.dot(y[s * B:(s + 1) * B, :], wl_ref[s],
                                  preferred_element_type=jnp.float32)
    logits = logits + bl_ref[...]
    mx = jnp.max(logits, axis=-1, keepdims=True)
    e = jnp.exp(logits - mx)
    o_ref[...] = e / jnp.sum(e, axis=-1, keepdims=True)


def _full_spec(shape):
    # Whole-array block, empty grid.
    return pl.BlockSpec(shape, lambda: (0,) * len(shape))


# ----------------------------------------------------------------------------
# Plain-JAX glue: layout plumbing + parameter folding (NCHW -> kernel layout)
# ----------------------------------------------------------------------------
def _fold_bn(conv_b, gamma, beta, mean, var):
    scale = gamma / jnp.sqrt(var + EPS)
    bias = (conv_b - mean) * scale + beta
    return jnp.stack([scale, bias], axis=0).astype(jnp.float32)   # (2, Cout)


@jax.jit
def classifier2_forward(x1_nchw, x2_nchw, params):
    x1 = jnp.transpose(x1_nchw, (0, 2, 3, 1)).astype(jnp.float32)  # (B,16,16,128)
    x2 = jnp.transpose(x2_nchw, (0, 2, 3, 1)).astype(jnp.float32)  # (B,8,8,256)
    B, _, _, C1 = x1.shape
    C2 = x2.shape[-1]

    # mod-4 space-to-batch phase split of x1, +1 zero halo at top/left.
    x1_ph = x1.reshape(B, 4, 4, 4, 4, C1).transpose(2, 4, 1, 3, 0, 5)
    x1_ph = jnp.pad(x1_ph, ((0, 0), (0, 0), (1, 0), (1, 0), (0, 0), (0, 0)))
    x1_ph = x1_ph.astype(jnp.bfloat16)                # (4,4,5,5,B,128)

    # mod-2 phase split of the residual (epilogue-only, keep f32).
    x2_ph = x2.reshape(B, 4, 2, 4, 2, C2).transpose(2, 4, 1, 3, 0, 5)

    # Conv weights: OIHW -> (tap, Cin, Cout), tap = ky*3 + kx.
    w1m = params['w1'].transpose(2, 3, 1, 0).reshape(9, C1, C2).astype(jnp.bfloat16)
    w2m = params['w2'].transpose(2, 3, 1, 0).reshape(9, C2, 64).astype(jnp.bfloat16)
    sb1 = _fold_bn(params['b1'], params['g1'], params['be1'],
                   params['m1'], params['v1'])
    sb2 = _fold_bn(params['b2'], params['g2'], params['be2'],
                   params['m2'], params['v2'])

    # Linear weight: PyTorch flattens NCHW (c, m, n); rearrange to (s=m*4+n, c, k)
    # and pad classes to a lane-dense multiple of 128.
    kinds = params['wl'].shape[0]
    npad = pl.cdiv(kinds, 128) * 128
    wl_r = (params['wl'].reshape(kinds, 64, 4, 4).transpose(2, 3, 1, 0)
            .reshape(16, 64, kinds))
    wl_r = jnp.pad(wl_r, ((0, 0), (0, 0), (0, npad - kinds))).astype(jnp.bfloat16)
    bl_pad = jnp.concatenate(
        [params['bl'].astype(jnp.float32),
         jnp.full((npad - kinds,), NEG_INF, jnp.float32)]).reshape(1, npad)

    probs = pl.pallas_call(
        _fused_classifier2_kernel,
        out_shape=jax.ShapeDtypeStruct((B, npad), jnp.float32),
        in_specs=[_full_spec(x1_ph.shape), _full_spec(x2_ph.shape),
                  _full_spec(w1m.shape), _full_spec(sb1.shape),
                  _full_spec(w2m.shape), _full_spec(sb2.shape),
                  _full_spec(wl_r.shape), _full_spec(bl_pad.shape)],
        out_specs=_full_spec((B, npad)),
        scratch_shapes=[pltpu.VMEM((2, 2, 5, 5, B, C2), jnp.bfloat16)],
    )(x1_ph, x2_ph, w1m, sb1, w2m, sb2, wl_r, bl_pad)
    return probs[:, :kinds]


# ----------------------------------------------------------------------------
# Deterministic parameter init (shapes from the module's __init__)
# ----------------------------------------------------------------------------
def init_params(key, kinds):
    ks = jax.random.split(key, 14)
    n = jax.random.normal
    p = {}
    p['w1'] = n(ks[0], (256, 128, 3, 3), jnp.float32) * (1.0 / (128 * 9) ** 0.5)
    p['b1'] = n(ks[1], (256,), jnp.float32) * 0.05
    p['g1'] = 1.0 + 0.1 * n(ks[2], (256,), jnp.float32)
    p['be1'] = 0.05 * n(ks[3], (256,), jnp.float32)
    p['m1'] = 0.05 * n(ks[4], (256,), jnp.float32)
    p['v1'] = 1.0 + 0.5 * jax.random.uniform(ks[5], (256,), jnp.float32)
    p['w2'] = n(ks[6], (64, 256, 3, 3), jnp.float32) * (1.0 / (256 * 9) ** 0.5)
    p['b2'] = n(ks[7], (64,), jnp.float32) * 0.05
    p['g2'] = 1.0 + 0.1 * n(ks[8], (64,), jnp.float32)
    p['be2'] = 0.05 * n(ks[9], (64,), jnp.float32)
    p['m2'] = 0.05 * n(ks[10], (64,), jnp.float32)
    p['v2'] = 1.0 + 0.5 * jax.random.uniform(ks[11], (64,), jnp.float32)
    p['wl'] = n(ks[12], (kinds, 4 * 4 * 64), jnp.float32) * (1.0 / 1024.0 ** 0.5)
    p['bl'] = n(ks[13], (kinds,), jnp.float32) * 0.05
    return p


# ----------------------------------------------------------------------------
# Pure-JAX f32 reference mirroring the PyTorch module (NCHW), for validation
# ----------------------------------------------------------------------------
def reference_forward(x1, x2, params):
    def unit(x, w, b, g, be, m, v):
        y = jax.lax.conv_general_dilated(
            x, w, (2, 2), ((1, 1), (1, 1)),
            dimension_numbers=('NCHW', 'OIHW', 'NCHW'), precision=HIGH)
        y = y + b[None, :, None, None]
        y = ((y - m[None, :, None, None])
             / jnp.sqrt(v[None, :, None, None] + EPS)
             * g[None, :, None, None] + be[None, :, None, None])
        return jnp.maximum(y, 0.0)

    x = unit(x1, params['w1'], params['b1'], params['g1'],
             params['be1'], params['m1'], params['v1']) + x2
    x = unit(x, params['w2'], params['b2'], params['g2'],
             params['be2'], params['m2'], params['v2'])
    feat = x.reshape(x.shape[0], -1)                     # NCHW flatten (.view)
    logits = jnp.dot(feat, params['wl'].T, precision=HIGH) + params['bl']
    return jax.nn.softmax(logits, axis=1)


if __name__ == "__main__":
    key = jax.random.PRNGKey(0)
    kinds = 10
    kx1, kx2, kp = jax.random.split(key, 3)

    # Shapes implied by the module (Linear expects 4*4*64 after two stride-2 convs).
    x1 = jax.random.normal(kx1, (2, 128, 16, 16), jnp.float32)
    x2 = jax.random.normal(kx2, (2, 256, 8, 8), jnp.float32)
    params = init_params(kp, kinds)

    out = classifier2_forward(x1, x2, params)
    out = jax.block_until_ready(out)

    ref = reference_forward(x1, x2, params)
    assert out.shape == (2, kinds), out.shape
    assert bool(jnp.allclose(jnp.sum(out, axis=-1), 1.0, atol=1e-4))
    # bf16 MXU operands vs f32-HIGHEST reference: probabilities agree to ~1e-2.
    assert bool(jnp.allclose(out, ref, rtol=3e-2, atol=3e-2)), \
        float(jnp.max(jnp.abs(out - ref)))

    print("KERNEL_OK")
</pallas_src>

<mosaic_0001>
module attributes {stable_mosaic.version = 11 : i64} {
  func.func @_fused_classifier2_kernel(%arg0: memref<4x4x5x5x2x128xbf16, #tpu.memory_space<vmem>>, %arg1: memref<2x2x4x4x2x256xf32, #tpu.memory_space<vmem>>, %arg2: memref<9x128x256xbf16, #tpu.memory_space<vmem>>, %arg3: memref<2x256xf32, #tpu.memory_space<vmem>>, %arg4: memref<9x256x64xbf16, #tpu.memory_space<vmem>>, %arg5: memref<2x64xf32, #tpu.memory_space<vmem>>, %arg6: memref<16x64x128xbf16, #tpu.memory_space<vmem>>, %arg7: memref<1x128xf32, #tpu.memory_space<vmem>>, %arg8: memref<2x128xf32, #tpu.memory_space<vmem>>, %arg9: memref<2x2x5x5x2x256xbf16, #tpu.memory_space<vmem>>) attributes {dimension_semantics = [], scalar_prefetch = 0 : i64, scratch_operands = 1 : i64, tpu.core_type = #tpu.core_type<tc>} {
    %cst = arith.constant 0.000000e+00 : bf16
    %0 = vector.broadcast %cst : bf16 to vector<2x2x5x5x2x256xbf16>
    %c0 = arith.constant 0 : index
    %c0_0 = arith.constant 0 : index
    %c0_1 = arith.constant 0 : index
    %c0_2 = arith.constant 0 : index
    %c0_3 = arith.constant 0 : index
    %c0_4 = arith.constant 0 : index
    %1 = vector.load %arg9[%c0, %c0_0, %c0_1, %c0_2, %c0_3, %c0_4] : memref<2x2x5x5x2x256xbf16, #tpu.memory_space<vmem>>, vector<2x2x5x5x2x256xbf16>
    tpu.vector_store %arg9[%c0, %c0_0, %c0_1, %c0_2, %c0_3, %c0_4], %0 {strides = array<i32>} : memref<2x2x5x5x2x256xbf16, #tpu.memory_space<vmem>>, vector<2x2x5x5x2x256xbf16>,
    %cst_5 = arith.constant 0.000000e+00 : f32
    %2 = vector.broadcast %cst_5 : f32 to vector<32x256xf32>
    %c3 = arith.constant 3 : index
    %c3_6 = arith.constant 3 : index
    %c0_7 = arith.constant 0 : index
    %c0_8 = arith.constant 0 : index
    %c0_9 = arith.constant 0 : index
    %c0_10 = arith.constant 0 : index
    %3 = vector.load %arg0[%c3, %c3_6, %c0_7, %c0_8, %c0_9, %c0_10] : memref<4x4x5x5x2x128xbf16, #tpu.memory_space<vmem>>, vector<1x1x4x4x2x128xbf16>
    %4 = vector.shape_cast %3 : vector<1x1x4x4x2x128xbf16> to vector<4x4x2x128xbf16>
    %5 = vector.shape_cast %4 : vector<4x4x2x128xbf16> to vector<32x128xbf16>
    %c0_11 = arith.constant 0 : index
    %c0_12 = arith.constant 0 : index
    %c0_13 = arith.constant 0 : index
    %6 = vector.load %arg2[%c0_11, %c0_12, %c0_13] : memref<9x128x256xbf16, #tpu.memory_space<vmem>>, vector<1x128x256xbf16>
    %7 = vector.shape_cast %6 : vector<1x128x256xbf16> to vector<128x256xbf16>
    %cst_14 = arith.constant dense<0.000000e+00> : vector<32x256xf32>
    %8 = tpu.matmul %5, %7, %cst_14 {dimension_numbers = #tpu.dot_dimension_numbers<[1], [0], [0], [1], [0, 0, 1, 1], [], []>} : vector<32x128xbf16>, vector<128x256xbf16>, vector<32x256xf32> -> vector<32x256xf32>
    %9 = arith.addf %2, %8 : vector<32x256xf32>
    %c3_15 = arith.constant 3 : index
    %c0_16 = arith.constant 0 : index
    %c0_17 = arith.constant 0 : index
    %c1 = arith.constant 1 : index
    %c0_18 = arith.constant 0 : index
    %c0_19 = arith.constant 0 : index
    %10 = vector.load %arg0[%c3_15, %c0_16, %c0_17, %c1, %c0_18, %c0_19] : memref<4x4x5x5x2x128xbf16, #tpu.memory_space<vmem>>, vector<1x1x4x4x2x128xbf16>
    %11 = vector.shape_cast %10 : vector<1x1x4x4x2x128xbf16> to vector<4x4x2x128xbf16>
    %12 = vector.shape_cast %11 : vector<4x4x2x128xbf16> to vector<32x128xbf16>
    %c1_20 = arith.constant 1 : index
    %c0_21 = arith.constant 0 : index
    %c0_22 = arith.constant 0 : index
    %13 = vector.load %arg2[%c1_20, %c0_21, %c0_22] : memref<9x128x256xbf16, #tpu.memory_space<vmem>>, vector<1x128x256xbf16>
    %14 = vector.shape_cast %13 : vector<1x128x256xbf16> to vector<128x256xbf16>
    %cst_23 = arith.constant dense<0.000000e+00> : vector<32x256xf32>
    %15 = tpu.matmul %12, %14, %cst_23 {dimension_numbers = #tpu.dot_dimension_numbers<[1], [0], [0], [1], [0, 0, 1, 1], [], []>} : vector<32x128xbf16>, vector<128x256xbf16>, vector<32x256xf32> -> vector<32x256xf32>
    %16 = arith.addf %9, %15 : vector<32x256xf32>
    %c3_24 = arith.constant 3 : index
    %c1_25 = arith.constant 1 : index
    %c0_26 = arith.constant 0 : index
    %c1_27 = arith.constant 1 : index
    %c0_28 = arith.constant 0 : index
    %c0_29 = arith.constant 0 : index
    %17 = vector.load %arg0[%c3_24, %c1_25, %c0_26, %c1_27, %c0_28, %c0_29] : memref<4x4x5x5x2x128xbf16, #tpu.memory_space<vmem>>, vector<1x1x4x4x2x128xbf16>
    %18 = vector.shape_cast %17 : vector<1x1x4x4x2x128xbf16> to vector<4x4x2x128xbf16>
    %19 = vector.shape_cast %18 : vector<4x4x2x128xbf16> to vector<32x128xbf16>
    %c2 = arith.constant 2 : index
    %c0_30 = arith.constant 0 : index
    %c0_31 = arith.constant 0 : index
    %20 = vector.load %arg2[%c2, %c0_30, %c0_31] : memref<9x128x256xbf16, #tpu.memory_space<vmem>>, vector<1x128x256xbf16>
    %21 = vector.shape_cast %20 : vector<1x128x256xbf16> to vector<128x256xbf16>
    %cst_32 = arith.constant dense<0.000000e+00> : vector<32x256xf32>
    %22 = tpu.matmul %19, %21, %cst_32 {dimension_numbers = #tpu.dot_dimension_numbers<[1], [0], [0], [1], [0, 0, 1, 1], [], []>} : vector<32x128xbf16>, vector<128x256xbf16>, vector<32x256xf32> -> vector<32x256xf32>
    %23 = arith.addf %16, %22 : vector<32x256xf32>
    %c0_33 = arith.constant 0 : index
    %c3_34 = arith.constant 3 : index
    %c1_35 = arith.constant 1 : index
    %c0_36 = arith.constant 0 : index
    %c0_37 = arith.constant 0 : index
    %c0_38 = arith.constant 0 : index
    %24 = vector.load %arg0[%c0_33, %c3_34, %c1_35, %c0_36, %c0_37, %c0_38] : memref<4x4x5x5x2x128xbf16, #tpu.memory_space<vmem>>, vector<1x1x4x4x2x128xbf16>
    %25 = vector.shape_cast %24 : vector<1x1x4x4x2x128xbf16> to vector<4x4x2x128xbf16>
    %26 = vector.shape_cast %25 : vector<4x4x2x128xbf16> to vector<32x128xbf16>
    %c3_39 = arith.constant 3 : index
    %c0_40 = arith.constant 0 : index
    %c0_41 = arith.constant 0 : index
    %27 = vector.load %arg2[%c3_39, %c0_40, %c0_41] : memref<9x128x256xbf16, #tpu.memory_space<vmem>>, vector<1x128x256xbf16>
    %28 = vector.shape_cast %27 : vector<1x128x256xbf16> to vector<128x256xbf16>
    %cst_42 = arith.constant dense<0.000000e+00> : vector<32x256xf32>
    %29 = tpu.matmul %26, %28, %cst_42 {dimension_numbers = #tpu.dot_dimension_numbers<[1], [0], [0], [1], [0, 0, 1, 1], [], []>} : vector<32x128xbf16>, vector<128x256xbf16>, vector<32x256xf32> -> vector<32x256xf32>
    %30 = arith.addf %23, %29 : vector<32x256xf32>
    %c0_43 = arith.constant 0 : index
    %c0_44 = arith.constant 0 : index
    %c1_45 = arith.constant 1 : index
    %c1_46 = arith.constant 1 : index
    %c0_47 = arith.constant 0 : index
    %c0_48 = arith.constant 0 : index
    %31 = vector.load %arg0[%c0_43, %c0_44, %c1_45, %c1_46, %c0_47, %c0_48] : memref<4x4x5x5x2x128xbf16, #tpu.memory_space<vmem>>, vector<1x1x4x4x2x128xbf16>
    %32 = vector.shape_cast %31 : vector<1x1x4x4x2x128xbf16> to vector<4x4x2x128xbf16>
    %33 = vector.shape_cast %32 : vector<4x4x2x128xbf16> to vector<32x128xbf16>
    %c4 = arith.constant 4 : index
    %c0_49 = arith.constant 0 : index
    %c0_50 = arith.constant 0 : index
    %34 = vector.load %arg2[%c4, %c0_49, %c0_50] : memref<9x128x256xbf16, #tpu.memory_space<vmem>>, vector<1x128x256xbf16>
    %35 = vector.shape_cast %34 : vector<1x128x256xbf16> to vector<128x256xbf16>
    %cst_51 = arith.constant dense<0.000000e+00> : vector<32x256xf32>
    %36 = tpu.matmul %33, %35, %cst_51 {dimension_numbers = #tpu.dot_dimension_numbers<[1], [0], [0], [1], [0, 0, 1, 1], [], []>} : vector<32x128xbf16>, vector<128x256xbf16>, vector<32x256xf32> -> vector<32x256xf32>
    %37 = arith.addf %30, %36 : vector<32x256xf32>
    %c0_52 = arith.constant 0 : index
    %c1_53 = arith.constant 1 : index
    %c1_54 = arith.constant 1 : index
    %c1_55 = arith.constant 1 : index
    %c0_56 = arith.constant 0 : index
    %c0_57 = arith.constant 0 : index
    %38 = vector.load %arg0[%c0_52, %c1_53, %c1_54, %c1_55, %c0_56, %c0_57] : memref<4x4x5x5x2x128xbf16, #tpu.memory_space<vmem>>, vector<1x1x4x4x2x128xbf16>
    %39 = vector.shape_cast %38 : vector<1x1x4x4x2x128xbf16> to vector<4x4x2x128xbf16>
    %40 = vector.shape_cast %39 : vector<4x4x2x128xbf16> to vector<32x128xbf16>
    %c5 = arith.constant 5 : index
    %c0_58 = arith.constant 0 : index
    %c0_59 = arith.constant 0 : index
    %41 = vector.load %arg2[%c5, %c0_58, %c0_59] : memref<9x128x256xbf16, #tpu.memory_space<vmem>>, vector<1x128x256xbf16>
    %42 = vector.shape_cast %41 : vector<1x128x256xbf16> to vector<128x256xbf16>
    %cst_60 = arith.constant dense<0.000000e+00> : vector<32x256xf32>
    %43 = tpu.matmul %40, %42, %cst_60 {dimension_numbers = #tpu.dot_dimension_numbers<[1], [0], [0], [1], [0, 0, 1, 1], [], []>} : vector<32x128xbf16>, vector<128x256xbf16>, vector<32x256xf32> -> vector<32x256xf32>
    %44 = arith.addf %37, %43 : vector<32x256xf32>
    %c1_61 = arith.constant 1 : index
    %c3_62 = arith.constant 3 : index
    %c1_63 = arith.constant 1 : index
    %c0_64 = arith.constant 0 : index
    %c0_65 = arith.constant 0 : index
    %c0_66 = arith.constant 0 : index
    %45 = vector.load %arg0[%c1_61, %c3_62, %c1_63, %c0_64, %c0_65, %c0_66] : memref<4x4x5x5x2x128xbf16, #tpu.memory_space<vmem>>, vector<1x1x4x4x2x128xbf16>
    %46 = vector.shape_cast %45 : vector<1x1x4x4x2x128xbf16> to vector<4x4x2x128xbf16>
    %47 = vector.shape_cast %46 : vector<4x4x2x128xbf16> to vector<32x128xbf16>
    %c6 = arith.constant 6 : index
    %c0_67 = arith.constant 0 : index
    %c0_68 = arith.constant 0 : index
    %48 = vector.load %arg2[%c6, %c0_67, %c0_68] : memref<9x128x256xbf16, #tpu.memory_space<vmem>>, vector<1x128x256xbf16>
    %49 = vector.shape_cast %48 : vector<1x128x256xbf16> to vector<128x256xbf16>
    %cst_69 = arith.constant dense<0.000000e+00> : vector<32x256xf32>
    %50 = tpu.matmul %47, %49, %cst_69 {dimension_numbers = #tpu.dot_dimension_numbers<[1], [0], [0], [1], [0, 0, 1, 1], [], []>} : vector<32x128xbf16>, vector<128x256xbf16>, vector<32x256xf32> -> vector<32x256xf32>
    %51 = arith.addf %44, %50 : vector<32x256xf32>
    %c1_70 = arith.constant 1 : index
    %c0_71 = arith.constant 0 : index
    %c1_72 = arith.constant 1 : index
    %c1_73 = arith.constant 1 : index
    %c0_74 = arith.constant 0 : index
    %c0_75 = arith.constant 0 : index
    %52 = vector.load %arg0[%c1_70, %c0_71, %c1_72, %c1_73, %c0_74, %c0_75] : memref<4x4x5x5x2x128xbf16, #tpu.memory_space<vmem>>, vector<1x1x4x4x2x128xbf16>
    %53 = vector.shape_cast %52 : vector<1x1x4x4x2x128xbf16> to vector<4x4x2x128xbf16>
    %54 = vector.shape_cast %53 : vector<4x4x2x128xbf16> to vector<32x128xbf16>
    %c7 = arith.constant 7 : index
    %c0_76 = arith.constant 0 : index
    %c0_77 = arith.constant 0 : index
    %55 = vector.load %arg2[%c7, %c0_76, %c0_77] : memref<9x128x256xbf16, #tpu.memory_space<vmem>>, vector<1x128x256xbf16>
    %56 = vector.shape_cast %55 : vector<1x128x256xbf16> to vector<128x256xbf16>
    %cst_78 = arith.constant dense<0.000000e+00> : vector<32x256xf32>
    %57 = tpu.matmul %54, %56, %cst_78 {dimension_numbers = #tpu.dot_dimension_numbers<[1], [0], [0], [1], [0, 0, 1, 1], [], []>} : vector<32x128xbf16>, vector<128x256xbf16>, vector<32x256xf32> -> vector<32x256xf32>
    %58 = arith.addf %51, %57 : vector<32x256xf32>
    %c1_79 = arith.constant 1 : index
    %c1_80 = arith.constant 1 : index
    %c1_81 = arith.constant 1 : index
    %c1_82 = arith.constant 1 : index
    %c0_83 = arith.constant 0 : index
    %c0_84 = arith.constant 0 : index
    %59 = vector.load %arg0[%c1_79, %c1_80, %c1_81, %c1_82, %c0_83, %c0_84] : memref<4x4x5x5x2x128xbf16, #tpu.memory_space<vmem>>, vector<1x1x4x4x2x128xbf16>
    %60 = vector.shape_cast %59 : vector<1x1x4x4x2x128xbf16> to vector<4x4x2x128xbf16>
    %61 = vector.shape_cast %60 : vector<4x4x2x128xbf16> to vector<32x128xbf16>
    %c8 = arith.constant 8 : index
    %c0_85 = arith.constant 0 : index
    %c0_86 = arith.constant 0 : index
    %62 = vector.load %arg2[%c8, %c0_85, %c0_86] : memref<9x128x256xbf16, #tpu.memory_space<vmem>>, vector<1x128x256xbf16>
    %63 = vector.shape_cast %62 : vector<1x128x256xbf16> to vector<128x256xbf16>
    %cst_87 = arith.constant dense<0.000000e+00> : vector<32x256xf32>
    %64 = tpu.matmul %61, %63, %cst_87 {dimension_numbers = #tpu.dot_dimension_numbers<[1], [0], [0], [1], [0, 0, 1, 1], [], []>} : vector<32x128xbf16>, vector<128x256xbf16>, vector<32x256xf32> -> vector<32x256xf32>
    %65 = arith.addf %58, %64 : vector<32x256xf32>
    %c0_88 = arith.constant 0 : index
    %c0_89 = arith.constant 0 : index
    %66 = vector.load %arg3[%c0_88, %c0_89] : memref<2x256xf32, #tpu.memory_space<vmem>>, vector<1x256xf32>
    %67 = vector.broadcast %66 : vector<1x256xf32> to vector<32x256xf32>
    %68 = arith.mulf %65, %67 : vector<32x256xf32>
    %c1_90 = arith.constant 1 : index
    %c0_91 = arith.constant 0 : index
    %69 = vector.load %arg3[%c1_90, %c0_91] : memref<2x256xf32, #tpu.memory_space<vmem>>, vector<1x256xf32>
    %70 = vector.broadcast %69 : vector<1x256xf32> to vector<32x256xf32>
    %71 = arith.addf %68, %70 : vector<32x256xf32>
    %cst_92 = arith.constant 0.000000e+00 : f32
    %72 = vector.broadcast %cst_92 : f32 to vector<32x256xf32>
    %73 = arith.maximumf %71, %72 : vector<32x256xf32>
    %c0_93 = arith.constant 0 : index
    %c0_94 = arith.constant 0 : index
    %c0_95 = arith.constant 0 : index
    %c0_96 = arith.constant 0 : index
    %c0_97 = arith.constant 0 : index
    %c0_98 = arith.constant 0 : index
    %74 = vector.load %arg1[%c0_93, %c0_94, %c0_95, %c0_96, %c0_97, %c0_98] : memref<2x2x4x4x2x256xf32, #tpu.memory_space<vmem>>, vector<1x1x4x4x2x256xf32>
    %75 = vector.shape_cast %74 : vector<1x1x4x4x2x256xf32> to vector<4x4x2x256xf32>
    %76 = vector.shape_cast %75 : vector<4x4x2x256xf32> to vector<32x256xf32>
    %77 = arith.addf %73, %76 : vector<32x256xf32>
    %78 = arith.truncf %77 : vector<32x256xf32> to vector<32x256xbf16>
    %79 = vector.shape_cast %78 : vector<32x256xbf16> to vector<4x4x2x256xbf16>
    %c0_99 = arith.constant 0 : index
    %c0_100 = arith.constant 0 : index
    %c1_101 = arith.constant 1 : index
    %c1_102 = arith.constant 1 : index
    %c0_103 = arith.constant 0 : index
    %c0_104 = arith.constant 0 : index
    %80 = vector.load %arg9[%c0_99, %c0_100, %c1_101, %c1_102, %c0_103, %c0_104] : memref<2x2x5x5x2x256xbf16, #tpu.memory_space<vmem>>, vector<1x1x4x4x2x256xbf16>
    %81 = vector.shape_cast %80 : vector<1x1x4x4x2x256xbf16> to vector<4x4x2x256xbf16>
    %82 = vector.shape_cast %79 : vector<4x4x2x256xbf16> to vector<1x1x4x4x2x256xbf16>
    tpu.vector_store %arg9[%c0_99, %c0_100, %c1_101, %c1_102, %c0_103, %c0_104], %82 {strides = array<i32>} : memref<2x2x5x5x2x256xbf16, #tpu.memory_space<vmem>>, vector<1x1x4x4x2x256xbf16>,
    %cst_105 = arith.constant 0.000000e+00 : f32
    %83 = vector.broadcast %cst_105 : f32 to vector<32x256xf32>
    %c3_106 = arith.constant 3 : index
    %c1_107 = arith.constant 1 : index
    %c0_108 = arith.constant 0 : index
    %c1_109 = arith.constant 1 : index
    %c0_110 = arith.constant 0 : index
    %c0_111 = arith.constant 0 : index
    %84 = vector.load %arg0[%c3_106, %c1_107, %c0_108, %c1_109, %c0_110, %c0_111] : memref<4x4x5x5x2x128xbf16, #tpu.memory_space<vmem>>, vector<1x1x4x4x2x128xbf16>
    %85 = vector.shape_cast %84 : vector<1x1x4x4x2x128xbf16> to vector<4x4x2x128xbf16>
    %86 = vector.shape_cast %85 : vector<4x4x2x128xbf16> to vector<32x128xbf16>
    %c0_112 = arith.constant 0 : index
    %c0_113 = arith.constant 0 : index
    %c0_114 = arith.constant 0 : index
    %87 = vector.load %arg2[%c0_112, %c0_113, %c0_114] : memref<9x128x256xbf16, #tpu.memory_space<vmem>>, vector<1x128x256xbf16>
    %88 = vector.shape_cast %87 : vector<1x128x256xbf16> to vector<128x256xbf16>
    %cst_115 = arith.constant dense<0.000000e+00> : vector<32x256xf32>
    %89 = tpu.matmul %86, %88, %cst_115 {dimension_numbers = #tpu.dot_dimension_numbers<[1], [0], [0], [1], [0, 0, 1, 1], [], []>} : vector<32x128xbf16>, vector<128x256xbf16>, vector<32x256xf32> -> vector<32x256xf32>
    %90 = arith.addf %83, %89 : vector<32x256xf32>
    %c3_116 = arith.constant 3 : index
    %c2_117 = arith.constant 2 : index
    %c0_118 = arith.constant 0 : index
    %c1_119 = arith.constant 1 : index
    %c0_120 = arith.constant 0 : index
    %c0_121 = arith.constant 0 : index
    %91 = vector.load %arg0[%c3_116, %c2_117, %c0_118, %c1_119, %c0_120, %c0_121] : memref<4x4x5x5x2x128xbf16, #tpu.memory_space<vmem>>, vector<1x1x4x4x2x128xbf16>
    %92 = vector.shape_cast %91 : vector<1x1x4x4x2x128xbf16> to vector<4x4x2x128xbf16>
    %93 = vector.shape_cast %92 : vector<4x4x2x128xbf16> to vector<32x128xbf16>
    %c1_122 = arith.constant 1 : index
    %c0_123 = arith.constant 0 : index
    %c0_124 = arith.constant 0 : index
    %94 = vector.load %arg2[%c1_122, %c0_123, %c0_124] : memref<9x128x256xbf16, #tpu.memory_space<vmem>>, vector<1x128x256xbf16>
    %95 = vector.shape_cast %94 : vector<1x128x256xbf16> to vector<128x256xbf16>
    %cst_125 = arith.constant dense<0.000000e+00> : vector<32x256xf32>
    %96 = tpu.matmul %93, %95, %cst_125 {dimension_numbers = #tpu.dot_dimension_numbers<[1], [0], [0], [1], [0, 0, 1, 1], [], []>} : vector<32x128xbf16>, vector<128x256xbf16>, vector<32x256xf32> -> vector<32x256xf32>
    %97 = arith.addf %90, %96 : vector<32x256xf32>
    %c3_126 = arith.constant 3 : index
    %c3_127 = arith.constant 3 : index
    %c0_128 = arith.constant 0 : index
    %c1_129 = arith.constant 1 : index
    %c0_130 = arith.constant 0 : index
    %c0_131 = arith.constant 0 : index
    %98 = vector.load %arg0[%c3_126, %c3_127, %c0_128, %c1_129, %c0_130, %c0_131] : memref<4x4x5x5x2x128xbf16, #tpu.memory_space<vmem>>, vector<1x1x4x4x2x128xbf16>
    %99 = vector.shape_cast %98 : vector<1x1x4x4x2x128xbf16> to vector<4x4x2x128xbf16>
    %100 = vector.shape_cast %99 : vector<4x4x2x128xbf16> to vector<32x128xbf16>
    %c2_132 = arith.constant 2 : index
    %c0_133 = arith.constant 0 : index
    %c0_134 = arith.constant 0 : index
    %101 = vector.load %arg2[%c2_132, %c0_133, %c0_134] : memref<9x128x256xbf16, #tpu.memory_space<vmem>>, vector<1x128x256xbf16>
    %102 = vector.shape_cast %101 : vector<1x128x256xbf16> to vector<128x256xbf16>
    %cst_135 = arith.constant dense<0.000000e+00> : vector<32x256xf32>
    %103 = tpu.matmul %100, %102, %cst_135 {dimension_numbers = #tpu.dot_dimension_numbers<[1], [0], [0], [1], [0, 0, 1, 1], [], []>} : vector<32x128xbf16>, vector<128x256xbf16>, vector<32x256xf32> -> vector<32x256xf32>
    %104 = arith.addf %97, %103 : vector<32x256xf32>
    %c0_136 = arith.constant 0 : index
    %c1_137 = arith.constant 1 : index
    %c1_138 = arith.constant 1 : index
    %c1_139 = arith.constant 1 : index
    %c0_140 = arith.constant 0 : index
    %c0_141 = arith.constant 0 : index
    %105 = vector.load %arg0[%c0_136, %c1_137, %c1_138, %c1_139, %c0_140, %c0_141] : memref<4x4x5x5x2x128xbf16, #tpu.memory_space<vmem>>, vector<1x1x4x4x2x128xbf16>
    %106 = vector.shape_cast %105 : vector<1x1x4x4x2x128xbf16> to vector<4x4x2x128xbf16>
    %107 = vector.shape_cast %106 : vector<4x4x2x128xbf16> to vector<32x128xbf16>
    %c3_142 = arith.constant 3 : index
    %c0_143 = arith.constant 0 : index
    %c0_144 = arith.constant 0 : index
    %108 = vector.load %arg2[%c3_142, %c0_143, %c0_144] : memref<9x128x256xbf16, #tpu.memory_space<vmem>>, vector<1x128x256xbf16>
    %109 = vector.shape_cast %108 : vector<1x128x256xbf16> to vector<128x256xbf16>
    %cst_145 = arith.constant dense<0.000000e+00> : vector<32x256xf32>
    %110 = tpu.matmul %107, %109, %cst_145 {dimension_numbers = #tpu.dot_dimension_numbers<[1], [0], [0], [1], [0, 0, 1, 1], [], []>} : vector<32x128xbf16>, vector<128x256xbf16>, vector<32x256xf32> -> vector<32x256xf32>
    %111 = arith.addf %104, %110 : vector<32x256xf32>
    %c0_146 = arith.constant 0 : index
    %c2_147 = arith.constant 2 : index
    %c1_148 = arith.constant 1 : index
    %c1_149 = arith.constant 1 : index
    %c0_150 = arith.constant 0 : index
    %c0_151 = arith.constant 0 : index
    %112 = vector.load %arg0[%c0_146, %c2_147, %c1_148, %c1_149, %c0_150, %c0_151] : memref<4x4x5x5x2x128xbf16, #tpu.memory_space<vmem>>, vector<1x1x4x4x2x128xbf16>
    %113 = vector.shape_cast %112 : vector<1x1x4x4x2x128xbf16> to vector<4x4x2x128xbf16>
    %114 = vector.shape_cast %113 : vector<4x4x2x128xbf16> to vector<32x128xbf16>
    %c4_152 = arith.constant 4 : index
    %c0_153 = arith.constant 0 : index
    %c0_154 = arith.constant 0 : index
    %115 = vector.load %arg2[%c4_152, %c0_153, %c0_154] : memref<9x128x256xbf16, #tpu.memory_space<vmem>>, vector<1x128x256xbf16>
    %116 = vector.shape_cast %115 : vector<1x128x256xbf16> to vector<128x256xbf16>
    %cst_155 = arith.constant dense<0.000000e+00> : vector<32x256xf32>
    %117 = tpu.matmul %114, %116, %cst_155 {dimension_numbers = #tpu.dot_dimension_numbers<[1], [0], [0], [1], [0, 0, 1, 1], [], []>} : vector<32x128xbf16>, vector<128x256xbf16>, vector<32x256xf32> -> vector<32x256xf32>
    %118 = arith.addf %111, %117 : vector<32x256xf32>
    %c0_156 = arith.constant 0 : index
    %c3_157 = arith.constant 3 : index
    %c1_158 = arith.constant 1 : index
    %c1_159 = arith.constant 1 : index
    %c0_160 = arith.constant 0 : index
    %c0_161 = arith.constant 0 : index
    %119 = vector.load %arg0[%c0_156, %c3_157, %c1_158, %c1_159, %c0_160, %c0_161] : memref<4x4x5x5x2x128xbf16, #tpu.memory_space<vmem>>, vector<1x1x4x4x2x128xbf16>
    %120 = vector.shape_cast %119 : vector<1x1x4x4x2x128xbf16> to vector<4x4x2x128xbf16>
    %121 = vector.shape_cast %120 : vector<4x4x2x128xbf16> to vector<32x128xbf16>
    %c5_162 = arith.constant 5 : index
    %c0_163 = arith.constant 0 : index
    %c0_164 = arith.constant 0 : index
    %122 = vector.load %arg2[%c5_162, %c0_163, %c0_164] : memref<9x128x256xbf16, #tpu.memory_space<vmem>>, vector<1x128x256xbf16>
    %123 = vector.shape_cast %122 : vector<1x128x256xbf16> to vector<128x256xbf16>
    %cst_165 = arith.constant dense<0.000000e+00> : vector<32x256xf32>
    %124 = tpu.matmul %121, %123, %cst_165 {dimension_numbers = #tpu.dot_dimension_numbers<[1], [0], [0], [1], [0, 0, 1, 1], [], []>} : vector<32x128xbf16>, vector<128x256xbf16>, vector<32x256xf32> -> vector<32x256xf32>
    %125 = arith.addf %118, %124 : vector<32x256xf32>
    %c1_166 = arith.constant 1 : index
    %c1_167 = arith.constant 1 : index
    %c1_168 = arith.constant 1 : index
    %c1_169 = arith.constant 1 : index
    %c0_170 = arith.constant 0 : index
    %c0_171 = arith.constant 0 : index
    %126 = vector.load %arg0[%c1_166, %c1_167, %c1_168, %c1_169, %c0_170, %c0_171] : memref<4x4x5x5x2x128xbf16, #tpu.memory_space<vmem>>, vector<1x1x4x4x2x128xbf16>
    %127 = vector.shape_cast %126 : vector<1x1x4x4x2x128xbf16> to vector<4x4x2x128xbf16>
    %128 = vector.shape_cast %127 : vector<4x4x2x128xbf16> to vector<32x128xbf16>
    %c6_172 = arith.constant 6 : index
    %c0_173 = arith.constant 0 : index
    %c0_174 = arith.constant 0 : index
    %129 = vector.load %arg2[%c6_172, %c0_173, %c0_174] : memref<9x128x256xbf16, #tpu.memory_space<vmem>>, vector<1x128x256xbf16>
    %130 = vector.shape_cast %129 : vector<1x128x256xbf16> to vector<128x256xbf16>
    %cst_175 = arith.constant dense<0.000000e+00> : vector<32x256xf32>
    %131 = tpu.matmul %128, %130, %cst_175 {dimension_numbers = #tpu.dot_dimension_numbers<[1], [0], [0], [1], [0, 0, 1, 1], [], []>} : vector<32x128xbf16>, vector<128x256xbf16>, vector<32x256xf32> -> vector<32x256xf32>
    %132 = arith.addf %125, %131 : vector<32x256xf32>
    %c1_176 = arith.constant 1 : index
    %c2_177 = arith.constant 2 : index
    %c1_178 = arith.constant 1 : index
    %c1_179 = arith.constant 1 : index
    %c0_180 = arith.constant 0 : index
    %c0_181 = arith.constant 0 : index
    %133 = vector.load %arg0[%c1_176, %c2_177, %c1_178, %c1_179, %c0_180, %c0_181] : memref<4x4x5x5x2x128xbf16, #tpu.memory_space<vmem>>, vector<1x1x4x4x2x128xbf16>
    %134 = vector.shape_cast %133 : vector<1x1x4x4x2x128xbf16> to vector<4x4x2x128xbf16>
    %135 = vector.shape_cast %134 : vector<4x4x2x128xbf16> to vector<32x128xbf16>
    %c7_182 = arith.constant 7 : index
    %c0_183 = arith.constant 0 : index
    %c0_184 = arith.constant 0 : index
    %136 = vector.load %arg2[%c7_182, %c0_183, %c0_184] : memref<9x128x256xbf16, #tpu.memory_space<vmem>>, vector<1x128x256xbf16>
    %137 = vector.shape_cast %136 : vector<1x128x256xbf16> to vector<128x256xbf16>
    %cst_185 = arith.constant dense<0.000000e+00> : vector<32x256xf32>
    %138 = tpu.matmul %135, %137, %cst_185 {dimension_numbers = #tpu.dot_dimension_numbers<[1], [0], [0], [1], [0, 0, 1, 1], [], []>} : vector<32x128xbf16>, vector<128x256xbf16>, vector<32x256xf32> -> vector<32x256xf32>
    %139 = arith.addf %132, %138 : vector<32x256xf32>
    %c1_186 = arith.constant 1 : index
    %c3_187 = arith.constant 3 : index
    %c1_188 = arith.constant 1 : index
    %c1_189 = arith.constant 1 : index
    %c0_190 = arith.constant 0 : index
    %c0_191 = arith.constant 0 : index
    %140 = vector.load %arg0[%c1_186, %c3_187, %c1_188, %c1_189, %c0_190, %c0_191] : memref<4x4x5x5x2x128xbf16, #tpu.memory_space<vmem>>, vector<1x1x4x4x2x128xbf16>
    %141 = vector.shape_cast %140 : vector<1x1x4x4x2x128xbf16> to vector<4x4x2x128xbf16>
    %142 = vector.shape_cast %141 : vector<4x4x2x128xbf16> to vector<32x128xbf16>
    %c8_192 = arith.constant 8 : index
    %c0_193 = arith.constant 0 : index
    %c0_194 = arith.constant 0 : index
    %143 = vector.load %arg2[%c8_192, %c0_193, %c0_194] : memref<9x128x256xbf16, #tpu.memory_space<vmem>>, vector<1x128x256xbf16>
    %144 = vector.shape_cast %143 : vector<1x128x256xbf16> to vector<128x256xbf16>
    %cst_195 = arith.constant dense<0.000000e+00> : vector<32x256xf32>
    %145 = tpu.matmul %142, %144, %cst_195 {dimension_numbers = #tpu.dot_dimension_numbers<[1], [0], [0], [1], [0, 0, 1, 1], [], []>} : vector<32x128xbf16>, vector<128x256xbf16>, vector<32x256xf32> -> vector<32x256xf32>
    %146 = arith.addf %139, %145 : vector<32x256xf32>
    %c0_196 = arith.constant 0 : index
    %c0_197 = arith.constant 0 : index
    %147 = vector.load %arg3[%c0_196, %c0_197] : memref<2x256xf32, #tpu.memory_space<vmem>>, vector<1x256xf32>
    %148 = vector.broadcast %147 : vector<1x256xf32> to vector<32x256xf32>
    %149 = arith.mulf %146, %148 : vector<32x256xf32>
    %c1_198 = arith.constant 1 : index
    %c0_199 = arith.constant 0 : index
    %150 = vector.load %arg3[%c1_198, %c0_199] : memref<2x256xf32, #tpu.memory_space<vmem>>, vector<1x256xf32>
    %151 = vector.broadcast %150 : vector<1x256xf32> to vector<32x256xf32>
    %152 = arith.addf %149, %151 : vector<32x256xf32>
    %cst_200 = arith.constant 0.000000e+00 : f32
    %153 = vector.broadcast %cst_200 : f32 to vector<32x256xf32>
    %154 = arith.maximumf %152, %153 : vector<32x256xf32>
    %c0_201 = arith.constant 0 : index
    %c1_202 = arith.constant 1 : index
    %c0_203 = arith.constant 0 : index
    %c0_204 = arith.constant 0 : index
    %c0_205 = arith.constant 0 : index
    %c0_206 = arith.constant 0 : index
    %155 = vector.load %arg1[%c0_201, %c1_202, %c0_203, %c0_204, %c0_205, %c0_206] : memref<2x2x4x4x2x256xf32, #tpu.memory_space<vmem>>, vector<1x1x4x4x2x256xf32>
    %156 = vector.shape_cast %155 : vector<1x1x4x4x2x256xf32> to vector<4x4x2x256xf32>
    %157 = vector.shape_cast %156 : vector<4x4x2x256xf32> to vector<32x256xf32>
    %158 = arith.addf %154, %157 : vector<32x256xf32>
    %159 = arith.truncf %158 : vector<32x256xf32> to vector<32x256xbf16>
    %160 = vector.shape_cast %159 : vector<32x256xbf16> to vector<4x4x2x256xbf16>
    %c0_207 = arith.constant 0 : index
    %c1_208 = arith.constant 1 : index
    %c1_209 = arith.constant 1 : index
    %c1_210 = arith.constant 1 : index
    %c0_211 = arith.constant 0 : index
    %c0_212 = arith.constant 0 : index
    %161 = vector.load %arg9[%c0_207, %c1_208, %c1_209, %c1_210, %c0_211, %c0_212] : memref<2x2x5x5x2x256xbf16, #tpu.memory_space<vmem>>, vector<1x1x4x4x2x256xbf16>
    %162 = vector.shape_cast %161 : vector<1x1x4x4x2x256xbf16> to vector<4x4x2x256xbf16>
    %163 = vector.shape_cast %160 : vector<4x4x2x256xbf16> to vector<1x1x4x4x2x256xbf16>
    tpu.vector_store %arg9[%c0_207, %c1_208, %c1_209, %c1_210, %c0_211, %c0_212], %163 {strides = array<i32>} : memref<2x2x5x5x2x256xbf16, #tpu.memory_space<vmem>>, vector<1x1x4x4x2x256xbf16>,
    %cst_213 = arith.constant 0.000000e+00 : f32
    %164 = vector.broadcast %cst_213 : f32 to vector<32x256xf32>
    %c1_214 = arith.constant 1 : index
    %c3_215 = arith.constant 3 : index
    %c1_216 = arith.constant 1 : index
    %c0_217 = arith.constant 0 : index
    %c0_218 = arith.constant 0 : index
    %c0_219 = arith.constant 0 : index
    %165 = vector.load %arg0[%c1_214, %c3_215, %c1_216, %c0_217, %c0_218, %c0_219] : memref<4x4x5x5x2x128xbf16, #tpu.memory_space<vmem>>, vector<1x1x4x4x2x128xbf16>
    %166 = vector.shape_cast %165 : vector<1x1x4x4x2x128xbf16> to vector<4x4x2x128xbf16>
    %167 = vector.shape_cast %166 : vector<4x4x2x128xbf16> to vector<32x128xbf16>
    %c0_220 = arith.constant 0 : index
    %c0_221 = arith.constant 0 : index
    %c0_222 = arith.constant 0 : index
    %168 = vector.load %arg2[%c0_220, %c0_221, %c0_222] : memref<9x128x256xbf16, #tpu.memory_space<vmem>>, vector<1x128x256xbf16>
    %169 = vector.shape_cast %168 : vector<1x128x256xbf16> to vector<128x256xbf16>
    %cst_223 = arith.constant dense<0.000000e+00> : vector<32x256xf32>
    %170 = tpu.matmul %167, %169, %cst_223 {dimension_numbers = #tpu.dot_dimension_numbers<[1], [0], [0], [1], [0, 0, 1, 1], [], []>} : vector<32x128xbf16>, vector<128x256xbf16>, vector<32x256xf32> -> vector<32x256xf32>
    %171 = arith.addf %164, %170 : vector<32x256xf32>
    %c1_224 = arith.constant 1 : index
    %c0_225 = arith.constant 0 : index
    %c1_226 = arith.constant 1 : index
    %c1_227 = arith.constant 1 : index
    %c0_228 = arith.constant 0 : index
    %c0_229 = arith.constant 0 : index
    %172 = vector.load %arg0[%c1_224, %c0_225, %c1_226, %c1_227, %c0_228, %c0_229] : memref<4x4x5x5x2x128xbf16, #tpu.memory_space<vmem>>, vector<1x1x4x4x2x128xbf16>
    %173 = vector.shape_cast %172 : vector<1x1x4x4x2x128xbf16> to vector<4x4x2x128xbf16>
    %174 = vector.shape_cast %173 : vector<4x4x2x128xbf16> to vector<32x128xbf16>
    %c1_230 = arith.constant 1 : index
    %c0_231 = arith.constant 0 : index
    %c0_232 = arith.constant 0 : index
    %175 = vector.load %arg2[%c1_230, %c0_231, %c0_232] : memref<9x128x256xbf16, #tpu.memory_space<vmem>>, vector<1x128x256xbf16>
    %176 = vector.shape_cast %175 : vector<1x128x256xbf16> to vector<128x256xbf16>
    %cst_233 = arith.constant dense<0.000000e+00> : vector<32x256xf32>
    %177 = tpu.matmul %174, %176, %cst_233 {dimension_numbers = #tpu.dot_dimension_numbers<[1], [0], [0], [1], [0, 0, 1, 1], [], []>} : vector<32x128xbf16>, vector<128x256xbf16>, vector<32x256xf32> -> vector<32x256xf32>
    %178 = arith.addf %171, %177 : vector<32x256xf32>
    %c1_234 = arith.constant 1 : index
    %c1_235 = arith.constant 1 : index
    %c1_236 = arith.constant 1 : index
    %c1_237 = arith.constant 1 : index
    %c0_238 = arith.constant 0 : index
    %c0_239 = arith.constant 0 : index
    %179 = vector.load %arg0[%c1_234, %c1_235, %c1_236, %c1_237, %c0_238, %c0_239] : memref<4x4x5x5x2x128xbf16, #tpu.memory_space<vmem>>, vector<1x1x4x4x2x128xbf16>
    %180 = vector.shape_cast %179 : vector<1x1x4x4x2x128xbf16> to vector<4x4x2x128xbf16>
    %181 = vector.shape_cast %180 : vector<4x4x2x128xbf16> to vector<32x128xbf16>
    %c2_240 = arith.constant 2 : index
    %c0_241 = arith.constant 0 : index
    %c0_242 = arith.constant 0 : index
    %182 = vector.load %arg2[%c2_240, %c0_241, %c0_242] : memref<9x128x256xbf16, #tpu.memory_space<vmem>>, vector<1x128x256xbf16>
    %183 = vector.shape_cast %182 : vector<1x128x256xbf16> to vector<128x256xbf16>
    %cst_243 = arith.constant dense<0.000000e+00> : vector<32x256xf32>
    %184 = tpu.matmul %181, %183, %cst_243 {dimension_numbers = #tpu.dot_dimension_numbers<[1], [0], [0], [1], [0, 0, 1, 1], [], []>} : vector<32x128xbf16>, vector<128x256xbf16>, vector<32x256xf32> -> vector<32x256xf32>
    %185 = arith.addf %178, %184 : vector<32x256xf32>
    %c2_244 = arith.constant 2 : index
    %c3_245 = arith.constant 3 : index
    %c1_246 = arith.constant 1 : index
    %c0_247 = arith.constant 0 : index
    %c0_248 = arith.constant 0 : index
    %c0_249 = arith.constant 0 : index
    %186 = vector.load %arg0[%c2_244, %c3_245, %c1_246, %c0_247, %c0_248, %c0_249] : memref<4x4x5x5x2x128xbf16, #tpu.memory_space<vmem>>, vector<1x1x4x4x2x128xbf16>
    %187 = vector.shape_cast %186 : vector<1x1x4x4x2x128xbf16> to vector<4x4x2x128xbf16>
    %188 = vector.shape_cast %187 : vector<4x4x2x128xbf16> to vector<32x128xbf16>
    %c3_250 = arith.constant 3 : index
    %c0_251 = arith.constant 0 : index
    %c0_252 = arith.constant 0 : index
    %189 = vector.load %arg2[%c3_250, %c0_251, %c0_252] : memref<9x128x256xbf16, #tpu.memory_space<vmem>>, vector<1x128x256xbf16>
    %190 = vector.shape_cast %189 : vector<1x128x256xbf16> to vector<128x256xbf16>
    %cst_253 = arith.constant dense<0.000000e+00> : vector<32x256xf32>
    %191 = tpu.matmul %188, %190, %cst_253 {dimension_numbers = #tpu.dot_dimension_numbers<[1], [0], [0], [1], [0, 0, 1, 1], [], []>} : vector<32x128xbf16>, vector<128x256xbf16>, vector<32x256xf32> -> vector<32x256xf32>
    %192 = arith.addf %185, %191 : vector<32x256xf32>
    %c2_254 = arith.constant 2 : index
    %c0_255 = arith.constant 0 : index
    %c1_256 = arith.constant 1 : index
    %c1_257 = arith.constant 1 : index
    %c0_258 = arith.constant 0 : index
    %c0_259 = arith.constant 0 : index
    %193 = vector.load %arg0[%c2_254, %c0_255, %c1_256, %c1_257, %c0_258, %c0_259] : memref<4x4x5x5x2x128xbf16, #tpu.memory_space<vmem>>, vector<1x1x4x4x2x128xbf16>
    %194 = vector.shape_cast %193 : vector<1x1x4x4x2x128xbf16> to vector<4x4x2x128xbf16>
    %195 = vector.shape_cast %194 : vector<4x4x2x128xbf16> to vector<32x128xbf16>
    %c4_260 = arith.constant 4 : index
    %c0_261 = arith.constant 0 : index
    %c0_262 = arith.constant 0 : index
    %196 = vector.load %arg2[%c4_260, %c0_261, %c0_262] : memref<9x128x256xbf16, #tpu.memory_space<vmem>>, vector<1x128x256xbf16>
    %197 = vector.shape_cast %196 : vector<1x128x256xbf16> to vector<128x256xbf16>
    %cst_263 = arith.constant dense<0.000000e+00> : vector<32x256xf32>
    %198 = tpu.matmul %195, %197, %cst_263 {dimension_numbers = #tpu.dot_dimension_numbers<[1], [0], [0], [1], [0, 0, 1, 1], [], []>} : vector<32x128xbf16>, vector<128x256xbf16>, vector<32x256xf32> -> vector<32x256xf32>
    %199 = arith.addf %192, %198 : vector<32x256xf32>
    %c2_264 = arith.constant 2 : index
    %c1_265 = arith.constant 1 : index
    %c1_266 = arith.constant 1 : index
    %c1_267 = arith.constant 1 : index
    %c0_268 = arith.constant 0 : index
    %c0_269 = arith.constant 0 : index
    %200 = vector.load %arg0[%c2_264, %c1_265, %c1_266, %c1_267, %c0_268, %c0_269] : memref<4x4x5x5x2x128xbf16, #tpu.memory_space<vmem>>, vector<1x1x4x4x2x128xbf16>
    %201 = vector.shape_cast %200 : vector<1x1x4x4x2x128xbf16> to vector<4x4x2x128xbf16>
    %202 = vector.shape_cast %201 : vector<4x4x2x128xbf16> to vector<32x128xbf16>
    %c5_270 = arith.constant 5 : index
    %c0_271 = arith.constant 0 : index
    %c0_272 = arith.constant 0 : index
    %203 = vector.load %arg2[%c5_270, %c0_271, %c0_272] : memref<9x128x256xbf16, #tpu.memory_space<vmem>>, vector<1x128x256xbf16>
    %204 = vector.shape_cast %203 : vector<1x128x256xbf16> to vector<128x256xbf16>
    %cst_273 = arith.constant dense<0.000000e+00> : vector<32x256xf32>
    %205 = tpu.matmul %202, %204, %cst_273 {dimension_numbers = #tpu.dot_dimension_numbers<[1], [0], [0], [1], [0, 0, 1, 1], [], []>} : vector<32x128xbf16>, vector<128x256xbf16>, vector<32x256xf32> -> vector<32x256xf32>
    %206 = arith.addf %199, %205 : vector<32x256xf32>
    %c3_274 = arith.constant 3 : index
    %c3_275 = arith.constant 3 : index
    %c1_276 = arith.constant 1 : index
    %c0_277 = arith.constant 0 : index
    %c0_278 = arith.constant 0 : index
    %c0_279 = arith.constant 0 : index
    %207 = vector.load %arg0[%c3_274, %c3_275, %c1_276, %c0_277, %c0_278, %c0_279] : memref<4x4x5x5x2x128xbf16, #tpu.memory_space<vmem>>, vector<1x1x4x4x2x128xbf16>
    %208 = vector.shape_cast %207 : vector<1x1x4x4x2x128xbf16> to vector<4x4x2x128xbf16>
    %209 = vector.shape_cast %208 : vector<4x4x2x128xbf16> to vector<32x128xbf16>
    %c6_280 = arith.constant 6 : index
    %c0_281 = arith.constant 0 : index
    %c0_282 = arith.constant 0 : index
    %210 = vector.load %arg2[%c6_280, %c0_281, %c0_282] : memref<9x128x256xbf16, #tpu.memory_space<vmem>>, vector<1x128x256xbf16>
    %211 = vector.shape_cast %210 : vector<1x128x256xbf16> to vector<128x256xbf16>
    %cst_283 = arith.constant dense<0.000000e+00> : vector<32x256xf32>
    %212 = tpu.matmul %209, %211, %cst_283 {dimension_numbers = #tpu.dot_dimension_numbers<[1], [0], [0], [1], [0, 0, 1, 1], [], []>} : vector<32x128xbf16>, vector<128x256xbf16>, vector<32x256xf32> -> vector<32x256xf32>
    %213 = arith.addf %206, %212 : vector<32x256xf32>
    %c3_284 = arith.constant 3 : index
    %c0_285 = arith.constant 0 : index
    %c1_286 = arith.constant 1 : index
    %c1_287 = arith.constant 1 : index
    %c0_288 = arith.constant 0 : index
    %c0_289 = arith.constant 0 : index
    %214 = vector.load %arg0[%c3_284, %c0_285, %c1_286, %c1_287, %c0_288, %c0_289] : memref<4x4x5x5x2x128xbf16, #tpu.memory_space<vmem>>, vector<1x1x4x4x2x128xbf16>
    %215 = vector.shape_cast %214 : vector<1x1x4x4x2x128xbf16> to vector<4x4x2x128xbf16>
    %216 = vector.shape_cast %215 : vector<4x4x2x128xbf16> to vector<32x128xbf16>
    %c7_290 = arith.constant 7 : index
    %c0_291 = arith.constant 0 : index
    %c0_292 = arith.constant 0 : index
    %217 = vector.load %arg2[%c7_290, %c0_291, %c0_292] : memref<9x128x256xbf16, #tpu.memory_space<vmem>>, vector<1x128x256xbf16>
    %218 = vector.shape_cast %217 : vector<1x128x256xbf16> to vector<128x256xbf16>
    %cst_293 = arith.constant dense<0.000000e+00> : vector<32x256xf32>
    %219 = tpu.matmul %216, %218, %cst_293 {dimension_numbers = #tpu.dot_dimension_numbers<[1], [0], [0], [1], [0, 0, 1, 1], [], []>} : vector<32x128xbf16>, vector<128x256xbf16>, vector<32x256xf32> -> vector<32x256xf32>
    %220 = arith.addf %213, %219 : vector<32x256xf32>
    %c3_294 = arith.constant 3 : index
    %c1_295 = arith.constant 1 : index
    %c1_296 = arith.constant 1 : index
    %c1_297 = arith.constant 1 : index
    %c0_298 = arith.constant 0 : index
    %c0_299 = arith.constant 0 : index
    %221 = vector.load %arg0[%c3_294, %c1_295, %c1_296, %c1_297, %c0_298, %c0_299] : memref<4x4x5x5x2x128xbf16, #tpu.memory_space<vmem>>, vector<1x1x4x4x2x128xbf16>
    %222 = vector.shape_cast %221 : vector<1x1x4x4x2x128xbf16> to vector<4x4x2x128xbf16>
    %223 = vector.shape_cast %222 : vector<4x4x2x128xbf16> to vector<32x128xbf16>
    %c8_300 = arith.constant 8 : index
    %c0_301 = arith.constant 0 : index
    %c0_302 = arith.constant 0 : index
    %224 = vector.load %arg2[%c8_300, %c0_301, %c0_302] : memref<9x128x256xbf16, #tpu.memory_space<vmem>>, vector<1x128x256xbf16>
    %225 = vector.shape_cast %224 : vector<1x128x256xbf16> to vector<128x256xbf16>
    %cst_303 = arith.constant dense<0.000000e+00> : vector<32x256xf32>
    %226 = tpu.matmul %223, %225, %cst_303 {dimension_numbers = #tpu.dot_dimension_numbers<[1], [0], [0], [1], [0, 0, 1, 1], [], []>} : vector<32x128xbf16>, vector<128x256xbf16>, vector<32x256xf32> -> vector<32x256xf32>
    %227 = arith.addf %220, %226 : vector<32x256xf32>
    %c0_304 = arith.constant 0 : index
    %c0_305 = arith.constant 0 : index
    %228 = vector.load %arg3[%c0_304, %c0_305] : memref<2x256xf32, #tpu.memory_space<vmem>>, vector<1x256xf32>
    %229 = vector.broadcast %228 : vector<1x256xf32> to vector<32x256xf32>
    %230 = arith.mulf %227, %229 : vector<32x256xf32>
    %c1_306 = arith.constant 1 : index
    %c0_307 = arith.constant 0 : index
    %231 = vector.load %arg3[%c1_306, %c0_307] : memref<2x256xf32, #tpu.memory_space<vmem>>, vector<1x256xf32>
    %232 = vector.broadcast %231 : vector<1x256xf32> to vector<32x256xf32>
    %233 = arith.addf %230, %232 : vector<32x256xf32>
    %cst_308 = arith.constant 0.000000e+00 : f32
    %234 = vector.broadcast %cst_308 : f32 to vector<32x256xf32>
    %235 = arith.maximumf %233, %234 : vector<32x256xf32>
    %c1_309 = arith.constant 1 : index
    %c0_310 = arith.constant 0 : index
    %c0_311 = arith.constant 0 : index
    %c0_312 = arith.constant 0 : index
    %c0_313 = arith.constant 0 : index
    %c0_314 = arith.constant 0 : index
    %236 = vector.load %arg1[%c1_309, %c0_310, %c0_311, %c0_312, %c0_313, %c0_314] : memref<2x2x4x4x2x256xf32, #tpu.memory_space<vmem>>, vector<1x1x4x4x2x256xf32>
    %237 = vector.shape_cast %236 : vector<1x1x4x4x2x256xf32> to vector<4x4x2x256xf32>
    %238 = vector.shape_cast %237 : vector<4x4x2x256xf32> to vector<32x256xf32>
    %239 = arith.addf %235, %238 : vector<32x256xf32>
    %240 = arith.truncf %239 : vector<32x256xf32> to vector<32x256xbf16>
    %241 = vector.shape_cast %240 : vector<32x256xbf16> to vector<4x4x2x256xbf16>
    %c1_315 = arith.constant 1 : index
    %c0_316 = arith.constant 0 : index
    %c1_317 = arith.constant 1 : index
    %c1_318 = arith.constant 1 : index
    %c0_319 = arith.constant 0 : index
    %c0_320 = arith.constant 0 : index
    %242 = vector.load %arg9[%c1_315, %c0_316, %c1_317, %c1_318, %c0_319, %c0_320] : memref<2x2x5x5x2x256xbf16, #tpu.memory_space<vmem>>, vector<1x1x4x4x2x256xbf16>
    %243 = vector.shape_cast %242 : vector<1x1x4x4x2x256xbf16> to vector<4x4x2x256xbf16>
    %244 = vector.shape_cast %241 : vector<4x4x2x256xbf16> to vector<1x1x4x4x2x256xbf16>
    tpu.vector_store %arg9[%c1_315, %c0_316, %c1_317, %c1_318, %c0_319, %c0_320], %244 {strides = array<i32>} : memref<2x2x5x5x2x256xbf16, #tpu.memory_space<vmem>>, vector<1x1x4x4x2x256xbf16>,
    %cst_321 = arith.constant 0.000000e+00 : f32
    %245 = vector.broadcast %cst_321 : f32 to vector<32x256xf32>
    %c1_322 = arith.constant 1 : index
    %c1_323 = arith.constant 1 : index
    %c1_324 = arith.constant 1 : index
    %c1_325 = arith.constant 1 : index
    %c0_326 = arith.constant 0 : index
    %c0_327 = arith.constant 0 : index
    %246 = vector.load %arg0[%c1_322, %c1_323, %c1_324, %c1_325, %c0_326, %c0_327] : memref<4x4x5x5x2x128xbf16, #tpu.memory_space<vmem>>, vector<1x1x4x4x2x128xbf16>
    %247 = vector.shape_cast %246 : vector<1x1x4x4x2x128xbf16> to vector<4x4x2x128xbf16>
    %248 = vector.shape_cast %247 : vector<4x4x2x128xbf16> to vector<32x128xbf16>
    %c0_328 = arith.constant 0 : index
    %c0_329 = arith.constant 0 : index
    %c0_330 = arith.constant 0 : index
    %249 = vector.load %arg2[%c0_328, %c0_329, %c0_330] : memref<9x128x256xbf16, #tpu.memory_space<vmem>>, vector<1x128x256xbf16>
    %250 = vector.shape_cast %249 : vector<1x128x256xbf16> to vector<128x256xbf16>
    %cst_331 = arith.constant dense<0.000000e+00> : vector<32x256xf32>
    %251 = tpu.matmul %248, %250, %cst_331 {dimension_numbers = #tpu.dot_dimension_numbers<[1], [0], [0], [1], [0, 0, 1, 1], [], []>} : vector<32x128xbf16>, vector<128x256xbf16>, vector<32x256xf32> -> vector<32x256xf32>
    %252 = arith.addf %245, %251 : vector<32x256xf32>
    %c1_332 = arith.constant 1 : index
    %c2_333 = arith.constant 2 : index
    %c1_334 = arith.constant 1 : index
    %c1_335 = arith.constant 1 : index
    %c0_336 = arith.constant 0 : index
    %c0_337 = arith.constant 0 : index
    %253 = vector.load %arg0[%c1_332, %c2_333, %c1_334, %c1_335, %c0_336, %c0_337] : memref<4x4x5x5x2x128xbf16, #tpu.memory_space<vmem>>, vector<1x1x4x4x2x128xbf16>
    %254 = vector.shape_cast %253 : vector<1x1x4x4x2x128xbf16> to vector<4x4x2x128xbf16>
    %255 = vector.shape_cast %254 : vector<4x4x2x128xbf16> to vector<32x128xbf16>
    %c1_338 = arith.constant 1 : index
    %c0_339 = arith.constant 0 : index
    %c0_340 = arith.constant 0 : index
    %256 = vector.load %arg2[%c1_338, %c0_339, %c0_340] : memref<9x128x256xbf16, #tpu.memory_space<vmem>>, vector<1x128x256xbf16>
    %257 = vector.shape_cast %256 : vector<1x128x256xbf16> to vector<128x256xbf16>
    %cst_341 = arith.constant dense<0.000000e+00> : vector<32x256xf32>
    %258 = tpu.matmul %255, %257, %cst_341 {dimension_numbers = #tpu.dot_dimension_numbers<[1], [0], [0], [1], [0, 0, 1, 1], [], []>} : vector<32x128xbf16>, vector<128x256xbf16>, vector<32x256xf32> -> vector<32x256xf32>
    %259 = arith.addf %252, %258 : vector<32x256xf32>
    %c1_342 = arith.constant 1 : index
    %c3_343 = arith.constant 3 : index
    %c1_344 = arith.constant 1 : index
    %c1_345 = arith.constant 1 : index
    %c0_346 = arith.constant 0 : index
    %c0_347 = arith.constant 0 : index
    %260 = vector.load %arg0[%c1_342, %c3_343, %c1_344, %c1_345, %c0_346, %c0_347] : memref<4x4x5x5x2x128xbf16, #tpu.memory_space<vmem>>, vector<1x1x4x4x2x128xbf16>
    %261 = vector.shape_cast %260 : vector<1x1x4x4x2x128xbf16> to vector<4x4x2x128xbf16>
    %262 = vector.shape_cast %261 : vector<4x4x2x128xbf16> to vector<32x128xbf16>
    %c2_348 = arith.constant 2 : index
    %c0_349 = arith.constant 0 : index
    %c0_350 = arith.constant 0 : index
    %263 = vector.load %arg2[%c2_348, %c0_349, %c0_350] : memref<9x128x256xbf16, #tpu.memory_space<vmem>>, vector<1x128x256xbf16>
    %264 = vector.shape_cast %263 : vector<1x128x256xbf16> to vector<128x256xbf16>
    %cst_351 = arith.constant dense<0.000000e+00> : vector<32x256xf32>
    %265 = tpu.matmul %262, %264, %cst_351 {dimension_numbers = #tpu.dot_dimension_numbers<[1], [0], [0], [1], [0, 0, 1, 1], [], []>} : vector<32x128xbf16>, vector<128x256xbf16>, vector<32x256xf32> -> vector<32x256xf32>
    %266 = arith.addf %259, %265 : vector<32x256xf32>
    %c2_352 = arith.constant 2 : index
    %c1_353 = arith.constant 1 : index
    %c1_354 = arith.constant 1 : index
    %c1_355 = arith.constant 1 : index
    %c0_356 = arith.constant 0 : index
    %c0_357 = arith.constant 0 : index
    %267 = vector.load %arg0[%c2_352, %c1_353, %c1_354, %c1_355, %c0_356, %c0_357] : memref<4x4x5x5x2x128xbf16, #tpu.memory_space<vmem>>, vector<1x1x4x4x2x128xbf16>
    %268 = vector.shape_cast %267 : vector<1x1x4x4x2x128xbf16> to vector<4x4x2x128xbf16>
    %269 = vector.shape_cast %268 : vector<4x4x2x128xbf16> to vector<32x128xbf16>
    %c3_358 = arith.constant 3 : index
    %c0_359 = arith.constant 0 : index
    %c0_360 = arith.constant 0 : index
    %270 = vector.load %arg2[%c3_358, %c0_359, %c0_360] : memref<9x128x256xbf16, #tpu.memory_space<vmem>>, vector<1x128x256xbf16>
    %271 = vector.shape_cast %270 : vector<1x128x256xbf16> to vector<128x256xbf16>
    %cst_361 = arith.constant dense<0.000000e+00> : vector<32x256xf32>
    %272 = tpu.matmul %269, %271, %cst_361 {dimension_numbers = #tpu.dot_dimension_numbers<[1], [0], [0], [1], [0, 0, 1, 1], [], []>} : vector<32x128xbf16>, vector<128x256xbf16>, vector<32x256xf32> -> vector<32x256xf32>
    %273 = arith.addf %266, %272 : vector<32x256xf32>
    %c2_362 = arith.constant 2 : index
    %c2_363 = arith.constant 2 : index
    %c1_364 = arith.constant 1 : index
    %c1_365 = arith.constant 1 : index
    %c0_366 = arith.constant 0 : index
    %c0_367 = arith.constant 0 : index
    %274 = vector.load %arg0[%c2_362, %c2_363, %c1_364, %c1_365, %c0_366, %c0_367] : memref<4x4x5x5x2x128xbf16, #tpu.memory_space<vmem>>, vector<1x1x4x4x2x128xbf16>
    %275 = vector.shape_cast %274 : vector<1x1x4x4x2x128xbf16> to vector<4x4x2x128xbf16>
    %276 = vector.shape_cast %275 : vector<4x4x2x128xbf16> to vector<32x128xbf16>
    %c4_368 = arith.constant 4 : index
    %c0_369 = arith.constant 0 : index
    %c0_370 = arith.constant 0 : index
    %277 = vector.load %arg2[%c4_368, %c0_369, %c0_370] : memref<9x128x256xbf16, #tpu.memory_space<vmem>>, vector<1x128x256xbf16>
    %278 = vector.shape_cast %277 : vector<1x128x256xbf16> to vector<128x256xbf16>
    %cst_371 = arith.constant dense<0.000000e+00> : vector<32x256xf32>
    %279 = tpu.matmul %276, %278, %cst_371 {dimension_numbers = #tpu.dot_dimension_numbers<[1], [0], [0], [1], [0, 0, 1, 1], [], []>} : vector<32x128xbf16>, vector<128x256xbf16>, vector<32x256xf32> -> vector<32x256xf32>
    %280 = arith.addf %273, %279 : vector<32x256xf32>
    %c2_372 = arith.constant 2 : index
    %c3_373 = arith.constant 3 : index
    %c1_374 = arith.constant 1 : index
    %c1_375 = arith.constant 1 : index
    %c0_376 = arith.constant 0 : index
    %c0_377 = arith.constant 0 : index
    %281 = vector.load %arg0[%c2_372, %c3_373, %c1_374, %c1_375, %c0_376, %c0_377] : memref<4x4x5x5x2x128xbf16, #tpu.memory_space<vmem>>, vector<1x1x4x4x2x128xbf16>
    %282 = vector.shape_cast %281 : vector<1x1x4x4x2x128xbf16> to vector<4x4x2x128xbf16>
    %283 = vector.shape_cast %282 : vector<4x4x2x128xbf16> to vector<32x128xbf16>
    %c5_378 = arith.constant 5 : index
    %c0_379 = arith.constant 0 : index
    %c0_380 = arith.constant 0 : index
    %284 = vector.load %arg2[%c5_378, %c0_379, %c0_380] : memref<9x128x256xbf16, #tpu.memory_space<vmem>>, vector<1x128x256xbf16>
    %285 = vector.shape_cast %284 : vector<1x128x256xbf16> to vector<128x256xbf16>
    %cst_381 = arith.constant dense<0.000000e+00> : vector<32x256xf32>
    %286 = tpu.matmul %283, %285, %cst_381 {dimension_numbers = #tpu.dot_dimension_numbers<[1], [0], [0], [1], [0, 0, 1, 1], [], []>} : vector<32x128xbf16>, vector<128x256xbf16>, vector<32x256xf32> -> vector<32x256xf32>
    %287 = arith.addf %280, %286 : vector<32x256xf32>
    %c3_382 = arith.constant 3 : index
    %c1_383 = arith.constant 1 : index
    %c1_384 = arith.constant 1 : index
    %c1_385 = arith.constant 1 : index
    %c0_386 = arith.constant 0 : index
    %c0_387 = arith.constant 0 : index
    %288 = vector.load %arg0[%c3_382, %c1_383, %c1_384, %c1_385, %c0_386, %c0_387] : memref<4x4x5x5x2x128xbf16, #tpu.memory_space<vmem>>, vector<1x1x4x4x2x128xbf16>
    %289 = vector.shape_cast %288 : vector<1x1x4x4x2x128xbf16> to vector<4x4x2x128xbf16>
    %290 = vector.shape_cast %289 : vector<4x4x2x128xbf16> to vector<32x128xbf16>
    %c6_388 = arith.constant 6 : index
    %c0_389 = arith.constant 0 : index
    %c0_390 = arith.constant 0 : index
    %291 = vector.load %arg2[%c6_388, %c0_389, %c0_390] : memref<9x128x256xbf16, #tpu.memory_space<vmem>>, vector<1x128x256xbf16>
    %292 = vector.shape_cast %291 : vector<1x128x256xbf16> to vector<128x256xbf16>
    %cst_391 = arith.constant dense<0.000000e+00> : vector<32x256xf32>
    %293 = tpu.matmul %290, %292, %cst_391 {dimension_numbers = #tpu.dot_dimension_numbers<[1], [0], [0], [1], [0, 0, 1, 1], [], []>} : vector<32x128xbf16>, vector<128x256xbf16>, vector<32x256xf32> -> vector<32x256xf32>
    %294 = arith.addf %287, %293 : vector<32x256xf32>
    %c3_392 = arith.constant 3 : index
    %c2_393 = arith.constant 2 : index
    %c1_394 = arith.constant 1 : index
    %c1_395 = arith.constant 1 : index
    %c0_396 = arith.constant 0 : index
    %c0_397 = arith.constant 0 : index
    %295 = vector.load %arg0[%c3_392, %c2_393, %c1_394, %c1_395, %c0_396, %c0_397] : memref<4x4x5x5x2x128xbf16, #tpu.memory_space<vmem>>, vector<1x1x4x4x2x128xbf16>
    %296 = vector.shape_cast %295 : vector<1x1x4x4x2x128xbf16> to vector<4x4x2x128xbf16>
    %297 = vector.shape_cast %296 : vector<4x4x2x128xbf16> to vector<32x128xbf16>
    %c7_398 = arith.constant 7 : index
    %c0_399 = arith.constant 0 : index
    %c0_400 = arith.constant 0 : index
    %298 = vector.load %arg2[%c7_398, %c0_399, %c0_400] : memref<9x128x256xbf16, #tpu.memory_space<vmem>>, vector<1x128x256xbf16>
    %299 = vector.shape_cast %298 : vector<1x128x256xbf16> to vector<128x256xbf16>
    %cst_401 = arith.constant dense<0.000000e+00> : vector<32x256xf32>
    %300 = tpu.matmul %297, %299, %cst_401 {dimension_numbers = #tpu.dot_dimension_numbers<[1], [0], [0], [1], [0, 0, 1, 1], [], []>} : vector<32x128xbf16>, vector<128x256xbf16>, vector<32x256xf32> -> vector<32x256xf32>
    %301 = arith.addf %294, %300 : vector<32x256xf32>
    %c3_402 = arith.constant 3 : index
    %c3_403 = arith.constant 3 : index
    %c1_404 = arith.constant 1 : index
    %c1_405 = arith.constant 1 : index
    %c0_406 = arith.constant 0 : index
    %c0_407 = arith.constant 0 : index
    %302 = vector.load %arg0[%c3_402, %c3_403, %c1_404, %c1_405, %c0_406, %c0_407] : memref<4x4x5x5x2x128xbf16, #tpu.memory_space<vmem>>, vector<1x1x4x4x2x128xbf16>
    %303 = vector.shape_cast %302 : vector<1x1x4x4x2x128xbf16> to vector<4x4x2x128xbf16>
    %304 = vector.shape_cast %303 : vector<4x4x2x128xbf16> to vector<32x128xbf16>
    %c8_408 = arith.constant 8 : index
    %c0_409 = arith.constant 0 : index
    %c0_410 = arith.constant 0 : index
    %305 = vector.load %arg2[%c8_408, %c0_409, %c0_410] : memref<9x128x256xbf16, #tpu.memory_space<vmem>>, vector<1x128x256xbf16>
    %306 = vector.shape_cast %305 : vector<1x128x256xbf16> to vector<128x256xbf16>
    %cst_411 = arith.constant dense<0.000000e+00> : vector<32x256xf32>
    %307 = tpu.matmul %304, %306, %cst_411 {dimension_numbers = #tpu.dot_dimension_numbers<[1], [0], [0], [1], [0, 0, 1, 1], [], []>} : vector<32x128xbf16>, vector<128x256xbf16>, vector<32x256xf32> -> vector<32x256xf32>
    %308 = arith.addf %301, %307 : vector<32x256xf32>
    %c0_412 = arith.constant 0 : index
    %c0_413 = arith.constant 0 : index
    %309 = vector.load %arg3[%c0_412, %c0_413] : memref<2x256xf32, #tpu.memory_space<vmem>>, vector<1x256xf32>
    %310 = vector.broadcast %309 : vector<1x256xf32> to vector<32x256xf32>
    %311 = arith.mulf %308, %310 : vector<32x256xf32>
    %c1_414 = arith.constant 1 : index
    %c0_415 = arith.constant 0 : index
    %312 = vector.load %arg3[%c1_414, %c0_415] : memref<2x256xf32, #tpu.memory_space<vmem>>, vector<1x256xf32>
    %313 = vector.broadcast %312 : vector<1x256xf32> to vector<32x256xf32>
    %314 = arith.addf %311, %313 : vector<32x256xf32>
    %cst_416 = arith.constant 0.000000e+00 : f32
    %315 = vector.broadcast %cst_416 : f32 to vector<32x256xf32>
    %316 = arith.maximumf %314, %315 : vector<32x256xf32>
    %c1_417 = arith.constant 1 : index
    %c1_418 = arith.constant 1 : index
    %c0_419 = arith.constant 0 : index
    %c0_420 = arith.constant 0 : index
    %c0_421 = arith.constant 0 : index
    %c0_422 = arith.constant 0 : index
    %317 = vector.load %arg1[%c1_417, %c1_418, %c0_419, %c0_420, %c0_421, %c0_422] : memref<2x2x4x4x2x256xf32, #tpu.memory_space<vmem>>, vector<1x1x4x4x2x256xf32>
    %318 = vector.shape_cast %317 : vector<1x1x4x4x2x256xf32> to vector<4x4x2x256xf32>
    %319 = vector.shape_cast %318 : vector<4x4x2x256xf32> to vector<32x256xf32>
    %320 = arith.addf %316, %319 : vector<32x256xf32>
    %321 = arith.truncf %320 : vector<32x256xf32> to vector<32x256xbf16>
    %322 = vector.shape_cast %321 : vector<32x256xbf16> to vector<4x4x2x256xbf16>
    %c1_423 = arith.constant 1 : index
    %c1_424 = arith.constant 1 : index
    %c1_425 = arith.constant 1 : index
    %c1_426 = arith.constant 1 : index
    %c0_427 = arith.constant 0 : index
    %c0_428 = arith.constant 0 : index
    %323 = vector.load %arg9[%c1_423, %c1_424, %c1_425, %c1_426, %c0_427, %c0_428] : memref<2x2x5x5x2x256xbf16, #tpu.memory_space<vmem>>, vector<1x1x4x4x2x256xbf16>
    %324 = vector.shape_cast %323 : vector<1x1x4x4x2x256xbf16> to vector<4x4x2x256xbf16>
    %325 = vector.shape_cast %322 : vector<4x4x2x256xbf16> to vector<1x1x4x4x2x256xbf16>
    tpu.vector_store %arg9[%c1_423, %c1_424, %c1_425, %c1_426, %c0_427, %c0_428], %325 {strides = array<i32>} : memref<2x2x5x5x2x256xbf16, #tpu.memory_space<vmem>>, vector<1x1x4x4x2x256xbf16>,
    %cst_429 = arith.constant 0.000000e+00 : f32
    %326 = vector.broadcast %cst_429 : f32 to vector<32x64xf32>
    %c1_430 = arith.constant 1 : index
    %c1_431 = arith.constant 1 : index
    %c0_432 = arith.constant 0 : index
    %c0_433 = arith.constant 0 : index
    %c0_434 = arith.constant 0 : index
    %c0_435 = arith.constant 0 : index
    %327 = vector.load %arg9[%c1_430, %c1_431, %c0_432, %c0_433, %c0_434, %c0_435] : memref<2x2x5x5x2x256xbf16, #tpu.memory_space<vmem>>, vector<1x1x4x4x2x256xbf16>
    %328 = vector.shape_cast %327 : vector<1x1x4x4x2x256xbf16> to vector<4x4x2x256xbf16>
    %329 = vector.shape_cast %328 : vector<4x4x2x256xbf16> to vector<32x256xbf16>
    %c0_436 = arith.constant 0 : index
    %c0_437 = arith.constant 0 : index
    %c0_438 = arith.constant 0 : index
    %330 = vector.load %arg4[%c0_436, %c0_437, %c0_438] : memref<9x256x64xbf16, #tpu.memory_space<vmem>>, vector<1x256x64xbf16>
    %331 = vector.shape_cast %330 : vector<1x256x64xbf16> to vector<256x64xbf16>
    %cst_439 = arith.constant dense<0.000000e+00> : vector<32x64xf32>
    %332 = tpu.matmul %329, %331, %cst_439 {dimension_numbers = #tpu.dot_dimension_numbers<[1], [0], [0], [1], [0, 0, 1, 1], [], []>} : vector<32x256xbf16>, vector<256x64xbf16>, vector<32x64xf32> -> vector<32x64xf32>
    %333 = arith.addf %326, %332 : vector<32x64xf32>
    %c1_440 = arith.constant 1 : index
    %c0_441 = arith.constant 0 : index
    %c0_442 = arith.constant 0 : index
    %c1_443 = arith.constant 1 : index
    %c0_444 = arith.constant 0 : index
    %c0_445 = arith.constant 0 : index
    %334 = vector.load %arg9[%c1_440, %c0_441, %c0_442, %c1_443, %c0_444, %c0_445] : memref<2x2x5x5x2x256xbf16, #tpu.memory_space<vmem>>, vector<1x1x4x4x2x256xbf16>
    %335 = vector.shape_cast %334 : vector<1x1x4x4x2x256xbf16> to vector<4x4x2x256xbf16>
    %336 = vector.shape_cast %335 : vector<4x4x2x256xbf16> to vector<32x256xbf16>
    %c1_446 = arith.constant 1 : index
    %c0_447 = arith.constant 0 : index
    %c0_448 = arith.constant 0 : index
    %337 = vector.load %arg4[%c1_446, %c0_447, %c0_448] : memref<9x256x64xbf16, #tpu.memory_space<vmem>>, vector<1x256x64xbf16>
    %338 = vector.shape_cast %337 : vector<1x256x64xbf16> to vector<256x64xbf16>
    %cst_449 = arith.constant dense<0.000000e+00> : vector<32x64xf32>
    %339 = tpu.matmul %336, %338, %cst_449 {dimension_numbers = #tpu.dot_dimension_numbers<[1], [0], [0], [1], [0, 0, 1, 1], [], []>} : vector<32x256xbf16>, vector<256x64xbf16>, vector<32x64xf32> -> vector<32x64xf32>
    %340 = arith.addf %333, %339 : vector<32x64xf32>
    %c1_450 = arith.constant 1 : index
    %c1_451 = arith.constant 1 : index
    %c0_452 = arith.constant 0 : index
    %c1_453 = arith.constant 1 : index
    %c0_454 = arith.constant 0 : index
    %c0_455 = arith.constant 0 : index
    %341 = vector.load %arg9[%c1_450, %c1_451, %c0_452, %c1_453, %c0_454, %c0_455] : memref<2x2x5x5x2x256xbf16, #tpu.memory_space<vmem>>, vector<1x1x4x4x2x256xbf16>
    %342 = vector.shape_cast %341 : vector<1x1x4x4x2x256xbf16> to vector<4x4x2x256xbf16>
    %343 = vector.shape_cast %342 : vector<4x4x2x256xbf16> to vector<32x256xbf16>
    %c2_456 = arith.constant 2 : index
    %c0_457 = arith.constant 0 : index
    %c0_458 = arith.constant 0 : index
    %344 = vector.load %arg4[%c2_456, %c0_457, %c0_458] : memref<9x256x64xbf16, #tpu.memory_space<vmem>>, vector<1x256x64xbf16>
    %345 = vector.shape_cast %344 : vector<1x256x64xbf16> to vector<256x64xbf16>
    %cst_459 = arith.constant dense<0.000000e+00> : vector<32x64xf32>
    %346 = tpu.matmul %343, %345, %cst_459 {dimension_numbers = #tpu.dot_dimension_numbers<[1], [0], [0], [1], [0, 0, 1, 1], [], []>} : vector<32x256xbf16>, vector<256x64xbf16>, vector<32x64xf32> -> vector<32x64xf32>
    %347 = arith.addf %340, %346 : vector<32x64xf32>
    %c0_460 = arith.constant 0 : index
    %c1_461 = arith.constant 1 : index
    %c1_462 = arith.constant 1 : index
    %c0_463 = arith.constant 0 : index
    %c0_464 = arith.constant 0 : index
    %c0_465 = arith.constant 0 : index
    %348 = vector.load %arg9[%c0_460, %c1_461, %c1_462, %c0_463, %c0_464, %c0_465] : memref<2x2x5x5x2x256xbf16, #tpu.memory_space<vmem>>, vector<1x1x4x4x2x256xbf16>
    %349 = vector.shape_cast %348 : vector<1x1x4x4x2x256xbf16> to vector<4x4x2x256xbf16>
    %350 = vector.shape_cast %349 : vector<4x4x2x256xbf16> to vector<32x256xbf16>
    %c3_466 = arith.constant 3 : index
    %c0_467 = arith.constant 0 : index
    %c0_468 = arith.constant 0 : index
    %351 = vector.load %arg4[%c3_466, %c0_467, %c0_468] : memref<9x256x64xbf16, #tpu.memory_space<vmem>>, vector<1x256x64xbf16>
    %352 = vector.shape_cast %351 : vector<1x256x64xbf16> to vector<256x64xbf16>
    %cst_469 = arith.constant dense<0.000000e+00> : vector<32x64xf32>
    %353 = tpu.matmul %350, %352, %cst_469 {dimension_numbers = #tpu.dot_dimension_numbers<[1], [0], [0], [1], [0, 0, 1, 1], [], []>} : vector<32x256xbf16>, vector<256x64xbf16>, vector<32x64xf32> -> vector<32x64xf32>
    %354 = arith.addf %347, %353 : vector<32x64xf32>
    %c0_470 = arith.constant 0 : index
    %c0_471 = arith.constant 0 : index
    %c1_472 = arith.constant 1 : index
    %c1_473 = arith.constant 1 : index
    %c0_474 = arith.constant 0 : index
    %c0_475 = arith.constant 0 : index
    %355 = vector.load %arg9[%c0_470, %c0_471, %c1_472, %c1_473, %c0_474, %c0_475] : memref<2x2x5x5x2x256xbf16, #tpu.memory_space<vmem>>, vector<1x1x4x4x2x256xbf16>
    %356 = vector.shape_cast %355 : vector<1x1x4x4x2x256xbf16> to vector<4x4x2x256xbf16>
    %357 = vector.shape_cast %356 : vector<4x4x2x256xbf16> to vector<32x256xbf16>
    %c4_476 = arith.constant 4 : index
    %c0_477 = arith.constant 0 : index
    %c0_478 = arith.constant 0 : index
    %358 = vector.load %arg4[%c4_476, %c0_477, %c0_478] : memref<9x256x64xbf16, #tpu.memory_space<vmem>>, vector<1x256x64xbf16>
    %359 = vector.shape_cast %358 : vector<1x256x64xbf16> to vector<256x64xbf16>
    %cst_479 = arith.constant dense<0.000000e+00> : vector<32x64xf32>
    %360 = tpu.matmul %357, %359, %cst_479 {dimension_numbers = #tpu.dot_dimension_numbers<[1], [0], [0], [1], [0, 0, 1, 1], [], []>} : vector<32x256xbf16>, vector<256x64xbf16>, vector<32x64xf32> -> vector<32x64xf32>
    %361 = arith.addf %354, %360 : vector<32x64xf32>
    %c0_480 = arith.constant 0 : index
    %c1_481 = arith.constant 1 : index
    %c1_482 = arith.constant 1 : index
    %c1_483 = arith.constant 1 : index
    %c0_484 = arith.constant 0 : index
    %c0_485 = arith.constant 0 : index
    %362 = vector.load %arg9[%c0_480, %c1_481, %c1_482, %c1_483, %c0_484, %c0_485] : memref<2x2x5x5x2x256xbf16, #tpu.memory_space<vmem>>, vector<1x1x4x4x2x256xbf16>
    %363 = vector.shape_cast %362 : vector<1x1x4x4x2x256xbf16> to vector<4x4x2x256xbf16>
    %364 = vector.shape_cast %363 : vector<4x4x2x256xbf16> to vector<32x256xbf16>
    %c5_486 = arith.constant 5 : index
    %c0_487 = arith.constant 0 : index
    %c0_488 = arith.constant 0 : index
    %365 = vector.load %arg4[%c5_486, %c0_487, %c0_488] : memref<9x256x64xbf16, #tpu.memory_space<vmem>>, vector<1x256x64xbf16>
    %366 = vector.shape_cast %365 : vector<1x256x64xbf16> to vector<256x64xbf16>
    %cst_489 = arith.constant dense<0.000000e+00> : vector<32x64xf32>
    %367 = tpu.matmul %364, %366, %cst_489 {dimension_numbers = #tpu.dot_dimension_numbers<[1], [0], [0], [1], [0, 0, 1, 1], [], []>} : vector<32x256xbf16>, vector<256x64xbf16>, vector<32x64xf32> -> vector<32x64xf32>
    %368 = arith.addf %361, %367 : vector<32x64xf32>
    %c1_490 = arith.constant 1 : index
    %c1_491 = arith.constant 1 : index
    %c1_492 = arith.constant 1 : index
    %c0_493 = arith.constant 0 : index
    %c0_494 = arith.constant 0 : index
    %c0_495 = arith.constant 0 : index
    %369 = vector.load %arg9[%c1_490, %c1_491, %c1_492, %c0_493, %c0_494, %c0_495] : memref<2x2x5x5x2x256xbf16, #tpu.memory_space<vmem>>, vector<1x1x4x4x2x256xbf16>
    %370 = vector.shape_cast %369 : vector<1x1x4x4x2x256xbf16> to vector<4x4x2x256xbf16>
    %371 = vector.shape_cast %370 : vector<4x4x2x256xbf16> to vector<32x256xbf16>
    %c6_496 = arith.constant 6 : index
    %c0_497 = arith.constant 0 : index
    %c0_498 = arith.constant 0 : index
    %372 = vector.load %arg4[%c6_496, %c0_497, %c0_498] : memref<9x256x64xbf16, #tpu.memory_space<vmem>>, vector<1x256x64xbf16>
    %373 = vector.shape_cast %372 : vector<1x256x64xbf16> to vector<256x64xbf16>
    %cst_499 = arith.constant dense<0.000000e+00> : vector<32x64xf32>
    %374 = tpu.matmul %371, %373, %cst_499 {dimension_numbers = #tpu.dot_dimension_numbers<[1], [0], [0], [1], [0, 0, 1, 1], [], []>} : vector<32x256xbf16>, vector<256x64xbf16>, vector<32x64xf32> -> vector<32x64xf32>
    %375 = arith.addf %368, %374 : vector<32x64xf32>
    %c1_500 = arith.constant 1 : index
    %c0_501 = arith.constant 0 : index
    %c1_502 = arith.constant 1 : index
    %c1_503 = arith.constant 1 : index
    %c0_504 = arith.constant 0 : index
    %c0_505 = arith.constant 0 : index
    %376 = vector.load %arg9[%c1_500, %c0_501, %c1_502, %c1_503, %c0_504, %c0_505] : memref<2x2x5x5x2x256xbf16, #tpu.memory_space<vmem>>, vector<1x1x4x4x2x256xbf16>
    %377 = vector.shape_cast %376 : vector<1x1x4x4x2x256xbf16> to vector<4x4x2x256xbf16>
    %378 = vector.shape_cast %377 : vector<4x4x2x256xbf16> to vector<32x256xbf16>
    %c7_506 = arith.constant 7 : index
    %c0_507 = arith.constant 0 : index
    %c0_508 = arith.constant 0 : index
    %379 = vector.load %arg4[%c7_506, %c0_507, %c0_508] : memref<9x256x64xbf16, #tpu.memory_space<vmem>>, vector<1x256x64xbf16>
    %380 = vector.shape_cast %379 : vector<1x256x64xbf16> to vector<256x64xbf16>
    %cst_509 = arith.constant dense<0.000000e+00> : vector<32x64xf32>
    %381 = tpu.matmul %378, %380, %cst_509 {dimension_numbers = #tpu.dot_dimension_numbers<[1], [0], [0], [1], [0, 0, 1, 1], [], []>} : vector<32x256xbf16>, vector<256x64xbf16>, vector<32x64xf32> -> vector<32x64xf32>
    %382 = arith.addf %375, %381 : vector<32x64xf32>
    %c1_510 = arith.constant 1 : index
    %c1_511 = arith.constant 1 : index
    %c1_512 = arith.constant 1 : index
    %c1_513 = arith.constant 1 : index
    %c0_514 = arith.constant 0 : index
    %c0_515 = arith.constant 0 : index
    %383 = vector.load %arg9[%c1_510, %c1_511, %c1_512, %c1_513, %c0_514, %c0_515] : memref<2x2x5x5x2x256xbf16, #tpu.memory_space<vmem>>, vector<1x1x4x4x2x256xbf16>
    %384 = vector.shape_cast %383 : vector<1x1x4x4x2x256xbf16> to vector<4x4x2x256xbf16>
    %385 = vector.shape_cast %384 : vector<4x4x2x256xbf16> to vector<32x256xbf16>
    %c8_516 = arith.constant 8 : index
    %c0_517 = arith.constant 0 : index
    %c0_518 = arith.constant 0 : index
    %386 = vector.load %arg4[%c8_516, %c0_517, %c0_518] : memref<9x256x64xbf16, #tpu.memory_space<vmem>>, vector<1x256x64xbf16>
    %387 = vector.shape_cast %386 : vector<1x256x64xbf16> to vector<256x64xbf16>
    %cst_519 = arith.constant dense<0.000000e+00> : vector<32x64xf32>
    %388 = tpu.matmul %385, %387, %cst_519 {dimension_numbers = #tpu.dot_dimension_numbers<[1], [0], [0], [1], [0, 0, 1, 1], [], []>} : vector<32x256xbf16>, vector<256x64xbf16>, vector<32x64xf32> -> vector<32x64xf32>
    %389 = arith.addf %382, %388 : vector<32x64xf32>
    %c0_520 = arith.constant 0 : index
    %c0_521 = arith.constant 0 : index
    %390 = vector.load %arg5[%c0_520, %c0_521] : memref<2x64xf32, #tpu.memory_space<vmem>>, vector<1x64xf32>
    %391 = vector.broadcast %390 : vector<1x64xf32> to vector<32x64xf32>
    %392 = arith.mulf %389, %391 : vector<32x64xf32>
    %c1_522 = arith.constant 1 : index
    %c0_523 = arith.constant 0 : index
    %393 = vector.load %arg5[%c1_522, %c0_523] : memref<2x64xf32, #tpu.memory_space<vmem>>, vector<1x64xf32>
    %394 = vector.broadcast %393 : vector<1x64xf32> to vector<32x64xf32>
    %395 = arith.addf %392, %394 : vector<32x64xf32>
    %cst_524 = arith.constant 0.000000e+00 : f32
    %396 = vector.broadcast %cst_524 : f32 to vector<32x64xf32>
    %397 = arith.maximumf %395, %396 : vector<32x64xf32>
    %398 = arith.truncf %397 : vector<32x64xf32> to vector<32x64xbf16>
    %cst_525 = arith.constant 0.000000e+00 : f32
    %399 = vector.broadcast %cst_525 : f32 to vector<2x128xf32>
    %400 = vector.extract_strided_slice %398 {offsets = [0, 0], sizes = [2, 64], strides = [1, 1]} : vector<32x64xbf16> to vector<2x64xbf16>
    %c0_526 = arith.constant 0 : index
    %c0_527 = arith.constant 0 : index
    %c0_528 = arith.constant 0 : index
    %401 = vector.load %arg6[%c0_526, %c0_527, %c0_528] : memref<16x64x128xbf16, #tpu.memory_space<vmem>>, vector<1x64x128xbf16>
    %402 = vector.shape_cast %401 : vector<1x64x128xbf16> to vector<64x128xbf16>
    %cst_529 = arith.constant dense<0.000000e+00> : vector<2x128xf32>
    %403 = tpu.matmul %400, %402, %cst_529 {dimension_numbers = #tpu.dot_dimension_numbers<[1], [0], [0], [1], [0, 0, 1, 1], [], []>} : vector<2x64xbf16>, vector<64x128xbf16>, vector<2x128xf32> -> vector<2x128xf32>
    %404 = arith.addf %399, %403 : vector<2x128xf32>
    %405 = vector.extract_strided_slice %398 {offsets = [2, 0], sizes = [2, 64], strides = [1, 1]} : vector<32x64xbf16> to vector<2x64xbf16>
    %c1_530 = arith.constant 1 : index
    %c0_531 = arith.constant 0 : index
    %c0_532 = arith.constant 0 : index
    %406 = vector.load %arg6[%c1_530, %c0_531, %c0_532] : memref<16x64x128xbf16, #tpu.memory_space<vmem>>, vector<1x64x128xbf16>
    %407 = vector.shape_cast %406 : vector<1x64x128xbf16> to vector<64x128xbf16>
    %cst_533 = arith.constant dense<0.000000e+00> : vector<2x128xf32>
    %408 = tpu.matmul %405, %407, %cst_533 {dimension_numbers = #tpu.dot_dimension_numbers<[1], [0], [0], [1], [0, 0, 1, 1], [], []>} : vector<2x64xbf16>, vector<64x128xbf16>, vector<2x128xf32> -> vector<2x128xf32>
    %409 = arith.addf %404, %408 : vector<2x128xf32>
    %410 = vector.extract_strided_slice %398 {offsets = [4, 0], sizes = [2, 64], strides = [1, 1]} : vector<32x64xbf16> to vector<2x64xbf16>
    %c2_534 = arith.constant 2 : index
    %c0_535 = arith.constant 0 : index
    %c0_536 = arith.constant 0 : index
    %411 = vector.load %arg6[%c2_534, %c0_535, %c0_536] : memref<16x64x128xbf16, #tpu.memory_space<vmem>>, vector<1x64x128xbf16>
    %412 = vector.shape_cast %411 : vector<1x64x128xbf16> to vector<64x128xbf16>
    %cst_537 = arith.constant dense<0.000000e+00> : vector<2x128xf32>
    %413 = tpu.matmul %410, %412, %cst_537 {dimension_numbers = #tpu.dot_dimension_numbers<[1], [0], [0], [1], [0, 0, 1, 1], [], []>} : vector<2x64xbf16>, vector<64x128xbf16>, vector<2x128xf32> -> vector<2x128xf32>
    %414 = arith.addf %409, %413 : vector<2x128xf32>
    %415 = vector.extract_strided_slice %398 {offsets = [6, 0], sizes = [2, 64], strides = [1, 1]} : vector<32x64xbf16> to vector<2x64xbf16>
    %c3_538 = arith.constant 3 : index
    %c0_539 = arith.constant 0 : index
    %c0_540 = arith.constant 0 : index
    %416 = vector.load %arg6[%c3_538, %c0_539, %c0_540] : memref<16x64x128xbf16, #tpu.memory_space<vmem>>, vector<1x64x128xbf16>
    %417 = vector.shape_cast %416 : vector<1x64x128xbf16> to vector<64x128xbf16>
    %cst_541 = arith.constant dense<0.000000e+00> : vector<2x128xf32>
    %418 = tpu.matmul %415, %417, %cst_541 {dimension_numbers = #tpu.dot_dimension_numbers<[1], [0], [0], [1], [0, 0, 1, 1], [], []>} : vector<2x64xbf16>, vector<64x128xbf16>, vector<2x128xf32> -> vector<2x128xf32>
    %419 = arith.addf %414, %418 : vector<2x128xf32>
    %420 = vector.extract_strided_slice %398 {offsets = [8, 0], sizes = [2, 64], strides = [1, 1]} : vector<32x64xbf16> to vector<2x64xbf16>
    %c4_542 = arith.constant 4 : index
    %c0_543 = arith.constant 0 : index
    %c0_544 = arith.constant 0 : index
    %421 = vector.load %arg6[%c4_542, %c0_543, %c0_544] : memref<16x64x128xbf16, #tpu.memory_space<vmem>>, vector<1x64x128xbf16>
    %422 = vector.shape_cast %421 : vector<1x64x128xbf16> to vector<64x128xbf16>
    %cst_545 = arith.constant dense<0.000000e+00> : vector<2x128xf32>
    %423 = tpu.matmul %420, %422, %cst_545 {dimension_numbers = #tpu.dot_dimension_numbers<[1], [0], [0], [1], [0, 0, 1, 1], [], []>} : vector<2x64xbf16>, vector<64x128xbf16>, vector<2x128xf32> -> vector<2x128xf32>
    %424 = arith.addf %419, %423 : vector<2x128xf32>
    %425 = vector.extract_strided_slice %398 {offsets = [10, 0], sizes = [2, 64], strides = [1, 1]} : vector<32x64xbf16> to vector<2x64xbf16>
    %c5_546 = arith.constant 5 : index
    %c0_547 = arith.constant 0 : index
    %c0_548 = arith.constant 0 : index
    %426 = vector.load %arg6[%c5_546, %c0_547, %c0_548] : memref<16x64x128xbf16, #tpu.memory_space<vmem>>, vector<1x64x128xbf16>
    %427 = vector.shape_cast %426 : vector<1x64x128xbf16> to vector<64x128xbf16>
    %cst_549 = arith.constant dense<0.000000e+00> : vector<2x128xf32>
    %428 = tpu.matmul %425, %427, %cst_549 {dimension_numbers = #tpu.dot_dimension_numbers<[1], [0], [0], [1], [0, 0, 1, 1], [], []>} : vector<2x64xbf16>, vector<64x128xbf16>, vector<2x128xf32> -> vector<2x128xf32>
    %429 = arith.addf %424, %428 : vector<2x128xf32>
    %430 = vector.extract_strided_slice %398 {offsets = [12, 0], sizes = [2, 64], strides = [1, 1]} : vector<32x64xbf16> to vector<2x64xbf16>
    %c6_550 = arith.constant 6 : index
    %c0_551 = arith.constant 0 : index
    %c0_552 = arith.constant 0 : index
    %431 = vector.load %arg6[%c6_550, %c0_551, %c0_552] : memref<16x64x128xbf16, #tpu.memory_space<vmem>>, vector<1x64x128xbf16>
    %432 = vector.shape_cast %431 : vector<1x64x128xbf16> to vector<64x128xbf16>
    %cst_553 = arith.constant dense<0.000000e+00> : vector<2x128xf32>
    %433 = tpu.matmul %430, %432, %cst_553 {dimension_numbers = #tpu.dot_dimension_numbers<[1], [0], [0], [1], [0, 0, 1, 1], [], []>} : vector<2x64xbf16>, vector<64x128xbf16>, vector<2x128xf32> -> vector<2x128xf32>
    %434 = arith.addf %429, %433 : vector<2x128xf32>
    %435 = vector.extract_strided_slice %398 {offsets = [14, 0], sizes = [2, 64], strides = [1, 1]} : vector<32x64xbf16> to vector<2x64xbf16>
    %c7_554 = arith.constant 7 : index
    %c0_555 = arith.constant 0 : index
    %c0_556 = arith.constant 0 : index
    %436 = vector.load %arg6[%c7_554, %c0_555, %c0_556] : memref<16x64x128xbf16, #tpu.memory_space<vmem>>, vector<1x64x128xbf16>
    %437 = vector.shape_cast %436 : vector<1x64x128xbf16> to vector<64x128xbf16>
    %cst_557 = arith.constant dense<0.000000e+00> : vector<2x128xf32>
    %438 = tpu.matmul %435, %437, %cst_557 {dimension_numbers = #tpu.dot_dimension_numbers<[1], [0], [0], [1], [0, 0, 1, 1], [], []>} : vector<2x64xbf16>, vector<64x128xbf16>, vector<2x128xf32> -> vector<2x128xf32>
    %439 = arith.addf %434, %438 : vector<2x128xf32>
    %440 = vector.extract_strided_slice %398 {offsets = [16, 0], sizes = [2, 64], strides = [1, 1]} : vector<32x64xbf16> to vector<2x64xbf16>
    %c8_558 = arith.constant 8 : index
    %c0_559 = arith.constant 0 : index
    %c0_560 = arith.constant 0 : index
    %441 = vector.load %arg6[%c8_558, %c0_559, %c0_560] : memref<16x64x128xbf16, #tpu.memory_space<vmem>>, vector<1x64x128xbf16>
    %442 = vector.shape_cast %441 : vector<1x64x128xbf16> to vector<64x128xbf16>
    %cst_561 = arith.constant dense<0.000000e+00> : vector<2x128xf32>
    %443 = tpu.matmul %440, %442, %cst_561 {dimension_numbers = #tpu.dot_dimension_numbers<[1], [0], [0], [1], [0, 0, 1, 1], [], []>} : vector<2x64xbf16>, vector<64x128xbf16>, vector<2x128xf32> -> vector<2x128xf32>
    %444 = arith.addf %439, %443 : vector<2x128xf32>
    %445 = vector.extract_strided_slice %398 {offsets = [18, 0], sizes = [2, 64], strides = [1, 1]} : vector<32x64xbf16> to vector<2x64xbf16>
    %c9 = arith.constant 9 : index
    %c0_562 = arith.constant 0 : index
    %c0_563 = arith.constant 0 : index
    %446 = vector.load %arg6[%c9, %c0_562, %c0_563] : memref<16x64x128xbf16, #tpu.memory_space<vmem>>, vector<1x64x128xbf16>
    %447 = vector.shape_cast %446 : vector<1x64x128xbf16> to vector<64x128xbf16>
    %cst_564 = arith.constant dense<0.000000e+00> : vector<2x128xf32>
    %448 = tpu.matmul %445, %447, %cst_564 {dimension_numbers = #tpu.dot_dimension_numbers<[1], [0], [0], [1], [0, 0, 1, 1], [], []>} : vector<2x64xbf16>, vector<64x128xbf16>, vector<2x128xf32> -> vector<2x128xf32>
    %449 = arith.addf %444, %448 : vector<2x128xf32>
    %450 = vector.extract_strided_slice %398 {offsets = [20, 0], sizes = [2, 64], strides = [1, 1]} : vector<32x64xbf16> to vector<2x64xbf16>
    %c10 = arith.constant 10 : index
    %c0_565 = arith.constant 0 : index
    %c0_566 = arith.constant 0 : index
    %451 = vector.load %arg6[%c10, %c0_565, %c0_566] : memref<16x64x128xbf16, #tpu.memory_space<vmem>>, vector<1x64x128xbf16>
    %452 = vector.shape_cast %451 : vector<1x64x128xbf16> to vector<64x128xbf16>
    %cst_567 = arith.constant dense<0.000000e+00> : vector<2x128xf32>
    %453 = tpu.matmul %450, %452, %cst_567 {dimension_numbers = #tpu.dot_dimension_numbers<[1], [0], [0], [1], [0, 0, 1, 1], [], []>} : vector<2x64xbf16>, vector<64x128xbf16>, vector<2x128xf32> -> vector<2x128xf32>
    %454 = arith.addf %449, %453 : vector<2x128xf32>
    %455 = vector.extract_strided_slice %398 {offsets = [22, 0], sizes = [2, 64], strides = [1, 1]} : vector<32x64xbf16> to vector<2x64xbf16>
    %c11 = arith.constant 11 : index
    %c0_568 = arith.constant 0 : index
    %c0_569 = arith.constant 0 : index
    %456 = vector.load %arg6[%c11, %c0_568, %c0_569] : memref<16x64x128xbf16, #tpu.memory_space<vmem>>, vector<1x64x128xbf16>
    %457 = vector.shape_cast %456 : vector<1x64x128xbf16> to vector<64x128xbf16>
    %cst_570 = arith.constant dense<0.000000e+00> : vector<2x128xf32>
    %458 = tpu.matmul %455, %457, %cst_570 {dimension_numbers = #tpu.dot_dimension_numbers<[1], [0], [0], [1], [0, 0, 1, 1], [], []>} : vector<2x64xbf16>, vector<64x128xbf16>, vector<2x128xf32> -> vector<2x128xf32>
    %459 = arith.addf %454, %458 : vector<2x128xf32>
    %460 = vector.extract_strided_slice %398 {offsets = [24, 0], sizes = [2, 64], strides = [1, 1]} : vector<32x64xbf16> to vector<2x64xbf16>
    %c12 = arith.constant 12 : index
    %c0_571 = arith.constant 0 : index
    %c0_572 = arith.constant 0 : index
    %461 = vector.load %arg6[%c12, %c0_571, %c0_572] : memref<16x64x128xbf16, #tpu.memory_space<vmem>>, vector<1x64x128xbf16>
    %462 = vector.shape_cast %461 : vector<1x64x128xbf16> to vector<64x128xbf16>
    %cst_573 = arith.constant dense<0.000000e+00> : vector<2x128xf32>
    %463 = tpu.matmul %460, %462, %cst_573 {dimension_numbers = #tpu.dot_dimension_numbers<[1], [0], [0], [1], [0, 0, 1, 1], [], []>} : vector<2x64xbf16>, vector<64x128xbf16>, vector<2x128xf32> -> vector<2x128xf32>
    %464 = arith.addf %459, %463 : vector<2x128xf32>
    %465 = vector.extract_strided_slice %398 {offsets = [26, 0], sizes = [2, 64], strides = [1, 1]} : vector<32x64xbf16> to vector<2x64xbf16>
    %c13 = arith.constant 13 : index
    %c0_574 = arith.constant 0 : index
    %c0_575 = arith.constant 0 : index
    %466 = vector.load %arg6[%c13, %c0_574, %c0_575] : memref<16x64x128xbf16, #tpu.memory_space<vmem>>, vector<1x64x128xbf16>
    %467 = vector.shape_cast %466 : vector<1x64x128xbf16> to vector<64x128xbf16>
    %cst_576 = arith.constant dense<0.000000e+00> : vector<2x128xf32>
    %468 = tpu.matmul %465, %467, %cst_576 {dimension_numbers = #tpu.dot_dimension_numbers<[1], [0], [0], [1], [0, 0, 1, 1], [], []>} : vector<2x64xbf16>, vector<64x128xbf16>, vector<2x128xf32> -> vector<2x128xf32>
    %469 = arith.addf %464, %468 : vector<2x128xf32>
    %470 = vector.extract_strided_slice %398 {offsets = [28, 0], sizes = [2, 64], strides = [1, 1]} : vector<32x64xbf16> to vector<2x64xbf16>
    %c14 = arith.constant 14 : index
    %c0_577 = arith.constant 0 : index
    %c0_578 = arith.constant 0 : index
    %471 = vector.load %arg6[%c14, %c0_577, %c0_578] : memref<16x64x128xbf16, #tpu.memory_space<vmem>>, vector<1x64x128xbf16>
    %472 = vector.shape_cast %471 : vector<1x64x128xbf16> to vector<64x128xbf16>
    %cst_579 = arith.constant dense<0.000000e+00> : vector<2x128xf32>
    %473 = tpu.matmul %470, %472, %cst_579 {dimension_numbers = #tpu.dot_dimension_numbers<[1], [0], [0], [1], [0, 0, 1, 1], [], []>} : vector<2x64xbf16>, vector<64x128xbf16>, vector<2x128xf32> -> vector<2x128xf32>
    %474 = arith.addf %469, %473 : vector<2x128xf32>
    %475 = vector.extract_strided_slice %398 {offsets = [30, 0], sizes = [2, 64], strides = [1, 1]} : vector<32x64xbf16> to vector<2x64xbf16>
    %c15 = arith.constant 15 : index
    %c0_580 = arith.constant 0 : index
    %c0_581 = arith.constant 0 : index
    %476 = vector.load %arg6[%c15, %c0_580, %c0_581] : memref<16x64x128xbf16, #tpu.memory_space<vmem>>, vector<1x64x128xbf16>
    %477 = vector.shape_cast %476 : vector<1x64x128xbf16> to vector<64x128xbf16>
    %cst_582 = arith.constant dense<0.000000e+00> : vector<2x128xf32>
    %478 = tpu.matmul %475, %477, %cst_582 {dimension_numbers = #tpu.dot_dimension_numbers<[1], [0], [0], [1], [0, 0, 1, 1], [], []>} : vector<2x64xbf16>, vector<64x128xbf16>, vector<2x128xf32> -> vector<2x128xf32>
    %479 = arith.addf %474, %478 : vector<2x128xf32>
    %c0_583 = arith.constant 0 : index
    %c0_584 = arith.constant 0 : index
    %480 = vector.load %arg7[%c0_583, %c0_584] : memref<1x128xf32, #tpu.memory_space<vmem>>, vector<1x128xf32>
    %481 = vector.broadcast %480 : vector<1x128xf32> to vector<2x128xf32>
    %482 = arith.addf %479, %481 : vector<2x128xf32>
    %cst_585 = arith.constant dense<0xFF800000> : vector<2xf32>
    %483 = vector.multi_reduction <maximumf>, %482, %cst_585 [1] : vector<2x128xf32> to vector<2xf32>
    %484 = vector.shape_cast %483 : vector<2xf32> to vector<2x1xf32>
    %485 = vector.broadcast %484 : vector<2x1xf32> to vector<2x128xf32>
    %486 = arith.subf %482, %485 : vector<2x128xf32>
    %487 = math.exp %486 : vector<2x128xf32>
    %cst_586 = arith.constant dense<0.000000e+00> : vector<2xf32>
    %488 = vector.multi_reduction <add>, %487, %cst_586 [1] : vector<2x128xf32> to vector<2xf32>
    %489 = vector.shape_cast %488 : vector<2xf32> to vector<2x1xf32>
    %490 = vector.broadcast %489 : vector<2x1xf32> to vector<2x128xf32>
    %491 = arith.divf %487, %490 : vector<2x128xf32>
    %c0_587 = arith.constant 0 : index
    %c0_588 = arith.constant 0 : index
    %492 = vector.load %arg8[%c0_587, %c0_588] : memref<2x128xf32, #tpu.memory_space<vmem>>, vector<2x128xf32>
    tpu.vector_store %arg8[%c0_587, %c0_588], %491 {strides = array<i32>} : memref<2x128xf32, #tpu.memory_space<vmem>>, vector<2x128xf32>,
    return
  }
}

</mosaic_0001>

<llo_original>
// kernel: classifier2_forward.1
$region0: #{classifier2_forward.1}
  #allocation0 [shape = 'u32[]', space=smem, size = 0x4, offset = 0x4, fixed_abs, tag = 'smem constant byte address 0x4 - core index']
  #allocation1 [shape = 'u32[72,128]{1,0:T(1,128)}', space=vmem, size = 0x9000, scoped, tag = 'internal scratch']
  #allocation2 [shape = 'bf16[2,2,5,5,2,256]{5,4,3,2,1,0:T(2,128)(2,1)}', space=vmem, size = 0x19000, scoped, tag = 'scratch operand']
  %s0 = inlined_call_operand.vmem [shape: bf16[4,4,5,5,2,128], index: 0, kind: input, shape index: {}]
  %s1 = inlined_call_operand.vmem [shape: f32[2,2,4,4,2,256], index: 1, kind: input, shape index: {}]
  %s2 = inlined_call_operand.vmem [shape: bf16[9,128,256], index: 2, kind: input, shape index: {}]
  %s3 = inlined_call_operand.vmem [shape: f32[2,256], index: 3, kind: input, shape index: {}]
  %s4 = inlined_call_operand.vmem [shape: bf16[9,256,64], index: 4, kind: input, shape index: {}]
  %s5 = inlined_call_operand.vmem [shape: f32[2,64], index: 5, kind: input, shape index: {}]
  %s6 = inlined_call_operand.vmem [shape: bf16[16,64,128], index: 6, kind: input, shape index: {}]
  %s7 = inlined_call_operand.vmem [shape: f32[1,128], index: 7, kind: input, shape index: {}]
  %s8 = inlined_call_operand.hbm [shape: f32[2,128], index: 8, kind: output, shape index: {}]
  %s9 = sld [smem:[#allocation0]]
  $region42: #{classifier2_forward.1} parent=0
    _
  %s11 = ssub.s32 1, %s9
  %s12 = scalar_select 0, %s11, %s9
  $region1: #{classifier2_forward.1} parent=0
    #allocation3 [shape = 'u8[1024]{0}', space=vmem, size = 0x400, scoped, tag = 'output window, operand 0, single buffered']
    #allocation4 [shape = 's32[1]{0}', space=sflag, size = 0x4, scoped, tag = 'scoped memory for classifier2_forward.1']
    %13 = vsyncpa [#allocation4], 0
    // Predicated region
    $region2: #{classifier2_forward.1} parent=1 // pred_check
      _
    $region3: #{classifier2_forward.1} parent=1 // pred_check_branch
      %15 = sbr.rel (0) target = $region5
    $region4: #{classifier2_forward.1} parent=1 // pred_region
      _
    $region5: #{classifier2_forward.1} parent=1 // pred_fallthru
      _
    // Predicated region
    $region6: #{classifier2_forward.1} parent=1 // pred_check
      _
    $region7: #{classifier2_forward.1} parent=1 // pred_check_branch
      %17 = sbr.rel (0) target = $region9
    $region8: #{classifier2_forward.1} parent=1 // pred_region
      _
    $region9: #{classifier2_forward.1} parent=1 // pred_fallthru
      _
    // Predicated region
    $region10: #{classifier2_forward.1} parent=1 // pred_check
      _
    $region11: #{classifier2_forward.1} parent=1 // pred_check_branch
      %19 = sbr.rel (0) target = $region13
    $region12: #{classifier2_forward.1} parent=1 // pred_region
      _
    $region13: #{classifier2_forward.1} parent=1 // pred_fallthru
      _
    // Predicated region
    $region14: #{classifier2_forward.1} parent=1 // pred_check
      _
    $region15: #{classifier2_forward.1} parent=1 // pred_check_branch
      %21 = sbr.rel (0) target = $region17
    $region16: #{classifier2_forward.1} parent=1 // pred_region
      _
    $region17: #{classifier2_forward.1} parent=1 // pred_fallthru
      _
    // Predicated region
    $region18: #{classifier2_forward.1} parent=1 // pred_check
      _
    $region19: #{classifier2_forward.1} parent=1 // pred_check_branch
      %23 = sbr.rel (0) target = $region21
    $region20: #{classifier2_forward.1} parent=1 // pred_region
      _
    $region21: #{classifier2_forward.1} parent=1 // pred_fallthru
      _
    // Predicated region
    $region22: #{classifier2_forward.1} parent=1 // pred_check
      _
    $region23: #{classifier2_forward.1} parent=1 // pred_check_branch
      %25 = sbr.rel (0) target = $region25
    $region24: #{classifier2_forward.1} parent=1 // pred_region
      _
    $region25: #{classifier2_forward.1} parent=1 // pred_fallthru
      _
    // Predicated region
    $region26: #{classifier2_forward.1} parent=1 // pred_check
      _
    $region27: #{classifier2_forward.1} parent=1 // pred_check_branch
      %27 = sbr.rel (0) target = $region29
    $region28: #{classifier2_forward.1} parent=1 // pred_region
      _
    $region29: #{classifier2_forward.1} parent=1 // pred_fallthru
      _
    // Predicated region
    $region30: #{classifier2_forward.1} parent=1 // pred_check
      _
    $region31: #{classifier2_forward.1} parent=1 // pred_check_branch
      %29 = sbr.rel (0) target = $region33
    $region32: #{classifier2_forward.1} parent=1 // pred_region
      _
    $region33: #{classifier2_forward.1} parent=1 // pred_fallthru
      _
    %31 = vst [vmem:[#allocation2] sm:$0x3] 0
    %32 = vst [vmem:[#allocation2 + $0x2] sm:$0x3] 0
    %33 = vst [vmem:[#allocation2 + $0x4] sm:$0x3] 0
    %34 = vst [vmem:[#allocation2 + $0x6] sm:$0x3] 0
    %35 = vst [vmem:[#allocation2 + $0x8] sm:$0x3] 0
    %36 = vst [vmem:[#allocation2 + $0xa] sm:$0x3] 0
    %37 = vst [vmem:[#allocation2 + $0xc] sm:$0x3] 0
    %38 = vst [vmem:[#allocation2 + $0xe] sm:$0x3] 0
    %39 = vst [vmem:[#allocation2 + $0x10] sm:$0x3] 0
    %40 = vst [vmem:[#allocation2 + $0x12] sm:$0x3] 0
    %41 = vst [vmem:[#allocation2 + $0x14] sm:$0x3] 0
    %42 = vst [vmem:[#allocation2 + $0x16] sm:$0x3] 0
    %43 = vst [vmem:[#allocation2 + $0x18] sm:$0x3] 0
    %44 = vst [vmem:[#allocation2 + $0x1a] sm:$0x3] 0
    %45 = vst [vmem:[#allocation2 + $0x1c] sm:$0x3] 0
    %46 = vst [vmem:[#allocation2 + $0x1e] sm:$0x3] 0
    %47 = vst [vmem:[#allocation2 + $0x20] sm:$0x3] 0
    %48 = vst [vmem:[#allocation2 + $0x22] sm:$0x3] 0
    %49 = vst [vmem:[#allocation2 + $0x24] sm:$0x3] 0
    %50 = vst [vmem:[#allocation2 + $0x26] sm:$0x3] 0
    %51 = vst [vmem:[#allocation2 + $0x28] sm:$0x3] 0
    %52 = vst [vmem:[#allocation2 + $0x2a] sm:$0x3] 0
    %53 = vst [vmem:[#allocation2 + $0x2c] sm:$0x3] 0
    %54 = vst [vmem:[#allocation2 + $0x2e] sm:$0x3] 0
    %55 = vst [vmem:[#allocation2 + $0x30] sm:$0x3] 0
    %56 = vst [vmem:[#allocation2 + $0x32] sm:$0x3] 0
    %57 = vst [vmem:[#allocation2 + $0x34] sm:$0x3] 0
    %58 = vst [vmem:[#allocation2 + $0x36] sm:$0x3] 0
    %59 = vst [vmem:[#allocation2 + $0x38] sm:$0x3] 0
    %60 = vst [vmem:[#allocation2 + $0x3a] sm:$0x3] 0
    %61 = vst [vmem:[#allocation2 + $0x3c] sm:$0x3] 0
    %62 = vst [vmem:[#allocation2 + $0x3e] sm:$0x3] 0
    %63 = vst [vmem:[#allocation2 + $0x40] sm:$0x3] 0
    %64 = vst [vmem:[#allocation2 + $0x42] sm:$0x3] 0
    %65 = vst [vmem:[#allocation2 + $0x44] sm:$0x3] 0
    %66 = vst [vmem:[#allocation2 + $0x46] sm:$0x3] 0
    %67 = vst [vmem:[#allocation2 + $0x48] sm:$0x3] 0
    %68 = vst [vmem:[#allocation2 + $0x4a] sm:$0x3] 0
    %69 = vst [vmem:[#allocation2 + $0x4c] sm:$0x3] 0
    %70 = vst [vmem:[#allocation2 + $0x4e] sm:$0x3] 0
    %71 = vst [vmem:[#allocation2 + $0x50] sm:$0x3] 0
    %72 = vst [vmem:[#allocation2 + $0x52] sm:$0x3] 0
    %73 = vst [vmem:[#allocation2 + $0x54] sm:$0x3] 0
    %74 = vst [vmem:[#allocation2 + $0x56] sm:$0x3] 0
    %75 = vst [vmem:[#allocation2 + $0x58] sm:$0x3] 0
    %76 = vst [vmem:[#allocation2 + $0x5a] sm:$0x3] 0
    %77 = vst [vmem:[#allocation2 + $0x5c] sm:$0x3] 0
    %78 = vst [vmem:[#allocation2 + $0x5e] sm:$0x3] 0
    %79 = vst [vmem:[#allocation2 + $0x60] sm:$0x3] 0
    %80 = vst [vmem:[#allocation2 + $0x62] sm:$0x3] 0
    %81 = vst [vmem:[#allocation2 + $0x64] sm:$0x3] 0
    %82 = vst [vmem:[#allocation2 + $0x66] sm:$0x3] 0
    %83 = vst [vmem:[#allocation2 + $0x68] sm:$0x3] 0
    %84 = vst [vmem:[#allocation2 + $0x6a] sm:$0x3] 0
    %85 = vst [vmem:[#allocation2 + $0x6c] sm:$0x3] 0
    %86 = vst [vmem:[#allocation2 + $0x6e] sm:$0x3] 0
    %87 = vst [vmem:[#allocation2 + $0x70] sm:$0x3] 0
    %88 = vst [vmem:[#allocation2 + $0x72] sm:$0x3] 0
    %89 = vst [vmem:[#allocation2 + $0x74] sm:$0x3] 0
    %90 = vst [vmem:[#allocation2 + $0x76] sm:$0x3] 0
    %91 = vst [vmem:[#allocation2 + $0x78] sm:$0x3] 0
    %92 = vst [vmem:[#allocation2 + $0x7a] sm:$0x3] 0
    %93 = vst [vmem:[#allocation2 + $0x7c] sm:$0x3] 0
    %94 = vst [vmem:[#allocation2 + $0x7e] sm:$0x3] 0
    %95 = vst [vmem:[#allocation2 + $0x80] sm:$0x3] 0
    %96 = vst [vmem:[#allocation2 + $0x82] sm:$0x3] 0
    %97 = vst [vmem:[#allocation2 + $0x84] sm:$0x3] 0
    %98 = vst [vmem:[#allocation2 + $0x86] sm:$0x3] 0
    %99 = vst [vmem:[#allocation2 + $0x88] sm:$0x3] 0
    %100 = vst [vmem:[#allocation2 + $0x8a] sm:$0x3] 0
    %101 = vst [vmem:[#allocation2 + $0x8c] sm:$0x3] 0
    %102 = vst [vmem:[#allocation2 + $0x8e] sm:$0x3] 0
    %103 = vst [vmem:[#allocation2 + $0x90] sm:$0x3] 0
    %104 = vst [vmem:[#allocation2 + $0x92] sm:$0x3] 0
    %105 = vst [vmem:[#allocation2 + $0x94] sm:$0x3] 0
    %106 = vst [vmem:[#allocation2 + $0x96] sm:$0x3] 0
    %107 = vst [vmem:[#allocation2 + $0x98] sm:$0x3] 0
    %108 = vst [vmem:[#allocation2 + $0x9a] sm:$0x3] 0
    %109 = vst [vmem:[#allocation2 + $0x9c] sm:$0x3] 0
    %110 = vst [vmem:[#allocation2 + $0x9e] sm:$0x3] 0
    %111 = vst [vmem:[#allocation2 + $0xa0] sm:$0x3] 0
    %112 = vst [vmem:[#allocation2 + $0xa2] sm:$0x3] 0
    %113 = vst [vmem:[#allocation2 + $0xa4] sm:$0x3] 0
    %114 = vst [vmem:[#allocation2 + $0xa6] sm:$0x3] 0
    %115 = vst [vmem:[#allocation2 + $0xa8] sm:$0x3] 0
    %116 = vst [vmem:[#allocation2 + $0xaa] sm:$0x3] 0
    %117 = vst [vmem:[#allocation2 + $0xac] sm:$0x3] 0
    %118 = vst [vmem:[#allocation2 + $0xae] sm:$0x3] 0
    %119 = vst [vmem:[#allocation2 + $0xb0] sm:$0x3] 0
    %120 = vst [vmem:[#allocation2 + $0xb2] sm:$0x3] 0
    %121 = vst [vmem:[#allocation2 + $0xb4] sm:$0x3] 0
    %122 = vst [vmem:[#allocation2 + $0xb6] sm:$0x3] 0
    %123 = vst [vmem:[#allocation2 + $0xb8] sm:$0x3] 0
    %124 = vst [vmem:[#allocation2 + $0xba] sm:$0x3] 0
    %125 = vst [vmem:[#allocation2 + $0xbc] sm:$0x3] 0
    %126 = vst [vmem:[#allocation2 + $0xbe] sm:$0x3] 0
    %127 = vst [vmem:[#allocation2 + $0xc0] sm:$0x3] 0
    %128 = vst [vmem:[#allocation2 + $0xc2] sm:$0x3] 0
    %129 = vst [vmem:[#allocation2 + $0xc4] sm:$0x3] 0
    %130 = vst [vmem:[#allocation2 + $0xc6] sm:$0x3] 0
    %s131 = scalar_lea.vmem %s0, 375
    %v132 = vld [vmem:[%s131] sm:$0x1]
    %v133 = vld [vmem:[%s131 + $0x1] sm:$0x1]
    %v134 = vld [vmem:[%s131 + $0x2] sm:$0x1]
    %v135 = vld [vmem:[%s131 + $0x3] sm:$0x1]
    %v136 = vld [vmem:[%s131 + $0x5] sm:$0x1]
    %v137 = vld [vmem:[%s131 + $0x6] sm:$0x1]
    %v138 = vld [vmem:[%s131 + $0x7] sm:$0x1]
    %v139 = vld [vmem:[%s131 + $0x8] sm:$0x1]
    %v140 = vld [vmem:[%s131 + $0xa] sm:$0x1]
    %v141 = vld [vmem:[%s131 + $0xb] sm:$0x1]
    %v142 = vld [vmem:[%s131 + $0xc] sm:$0x1]
    %v143 = vld [vmem:[%s131 + $0xd] sm:$0x1]
    %v144 = vld [vmem:[%s131 + $0xf] sm:$0x1]
    %v145 = vld [vmem:[%s131 + $0x10] sm:$0x1]
    %v146 = vld [vmem:[%s131 + $0x11] sm:$0x1]
    %v147 = vld [vmem:[%s131 + $0x12] sm:$0x1]
    %v148 = vld [vmem:[%s2] sm:$0xff]
    %v149 = vld [vmem:[%s2 + $0x8] sm:$0xff]
    %v150 = vld [vmem:[%s2 + $0x10] sm:$0xff]
    %v151 = vld [vmem:[%s2 + $0x18] sm:$0xff]
    %v152 = vld [vmem:[%s2 + $0x20] sm:$0xff]
    %v153 = vld [vmem:[%s2 + $0x28] sm:$0xff]
    %v154 = vld [vmem:[%s2 + $0x30] sm:$0xff]
    %v155 = vld [vmem:[%s2 + $0x38] sm:$0xff]
    %v156 = vld [vmem:[%s2 + $0x40] sm:$0xff]
    %v157 = vld [vmem:[%s2 + $0x48] sm:$0xff]
    %v158 = vld [vmem:[%s2 + $0x50] sm:$0xff]
    %v159 = vld [vmem:[%s2 + $0x58] sm:$0xff]
    %v160 = vld [vmem:[%s2 + $0x60] sm:$0xff]
    %v161 = vld [vmem:[%s2 + $0x68] sm:$0xff]
    %v162 = vld [vmem:[%s2 + $0x70] sm:$0xff]
    %v163 = vld [vmem:[%s2 + $0x78] sm:$0xff]
    %s164 = scalar_lea.vmem %s0, 301
    %v165 = vld [vmem:[%s164] sm:$0x1]
    %v166 = vld [vmem:[%s164 + $0x1] sm:$0x1]
    %v167 = vld [vmem:[%s164 + $0x2] sm:$0x1]
    %v168 = vld [vmem:[%s164 + $0x3] sm:$0x1]
    %v169 = vld [vmem:[%s164 + $0x5] sm:$0x1]
    %v170 = vld [vmem:[%s164 + $0x6] sm:$0x1]
    %v171 = vld [vmem:[%s164 + $0x7] sm:$0x1]
    %v172 = vld [vmem:[%s164 + $0x8] sm:$0x1]
    %v173 = vld [vmem:[%s164 + $0xa] sm:$0x1]
    %v174 = vld [vmem:[%s164 + $0xb] sm:$0x1]
    %v175 = vld [vmem:[%s164 + $0xc] sm:$0x1]
    %v176 = vld [vmem:[%s164 + $0xd] sm:$0x1]
    %v177 = vld [vmem:[%s164 + $0xf] sm:$0x1]
    %v178 = vld [vmem:[%s164 + $0x10] sm:$0x1]
    %v179 = vld [vmem:[%s164 + $0x11] sm:$0x1]
    %v180 = vld [vmem:[%s164 + $0x12] sm:$0x1]
    %s181 = scalar_lea.vmem %s2, 128
    %v182 = vld [vmem:[%s181] sm:$0xff]
    %v183 = vld [vmem:[%s181 + $0x8] sm:$0xff]
    %v184 = vld [vmem:[%s181 + $0x10] sm:$0xff]
    %v185 = vld [vmem:[%s181 + $0x18] sm:$0xff]
    %v186 = vld [vmem:[%s181 + $0x20] sm:$0xff]
    %v187 = vld [vmem:[%s181 + $0x28] sm:$0xff]
    %v188 = vld [vmem:[%s181 + $0x30] sm:$0xff]
    %v189 = vld [vmem:[%s181 + $0x38] sm:$0xff]
    %v190 = vld [vmem:[%s181 + $0x40] sm:$0xff]
    %v191 = vld [vmem:[%s181 + $0x48] sm:$0xff]
    %v192 = vld [vmem:[%s181 + $0x50] sm:$0xff]
    %v193 = vld [vmem:[%s181 + $0x58] sm:$0xff]
    %v194 = vld [vmem:[%s181 + $0x60] sm:$0xff]
    %v195 = vld [vmem:[%s181 + $0x68] sm:$0xff]
    %v196 = vld [vmem:[%s181 + $0x70] sm:$0xff]
    %v197 = vld [vmem:[%s181 + $0x78] sm:$0xff]
    %199 = vst [vmem:[#allocation1] ss:$9 sm:$0xff] %v165
    %s201 = scalar_lea.vmem [#allocation1], 1
    %202 = vst [vmem:[%s201] ss:$9 sm:$0xff] %v166
    %s204 = scalar_lea.vmem [#allocation1], 2
    %205 = vst [vmem:[%s204] ss:$9 sm:$0xff] %v167
    %s207 = scalar_lea.vmem [#allocation1], 3
    %208 = vst [vmem:[%s207] ss:$9 sm:$0xff] %v168
    %s210 = scalar_lea.vmem [#allocation1], 4
    %211 = vst [vmem:[%s210] ss:$9 sm:$0xff] %v169
    %s213 = scalar_lea.vmem [#allocation1], 5
    %214 = vst [vmem:[%s213] ss:$9 sm:$0xff] %v170
    %s216 = scalar_lea.vmem [#allocation1], 6
    %217 = vst [vmem:[%s216] ss:$9 sm:$0xff] %v171
    %s219 = scalar_lea.vmem [#allocation1], 7
    %220 = vst [vmem:[%s219] ss:$9 sm:$0xff] %v172
    %v221 = vld [vmem:[#allocation1] sm:$0xff]
    %223 = vst [vmem:[#allocation1] ss:$9 sm:$0xff] %v173
    %225 = vst [vmem:[%s201] ss:$9 sm:$0xff] %v174
    %227 = vst [vmem:[%s204] ss:$9 sm:$0xff] %v175
    %229 = vst [vmem:[%s207] ss:$9 sm:$0xff] %v176
    %231 = vst [vmem:[%s210] ss:$9 sm:$0xff] %v177
    %233 = vst [vmem:[%s213] ss:$9 sm:$0xff] %v178
    %235 = vst [vmem:[%s216] ss:$9 sm:$0xff] %v179
    %237 = vst [vmem:[%s219] ss:$9 sm:$0xff] %v180
    %v238 = vld [vmem:[#allocation1] sm:$0xff]
    %v257 = vunpack.c.l.b16 %v182
    %v258 = vunpack.c.h.b16 %v182
    %v259 = vunpack.c.l.b16 %v183
    %v260 = vunpack.c.h.b16 %v183
    %v261 = vunpack.c.l.b16 %v184
    %v262 = vunpack.c.h.b16 %v184
    %v263 = vunpack.c.l.b16 %v185
    %v264 = vunpack.c.h.b16 %v185
    %v265 = vunpack.c.l.b16 %v186
    %v266 = vunpack.c.h.b16 %v186
    %v267 = vunpack.c.l.b16 %v187
    %v268 = vunpack.c.h.b16 %v187
    %v269 = vunpack.c.l.b16 %v188
    %v270 = vunpack.c.h.b16 %v188
    %v271 = vunpack.c.l.b16 %v189
    %v272 = vunpack.c.h.b16 %v189
    %v273 = vunpack.c.l.b16 %v190
    %v274 = vunpack.c.h.b16 %v190
    %v275 = vunpack.c.l.b16 %v191
    %v276 = vunpack.c.h.b16 %v191
    %v277 = vunpack.c.l.b16 %v192
    %v278 = vunpack.c.h.b16 %v192
    %v279 = vunpack.c.l.b16 %v193
    %v280 = vunpack.c.h.b16 %v193
    %v281 = vunpack.c.l.b16 %v194
    %v282 = vunpack.c.h.b16 %v194
    %v283 = vunpack.c.l.b16 %v195
    %v284 = vunpack.c.h.b16 %v195
    %v285 = vunpack.c.l.b16 %v196
    %v286 = vunpack.c.h.b16 %v196
    %v287 = vunpack.c.l.b16 %v197
    %v288 = vunpack.c.h.b16 %v197
    %v289 = vpack.c.b16 %v259, %v257
    %v290 = vpack.c.b16 %v260, %v258
    %v291 = vpack.c.b16 %v263, %v261
    %v292 = vpack.c.b16 %v264, %v262
    %v293 = vpack.c.b16 %v267, %v265
    %v294 = vpack.c.b16 %v268, %v266
    %v295 = vpack.c.b16 %v271, %v269
    %v296 = vpack.c.b16 %v272, %v270
    %v297 = vpack.c.b16 %v275, %v273
    %v298 = vpack.c.b16 %v276, %v274
    %v299 = vpack.c.b16 %v279, %v277
    %v300 = vpack.c.b16 %v280, %v278
    %v301 = vpack.c.b16 %v283, %v281
    %v302 = vpack.c.b16 %v284, %v282
    %v303 = vpack.c.b16 %v287, %v285
    %v304 = vpack.c.b16 %v288, %v286
    %321 = vmatpush.bf16.msra.mxu0 %v303
    %322 = vmatpush.bf16.msra.mxu0 %v301
    %323 = vmatpush.bf16.msra.mxu0 %v299
    %324 = vmatpush.bf16.msra.mxu0 %v297
    %325 = vmatpush.bf16.msra.mxu0 %v295
    %326 = vmatpush.bf16.msra.mxu0 %v293
    %327 = vmatpush.bf16.msra.mxu0 %v291
    %328 = vmatpush.bf16.msra.mxu0 %v289
    %329 = vmatmul.bf16.gmra.mxu0 %v221
    %v330 = vpop.f32.mrf.mxu0
    %v331 = vadd.f32 0.0, %v330
    %v332 = vpop.f32.mrf.mxu0
    %v333 = vadd.f32 0.0, %v332
    %334 = vmatmul.bf16.gmra.mxu0 %v238
    %v335 = vpop.f32.mrf.mxu0
    %v336 = vadd.f32 0.0, %v335
    %v337 = vpop.f32.mrf.mxu0
    %v338 = vadd.f32 0.0, %v337
    %339 = vdwg.mxu0
    %340 = vmatpush.bf16.msra.mxu0 %v304
    %341 = vmatpush.bf16.msra.mxu0 %v302
    %342 = vmatpush.bf16.msra.mxu0 %v300
    %343 = vmatpush.bf16.msra.mxu0 %v298
    %344 = vmatpush.bf16.msra.mxu0 %v296
    %345 = vmatpush.bf16.msra.mxu0 %v294
    %346 = vmatpush.bf16.msra.mxu0 %v292
    %347 = vmatpush.bf16.msra.mxu0 %v290
    %348 = vmatmul.bf16.gmra.mxu0 %v221
    %v349 = vpop.f32.mrf.mxu0
    %v350 = vadd.f32 0.0, %v349
    %v351 = vpop.f32.mrf.mxu0
    %v352 = vadd.f32 0.0, %v351
    %353 = vmatmul.bf16.gmra.mxu0 %v238
    %v354 = vpop.f32.mrf.mxu0
    %v355 = vadd.f32 0.0, %v354
    %v356 = vpop.f32.mrf.mxu0
    %v357 = vadd.f32 0.0, %v356
    %358 = vdwg.mxu0
    %360 = vst [vmem:[#allocation1] ss:$9 sm:$0xff] %v132
    %s362 = scalar_lea.vmem [#allocation1], 1
    %363 = vst [vmem:[%s362] ss:$9 sm:$0xff] %v133
    %s365 = scalar_lea.vmem [#allocation1], 2
    %366 = vst [vmem:[%s365] ss:$9 sm:$0xff] %v134
    %s368 = scalar_lea.vmem [#allocation1], 3
    %369 = vst [vmem:[%s368] ss:$9 sm:$0xff] %v135
    %s371 = scalar_lea.vmem [#allocation1], 4
    %372 = vst [vmem:[%s371] ss:$9 sm:$0xff] %v136
    %s374 = scalar_lea.vmem [#allocation1], 5
    %375 = vst [vmem:[%s374] ss:$9 sm:$0xff] %v137
    %s377 = scalar_lea.vmem [#allocation1], 6
    %378 = vst [vmem:[%s377] ss:$9 sm:$0xff] %v138
    %s380 = scalar_lea.vmem [#allocation1], 7
    %381 = vst [vmem:[%s380] ss:$9 sm:$0xff] %v139
    %v382 = vld [vmem:[#allocation1] sm:$0xff]
    %384 = vst [vmem:[#allocation1] ss:$9 sm:$0xff] %v140
    %386 = vst [vmem:[%s362] ss:$9 sm:$0xff] %v141
    %388 = vst [vmem:[%s365] ss:$9 sm:$0xff] %v142
    %390 = vst [vmem:[%s368] ss:$9 sm:$0xff] %v143
    %392 = vst [vmem:[%s371] ss:$9 sm:$0xff] %v144
    %394 = vst [vmem:[%s374] ss:$9 sm:$0xff] %v145
    %396 = vst [vmem:[%s377] ss:$9 sm:$0xff] %v146
    %398 = vst [vmem:[%s380] ss:$9 sm:$0xff] %v147
    %v399 = vld [vmem:[#allocation1] sm:$0xff]
    %v418 = vunpack.c.l.b16 %v148
    %v419 = vunpack.c.h.b16 %v148
    %v420 = vunpack.c.l.b16 %v149
    %v421 = vunpack.c.h.b16 %v149
    %v422 = vunpack.c.l.b16 %v150
    %v423 = vunpack.c.h.b16 %v150
    %v424 = vunpack.c.l.b16 %v151
    %v425 = vunpack.c.h.b16 %v151
    %v426 = vunpack.c.l.b16 %v152
    %v427 = vunpack.c.h.b16 %v152
    %v428 = vunpack.c.l.b16 %v153
    %v429 = vunpack.c.h.b16 %v153
    %v430 = vunpack.c.l.b16 %v154
    %v431 = vunpack.c.h.b16 %v154
    %v432 = vunpack.c.l.b16 %v155
    %v433 = vunpack.c.h.b16 %v155
    %v434 = vunpack.c.l.b16 %v156
    %v435 = vunpack.c.h.b16 %v156
    %v436 = vunpack.c.l.b16 %v157
    %v437 = vunpack.c.h.b16 %v157
    %v438 = vunpack.c.l.b16 %v158
    %v439 = vunpack.c.h.b16 %v158
    %v440 = vunpack.c.l.b16 %v159
    %v441 = vunpack.c.h.b16 %v159
    %v442 = vunpack.c.l.b16 %v160
    %v443 = vunpack.c.h.b16 %v160
    %v444 = vunpack.c.l.b16 %v161
    %v445 = vunpack.c.h.b16 %v161
    %v446 = vunpack.c.l.b16 %v162
    %v447 = vunpack.c.h.b16 %v162
    %v448 = vunpack.c.l.b16 %v163
    %v449 = vunpack.c.h.b16 %v163
    %v450 = vpack.c.b16 %v420, %v418
    %v451 = vpack.c.b16 %v421, %v419
    %v452 = vpack.c.b16 %v424, %v422
    %v453 = vpack.c.b16 %v425, %v423
    %v454 = vpack.c.b16 %v428, %v426
    %v455 = vpack.c.b16 %v429, %v427
    %v456 = vpack.c.b16 %v432, %v430
    %v457 = vpack.c.b16 %v433, %v431
    %v458 = vpack.c.b16 %v436, %v434
    %v459 = vpack.c.b16 %v437, %v435
    %v460 = vpack.c.b16 %v440, %v438
    %v461 = vpack.c.b16 %v441, %v439
    %v462 = vpack.c.b16 %v444, %v442
    %v463 = vpack.c.b16 %v445, %v443
    %v464 = vpack.c.b16 %v448, %v446
    %v465 = vpack.c.b16 %v449, %v447
    %482 = vmatpush.bf16.msra.mxu0 %v464
    %483 = vmatpush.bf16.msra.mxu0 %v462
    %484 = vmatpush.bf16.msra.mxu0 %v460
    %485 = vmatpush.bf16.msra.mxu0 %v458
    %486 = vmatpush.bf16.msra.mxu0 %v456
    %487 = vmatpush.bf16.msra.mxu0 %v454
    %488 = vmatpush.bf16.msra.mxu0 %v452
    %489 = vmatpush.bf16.msra.mxu0 %v450
    %490 = vmatmul.bf16.gmra.mxu0 %v382
    %v491 = vpop.f32.mrf.mxu0
    %v492 = vadd.f32 %v331, %v491
    %v493 = vpop.f32.mrf.mxu0
    %v494 = vadd.f32 %v333, %v493
    %495 = vmatmul.bf16.gmra.mxu0 %v399
    %v496 = vpop.f32.mrf.mxu0
    %v497 = vadd.f32 %v336, %v496
    %v498 = vpop.f32.mrf.mxu0
    %v499 = vadd.f32 %v338, %v498
    %500 = vdwg.mxu0
    %501 = vmatpush.bf16.msra.mxu0 %v465
    %502 = vmatpush.bf16.msra.mxu0 %v463
    %503 = vmatpush.bf16.msra.mxu0 %v461
    %504 = vmatpush.bf16.msra.mxu0 %v459
    %505 = vmatpush.bf16.msra.mxu0 %v457
    %506 = vmatpush.bf16.msra.mxu0 %v455
    %507 = vmatpush.bf16.msra.mxu0 %v453
    %508 = vmatpush.bf16.msra.mxu0 %v451
    %509 = vmatmul.bf16.gmra.mxu0 %v382
    %v510 = vpop.f32.mrf.mxu0
    %v511 = vadd.f32 %v350, %v510
    %v512 = vpop.f32.mrf.mxu0
    %v513 = vadd.f32 %v352, %v512
    %514 = vmatmul.bf16.gmra.mxu0 %v399
    %v515 = vpop.f32.mrf.mxu0
    %v516 = vadd.f32 %v355, %v515
    %v517 = vpop.f32.mrf.mxu0
    %v518 = vadd.f32 %v357, %v517
    %519 = vdwg.mxu0
    %s520 = scalar_lea.vmem %s0, 326
    %v521 = vld [vmem:[%s520] sm:$0x1]
    %v522 = vld [vmem:[%s520 + $0x1] sm:$0x1]
    %v523 = vld [vmem:[%s520 + $0x2] sm:$0x1]
    %v524 = vld [vmem:[%s520 + $0x3] sm:$0x1]
    %v525 = vld [vmem:[%s520 + $0x5] sm:$0x1]
    %v526 = vld [vmem:[%s520 + $0x6] sm:$0x1]
    %v527 = vld [vmem:[%s520 + $0x7] sm:$0x1]
    %v528 = vld [vmem:[%s520 + $0x8] sm:$0x1]
    %v529 = vld [vmem:[%s520 + $0xa] sm:$0x1]
    %v530 = vld [vmem:[%s520 + $0xb] sm:$0x1]
    %v531 = vld [vmem:[%s520 + $0xc] sm:$0x1]
    %v532 = vld [vmem:[%s520 + $0xd] sm:$0x1]
    %v533 = vld [vmem:[%s520 + $0xf] sm:$0x1]
    %v534 = vld [vmem:[%s520 + $0x10] sm:$0x1]
    %v535 = vld [vmem:[%s520 + $0x11] sm:$0x1]
    %v536 = vld [vmem:[%s520 + $0x12] sm:$0x1]
    %s537 = scalar_lea.vmem %s2, 256
    %v538 = vld [vmem:[%s537] sm:$0xff]
    %v539 = vld [vmem:[%s537 + $0x8] sm:$0xff]
    %v540 = vld [vmem:[%s537 + $0x10] sm:$0xff]
    %v541 = vld [vmem:[%s537 + $0x18] sm:$0xff]
    %v542 = vld [vmem:[%s537 + $0x20] sm:$0xff]
    %v543 = vld [vmem:[%s537 + $0x28] sm:$0xff]
    %v544 = vld [vmem:[%s537 + $0x30] sm:$0xff]
    %v545 = vld [vmem:[%s537 + $0x38] sm:$0xff]
    %v546 = vld [vmem:[%s537 + $0x40] sm:$0xff]
    %v547 = vld [vmem:[%s537 + $0x48] sm:$0xff]
    %v548 = vld [vmem:[%s537 + $0x50] sm:$0xff]
    %v549 = vld [vmem:[%s537 + $0x58] sm:$0xff]
    %v550 = vld [vmem:[%s537 + $0x60] sm:$0xff]
    %v551 = vld [vmem:[%s537 + $0x68] sm:$0xff]
    %v552 = vld [vmem:[%s537 + $0x70] sm:$0xff]
    %v553 = vld [vmem:[%s537 + $0x78] sm:$0xff]
    %555 = vst [vmem:[#allocation1] ss:$9 sm:$0xff] %v521
    %s557 = scalar_lea.vmem [#allocation1], 1
    %558 = vst [vmem:[%s557] ss:$9 sm:$0xff] %v522
    %s560 = scalar_lea.vmem [#allocation1], 2
    %561 = vst [vmem:[%s560] ss:$9 sm:$0xff] %v523
    %s563 = scalar_lea.vmem [#allocation1], 3
    %564 = vst [vmem:[%s563] ss:$9 sm:$0xff] %v524
    %s566 = scalar_lea.vmem [#allocation1], 4
    %567 = vst [vmem:[%s566] ss:$9 sm:$0xff] %v525
    %s569 = scalar_lea.vmem [#allocation1], 5
    %570 = vst [vmem:[%s569] ss:$9 sm:$0xff] %v526
    %s572 = scalar_lea.vmem [#allocation1], 6
    %573 = vst [vmem:[%s572] ss:$9 sm:$0xff] %v527
    %s575 = scalar_lea.vmem [#allocation1], 7
    %576 = vst [vmem:[%s575] ss:$9 sm:$0xff] %v528
    %v577 = vld [vmem:[#allocation1] sm:$0xff]
    %579 = vst [vmem:[#allocation1] ss:$9 sm:$0xff] %v529
    %581 = vst [vmem:[%s557] ss:$9 sm:$0xff] %v530
    %583 = vst [vmem:[%s560] ss:$9 sm:$0xff] %v531
    %585 = vst [vmem:[%s563] ss:$9 sm:$0xff] %v532
    %587 = vst [vmem:[%s566] ss:$9 sm:$0xff] %v533
    %589 = vst [vmem:[%s569] ss:$9 sm:$0xff] %v534
    %591 = vst [vmem:[%s572] ss:$9 sm:$0xff] %v535
    %593 = vst [vmem:[%s575] ss:$9 sm:$0xff] %v536
    %v594 = vld [vmem:[#allocation1] sm:$0xff]
    %v613 = vunpack.c.l.b16 %v538
    %v614 = vunpack.c.h.b16 %v538
    %v615 = vunpack.c.l.b16 %v539
    %v616 = vunpack.c.h.b16 %v539
    %v617 = vunpack.c.l.b16 %v540
    %v618 = vunpack.c.h.b16 %v540
    %v619 = vunpack.c.l.b16 %v541
    %v620 = vunpack.c.h.b16 %v541
    %v621 = vunpack.c.l.b16 %v542
    %v622 = vunpack.c.h.b16 %v542
    %v623 = vunpack.c.l.b16 %v543
    %v624 = vunpack.c.h.b16 %v543
    %v625 = vunpack.c.l.b16 %v544
    %v626 = vunpack.c.h.b16 %v544
    %v627 = vunpack.c.l.b16 %v545
    %v628 = vunpack.c.h.b16 %v545
    %v629 = vunpack.c.l.b16 %v546
    %v630 = vunpack.c.h.b16 %v546
    %v631 = vunpack.c.l.b16 %v547
    %v632 = vunpack.c.h.b16 %v547
    %v633 = vunpack.c.l.b16 %v548
    %v634 = vunpack.c.h.b16 %v548
    %v635 = vunpack.c.l.b16 %v549
    %v636 = vunpack.c.h.b16 %v549
    %v637 = vunpack.c.l.b16 %v550
    %v638 = vunpack.c.h.b16 %v550
    %v639 = vunpack.c.l.b16 %v551
    %v640 = vunpack.c.h.b16 %v551
    %v641 = vunpack.c.l.b16 %v552
    %v642 = vunpack.c.h.b16 %v552
    %v643 = vunpack.c.l.b16 %v553
    %v644 = vunpack.c.h.b16 %v553
    %v645 = vpack.c.b16 %v615, %v613
    %v646 = vpack.c.b16 %v616, %v614
    %v647 = vpack.c.b16 %v619, %v617
    %v648 = vpack.c.b16 %v620, %v618
    %v649 = vpack.c.b16 %v623, %v621
    %v650 = vpack.c.b16 %v624, %v622
    %v651 = vpack.c.b16 %v627, %v625
    %v652 = vpack.c.b16 %v628, %v626
    %v653 = vpack.c.b16 %v631, %v629
    %v654 = vpack.c.b16 %v632, %v630
    %v655 = vpack.c.b16 %v635, %v633
    %v656 = vpack.c.b16 %v636, %v634
    %v657 = vpack.c.b16 %v639, %v637
    %v658 = vpack.c.b16 %v640, %v638
    %v659 = vpack.c.b16 %v643, %v641
    %v660 = vpack.c.b16 %v644, %v642
    %677 = vmatpush.bf16.msra.mxu0 %v659
    %678 = vmatpush.bf16.msra.mxu0 %v657
    %679 = vmatpush.bf16.msra.mxu0 %v655
    %680 = vmatpush.bf16.msra.mxu0 %v653
    %681 = vmatpush.bf16.msra.mxu0 %v651
    %682 = vmatpush.bf16.msra.mxu0 %v649
    %683 = vmatpush.bf16.msra.mxu0 %v647
    %684 = vmatpush.bf16.msra.mxu0 %v645
    %685 = vmatmul.bf16.gmra.mxu0 %v577
    %v686 = vpop.f32.mrf.mxu0
    %v687 = vadd.f32 0.0, %v686
    %v688 = vpop.f32.mrf.mxu0
    %v689 = vadd.f32 0.0, %v688
    %690 = vmatmul.bf16.gmra.mxu0 %v594
    %v691 = vpop.f32.mrf.mxu0
    %v692 = vadd.f32 0.0, %v691
    %v693 = vpop.f32.mrf.mxu0
    %v694 = vadd.f32 0.0, %v693
    %695 = vdwg.mxu0
    %696 = vmatpush.bf16.msra.mxu0 %v660
    %697 = vmatpush.bf16.msra.mxu0 %v658
    %698 = vmatpush.bf16.msra.mxu0 %v656
    %699 = vmatpush.bf16.msra.mxu0 %v654
    %700 = vmatpush.bf16.msra.mxu0 %v652
    %701 = vmatpush.bf16.msra.mxu0 %v650
    %702 = vmatpush.bf16.msra.mxu0 %v648
    %703 = vmatpush.bf16.msra.mxu0 %v646
    %704 = vmatmul.bf16.gmra.mxu0 %v577
    %v705 = vpop.f32.mrf.mxu0
    %v706 = vadd.f32 0.0, %v705
    %v707 = vpop.f32.mrf.mxu0
    %v708 = vadd.f32 0.0, %v707
    %709 = vmatmul.bf16.gmra.mxu0 %v594
    %v710 = vpop.f32.mrf.mxu0
    %v711 = vadd.f32 0.0, %v710
    %v712 = vpop.f32.mrf.mxu0
    %v713 = vadd.f32 0.0, %v712
    %714 = vdwg.mxu0
    %v715 = vadd.f32 %v492, %v687
    %v716 = vadd.f32 %v511, %v706
    %v717 = vadd.f32 %v494, %v689
    %v718 = vadd.f32 %v513, %v708
    %v719 = vadd.f32 %v497, %v692
    %v720 = vadd.f32 %v516, %v711
    %v721 = vadd.f32 %v499, %v694
    %v722 = vadd.f32 %v518, %v713
    %s723 = scalar_lea.vmem %s0, 80
    %v724 = vld [vmem:[%s723] sm:$0x1]
    %v725 = vld [vmem:[%s723 + $0x1] sm:$0x1]
    %v726 = vld [vmem:[%s723 + $0x2] sm:$0x1]
    %v727 = vld [vmem:[%s723 + $0x3] sm:$0x1]
    %v728 = vld [vmem:[%s723 + $0x5] sm:$0x1]
    %v729 = vld [vmem:[%s723 + $0x6] sm:$0x1]
    %v730 = vld [vmem:[%s723 + $0x7] sm:$0x1]
    %v731 = vld [vmem:[%s723 + $0x8] sm:$0x1]
    %v732 = vld [vmem:[%s723 + $0xa] sm:$0x1]
    %v733 = vld [vmem:[%s723 + $0xb] sm:$0x1]
    %v734 = vld [vmem:[%s723 + $0xc] sm:$0x1]
    %v735 = vld [vmem:[%s723 + $0xd] sm:$0x1]
    %v736 = vld [vmem:[%s723 + $0xf] sm:$0x1]
    %v737 = vld [vmem:[%s723 + $0x10] sm:$0x1]
    %v738 = vld [vmem:[%s723 + $0x11] sm:$0x1]
    %v739 = vld [vmem:[%s723 + $0x12] sm:$0x1]
    %s740 = scalar_lea.vmem %s2, 384
    %v741 = vld [vmem:[%s740] sm:$0xff]
    %v742 = vld [vmem:[%s740 + $0x8] sm:$0xff]
    %v743 = vld [vmem:[%s740 + $0x10] sm:$0xff]
    %v744 = vld [vmem:[%s740 + $0x18] sm:$0xff]
    %v745 = vld [vmem:[%s740 + $0x20] sm:$0xff]
    %v746 = vld [vmem:[%s740 + $0x28] sm:$0xff]
    %v747 = vld [vmem:[%s740 + $0x30] sm:$0xff]
    %v748 = vld [vmem:[%s740 + $0x38] sm:$0xff]
    %v749 = vld [vmem:[%s740 + $0x40] sm:$0xff]
    %v750 = vld [vmem:[%s740 + $0x48] sm:$0xff]
    %v751 = vld [vmem:[%s740 + $0x50] sm:$0xff]
    %v752 = vld [vmem:[%s740 + $0x58] sm:$0xff]
    %v753 = vld [vmem:[%s740 + $0x60] sm:$0xff]
    %v754 = vld [vmem:[%s740 + $0x68] sm:$0xff]
    %v755 = vld [vmem:[%s740 + $0x70] sm:$0xff]
    %v756 = vld [vmem:[%s740 + $0x78] sm:$0xff]
    %758 = vst [vmem:[#allocation1] ss:$9 sm:$0xff] %v724
    %s760 = scalar_lea.vmem [#allocation1], 1
    %761 = vst [vmem:[%s760] ss:$9 sm:$0xff] %v725
    %s763 = scalar_lea.vmem [#allocation1], 2
    %764 = vst [vmem:[%s763] ss:$9 sm:$0xff] %v726
    %s766 = scalar_lea.vmem [#allocation1], 3
    %767 = vst [vmem:[%s766] ss:$9 sm:$0xff] %v727
    %s769 = scalar_lea.vmem [#allocation1], 4
    %770 = vst [vmem:[%s769] ss:$9 sm:$0xff] %v728
    %s772 = scalar_lea.vmem [#allocation1], 5
    %773 = vst [vmem:[%s772] ss:$9 sm:$0xff] %v729
    %s775 = scalar_lea.vmem [#allocation1], 6
    %776 = vst [vmem:[%s775] ss:$9 sm:$0xff] %v730
    %s778 = scalar_lea.vmem [#allocation1], 7
    %779 = vst [vmem:[%s778] ss:$9 sm:$0xff] %v731
    %v780 = vld [vmem:[#allocation1] sm:$0xff]
    %782 = vst [vmem:[#allocation1] ss:$9 sm:$0xff] %v732
    %784 = vst [vmem:[%s760] ss:$9 sm:$0xff] %v733
    %786 = vst [vmem:[%s763] ss:$9 sm:$0xff] %v734
    %788 = vst [vmem:[%s766] ss:$9 sm:$0xff] %v735
    %790 = vst [vmem:[%s769] ss:$9 sm:$0xff] %v736
    %792 = vst [vmem:[%s772] ss:$9 sm:$0xff] %v737
    %794 = vst [vmem:[%s775] ss:$9 sm:$0xff] %v738
    %796 = vst [vmem:[%s778] ss:$9 sm:$0xff] %v739
    %v797 = vld [vmem:[#allocation1] sm:$0xff]
    %v816 = vunpack.c.l.b16 %v741
    %v817 = vunpack.c.h.b16 %v741
    %v818 = vunpack.c.l.b16 %v742
    %v819 = vunpack.c.h.b16 %v742
    %v820 = vunpack.c.l.b16 %v743
    %v821 = vunpack.c.h.b16 %v743
    %v822 = vunpack.c.l.b16 %v744
    %v823 = vunpack.c.h.b16 %v744
    %v824 = vunpack.c.l.b16 %v745
    %v825 = vunpack.c.h.b16 %v745
    %v826 = vunpack.c.l.b16 %v746
    %v827 = vunpack.c.h.b16 %v746
    %v828 = vunpack.c.l.b16 %v747
    %v829 = vunpack.c.h.b16 %v747
    %v830 = vunpack.c.l.b16 %v748
    %v831 = vunpack.c.h.b16 %v748
    %v832 = vunpack.c.l.b16 %v749
    %v833 = vunpack.c.h.b16 %v749
    %v834 = vunpack.c.l.b16 %v750
    %v835 = vunpack.c.h.b16 %v750
    %v836 = vunpack.c.l.b16 %v751
    %v837 = vunpack.c.h.b16 %v751
    %v838 = vunpack.c.l.b16 %v752
    %v839 = vunpack.c.h.b16 %v752
    %v840 = vunpack.c.l.b16 %v753
    %v841 = vunpack.c.h.b16 %v753
    %v842 = vunpack.c.l.b16 %v754
    %v843 = vunpack.c.h.b16 %v754
    %v844 = vunpack.c.l.b16 %v755
    %v845 = vunpack.c.h.b16 %v755
    %v846 = vunpack.c.l.b16 %v756
    %v847 = vunpack.c.h.b16 %v756
    %v848 = vpack.c.b16 %v818, %v816
    %v849 = vpack.c.b16 %v819, %v817
    %v850 = vpack.c.b16 %v822, %v820
    %v851 = vpack.c.b16 %v823, %v821
    %v852 = vpack.c.b16 %v826, %v824
    %v853 = vpack.c.b16 %v827, %v825
    %v854 = vpack.c.b16 %v830, %v828
    %v855 = vpack.c.b16 %v831, %v829
    %v856 = vpack.c.b16 %v834, %v832
    %v857 = vpack.c.b16 %v835, %v833
    %v858 = vpack.c.b16 %v838, %v836
    %v859 = vpack.c.b16 %v839, %v837
    %v860 = vpack.c.b16 %v842, %v840
    %v861 = vpack.c.b16 %v843, %v841
    %v862 = vpack.c.b16 %v846, %v844
    %v863 = vpack.c.b16 %v847, %v845
    %880 = vmatpush.bf16.msra.mxu0 %v862
    %881 = vmatpush.bf16.msra.mxu0 %v860
    %882 = vmatpush.bf16.msra.mxu0 %v858
    %883 = vmatpush.bf16.msra.mxu0 %v856
    %884 = vmatpush.bf16.msra.mxu0 %v854
    %885 = vmatpush.bf16.msra.mxu0 %v852
    %886 = vmatpush.bf16.msra.mxu0 %v850
    %887 = vmatpush.bf16.msra.mxu0 %v848
    %888 = vmatmul.bf16.gmra.mxu0 %v780
    %v889 = vpop.f32.mrf.mxu0
    %v890 = vadd.f32 0.0, %v889
    %v891 = vpop.f32.mrf.mxu0
    %v892 = vadd.f32 0.0, %v891
    %893 = vmatmul.bf16.gmra.mxu0 %v797
    %v894 = vpop.f32.mrf.mxu0
    %v895 = vadd.f32 0.0, %v894
    %v896 = vpop.f32.mrf.mxu0
    %v897 = vadd.f32 0.0, %v896
    %898 = vdwg.mxu0
    %899 = vmatpush.bf16.msra.mxu0 %v863
    %900 = vmatpush.bf16.msra.mxu0 %v861
    %901 = vmatpush.bf16.msra.mxu0 %v859
    %902 = vmatpush.bf16.msra.mxu0 %v857
    %903 = vmatpush.bf16.msra.mxu0 %v855
    %904 = vmatpush.bf16.msra.mxu0 %v853
    %905 = vmatpush.bf16.msra.mxu0 %v851
    %906 = vmatpush.bf16.msra.mxu0 %v849
    %907 = vmatmul.bf16.gmra.mxu0 %v780
    %v908 = vpop.f32.mrf.mxu0
    %v909 = vadd.f32 0.0, %v908
    %v910 = vpop.f32.mrf.mxu0
    %v911 = vadd.f32 0.0, %v910
    %912 = vmatmul.bf16.gmra.mxu0 %v797
    %v913 = vpop.f32.mrf.mxu0
    %v914 = vadd.f32 0.0, %v913
    %v915 = vpop.f32.mrf.mxu0
    %v916 = vadd.f32 0.0, %v915
    %917 = vdwg.mxu0
    %v918 = vadd.f32 %v715, %v890
    %v919 = vadd.f32 %v716, %v909
    %v920 = vadd.f32 %v717, %v892
    %v921 = vadd.f32 %v718, %v911
    %v922 = vadd.f32 %v719, %v895
    %v923 = vadd.f32 %v720, %v914
    %v924 = vadd.f32 %v721, %v897
    %v925 = vadd.f32 %v722, %v916
    %s926 = scalar_lea.vmem %s0, 6
    %v927 = vld [vmem:[%s926] sm:$0x1]
    %v928 = vld [vmem:[%s926 + $0x1] sm:$0x1]
    %v929 = vld [vmem:[%s926 + $0x2] sm:$0x1]
    %v930 = vld [vmem:[%s926 + $0x3] sm:$0x1]
    %v931 = vld [vmem:[%s926 + $0x5] sm:$0x1]
    %v932 = vld [vmem:[%s926 + $0x6] sm:$0x1]
    %v933 = vld [vmem:[%s926 + $0x7] sm:$0x1]
    %v934 = vld [vmem:[%s926 + $0x8] sm:$0x1]
    %v935 = vld [vmem:[%s926 + $0xa] sm:$0x1]
    %v936 = vld [vmem:[%s926 + $0xb] sm:$0x1]
    %v937 = vld [vmem:[%s926 + $0xc] sm:$0x1]
    %v938 = vld [vmem:[%s926 + $0xd] sm:$0x1]
    %v939 = vld [vmem:[%s926 + $0xf] sm:$0x1]
    %v940 = vld [vmem:[%s926 + $0x10] sm:$0x1]
    %v941 = vld [vmem:[%s926 + $0x11] sm:$0x1]
    %v942 = vld [vmem:[%s926 + $0x12] sm:$0x1]
    %s943 = scalar_lea.vmem %s2, 512
    %v944 = vld [vmem:[%s943] sm:$0xff]
    %v945 = vld [vmem:[%s943 + $0x8] sm:$0xff]
    %v946 = vld [vmem:[%s943 + $0x10] sm:$0xff]
    %v947 = vld [vmem:[%s943 + $0x18] sm:$0xff]
    %v948 = vld [vmem:[%s943 + $0x20] sm:$0xff]
    %v949 = vld [vmem:[%s943 + $0x28] sm:$0xff]
    %v950 = vld [vmem:[%s943 + $0x30] sm:$0xff]
    %v951 = vld [vmem:[%s943 + $0x38] sm:$0xff]
    %v952 = vld [vmem:[%s943 + $0x40] sm:$0xff]
    %v953 = vld [vmem:[%s943 + $0x48] sm:$0xff]
    %v954 = vld [vmem:[%s943 + $0x50] sm:$0xff]
    %v955 = vld [vmem:[%s943 + $0x58] sm:$0xff]
    %v956 = vld [vmem:[%s943 + $0x60] sm:$0xff]
    %v957 = vld [vmem:[%s943 + $0x68] sm:$0xff]
    %v958 = vld [vmem:[%s943 + $0x70] sm:$0xff]
    %v959 = vld [vmem:[%s943 + $0x78] sm:$0xff]
    %961 = vst [vmem:[#allocation1] ss:$9 sm:$0xff] %v927
    %s963 = scalar_lea.vmem [#allocation1], 1
    %964 = vst [vmem:[%s963] ss:$9 sm:$0xff] %v928
    %s966 = scalar_lea.vmem [#allocation1], 2
    %967 = vst [vmem:[%s966] ss:$9 sm:$0xff] %v929
    %s969 = scalar_lea.vmem [#allocation1], 3
    %970 = vst [vmem:[%s969] ss:$9 sm:$0xff] %v930
    %s972 = scalar_lea.vmem [#allocation1], 4
    %973 = vst [vmem:[%s972] ss:$9 sm:$0xff] %v931
    %s975 = scalar_lea.vmem [#allocation1], 5
    %976 = vst [vmem:[%s975] ss:$9 sm:$0xff] %v932
    %s978 = scalar_lea.vmem [#allocation1], 6
    %979 = vst [vmem:[%s978] ss:$9 sm:$0xff] %v933
    %s981 = scalar_lea.vmem [#allocation1], 7
    %982 = vst [vmem:[%s981] ss:$9 sm:$0xff] %v934
    %v983 = vld [vmem:[#allocation1] sm:$0xff]
    %985 = vst [vmem:[#allocation1] ss:$9 sm:$0xff] %v935
    %987 = vst [vmem:[%s963] ss:$9 sm:$0xff] %v936
    %989 = vst [vmem:[%s966] ss:$9 sm:$0xff] %v937
    %991 = vst [vmem:[%s969] ss:$9 sm:$0xff] %v938
    %993 = vst [vmem:[%s972] ss:$9 sm:$0xff] %v939
    %995 = vst [vmem:[%s975] ss:$9 sm:$0xff] %v940
    %997 = vst [vmem:[%s978] ss:$9 sm:$0xff] %v941
    %999 = vst [vmem:[%s981] ss:$9 sm:$0xff] %v942
    %v1000 = vld [vmem:[#allocation1] sm:$0xff]
    %v1019 = vunpack.c.l.b16 %v944
    %v1020 = vunpack.c.h.b16 %v944
    %v1021 = vunpack.c.l.b16 %v945
    %v1022 = vunpack.c.h.b16 %v945
    %v1023 = vunpack.c.l.b16 %v946
    %v1024 = vunpack.c.h.b16 %v946
    %v1025 = vunpack.c.l.b16 %v947
    %v1026 = vunpack.c.h.b16 %v947
    %v1027 = vunpack.c.l.b16 %v948
    %v1028 = vunpack.c.h.b16 %v948
    %v1029 = vunpack.c.l.b16 %v949
    %v1030 = vunpack.c.h.b16 %v949
    %v1031 = vunpack.c.l.b16 %v950
    %v1032 = vunpack.c.h.b16 %v950
    %v1033 = vunpack.c.l.b16 %v951
    %v1034 = vunpack.c.h.b16 %v951
    %v1035 = vunpack.c.l.b16 %v952
    %v1036 = vunpack.c.h.b16 %v952
    %v1037 = vunpack.c.l.b16 %v953
    %v1038 = vunpack.c.h.b16 %v953
    %v1039 = vunpack.c.l.b16 %v954
    %v1040 = vunpack.c.h.b16 %v954
    %v1041 = vunpack.c.l.b16 %v955
    %v1042 = vunpack.c.h.b16 %v955
    %v1043 = vunpack.c.l.b16 %v956
    %v1044 = vunpack.c.h.b16 %v956
    %v1045 = vunpack.c.l.b16 %v957
    %v1046 = vunpack.c.h.b16 %v957
    %v1047 = vunpack.c.l.b16 %v958
    %v1048 = vunpack.c.h.b16 %v958
    %v1049 = vunpack.c.l.b16 %v959
    %v1050 = vunpack.c.h.b16 %v959
    %v1051 = vpack.c.b16 %v1021, %v1019
    %v1052 = vpack.c.b16 %v1022, %v1020
    %v1053 = vpack.c.b16 %v1025, %v1023
    %v1054 = vpack.c.b16 %v1026, %v1024
    %v1055 = vpack.c.b16 %v1029, %v1027
    %v1056 = vpack.c.b16 %v1030, %v1028
    %v1057 = vpack.c.b16 %v1033, %v1031
    %v1058 = vpack.c.b16 %v1034, %v1032
    %v1059 = vpack.c.b16 %v1037, %v1035
    %v1060 = vpack.c.b16 %v1038, %v1036
    %v1061 = vpack.c.b16 %v1041, %v1039
    %v1062 = vpack.c.b16 %v1042, %v1040
    %v1063 = vpack.c.b16 %v1045, %v1043
    %v1064 = vpack.c.b16 %v1046, %v1044
    %v1065 = vpack.c.b16 %v1049, %v1047
    %v1066 = vpack.c.b16 %v1050, %v1048
    %1083 = vmatpush.bf16.msra.mxu0 %v1065
    %1084 = vmatpush.bf16.msra.mxu0 %v1063
    %1085 = vmatpush.bf16.msra.mxu0 %v1061
    %1086 = vmatpush.bf16.msra.mxu0 %v1059
    %1087 = vmatpush.bf16.msra.mxu0 %v1057
    %1088 = vmatpush.bf16.msra.mxu0 %v1055
    %1089 = vmatpush.bf16.msra.mxu0 %v1053
    %1090 = vmatpush.bf16.msra.mxu0 %v1051
    %1091 = vmatmul.bf16.gmra.mxu0 %v983
    %v1092 = vpop.f32.mrf.mxu0
    %v1093 = vadd.f32 0.0, %v1092
    %v1094 = vpop.f32.mrf.mxu0
    %v1095 = vadd.f32 0.0, %v1094
    %1096 = vmatmul.bf16.gmra.mxu0 %v1000
    %v1097 = vpop.f32.mrf.mxu0
    %v1098 = vadd.f32 0.0, %v1097
    %v1099 = vpop.f32.mrf.mxu0
    %v1100 = vadd.f32 0.0, %v1099
    %1101 = vdwg.mxu0
    %1102 = vmatpush.bf16.msra.mxu0 %v1066
    %1103 = vmatpush.bf16.msra.mxu0 %v1064
    %1104 = vmatpush.bf16.msra.mxu0 %v1062
    %1105 = vmatpush.bf16.msra.mxu0 %v1060
    %1106 = vmatpush.bf16.msra.mxu0 %v1058
    %1107 = vmatpush.bf16.msra.mxu0 %v1056
    %1108 = vmatpush.bf16.msra.mxu0 %v1054
    %1109 = vmatpush.bf16.msra.mxu0 %v1052
    %1110 = vmatmul.bf16.gmra.mxu0 %v983
    %v1111 = vpop.f32.mrf.mxu0
    %v1112 = vadd.f32 0.0, %v1111
    %v1113 = vpop.f32.mrf.mxu0
    %v1114 = vadd.f32 0.0, %v1113
    %1115 = vmatmul.bf16.gmra.mxu0 %v1000
    %v1116 = vpop.f32.mrf.mxu0
    %v1117 = vadd.f32 0.0, %v1116
    %v1118 = vpop.f32.mrf.mxu0
    %v1119 = vadd.f32 0.0, %v1118
    %1120 = vdwg.mxu0
    %v1121 = vadd.f32 %v918, %v1093
    %v1122 = vadd.f32 %v919, %v1112
    %v1123 = vadd.f32 %v920, %v1095
    %v1124 = vadd.f32 %v921, %v1114
    %v1125 = vadd.f32 %v922, %v1098
    %v1126 = vadd.f32 %v923, %v1117
    %v1127 = vadd.f32 %v924, %v1100
    %v1128 = vadd.f32 %v925, %v1119
    %s1129 = scalar_lea.vmem %s0, 31
    %v1130 = vld [vmem:[%s1129] sm:$0x1]
    %v1131 = vld [vmem:[%s1129 + $0x1] sm:$0x1]
    %v1132 = vld [vmem:[%s1129 + $0x2] sm:$0x1]
    %v1133 = vld [vmem:[%s1129 + $0x3] sm:$0x1]
    %v1134 = vld [vmem:[%s1129 + $0x5] sm:$0x1]
    %v1135 = vld [vmem:[%s1129 + $0x6] sm:$0x1]
    %v1136 = vld [vmem:[%s1129 + $0x7] sm:$0x1]
    %v1137 = vld [vmem:[%s1129 + $0x8] sm:$0x1]
    %v1138 = vld [vmem:[%s1129 + $0xa] sm:$0x1]
    %v1139 = vld [vmem:[%s1129 + $0xb] sm:$0x1]
    %v1140 = vld [vmem:[%s1129 + $0xc] sm:$0x1]
    %v1141 = vld [vmem:[%s1129 + $0xd] sm:$0x1]
    %v1142 = vld [vmem:[%s1129 + $0xf] sm:$0x1]
    %v1143 = vld [vmem:[%s1129 + $0x10] sm:$0x1]
    %v1144 = vld [vmem:[%s1129 + $0x11] sm:$0x1]
    %v1145 = vld [vmem:[%s1129 + $0x12] sm:$0x1]
    %s1146 = scalar_lea.vmem %s2, 640
    %v1147 = vld [vmem:[%s1146] sm:$0xff]
    %v1148 = vld [vmem:[%s1146 + $0x8] sm:$0xff]
    %v1149 = vld [vmem:[%s1146 + $0x10] sm:$0xff]
    %v1150 = vld [vmem:[%s1146 + $0x18] sm:$0xff]
    %v1151 = vld [vmem:[%s1146 + $0x20] sm:$0xff]
    %v1152 = vld [vmem:[%s1146 + $0x28] sm:$0xff]
    %v1153 = vld [vmem:[%s1146 + $0x30] sm:$0xff]
    %v1154 = vld [vmem:[%s1146 + $0x38] sm:$0xff]
    %v1155 = vld [vmem:[%s1146 + $0x40] sm:$0xff]
    %v1156 = vld [vmem:[%s1146 + $0x48] sm:$0xff]
    %v1157 = vld [vmem:[%s1146 + $0x50] sm:$0xff]
    %v1158 = vld [vmem:[%s1146 + $0x58] sm:$0xff]
    %v1159 = vld [vmem:[%s1146 + $0x60] sm:$0xff]
    %v1160 = vld [vmem:[%s1146 + $0x68] sm:$0xff]
    %v1161 = vld [vmem:[%s1146 + $0x70] sm:$0xff]
    %v1162 = vld [vmem:[%s1146 + $0x78] sm:$0xff]
    %1164 = vst [vmem:[#allocation1] ss:$9 sm:$0xff] %v1130
    %s1166 = scalar_lea.vmem [#allocation1], 1
    %1167 = vst [vmem:[%s1166] ss:$9 sm:$0xff] %v1131
    %s1169 = scalar_lea.vmem [#allocation1], 2
    %1170 = vst [vmem:[%s1169] ss:$9 sm:$0xff] %v1132
    %s1172 = scalar_lea.vmem [#allocation1], 3
    %1173 = vst [vmem:[%s1172] ss:$9 sm:$0xff] %v1133
    %s1175 = scalar_lea.vmem [#allocation1], 4
    %1176 = vst [vmem:[%s1175] ss:$9 sm:$0xff] %v1134
    %s1178 = scalar_lea.vmem [#allocation1], 5
    %1179 = vst [vmem:[%s1178] ss:$9 sm:$0xff] %v1135
    %s1181 = scalar_lea.vmem [#allocation1], 6
    %1182 = vst [vmem:[%s1181] ss:$9 sm:$0xff] %v1136
    %s1184 = scalar_lea.vmem [#allocation1], 7
    %1185 = vst [vmem:[%s1184] ss:$9 sm:$0xff] %v1137
    %v1186 = vld [vmem:[#allocation1] sm:$0xff]
    %1188 = vst [vmem:[#allocation1] ss:$9 sm:$0xff] %v1138
    %1190 = vst [vmem:[%s1166] ss:$9 sm:$0xff] %v1139
    %1192 = vst [vmem:[%s1169] ss:$9 sm:$0xff] %v1140
    %1194 = vst [vmem:[%s1172] ss:$9 sm:$0xff] %v1141
    %1196 = vst [vmem:[%s1175] ss:$9 sm:$0xff] %v1142
    %1198 = vst [vmem:[%s1178] ss:$9 sm:$0xff] %v1143
    %1200 = vst [vmem:[%s1181] ss:$9 sm:$0xff] %v1144
    %1202 = vst [vmem:[%s1184] ss:$9 sm:$0xff] %v1145
    %v1203 = vld [vmem:[#allocation1] sm:$0xff]
    %v1222 = vunpack.c.l.b16 %v1147
    %v1223 = vunpack.c.h.b16 %v1147
    %v1224 = vunpack.c.l.b16 %v1148
    %v1225 = vunpack.c.h.b16 %v1148
    %v1226 = vunpack.c.l.b16 %v1149
    %v1227 = vunpack.c.h.b16 %v1149
    %v1228 = vunpack.c.l.b16 %v1150
    %v1229 = vunpack.c.h.b16 %v1150
    %v1230 = vunpack.c.l.b16 %v1151
    %v1231 = vunpack.c.h.b16 %v1151
    %v1232 = vunpack.c.l.b16 %v1152
    %v1233 = vunpack.c.h.b16 %v1152
    %v1234 = vunpack.c.l.b16 %v1153
    %v1235 = vunpack.c.h.b16 %v1153
    %v1236 = vunpack.c.l.b16 %v1154
    %v1237 = vunpack.c.h.b16 %v1154
    %v1238 = vunpack.c.l.b16 %v1155
    %v1239 = vunpack.c.h.b16 %v1155
    %v1240 = vunpack.c.l.b16 %v1156
    %v1241 = vunpack.c.h.b16 %v1156
    %v1242 = vunpack.c.l.b16 %v1157
    %v1243 = vunpack.c.h.b16 %v1157
    %v1244 = vunpack.c.l.b16 %v1158
    %v1245 = vunpack.c.h.b16 %v1158
    %v1246 = vunpack.c.l.b16 %v1159
    %v1247 = vunpack.c.h.b16 %v1159
    %v1248 = vunpack.c.l.b16 %v1160
    %v1249 = vunpack.c.h.b16 %v1160
    %v1250 = vunpack.c.l.b16 %v1161
    %v1251 = vunpack.c.h.b16 %v1161
    %v1252 = vunpack.c.l.b16 %v1162
    %v1253 = vunpack.c.h.b16 %v1162
    %v1254 = vpack.c.b16 %v1224, %v1222
    %v1255 = vpack.c.b16 %v1225, %v1223
    %v1256 = vpack.c.b16 %v1228, %v1226
    %v1257 = vpack.c.b16 %v1229, %v1227
    %v1258 = vpack.c.b16 %v1232, %v1230
    %v1259 = vpack.c.b16 %v1233, %v1231
    %v1260 = vpack.c.b16 %v1236, %v1234
    %v1261 = vpack.c.b16 %v1237, %v1235
    %v1262 = vpack.c.b16 %v1240, %v1238
    %v1263 = vpack.c.b16 %v1241, %v1239
    %v1264 = vpack.c.b16 %v1244, %v1242
    %v1265 = vpack.c.b16 %v1245, %v1243
    %v1266 = vpack.c.b16 %v1248, %v1246
    %v1267 = vpack.c.b16 %v1249, %v1247
    %v1268 = vpack.c.b16 %v1252, %v1250
    %v1269 = vpack.c.b16 %v1253, %v1251
    %1286 = vmatpush.bf16.msra.mxu0 %v1268
    %1287 = vmatpush.bf16.msra.mxu0 %v1266
    %1288 = vmatpush.bf16.msra.mxu0 %v1264
    %1289 = vmatpush.bf16.msra.mxu0 %v1262
    %1290 = vmatpush.bf16.msra.mxu0 %v1260
    %1291 = vmatpush.bf16.msra.mxu0 %v1258
    %1292 = vmatpush.bf16.msra.mxu0 %v1256
    %1293 = vmatpush.bf16.msra.mxu0 %v1254
    %1294 = vmatmul.bf16.gmra.mxu0 %v1186
    %v1295 = vpop.f32.mrf.mxu0
    %v1296 = vadd.f32 0.0, %v1295
    %v1297 = vpop.f32.mrf.mxu0
    %v1298 = vadd.f32 0.0, %v1297
    %1299 = vmatmul.bf16.gmra.mxu0 %v1203
    %v1300 = vpop.f32.mrf.mxu0
    %v1301 = vadd.f32 0.0, %v1300
    %v1302 = vpop.f32.mrf.mxu0
    %v1303 = vadd.f32 0.0, %v1302
    %1304 = vdwg.mxu0
    %1305 = vmatpush.bf16.msra.mxu0 %v1269
    %1306 = vmatpush.bf16.msra.mxu0 %v1267
    %1307 = vmatpush.bf16.msra.mxu0 %v1265
    %1308 = vmatpush.bf16.msra.mxu0 %v1263
    %1309 = vmatpush.bf16.msra.mxu0 %v1261
    %1310 = vmatpush.bf16.msra.mxu0 %v1259
    %1311 = vmatpush.bf16.msra.mxu0 %v1257
    %1312 = vmatpush.bf16.msra.mxu0 %v1255
    %1313 = vmatmul.bf16.gmra.mxu0 %v1186
    %v1314 = vpop.f32.mrf.mxu0
    %v1315 = vadd.f32 0.0, %v1314
    %v1316 = vpop.f32.mrf.mxu0
    %v1317 = vadd.f32 0.0, %v1316
    %1318 = vmatmul.bf16.gmra.mxu0 %v1203
    %v1319 = vpop.f32.mrf.mxu0
    %v1320 = vadd.f32 0.0, %v1319
    %v1321 = vpop.f32.mrf.mxu0
    %v1322 = vadd.f32 0.0, %v1321
    %1323 = vdwg.mxu0
    %v1324 = vadd.f32 %v1121, %v1296
    %v1325 = vadd.f32 %v1122, %v1315
    %v1326 = vadd.f32 %v1123, %v1298
    %v1327 = vadd.f32 %v1124, %v1317
    %v1328 = vadd.f32 %v1125, %v1301
    %v1329 = vadd.f32 %v1126, %v1320
    %v1330 = vadd.f32 %v1127, %v1303
    %v1331 = vadd.f32 %v1128, %v1322
    %s1332 = scalar_lea.vmem %s0, 180
    %v1333 = vld [vmem:[%s1332] sm:$0x1]
    %v1334 = vld [vmem:[%s1332 + $0x1] sm:$0x1]
    %v1335 = vld [vmem:[%s1332 + $0x2] sm:$0x1]
    %v1336 = vld [vmem:[%s1332 + $0x3] sm:$0x1]
    %v1337 = vld [vmem:[%s1332 + $0x5] sm:$0x1]
    %v1338 = vld [vmem:[%s1332 + $0x6] sm:$0x1]
    %v1339 = vld [vmem:[%s1332 + $0x7] sm:$0x1]
    %v1340 = vld [vmem:[%s1332 + $0x8] sm:$0x1]
    %v1341 = vld [vmem:[%s1332 + $0xa] sm:$0x1]
    %v1342 = vld [vmem:[%s1332 + $0xb] sm:$0x1]
    %v1343 = vld [vmem:[%s1332 + $0xc] sm:$0x1]
    %v1344 = vld [vmem:[%s1332 + $0xd] sm:$0x1]
    %v1345 = vld [vmem:[%s1332 + $0xf] sm:$0x1]
    %v1346 = vld [vmem:[%s1332 + $0x10] sm:$0x1]
    %v1347 = vld [vmem:[%s1332 + $0x11] sm:$0x1]
    %v1348 = vld [vmem:[%s1332 + $0x12] sm:$0x1]
    %s1349 = scalar_lea.vmem %s2, 768
    %v1350 = vld [vmem:[%s1349] sm:$0xff]
    %v1351 = vld [vmem:[%s1349 + $0x8] sm:$0xff]
    %v1352 = vld [vmem:[%s1349 + $0x10] sm:$0xff]
    %v1353 = vld [vmem:[%s1349 + $0x18] sm:$0xff]
    %v1354 = vld [vmem:[%s1349 + $0x20] sm:$0xff]
    %v1355 = vld [vmem:[%s1349 + $0x28] sm:$0xff]
    %v1356 = vld [vmem:[%s1349 + $0x30] sm:$0xff]
    %v1357 = vld [vmem:[%s1349 + $0x38] sm:$0xff]
    %v1358 = vld [vmem:[%s1349 + $0x40] sm:$0xff]
    %v1359 = vld [vmem:[%s1349 + $0x48] sm:$0xff]
    %v1360 = vld [vmem:[%s1349 + $0x50] sm:$0xff]
    %v1361 = vld [vmem:[%s1349 + $0x58] sm:$0xff]
    %v1362 = vld [vmem:[%s1349 + $0x60] sm:$0xff]
    %v1363 = vld [vmem:[%s1349 + $0x68] sm:$0xff]
    %v1364 = vld [vmem:[%s1349 + $0x70] sm:$0xff]
    %v1365 = vld [vmem:[%s1349 + $0x78] sm:$0xff]
    %1367 = vst [vmem:[#allocation1] ss:$9 sm:$0xff] %v1333
    %s1369 = scalar_lea.vmem [#allocation1], 1
    %1370 = vst [vmem:[%s1369] ss:$9 sm:$0xff] %v1334
    %s1372 = scalar_lea.vmem [#allocation1], 2
    %1373 = vst [vmem:[%s1372] ss:$9 sm:$0xff] %v1335
    %s1375 = scalar_lea.vmem [#allocation1], 3
    %1376 = vst [vmem:[%s1375] ss:$9 sm:$0xff] %v1336
    %s1378 = scalar_lea.vmem [#allocation1], 4
    %1379 = vst [vmem:[%s1378] ss:$9 sm:$0xff] %v1337
    %s1381 = scalar_lea.vmem [#allocation1], 5
    %1382 = vst [vmem:[%s1381] ss:$9 sm:$0xff] %v1338
    %s1384 = scalar_lea.vmem [#allocation1], 6
    %1385 = vst [vmem:[%s1384] ss:$9 sm:$0xff] %v1339
    %s1387 = scalar_lea.vmem [#allocation1], 7
    %1388 = vst [vmem:[%s1387] ss:$9 sm:$0xff] %v1340
    %v1389 = vld [vmem:[#allocation1] sm:$0xff]
    %1391 = vst [vmem:[#allocation1] ss:$9 sm:$0xff] %v1341
    %1393 = vst [vmem:[%s1369] ss:$9 sm:$0xff] %v1342
    %1395 = vst [vmem:[%s1372] ss:$9 sm:$0xff] %v1343
    %1397 = vst [vmem:[%s1375] ss:$9 sm:$0xff] %v1344
    %1399 = vst [vmem:[%s1378] ss:$9 sm:$0xff] %v1345
    %1401 = vst [vmem:[%s1381] ss:$9 sm:$0xff] %v1346
    %1403 = vst [vmem:[%s1384] ss:$9 sm:$0xff] %v1347
    %1405 = vst [vmem:[%s1387] ss:$9 sm:$0xff] %v1348
    %v1406 = vld [vmem:[#allocation1] sm:$0xff]
    %v1425 = vunpack.c.l.b16 %v1350
    %v1426 = vunpack.c.h.b16 %v1350
    %v1427 = vunpack.c.l.b16 %v1351
    %v1428 = vunpack.c.h.b16 %v1351
    %v1429 = vunpack.c.l.b16 %v1352
    %v1430 = vunpack.c.h.b16 %v1352
    %v1431 = vunpack.c.l.b16 %v1353
    %v1432 = vunpack.c.h.b16 %v1353
    %v1433 = vunpack.c.l.b16 %v1354
    %v1434 = vunpack.c.h.b16 %v1354
    %v1435 = vunpack.c.l.b16 %v1355
    %v1436 = vunpack.c.h.b16 %v1355
    %v1437 = vunpack.c.l.b16 %v1356
    %v1438 = vunpack.c.h.b16 %v1356
    %v1439 = vunpack.c.l.b16 %v1357
    %v1440 = vunpack.c.h.b16 %v1357
    %v1441 = vunpack.c.l.b16 %v1358
    %v1442 = vunpack.c.h.b16 %v1358
    %v1443 = vunpack.c.l.b16 %v1359
    %v1444 = vunpack.c.h.b16 %v1359
    %v1445 = vunpack.c.l.b16 %v1360
    %v1446 = vunpack.c.h.b16 %v1360
    %v1447 = vunpack.c.l.b16 %v1361
    %v1448 = vunpack.c.h.b16 %v1361
    %v1449 = vunpack.c.l.b16 %v1362
    %v1450 = vunpack.c.h.b16 %v1362
    %v1451 = vunpack.c.l.b16 %v1363
    %v1452 = vunpack.c.h.b16 %v1363
    %v1453 = vunpack.c.l.b16 %v1364
    %v1454 = vunpack.c.h.b16 %v1364
    %v1455 = vunpack.c.l.b16 %v1365
    %v1456 = vunpack.c.h.b16 %v1365
    %v1457 = vpack.c.b16 %v1427, %v1425
    %v1458 = vpack.c.b16 %v1428, %v1426
    %v1459 = vpack.c.b16 %v1431, %v1429
    %v1460 = vpack.c.b16 %v1432, %v1430
    %v1461 = vpack.c.b16 %v1435, %v1433
    %v1462 = vpack.c.b16 %v1436, %v1434
    %v1463 = vpack.c.b16 %v1439, %v1437
    %v1464 = vpack.c.b16 %v1440, %v1438
    %v1465 = vpack.c.b16 %v1443, %v1441
    %v1466 = vpack.c.b16 %v1444, %v1442
    %v1467 = vpack.c.b16 %v1447, %v1445
    %v1468 = vpack.c.b16 %v1448, %v1446
    %v1469 = vpack.c.b16 %v1451, %v1449
    %v1470 = vpack.c.b16 %v1452, %v1450
    %v1471 = vpack.c.b16 %v1455, %v1453
    %v1472 = vpack.c.b16 %v1456, %v1454
    %1489 = vmatpush.bf16.msra.mxu0 %v1471
    %1490 = vmatpush.bf16.msra.mxu0 %v1469
    %1491 = vmatpush.bf16.msra.mxu0 %v1467
    %1492 = vmatpush.bf16.msra.mxu0 %v1465
    %1493 = vmatpush.bf16.msra.mxu0 %v1463
    %1494 = vmatpush.bf16.msra.mxu0 %v1461
    %1495 = vmatpush.bf16.msra.mxu0 %v1459
    %1496 = vmatpush.bf16.msra.mxu0 %v1457
    %1497 = vmatmul.bf16.gmra.mxu0 %v1389
    %v1498 = vpop.f32.mrf.mxu0
    %v1499 = vadd.f32 0.0, %v1498
    %v1500 = vpop.f32.mrf.mxu0
    %v1501 = vadd.f32 0.0, %v1500
    %1502 = vmatmul.bf16.gmra.mxu0 %v1406
    %v1503 = vpop.f32.mrf.mxu0
    %v1504 = vadd.f32 0.0, %v1503
    %v1505 = vpop.f32.mrf.mxu0
    %v1506 = vadd.f32 0.0, %v1505
    %1507 = vdwg.mxu0
    %1508 = vmatpush.bf16.msra.mxu0 %v1472
    %1509 = vmatpush.bf16.msra.mxu0 %v1470
    %1510 = vmatpush.bf16.msra.mxu0 %v1468
    %1511 = vmatpush.bf16.msra.mxu0 %v1466
    %1512 = vmatpush.bf16.msra.mxu0 %v1464
    %1513 = vmatpush.bf16.msra.mxu0 %v1462
    %1514 = vmatpush.bf16.msra.mxu0 %v1460
    %1515 = vmatpush.bf16.msra.mxu0 %v1458
    %1516 = vmatmul.bf16.gmra.mxu0 %v1389
    %v1517 = vpop.f32.mrf.mxu0
    %v1518 = vadd.f32 0.0, %v1517
    %v1519 = vpop.f32.mrf.mxu0
    %v1520 = vadd.f32 0.0, %v1519
    %1521 = vmatmul.bf16.gmra.mxu0 %v1406
    %v1522 = vpop.f32.mrf.mxu0
    %v1523 = vadd.f32 0.0, %v1522
    %v1524 = vpop.f32.mrf.mxu0
    %v1525 = vadd.f32 0.0, %v1524
    %1526 = vdwg.mxu0
    %v1527 = vadd.f32 %v1324, %v1499
    %v1528 = vadd.f32 %v1325, %v1518
    %v1529 = vadd.f32 %v1326, %v1501
    %v1530 = vadd.f32 %v1327, %v1520
    %v1531 = vadd.f32 %v1328, %v1504
    %v1532 = vadd.f32 %v1329, %v1523
    %v1533 = vadd.f32 %v1330, %v1506
    %v1534 = vadd.f32 %v1331, %v1525
    %s1535 = scalar_lea.vmem %s0, 106
    %v1536 = vld [vmem:[%s1535] sm:$0x1]
    %v1537 = vld [vmem:[%s1535 + $0x1] sm:$0x1]
    %v1538 = vld [vmem:[%s1535 + $0x2] sm:$0x1]
    %v1539 = vld [vmem:[%s1535 + $0x3] sm:$0x1]
    %v1540 = vld [vmem:[%s1535 + $0x5] sm:$0x1]
    %v1541 = vld [vmem:[%s1535 + $0x6] sm:$0x1]
    %v1542 = vld [vmem:[%s1535 + $0x7] sm:$0x1]
    %v1543 = vld [vmem:[%s1535 + $0x8] sm:$0x1]
    %v1544 = vld [vmem:[%s1535 + $0xa] sm:$0x1]
    %v1545 = vld [vmem:[%s1535 + $0xb] sm:$0x1]
    %v1546 = vld [vmem:[%s1535 + $0xc] sm:$0x1]
    %v1547 = vld [vmem:[%s1535 + $0xd] sm:$0x1]
    %v1548 = vld [vmem:[%s1535 + $0xf] sm:$0x1]
    %v1549 = vld [vmem:[%s1535 + $0x10] sm:$0x1]
    %v1550 = vld [vmem:[%s1535 + $0x11] sm:$0x1]
    %v1551 = vld [vmem:[%s1535 + $0x12] sm:$0x1]
    %s1552 = scalar_lea.vmem %s2, 896
    %v1553 = vld [vmem:[%s1552] sm:$0xff]
    %v1554 = vld [vmem:[%s1552 + $0x8] sm:$0xff]
    %v1555 = vld [vmem:[%s1552 + $0x10] sm:$0xff]
    %v1556 = vld [vmem:[%s1552 + $0x18] sm:$0xff]
    %v1557 = vld [vmem:[%s1552 + $0x20] sm:$0xff]
    %v1558 = vld [vmem:[%s1552 + $0x28] sm:$0xff]
    %v1559 = vld [vmem:[%s1552 + $0x30] sm:$0xff]
    %v1560 = vld [vmem:[%s1552 + $0x38] sm:$0xff]
    %v1561 = vld [vmem:[%s1552 + $0x40] sm:$0xff]
    %v1562 = vld [vmem:[%s1552 + $0x48] sm:$0xff]
    %v1563 = vld [vmem:[%s1552 + $0x50] sm:$0xff]
    %v1564 = vld [vmem:[%s1552 + $0x58] sm:$0xff]
    %v1565 = vld [vmem:[%s1552 + $0x60] sm:$0xff]
    %v1566 = vld [vmem:[%s1552 + $0x68] sm:$0xff]
    %v1567 = vld [vmem:[%s1552 + $0x70] sm:$0xff]
    %v1568 = vld [vmem:[%s1552 + $0x78] sm:$0xff]
    %1570 = vst [vmem:[#allocation1] ss:$9 sm:$0xff] %v1536
    %s1572 = scalar_lea.vmem [#allocation1], 1
    %1573 = vst [vmem:[%s1572] ss:$9 sm:$0xff] %v1537
    %s1575 = scalar_lea.vmem [#allocation1], 2
    %1576 = vst [vmem:[%s1575] ss:$9 sm:$0xff] %v1538
    %s1578 = scalar_lea.vmem [#allocation1], 3
    %1579 = vst [vmem:[%s1578] ss:$9 sm:$0xff] %v1539
    %s1581 = scalar_lea.vmem [#allocation1], 4
    %1582 = vst [vmem:[%s1581] ss:$9 sm:$0xff] %v1540
    %s1584 = scalar_lea.vmem [#allocation1], 5
    %1585 = vst [vmem:[%s1584] ss:$9 sm:$0xff] %v1541
    %s1587 = scalar_lea.vmem [#allocation1], 6
    %1588 = vst [vmem:[%s1587] ss:$9 sm:$0xff] %v1542
    %s1590 = scalar_lea.vmem [#allocation1], 7
    %1591 = vst [vmem:[%s1590] ss:$9 sm:$0xff] %v1543
    %v1592 = vld [vmem:[#allocation1] sm:$0xff]
    %1594 = vst [vmem:[#allocation1] ss:$9 sm:$0xff] %v1544
    %1596 = vst [vmem:[%s1572] ss:$9 sm:$0xff] %v1545
    %1598 = vst [vmem:[%s1575] ss:$9 sm:$0xff] %v1546
    %1600 = vst [vmem:[%s1578] ss:$9 sm:$0xff] %v1547
    %1602 = vst [vmem:[%s1581] ss:$9 sm:$0xff] %v1548
    %1604 = vst [vmem:[%s1584] ss:$9 sm:$0xff] %v1549
    %1606 = vst [vmem:[%s1587] ss:$9 sm:$0xff] %v1550
    %1608 = vst [vmem:[%s1590] ss:$9 sm:$0xff] %v1551
    %v1609 = vld [vmem:[#allocation1] sm:$0xff]
    %v1628 = vunpack.c.l.b16 %v1553
    %v1629 = vunpack.c.h.b16 %v1553
    %v1630 = vunpack.c.l.b16 %v1554
    %v1631 = vunpack.c.h.b16 %v1554
    %v1632 = vunpack.c.l.b16 %v1555
    %v1633 = vunpack.c.h.b16 %v1555
    %v1634 = vunpack.c.l.b16 %v1556
    %v1635 = vunpack.c.h.b16 %v1556
    %v1636 = vunpack.c.l.b16 %v1557
    %v1637 = vunpack.c.h.b16 %v1557
    %v1638 = vunpack.c.l.b16 %v1558
    %v1639 = vunpack.c.h.b16 %v1558
    %v1640 = vunpack.c.l.b16 %v1559
    %v1641 = vunpack.c.h.b16 %v1559
    %v1642 = vunpack.c.l.b16 %v1560
    %v1643 = vunpack.c.h.b16 %v1560
    %v1644 = vunpack.c.l.b16 %v1561
    %v1645 = vunpack.c.h.b16 %v1561
    %v1646 = vunpack.c.l.b16 %v1562
    %v1647 = vunpack.c.h.b16 %v1562
    %v1648 = vunpack.c.l.b16 %v1563
    %v1649 = vunpack.c.h.b16 %v1563
    %v1650 = vunpack.c.l.b16 %v1564
    %v1651 = vunpack.c.h.b16 %v1564
    %v1652 = vunpack.c.l.b16 %v1565
    %v1653 = vunpack.c.h.b16 %v1565
    %v1654 = vunpack.c.l.b16 %v1566
    %v1655 = vunpack.c.h.b16 %v1566
    %v1656 = vunpack.c.l.b16 %v1567
    %v1657 = vunpack.c.h.b16 %v1567
    %v1658 = vunpack.c.l.b16 %v1568
    %v1659 = vunpack.c.h.b16 %v1568
    %v1660 = vpack.c.b16 %v1630, %v1628
    %v1661 = vpack.c.b16 %v1631, %v1629
    %v1662 = vpack.c.b16 %v1634, %v1632
    %v1663 = vpack.c.b16 %v1635, %v1633
    %v1664 = vpack.c.b16 %v1638, %v1636
    %v1665 = vpack.c.b16 %v1639, %v1637
    %v1666 = vpack.c.b16 %v1642, %v1640
    %v1667 = vpack.c.b16 %v1643, %v1641
    %v1668 = vpack.c.b16 %v1646, %v1644
    %v1669 = vpack.c.b16 %v1647, %v1645
    %v1670 = vpack.c.b16 %v1650, %v1648
    %v1671 = vpack.c.b16 %v1651, %v1649
    %v1672 = vpack.c.b16 %v1654, %v1652
    %v1673 = vpack.c.b16 %v1655, %v1653
    %v1674 = vpack.c.b16 %v1658, %v1656
    %v1675 = vpack.c.b16 %v1659, %v1657
    %1692 = vmatpush.bf16.msra.mxu0 %v1674
    %1693 = vmatpush.bf16.msra.mxu0 %v1672
    %1694 = vmatpush.bf16.msra.mxu0 %v1670
    %1695 = vmatpush.bf16.msra.mxu0 %v1668
    %1696 = vmatpush.bf16.msra.mxu0 %v1666
    %1697 = vmatpush.bf16.msra.mxu0 %v1664
    %1698 = vmatpush.bf16.msra.mxu0 %v1662
    %1699 = vmatpush.bf16.msra.mxu0 %v1660
    %1700 = vmatmul.bf16.gmra.mxu0 %v1592
    %v1701 = vpop.f32.mrf.mxu0
    %v1702 = vadd.f32 0.0, %v1701
    %v1703 = vpop.f32.mrf.mxu0
    %v1704 = vadd.f32 0.0, %v1703
    %1705 = vmatmul.bf16.gmra.mxu0 %v1609
    %v1706 = vpop.f32.mrf.mxu0
    %v1707 = vadd.f32 0.0, %v1706
    %v1708 = vpop.f32.mrf.mxu0
    %v1709 = vadd.f32 0.0, %v1708
    %1710 = vdwg.mxu0
    %1711 = vmatpush.bf16.msra.mxu0 %v1675
    %1712 = vmatpush.bf16.msra.mxu0 %v1673
    %1713 = vmatpush.bf16.msra.mxu0 %v1671
    %1714 = vmatpush.bf16.msra.mxu0 %v1669
    %1715 = vmatpush.bf16.msra.mxu0 %v1667
    %1716 = vmatpush.bf16.msra.mxu0 %v1665
    %1717 = vmatpush.bf16.msra.mxu0 %v1663
    %1718 = vmatpush.bf16.msra.mxu0 %v1661
    %1719 = vmatmul.bf16.gmra.mxu0 %v1592
    %v1720 = vpop.f32.mrf.mxu0
    %v1721 = vadd.f32 0.0, %v1720
    %v1722 = vpop.f32.mrf.mxu0
    %v1723 = vadd.f32 0.0, %v1722
    %1724 = vmatmul.bf16.gmra.mxu0 %v1609
    %v1725 = vpop.f32.mrf.mxu0
    %v1726 = vadd.f32 0.0, %v1725
    %v1727 = vpop.f32.mrf.mxu0
    %v1728 = vadd.f32 0.0, %v1727
    %1729 = vdwg.mxu0
    %v1730 = vadd.f32 %v1527, %v1702
    %v1731 = vadd.f32 %v1528, %v1721
    %v1732 = vadd.f32 %v1529, %v1704
    %v1733 = vadd.f32 %v1530, %v1723
    %v1734 = vadd.f32 %v1531, %v1707
    %v1735 = vadd.f32 %v1532, %v1726
    %v1736 = vadd.f32 %v1533, %v1709
    %v1737 = vadd.f32 %v1534, %v1728
    %s1738 = scalar_lea.vmem %s0, 131
    %v1739 = vld [vmem:[%s1738] sm:$0x1]
    %v1740 = vld [vmem:[%s1738 + $0x1] sm:$0x1]
    %v1741 = vld [vmem:[%s1738 + $0x2] sm:$0x1]
    %v1742 = vld [vmem:[%s1738 + $0x3] sm:$0x1]
    %v1743 = vld [vmem:[%s1738 + $0x5] sm:$0x1]
    %v1744 = vld [vmem:[%s1738 + $0x6] sm:$0x1]
    %v1745 = vld [vmem:[%s1738 + $0x7] sm:$0x1]
    %v1746 = vld [vmem:[%s1738 + $0x8] sm:$0x1]
    %v1747 = vld [vmem:[%s1738 + $0xa] sm:$0x1]
    %v1748 = vld [vmem:[%s1738 + $0xb] sm:$0x1]
    %v1749 = vld [vmem:[%s1738 + $0xc] sm:$0x1]
    %v1750 = vld [vmem:[%s1738 + $0xd] sm:$0x1]
    %v1751 = vld [vmem:[%s1738 + $0xf] sm:$0x1]
    %v1752 = vld [vmem:[%s1738 + $0x10] sm:$0x1]
    %v1753 = vld [vmem:[%s1738 + $0x11] sm:$0x1]
    %v1754 = vld [vmem:[%s1738 + $0x12] sm:$0x1]
    %s1755 = scalar_lea.vmem %s2, 1024
    %v1756 = vld [vmem:[%s1755] sm:$0xff]
    %v1757 = vld [vmem:[%s1755 + $0x8] sm:$0xff]
    %v1758 = vld [vmem:[%s1755 + $0x10] sm:$0xff]
    %v1759 = vld [vmem:[%s1755 + $0x18] sm:$0xff]
    %v1760 = vld [vmem:[%s1755 + $0x20] sm:$0xff]
    %v1761 = vld [vmem:[%s1755 + $0x28] sm:$0xff]
    %v1762 = vld [vmem:[%s1755 + $0x30] sm:$0xff]
    %v1763 = vld [vmem:[%s1755 + $0x38] sm:$0xff]
    %v1764 = vld [vmem:[%s1755 + $0x40] sm:$0xff]
    %v1765 = vld [vmem:[%s1755 + $0x48] sm:$0xff]
    %v1766 = vld [vmem:[%s1755 + $0x50] sm:$0xff]
    %v1767 = vld [vmem:[%s1755 + $0x58] sm:$0xff]
    %v1768 = vld [vmem:[%s1755 + $0x60] sm:$0xff]
    %v1769 = vld [vmem:[%s1755 + $0x68] sm:$0xff]
    %v1770 = vld [vmem:[%s1755 + $0x70] sm:$0xff]
    %v1771 = vld [vmem:[%s1755 + $0x78] sm:$0xff]
    %1773 = vst [vmem:[#allocation1] ss:$9 sm:$0xff] %v1739
    %s1775 = scalar_lea.vmem [#allocation1], 1
    %1776 = vst [vmem:[%s1775] ss:$9 sm:$0xff] %v1740
    %s1778 = scalar_lea.vmem [#allocation1], 2
    %1779 = vst [vmem:[%s1778] ss:$9 sm:$0xff] %v1741
    %s1781 = scalar_lea.vmem [#allocation1], 3
    %1782 = vst [vmem:[%s1781] ss:$9 sm:$0xff] %v1742
    %s1784 = scalar_lea.vmem [#allocation1], 4
    %1785 = vst [vmem:[%s1784] ss:$9 sm:$0xff] %v1743
    %s1787 = scalar_lea.vmem [#allocation1], 5
    %1788 = vst [vmem:[%s1787] ss:$9 sm:$0xff] %v1744
    %s1790 = scalar_lea.vmem [#allocation1], 6
    %1791 = vst [vmem:[%s1790] ss:$9 sm:$0xff] %v1745
    %s1793 = scalar_lea.vmem [#allocation1], 7
    %1794 = vst [vmem:[%s1793] ss:$9 sm:$0xff] %v1746
    %v1795 = vld [vmem:[#allocation1] sm:$0xff]
    %1797 = vst [vmem:[#allocation1] ss:$9 sm:$0xff] %v1747
    %1799 = vst [vmem:[%s1775] ss:$9 sm:$0xff] %v1748
    %1801 = vst [vmem:[%s1778] ss:$9 sm:$0xff] %v1749
    %1803 = vst [vmem:[%s1781] ss:$9 sm:$0xff] %v1750
    %1805 = vst [vmem:[%s1784] ss:$9 sm:$0xff] %v1751
    %1807 = vst [vmem:[%s1787] ss:$9 sm:$0xff] %v1752
    %1809 = vst [vmem:[%s1790] ss:$9 sm:$0xff] %v1753
    %1811 = vst [vmem:[%s1793] ss:$9 sm:$0xff] %v1754
    %v1812 = vld [vmem:[#allocation1] sm:$0xff]
    %v1831 = vunpack.c.l.b16 %v1756
    %v1832 = vunpack.c.h.b16 %v1756
    %v1833 = vunpack.c.l.b16 %v1757
    %v1834 = vunpack.c.h.b16 %v1757
    %v1835 = vunpack.c.l.b16 %v1758
    %v1836 = vunpack.c.h.b16 %v1758
    %v1837 = vunpack.c.l.b16 %v1759
    %v1838 = vunpack.c.h.b16 %v1759
    %v1839 = vunpack.c.l.b16 %v1760
    %v1840 = vunpack.c.h.b16 %v1760
    %v1841 = vunpack.c.l.b16 %v1761
    %v1842 = vunpack.c.h.b16 %v1761
    %v1843 = vunpack.c.l.b16 %v1762
    %v1844 = vunpack.c.h.b16 %v1762
    %v1845 = vunpack.c.l.b16 %v1763
    %v1846 = vunpack.c.h.b16 %v1763
    %v1847 = vunpack.c.l.b16 %v1764
    %v1848 = vunpack.c.h.b16 %v1764
    %v1849 = vunpack.c.l.b16 %v1765
    %v1850 = vunpack.c.h.b16 %v1765
    %v1851 = vunpack.c.l.b16 %v1766
    %v1852 = vunpack.c.h.b16 %v1766
    %v1853 = vunpack.c.l.b16 %v1767
    %v1854 = vunpack.c.h.b16 %v1767
    %v1855 = vunpack.c.l.b16 %v1768
    %v1856 = vunpack.c.h.b16 %v1768
    %v1857 = vunpack.c.l.b16 %v1769
    %v1858 = vunpack.c.h.b16 %v1769
    %v1859 = vunpack.c.l.b16 %v1770
    %v1860 = vunpack.c.h.b16 %v1770
    %v1861 = vunpack.c.l.b16 %v1771
    %v1862 = vunpack.c.h.b16 %v1771
    %v1863 = vpack.c.b16 %v1833, %v1831
    %v1864 = vpack.c.b16 %v1834, %v1832
    %v1865 = vpack.c.b16 %v1837, %v1835
    %v1866 = vpack.c.b16 %v1838, %v1836
    %v1867 = vpack.c.b16 %v1841, %v1839
    %v1868 = vpack.c.b16 %v1842, %v1840
    %v1869 = vpack.c.b16 %v1845, %v1843
    %v1870 = vpack.c.b16 %v1846, %v1844
    %v1871 = vpack.c.b16 %v1849, %v1847
    %v1872 = vpack.c.b16 %v1850, %v1848
    %v1873 = vpack.c.b16 %v1853, %v1851
    %v1874 = vpack.c.b16 %v1854, %v1852
    %v1875 = vpack.c.b16 %v1857, %v1855
    %v1876 = vpack.c.b16 %v1858, %v1856
    %v1877 = vpack.c.b16 %v1861, %v1859
    %v1878 = vpack.c.b16 %v1862, %v1860
    %1895 = vmatpush.bf16.msra.mxu0 %v1877
    %1896 = vmatpush.bf16.msra.mxu0 %v1875
    %1897 = vmatpush.bf16.msra.mxu0 %v1873
    %1898 = vmatpush.bf16.msra.mxu0 %v1871
    %1899 = vmatpush.bf16.msra.mxu0 %v1869
    %1900 = vmatpush.bf16.msra.mxu0 %v1867
    %1901 = vmatpush.bf16.msra.mxu0 %v1865
    %1902 = vmatpush.bf16.msra.mxu0 %v1863
    %1903 = vmatmul.bf16.gmra.mxu0 %v1795
    %v1904 = vpop.f32.mrf.mxu0
    %v1905 = vadd.f32 0.0, %v1904
    %v1906 = vpop.f32.mrf.mxu0
    %v1907 = vadd.f32 0.0, %v1906
    %1908 = vmatmul.bf16.gmra.mxu0 %v1812
    %v1909 = vpop.f32.mrf.mxu0
    %v1910 = vadd.f32 0.0, %v1909
    %v1911 = vpop.f32.mrf.mxu0
    %v1912 = vadd.f32 0.0, %v1911
    %1913 = vdwg.mxu0
    %1914 = vmatpush.bf16.msra.mxu0 %v1878
    %1915 = vmatpush.bf16.msra.mxu0 %v1876
    %1916 = vmatpush.bf16.msra.mxu0 %v1874
    %1917 = vmatpush.bf16.msra.mxu0 %v1872
    %1918 = vmatpush.bf16.msra.mxu0 %v1870
    %1919 = vmatpush.bf16.msra.mxu0 %v1868
    %1920 = vmatpush.bf16.msra.mxu0 %v1866
    %1921 = vmatpush.bf16.msra.mxu0 %v1864
    %1922 = vmatmul.bf16.gmra.mxu0 %v1795
    %v1923 = vpop.f32.mrf.mxu0
    %v1924 = vadd.f32 0.0, %v1923
    %v1925 = vpop.f32.mrf.mxu0
    %v1926 = vadd.f32 0.0, %v1925
    %1927 = vmatmul.bf16.gmra.mxu0 %v1812
    %v1928 = vpop.f32.mrf.mxu0
    %v1929 = vadd.f32 0.0, %v1928
    %v1930 = vpop.f32.mrf.mxu0
    %v1931 = vadd.f32 0.0, %v1930
    %1932 = vdwg.mxu0
    %v1933 = vadd.f32 %v1730, %v1905
    %v1934 = vadd.f32 %v1731, %v1924
    %v1935 = vadd.f32 %v1732, %v1907
    %v1936 = vadd.f32 %v1733, %v1926
    %v1937 = vadd.f32 %v1734, %v1910
    %v1938 = vadd.f32 %v1735, %v1929
    %v1939 = vadd.f32 %v1736, %v1912
    %v1940 = vadd.f32 %v1737, %v1931
    %v1941 = vld [vmem:[%s3] ss:$2 sm:$0x3]
    %v1943 = vperm.slane %v1941, 0
    %v1944 = vperm.slane %v1941, 1
    %v1947 = vmul.f32 %v1933, %v1943
    %v1948 = vmul.f32 %v1934, %v1944
    %v1949 = vmul.f32 %v1935, %v1943
    %v1950 = vmul.f32 %v1936, %v1944
    %v1951 = vmul.f32 %v1937, %v1943
    %v1952 = vmul.f32 %v1938, %v1944
    %v1953 = vmul.f32 %v1939, %v1943
    %v1954 = vmul.f32 %v1940, %v1944
    %s1955 = scalar_lea.vmem %s3, 1
    %v1956 = vld [vmem:[%s1955] ss:$2 sm:$0x3]
    %v1958 = vperm.slane %v1956, 0
    %v1959 = vperm.slane %v1956, 1
    %v1962 = vadd.f32 %v1947, %v1958
    %v1963 = vadd.f32 %v1948, %v1959
    %v1964 = vadd.f32 %v1949, %v1958
    %v1965 = vadd.f32 %v1950, %v1959
    %v1966 = vadd.f32 %v1951, %v1958
    %v1967 = vadd.f32 %v1952, %v1959
    %v1968 = vadd.f32 %v1953, %v1958
    %v1969 = vadd.f32 %v1954, %v1959
    %v1970 = vmax.f32 %v1962, 0.0
    %v1971 = vmax.f32 %v1963, 0.0
    %v1972 = vmax.f32 %v1964, 0.0
    %v1973 = vmax.f32 %v1965, 0.0
    %v1974 = vmax.f32 %v1966, 0.0
    %v1975 = vmax.f32 %v1967, 0.0
    %v1976 = vmax.f32 %v1968, 0.0
    %v1977 = vmax.f32 %v1969, 0.0
    %v1978 = vld [vmem:[%s1] sm:$0xf]
    %v1979 = vld [vmem:[%s1 + $0x4] sm:$0xf]
    %v1980 = vld [vmem:[%s1 + $0x8] sm:$0xf]
    %v1981 = vld [vmem:[%s1 + $0xc] sm:$0xf]
    %v1982 = vld [vmem:[%s1 + $0x10] sm:$0xf]
    %v1983 = vld [vmem:[%s1 + $0x14] sm:$0xf]
    %v1984 = vld [vmem:[%s1 + $0x18] sm:$0xf]
    %v1985 = vld [vmem:[%s1 + $0x1c] sm:$0xf]
    %v1986 = vld [vmem:[%s1 + $0x20] sm:$0xf]
    %v1987 = vld [vmem:[%s1 + $0x24] sm:$0xf]
    %v1988 = vld [vmem:[%s1 + $0x28] sm:$0xf]
    %v1989 = vld [vmem:[%s1 + $0x2c] sm:$0xf]
    %v1990 = vld [vmem:[%s1 + $0x30] sm:$0xf]
    %v1991 = vld [vmem:[%s1 + $0x34] sm:$0xf]
    %v1992 = vld [vmem:[%s1 + $0x38] sm:$0xf]
    %v1993 = vld [vmem:[%s1 + $0x3c] sm:$0xf]
    %2010 = vst [vmem:[#allocation1] ss:$4 sm:$0xff] %v1978
    %s2011 = scalar_lea.vmem [#allocation1], 1
    %2012 = vst [vmem:[%s2011] ss:$4 sm:$0xff] %v1979
    %s2013 = scalar_lea.vmem [#allocation1], 2
    %2014 = vst [vmem:[%s2013] ss:$4 sm:$0xff] %v1980
    %s2015 = scalar_lea.vmem [#allocation1], 3
    %2016 = vst [vmem:[%s2015] ss:$4 sm:$0xff] %v1981
    %s2017 = scalar_lea.vmem [#allocation1], 32
    %2018 = vst [vmem:[%s2017] ss:$4 sm:$0xff] %v1982
    %s2019 = scalar_lea.vmem [#allocation1], 33
    %2020 = vst [vmem:[%s2019] ss:$4 sm:$0xff] %v1983
    %s2021 = scalar_lea.vmem [#allocation1], 34
    %2022 = vst [vmem:[%s2021] ss:$4 sm:$0xff] %v1984
    %s2023 = scalar_lea.vmem [#allocation1], 35
    %2024 = vst [vmem:[%s2023] ss:$4 sm:$0xff] %v1985
    %v2025 = vld.sshfl [vmem:[#allocation1] sm:$0xff pattern:$0x73625140]
    %v2026 = vld.sshfl [vmem:[#allocation1 + $0x8] sm:$0xff pattern:$0x73625140]
    %v2027 = vld.sshfl [vmem:[#allocation1 + $0x20] sm:$0xff pattern:$0x73625140]
    %v2028 = vld.sshfl [vmem:[#allocation1 + $0x28] sm:$0xff pattern:$0x73625140]
    %2029 = vst [vmem:[#allocation1] ss:$4 sm:$0xff] %v1986
    %2030 = vst [vmem:[%s2011] ss:$4 sm:$0xff] %v1987
    %2031 = vst [vmem:[%s2013] ss:$4 sm:$0xff] %v1988
    %2032 = vst [vmem:[%s2015] ss:$4 sm:$0xff] %v1989
    %2033 = vst [vmem:[%s2017] ss:$4 sm:$0xff] %v1990
    %2034 = vst [vmem:[%s2019] ss:$4 sm:$0xff] %v1991
    %2035 = vst [vmem:[%s2021] ss:$4 sm:$0xff] %v1992
    %2036 = vst [vmem:[%s2023] ss:$4 sm:$0xff] %v1993
    %v2037 = vld.sshfl [vmem:[#allocation1] sm:$0xff pattern:$0x73625140]
    %v2038 = vld.sshfl [vmem:[#allocation1 + $0x8] sm:$0xff pattern:$0x73625140]
    %v2039 = vld.sshfl [vmem:[#allocation1 + $0x20] sm:$0xff pattern:$0x73625140]
    %v2040 = vld.sshfl [vmem:[#allocation1 + $0x28] sm:$0xff pattern:$0x73625140]
    %v2049 = vadd.f32 %v1970, %v2025
    %v2050 = vadd.f32 %v1971, %v2026
    %v2051 = vadd.f32 %v1972, %v2027
    %v2052 = vadd.f32 %v1973, %v2028
    %v2053 = vadd.f32 %v1974, %v2037
    %v2054 = vadd.f32 %v1975, %v2038
    %v2055 = vadd.f32 %v1976, %v2039
    %v2056 = vadd.f32 %v1977, %v2040
    %v2057 = vpack.c.bf16 %v2050, %v2049
    %v2058 = vpack.c.bf16 %v2052, %v2051
    %v2059 = vpack.c.bf16 %v2054, %v2053
    %v2060 = vpack.c.bf16 %v2056, %v2055
    %v2065 = vrot.slane %v2057, 3
    %v2066 = vrot.slane %v2058, 3
    %v2067 = vrot.slane %v2059, 3
    %v2068 = vrot.slane %v2060, 3
    %vm2069 = vcmask 1040384
    %v2072 = vsel %vm2069, %v2057, %v2065
    %vm2073 = vcmask 1041409
    %v2074 = vsel %vm2073, %v2057, %v2065
    %v2076 = vrot.slane %v2074, 1
    %vm2077 = vcmask 1042434
    %v2078 = vsel %vm2077, %v2057, %v2065
    %v2080 = vrot.slane %v2078, 2
    %vm2081 = vcmask 1043459
    %v2082 = vsel %vm2081, %v2057, %v2065
    %v2084 = vrot.slane %v2082, 3
    %v2087 = vsel %vm2069, %v2058, %v2066
    %v2088 = vsel %vm2073, %v2058, %v2066
    %v2090 = vrot.slane %v2088, 1
    %v2091 = vsel %vm2077, %v2058, %v2066
    %v2093 = vrot.slane %v2091, 2
    %v2094 = vsel %vm2081, %v2058, %v2066
    %v2096 = vrot.slane %v2094, 3
    %v2099 = vsel %vm2069, %v2059, %v2067
    %v2100 = vsel %vm2073, %v2059, %v2067
    %v2102 = vrot.slane %v2100, 1
    %v2103 = vsel %vm2077, %v2059, %v2067
    %v2105 = vrot.slane %v2103, 2
    %v2106 = vsel %vm2081, %v2059, %v2067
    %v2108 = vrot.slane %v2106, 3
    %v2111 = vsel %vm2069, %v2060, %v2068
    %v2112 = vsel %vm2073, %v2060, %v2068
    %v2114 = vrot.slane %v2112, 1
    %v2115 = vsel %vm2077, %v2060, %v2068
    %v2117 = vrot.slane %v2115, 2
    %v2118 = vsel %vm2081, %v2060, %v2068
    %v2120 = vrot.slane %v2118, 3
    %s2137 = scalar_lea.vmem [#allocation2], 12
    %2138 = vst [vmem:[%s2137] sm:$0x3] %v2072
    %2139 = vst [vmem:[%s2137 + $0x2] sm:$0x3] %v2076
    %2140 = vst [vmem:[%s2137 + $0x4] sm:$0x3] %v2080
    %2141 = vst [vmem:[%s2137 + $0x6] sm:$0x3] %v2084
    %2142 = vst [vmem:[%s2137 + $0xa] sm:$0x3] %v2087
    %2143 = vst [vmem:[%s2137 + $0xc] sm:$0x3] %v2090
    %2144 = vst [vmem:[%s2137 + $0xe] sm:$0x3] %v2093
    %2145 = vst [vmem:[%s2137 + $0x10] sm:$0x3] %v2096
    %2146 = vst [vmem:[%s2137 + $0x14] sm:$0x3] %v2099
    %2147 = vst [vmem:[%s2137 + $0x16] sm:$0x3] %v2102
    %2148 = vst [vmem:[%s2137 + $0x18] sm:$0x3] %v2105
    %2149 = vst [vmem:[%s2137 + $0x1a] sm:$0x3] %v2108
    %2150 = vst [vmem:[%s2137 + $0x1e] sm:$0x3] %v2111
    %2151 = vst [vmem:[%s2137 + $0x20] sm:$0x3] %v2114
    %2152 = vst [vmem:[%s2137 + $0x22] sm:$0x3] %v2117
    %2153 = vst [vmem:[%s2137 + $0x24] sm:$0x3] %v2120
    %v2154 = vld [vmem:[%s520] sm:$0x1]
    %v2155 = vld [vmem:[%s520 + $0x1] sm:$0x1]
    %v2156 = vld [vmem:[%s520 + $0x2] sm:$0x1]
    %v2157 = vld [vmem:[%s520 + $0x3] sm:$0x1]
    %v2158 = vld [vmem:[%s520 + $0x5] sm:$0x1]
    %v2159 = vld [vmem:[%s520 + $0x6] sm:$0x1]
    %v2160 = vld [vmem:[%s520 + $0x7] sm:$0x1]
    %v2161 = vld [vmem:[%s520 + $0x8] sm:$0x1]
    %v2162 = vld [vmem:[%s520 + $0xa] sm:$0x1]
    %v2163 = vld [vmem:[%s520 + $0xb] sm:$0x1]
    %v2164 = vld [vmem:[%s520 + $0xc] sm:$0x1]
    %v2165 = vld [vmem:[%s520 + $0xd] sm:$0x1]
    %v2166 = vld [vmem:[%s520 + $0xf] sm:$0x1]
    %v2167 = vld [vmem:[%s520 + $0x10] sm:$0x1]
    %v2168 = vld [vmem:[%s520 + $0x11] sm:$0x1]
    %v2169 = vld [vmem:[%s520 + $0x12] sm:$0x1]
    %v2170 = vld [vmem:[%s2] sm:$0xff]
    %v2171 = vld [vmem:[%s2 + $0x8] sm:$0xff]
    %v2172 = vld [vmem:[%s2 + $0x10] sm:$0xff]
    %v2173 = vld [vmem:[%s2 + $0x18] sm:$0xff]
    %v2174 = vld [vmem:[%s2 + $0x20] sm:$0xff]
    %v2175 = vld [vmem:[%s2 + $0x28] sm:$0xff]
    %v2176 = vld [vmem:[%s2 + $0x30] sm:$0xff]
    %v2177 = vld [vmem:[%s2 + $0x38] sm:$0xff]
    %v2178 = vld [vmem:[%s2 + $0x40] sm:$0xff]
    %v2179 = vld [vmem:[%s2 + $0x48] sm:$0xff]
    %v2180 = vld [vmem:[%s2 + $0x50] sm:$0xff]
    %v2181 = vld [vmem:[%s2 + $0x58] sm:$0xff]
    %v2182 = vld [vmem:[%s2 + $0x60] sm:$0xff]
    %v2183 = vld [vmem:[%s2 + $0x68] sm:$0xff]
    %v2184 = vld [vmem:[%s2 + $0x70] sm:$0xff]
    %v2185 = vld [vmem:[%s2 + $0x78] sm:$0xff]
    %s2186 = scalar_lea.vmem %s0, 351
    %v2187 = vld [vmem:[%s2186] sm:$0x1]
    %v2188 = vld [vmem:[%s2186 + $0x1] sm:$0x1]
    %v2189 = vld [vmem:[%s2186 + $0x2] sm:$0x1]
    %v2190 = vld [vmem:[%s2186 + $0x3] sm:$0x1]
    %v2191 = vld [vmem:[%s2186 + $0x5] sm:$0x1]
    %v2192 = vld [vmem:[%s2186 + $0x6] sm:$0x1]
    %v2193 = vld [vmem:[%s2186 + $0x7] sm:$0x1]
    %v2194 = vld [vmem:[%s2186 + $0x8] sm:$0x1]
    %v2195 = vld [vmem:[%s2186 + $0xa] sm:$0x1]
    %v2196 = vld [vmem:[%s2186 + $0xb] sm:$0x1]
    %v2197 = vld [vmem:[%s2186 + $0xc] sm:$0x1]
    %v2198 = vld [vmem:[%s2186 + $0xd] sm:$0x1]
    %v2199 = vld [vmem:[%s2186 + $0xf] sm:$0x1]
    %v2200 = vld [vmem:[%s2186 + $0x10] sm:$0x1]
    %v2201 = vld [vmem:[%s2186 + $0x11] sm:$0x1]
    %v2202 = vld [vmem:[%s2186 + $0x12] sm:$0x1]
    %v2203 = vld [vmem:[%s181] sm:$0xff]
    %v2204 = vld [vmem:[%s181 + $0x8] sm:$0xff]
    %v2205 = vld [vmem:[%s181 + $0x10] sm:$0xff]
    %v2206 = vld [vmem:[%s181 + $0x18] sm:$0xff]
    %v2207 = vld [vmem:[%s181 + $0x20] sm:$0xff]
    %v2208 = vld [vmem:[%s181 + $0x28] sm:$0xff]
    %v2209 = vld [vmem:[%s181 + $0x30] sm:$0xff]
    %v2210 = vld [vmem:[%s181 + $0x38] sm:$0xff]
    %v2211 = vld [vmem:[%s181 + $0x40] sm:$0xff]
    %v2212 = vld [vmem:[%s181 + $0x48] sm:$0xff]
    %v2213 = vld [vmem:[%s181 + $0x50] sm:$0xff]
    %v2214 = vld [vmem:[%s181 + $0x58] sm:$0xff]
    %v2215 = vld [vmem:[%s181 + $0x60] sm:$0xff]
    %v2216 = vld [vmem:[%s181 + $0x68] sm:$0xff]
    %v2217 = vld [vmem:[%s181 + $0x70] sm:$0xff]
    %v2218 = vld [vmem:[%s181 + $0x78] sm:$0xff]
    %2220 = vst [vmem:[#allocation1] ss:$9 sm:$0xff] %v2187
    %s2222 = scalar_lea.vmem [#allocation1], 1
    %2223 = vst [vmem:[%s2222] ss:$9 sm:$0xff] %v2188
    %s2225 = scalar_lea.vmem [#allocation1], 2
    %2226 = vst [vmem:[%s2225] ss:$9 sm:$0xff] %v2189
    %s2228 = scalar_lea.vmem [#allocation1], 3
    %2229 = vst [vmem:[%s2228] ss:$9 sm:$0xff] %v2190
    %s2231 = scalar_lea.vmem [#allocation1], 4
    %2232 = vst [vmem:[%s2231] ss:$9 sm:$0xff] %v2191
    %s2234 = scalar_lea.vmem [#allocation1], 5
    %2235 = vst [vmem:[%s2234] ss:$9 sm:$0xff] %v2192
    %s2237 = scalar_lea.vmem [#allocation1], 6
    %2238 = vst [vmem:[%s2237] ss:$9 sm:$0xff] %v2193
    %s2240 = scalar_lea.vmem [#allocation1], 7
    %2241 = vst [vmem:[%s2240] ss:$9 sm:$0xff] %v2194
    %v2242 = vld [vmem:[#allocation1] sm:$0xff]
    %2244 = vst [vmem:[#allocation1] ss:$9 sm:$0xff] %v2195
    %2246 = vst [vmem:[%s2222] ss:$9 sm:$0xff] %v2196
    %2248 = vst [vmem:[%s2225] ss:$9 sm:$0xff] %v2197
    %2250 = vst [vmem:[%s2228] ss:$9 sm:$0xff] %v2198
    %2252 = vst [vmem:[%s2231] ss:$9 sm:$0xff] %v2199
    %2254 = vst [vmem:[%s2234] ss:$9 sm:$0xff] %v2200
    %2256 = vst [vmem:[%s2237] ss:$9 sm:$0xff] %v2201
    %2258 = vst [vmem:[%s2240] ss:$9 sm:$0xff] %v2202
    %v2259 = vld [vmem:[#allocation1] sm:$0xff]
    %v2278 = vunpack.c.l.b16 %v2203
    %v2279 = vunpack.c.h.b16 %v2203
    %v2280 = vunpack.c.l.b16 %v2204
    %v2281 = vunpack.c.h.b16 %v2204
    %v2282 = vunpack.c.l.b16 %v2205
    %v2283 = vunpack.c.h.b16 %v2205
    %v2284 = vunpack.c.l.b16 %v2206
    %v2285 = vunpack.c.h.b16 %v2206
    %v2286 = vunpack.c.l.b16 %v2207
    %v2287 = vunpack.c.h.b16 %v2207
    %v2288 = vunpack.c.l.b16 %v2208
    %v2289 = vunpack.c.h.b16 %v2208
    %v2290 = vunpack.c.l.b16 %v2209
    %v2291 = vunpack.c.h.b16 %v2209
    %v2292 = vunpack.c.l.b16 %v2210
    %v2293 = vunpack.c.h.b16 %v2210
    %v2294 = vunpack.c.l.b16 %v2211
    %v2295 = vunpack.c.h.b16 %v2211
    %v2296 = vunpack.c.l.b16 %v2212
    %v2297 = vunpack.c.h.b16 %v2212
    %v2298 = vunpack.c.l.b16 %v2213
    %v2299 = vunpack.c.h.b16 %v2213
    %v2300 = vunpack.c.l.b16 %v2214
    %v2301 = vunpack.c.h.b16 %v2214
    %v2302 = vunpack.c.l.b16 %v2215
    %v2303 = vunpack.c.h.b16 %v2215
    %v2304 = vunpack.c.l.b16 %v2216
    %v2305 = vunpack.c.h.b16 %v2216
    %v2306 = vunpack.c.l.b16 %v2217
    %v2307 = vunpack.c.h.b16 %v2217
    %v2308 = vunpack.c.l.b16 %v2218
    %v2309 = vunpack.c.h.b16 %v2218
    %v2310 = vpack.c.b16 %v2280, %v2278
    %v2311 = vpack.c.b16 %v2281, %v2279
    %v2312 = vpack.c.b16 %v2284, %v2282
    %v2313 = vpack.c.b16 %v2285, %v2283
    %v2314 = vpack.c.b16 %v2288, %v2286
    %v2315 = vpack.c.b16 %v2289, %v2287
    %v2316 = vpack.c.b16 %v2292, %v2290
    %v2317 = vpack.c.b16 %v2293, %v2291
    %v2318 = vpack.c.b16 %v2296, %v2294
    %v2319 = vpack.c.b16 %v2297, %v2295
    %v2320 = vpack.c.b16 %v2300, %v2298
    %v2321 = vpack.c.b16 %v2301, %v2299
    %v2322 = vpack.c.b16 %v2304, %v2302
    %v2323 = vpack.c.b16 %v2305, %v2303
    %v2324 = vpack.c.b16 %v2308, %v2306
    %v2325 = vpack.c.b16 %v2309, %v2307
    %2342 = vmatpush.bf16.msra.mxu0 %v2324
    %2343 = vmatpush.bf16.msra.mxu0 %v2322
    %2344 = vmatpush.bf16.msra.mxu0 %v2320
    %2345 = vmatpush.bf16.msra.mxu0 %v2318
    %2346 = vmatpush.bf16.msra.mxu0 %v2316
    %2347 = vmatpush.bf16.msra.mxu0 %v2314
    %2348 = vmatpush.bf16.msra.mxu0 %v2312
    %2349 = vmatpush.bf16.msra.mxu0 %v2310
    %2350 = vmatmul.bf16.gmra.mxu0 %v2242
    %v2351 = vpop.f32.mrf.mxu0
    %v2352 = vadd.f32 0.0, %v2351
    %v2353 = vpop.f32.mrf.mxu0
    %v2354 = vadd.f32 0.0, %v2353
    %2355 = vmatmul.bf16.gmra.mxu0 %v2259
    %v2356 = vpop.f32.mrf.mxu0
    %v2357 = vadd.f32 0.0, %v2356
    %v2358 = vpop.f32.mrf.mxu0
    %v2359 = vadd.f32 0.0, %v2358
    %2360 = vdwg.mxu0
    %2361 = vmatpush.bf16.msra.mxu0 %v2325
    %2362 = vmatpush.bf16.msra.mxu0 %v2323
    %2363 = vmatpush.bf16.msra.mxu0 %v2321
    %2364 = vmatpush.bf16.msra.mxu0 %v2319
    %2365 = vmatpush.bf16.msra.mxu0 %v2317
    %2366 = vmatpush.bf16.msra.mxu0 %v2315
    %2367 = vmatpush.bf16.msra.mxu0 %v2313
    %2368 = vmatpush.bf16.msra.mxu0 %v2311
    %2369 = vmatmul.bf16.gmra.mxu0 %v2242
    %v2370 = vpop.f32.mrf.mxu0
    %v2371 = vadd.f32 0.0, %v2370
    %v2372 = vpop.f32.mrf.mxu0
    %v2373 = vadd.f32 0.0, %v2372
    %2374 = vmatmul.bf16.gmra.mxu0 %v2259
    %v2375 = vpop.f32.mrf.mxu0
    %v2376 = vadd.f32 0.0, %v2375
    %v2377 = vpop.f32.mrf.mxu0
    %v2378 = vadd.f32 0.0, %v2377
    %2379 = vdwg.mxu0
    %2381 = vst [vmem:[#allocation1] ss:$9 sm:$0xff] %v2154
    %s2383 = scalar_lea.vmem [#allocation1], 1
    %2384 = vst [vmem:[%s2383] ss:$9 sm:$0xff] %v2155
    %s2386 = scalar_lea.vmem [#allocation1], 2
    %2387 = vst [vmem:[%s2386] ss:$9 sm:$0xff] %v2156
    %s2389 = scalar_lea.vmem [#allocation1], 3
    %2390 = vst [vmem:[%s2389] ss:$9 sm:$0xff] %v2157
    %s2392 = scalar_lea.vmem [#allocation1], 4
    %2393 = vst [vmem:[%s2392] ss:$9 sm:$0xff] %v2158
    %s2395 = scalar_lea.vmem [#allocation1], 5
    %2396 = vst [vmem:[%s2395] ss:$9 sm:$0xff] %v2159
    %s2398 = scalar_lea.vmem [#allocation1], 6
    %2399 = vst [vmem:[%s2398] ss:$9 sm:$0xff] %v2160
    %s2401 = scalar_lea.vmem [#allocation1], 7
    %2402 = vst [vmem:[%s2401] ss:$9 sm:$0xff] %v2161
    %v2403 = vld [vmem:[#allocation1] sm:$0xff]
    %2405 = vst [vmem:[#allocation1] ss:$9 sm:$0xff] %v2162
    %2407 = vst [vmem:[%s2383] ss:$9 sm:$0xff] %v2163
    %2409 = vst [vmem:[%s2386] ss:$9 sm:$0xff] %v2164
    %2411 = vst [vmem:[%s2389] ss:$9 sm:$0xff] %v2165
    %2413 = vst [vmem:[%s2392] ss:$9 sm:$0xff] %v2166
    %2415 = vst [vmem:[%s2395] ss:$9 sm:$0xff] %v2167
    %2417 = vst [vmem:[%s2398] ss:$9 sm:$0xff] %v2168
    %2419 = vst [vmem:[%s2401] ss:$9 sm:$0xff] %v2169
    %v2420 = vld [vmem:[#allocation1] sm:$0xff]
    %v2439 = vunpack.c.l.b16 %v2170
    %v2440 = vunpack.c.h.b16 %v2170
    %v2441 = vunpack.c.l.b16 %v2171
    %v2442 = vunpack.c.h.b16 %v2171
    %v2443 = vunpack.c.l.b16 %v2172
    %v2444 = vunpack.c.h.b16 %v2172
    %v2445 = vunpack.c.l.b16 %v2173
    %v2446 = vunpack.c.h.b16 %v2173
    %v2447 = vunpack.c.l.b16 %v2174
    %v2448 = vunpack.c.h.b16 %v2174
    %v2449 = vunpack.c.l.b16 %v2175
    %v2450 = vunpack.c.h.b16 %v2175
    %v2451 = vunpack.c.l.b16 %v2176
    %v2452 = vunpack.c.h.b16 %v2176
    %v2453 = vunpack.c.l.b16 %v2177
    %v2454 = vunpack.c.h.b16 %v2177
    %v2455 = vunpack.c.l.b16 %v2178
    %v2456 = vunpack.c.h.b16 %v2178
    %v2457 = vunpack.c.l.b16 %v2179
    %v2458 = vunpack.c.h.b16 %v2179
    %v2459 = vunpack.c.l.b16 %v2180
    %v2460 = vunpack.c.h.b16 %v2180
    %v2461 = vunpack.c.l.b16 %v2181
    %v2462 = vunpack.c.h.b16 %v2181
    %v2463 = vunpack.c.l.b16 %v2182
    %v2464 = vunpack.c.h.b16 %v2182
    %v2465 = vunpack.c.l.b16 %v2183
    %v2466 = vunpack.c.h.b16 %v2183
    %v2467 = vunpack.c.l.b16 %v2184
    %v2468 = vunpack.c.h.b16 %v2184
    %v2469 = vunpack.c.l.b16 %v2185
    %v2470 = vunpack.c.h.b16 %v2185
    %v2471 = vpack.c.b16 %v2441, %v2439
    %v2472 = vpack.c.b16 %v2442, %v2440
    %v2473 = vpack.c.b16 %v2445, %v2443
    %v2474 = vpack.c.b16 %v2446, %v2444
    %v2475 = vpack.c.b16 %v2449, %v2447
    %v2476 = vpack.c.b16 %v2450, %v2448
    %v2477 = vpack.c.b16 %v2453, %v2451
    %v2478 = vpack.c.b16 %v2454, %v2452
    %v2479 = vpack.c.b16 %v2457, %v2455
    %v2480 = vpack.c.b16 %v2458, %v2456
    %v2481 = vpack.c.b16 %v2461, %v2459
    %v2482 = vpack.c.b16 %v2462, %v2460
    %v2483 = vpack.c.b16 %v2465, %v2463
    %v2484 = vpack.c.b16 %v2466, %v2464
    %v2485 = vpack.c.b16 %v2469, %v2467
    %v2486 = vpack.c.b16 %v2470, %v2468
    %2503 = vmatpush.bf16.msra.mxu0 %v2485
    %2504 = vmatpush.bf16.msra.mxu0 %v2483
    %2505 = vmatpush.bf16.msra.mxu0 %v2481
    %2506 = vmatpush.bf16.msra.mxu0 %v2479
    %2507 = vmatpush.bf16.msra.mxu0 %v2477
    %2508 = vmatpush.bf16.msra.mxu0 %v2475
    %2509 = vmatpush.bf16.msra.mxu0 %v2473
    %2510 = vmatpush.bf16.msra.mxu0 %v2471
    %2511 = vmatmul.bf16.gmra.mxu0 %v2403
    %v2512 = vpop.f32.mrf.mxu0
    %v2513 = vadd.f32 %v2352, %v2512
    %v2514 = vpop.f32.mrf.mxu0
    %v2515 = vadd.f32 %v2354, %v2514
    %2516 = vmatmul.bf16.gmra.mxu0 %v2420
    %v2517 = vpop.f32.mrf.mxu0
    %v2518 = vadd.f32 %v2357, %v2517
    %v2519 = vpop.f32.mrf.mxu0
    %v2520 = vadd.f32 %v2359, %v2519
    %2521 = vdwg.mxu0
    %2522 = vmatpush.bf16.msra.mxu0 %v2486
    %2523 = vmatpush.bf16.msra.mxu0 %v2484
    %2524 = vmatpush.bf16.msra.mxu0 %v2482
    %2525 = vmatpush.bf16.msra.mxu0 %v2480
    %2526 = vmatpush.bf16.msra.mxu0 %v2478
    %2527 = vmatpush.bf16.msra.mxu0 %v2476
    %2528 = vmatpush.bf16.msra.mxu0 %v2474
    %2529 = vmatpush.bf16.msra.mxu0 %v2472
    %2530 = vmatmul.bf16.gmra.mxu0 %v2403
    %v2531 = vpop.f32.mrf.mxu0
    %v2532 = vadd.f32 %v2371, %v2531
    %v2533 = vpop.f32.mrf.mxu0
    %v2534 = vadd.f32 %v2373, %v2533
    %2535 = vmatmul.bf16.gmra.mxu0 %v2420
    %v2536 = vpop.f32.mrf.mxu0
    %v2537 = vadd.f32 %v2376, %v2536
    %v2538 = vpop.f32.mrf.mxu0
    %v2539 = vadd.f32 %v2378, %v2538
    %2540 = vdwg.mxu0
    %s2541 = scalar_lea.vmem %s0, 376
    %v2542 = vld [vmem:[%s2541] sm:$0x1]
    %v2543 = vld [vmem:[%s2541 + $0x1] sm:$0x1]
    %v2544 = vld [vmem:[%s2541 + $0x2] sm:$0x1]
    %v2545 = vld [vmem:[%s2541 + $0x3] sm:$0x1]
    %v2546 = vld [vmem:[%s2541 + $0x5] sm:$0x1]
    %v2547 = vld [vmem:[%s2541 + $0x6] sm:$0x1]
    %v2548 = vld [vmem:[%s2541 + $0x7] sm:$0x1]
    %v2549 = vld [vmem:[%s2541 + $0x8] sm:$0x1]
    %v2550 = vld [vmem:[%s2541 + $0xa] sm:$0x1]
    %v2551 = vld [vmem:[%s2541 + $0xb] sm:$0x1]
    %v2552 = vld [vmem:[%s2541 + $0xc] sm:$0x1]
    %v2553 = vld [vmem:[%s2541 + $0xd] sm:$0x1]
    %v2554 = vld [vmem:[%s2541 + $0xf] sm:$0x1]
    %v2555 = vld [vmem:[%s2541 + $0x10] sm:$0x1]
    %v2556 = vld [vmem:[%s2541 + $0x11] sm:$0x1]
    %v2557 = vld [vmem:[%s2541 + $0x12] sm:$0x1]
    %v2558 = vld [vmem:[%s537] sm:$0xff]
    %v2559 = vld [vmem:[%s537 + $0x8] sm:$0xff]
    %v2560 = vld [vmem:[%s537 + $0x10] sm:$0xff]
    %v2561 = vld [vmem:[%s537 + $0x18] sm:$0xff]
    %v2562 = vld [vmem:[%s537 + $0x20] sm:$0xff]
    %v2563 = vld [vmem:[%s537 + $0x28] sm:$0xff]
    %v2564 = vld [vmem:[%s537 + $0x30] sm:$0xff]
    %v2565 = vld [vmem:[%s537 + $0x38] sm:$0xff]
    %v2566 = vld [vmem:[%s537 + $0x40] sm:$0xff]
    %v2567 = vld [vmem:[%s537 + $0x48] sm:$0xff]
    %v2568 = vld [vmem:[%s537 + $0x50] sm:$0xff]
    %v2569 = vld [vmem:[%s537 + $0x58] sm:$0xff]
    %v2570 = vld [vmem:[%s537 + $0x60] sm:$0xff]
    %v2571 = vld [vmem:[%s537 + $0x68] sm:$0xff]
    %v2572 = vld [vmem:[%s537 + $0x70] sm:$0xff]
    %v2573 = vld [vmem:[%s537 + $0x78] sm:$0xff]
    %2575 = vst [vmem:[#allocation1] ss:$9 sm:$0xff] %v2542
    %s2577 = scalar_lea.vmem [#allocation1], 1
    %2578 = vst [vmem:[%s2577] ss:$9 sm:$0xff] %v2543
    %s2580 = scalar_lea.vmem [#allocation1], 2
    %2581 = vst [vmem:[%s2580] ss:$9 sm:$0xff] %v2544
    %s2583 = scalar_lea.vmem [#allocation1], 3
    %2584 = vst [vmem:[%s2583] ss:$9 sm:$0xff] %v2545
    %s2586 = scalar_lea.vmem [#allocation1], 4
    %2587 = vst [vmem:[%s2586] ss:$9 sm:$0xff] %v2546
    %s2589 = scalar_lea.vmem [#allocation1], 5
    %2590 = vst [vmem:[%s2589] ss:$9 sm:$0xff] %v2547
    %s2592 = scalar_lea.vmem [#allocation1], 6
    %2593 = vst [vmem:[%s2592] ss:$9 sm:$0xff] %v2548
    %s2595 = scalar_lea.vmem [#allocation1], 7
    %2596 = vst [vmem:[%s2595] ss:$9 sm:$0xff] %v2549
    %v2597 = vld [vmem:[#allocation1] sm:$0xff]
    %2599 = vst [vmem:[#allocation1] ss:$9 sm:$0xff] %v2550
    %2601 = vst [vmem:[%s2577] ss:$9 sm:$0xff] %v2551
    %2603 = vst [vmem:[%s2580] ss:$9 sm:$0xff] %v2552
    %2605 = vst [vmem:[%s2583] ss:$9 sm:$0xff] %v2553
    %2607 = vst [vmem:[%s2586] ss:$9 sm:$0xff] %v2554
    %2609 = vst [vmem:[%s2589] ss:$9 sm:$0xff] %v2555
    %2611 = vst [vmem:[%s2592] ss:$9 sm:$0xff] %v2556
    %2613 = vst [vmem:[%s2595] ss:$9 sm:$0xff] %v2557
    %v2614 = vld [vmem:[#allocation1] sm:$0xff]
    %v2633 = vunpack.c.l.b16 %v2558
    %v2634 = vunpack.c.h.b16 %v2558
    %v2635 = vunpack.c.l.b16 %v2559
    %v2636 = vunpack.c.h.b16 %v2559
    %v2637 = vunpack.c.l.b16 %v2560
    %v2638 = vunpack.c.h.b16 %v2560
    %v2639 = vunpack.c.l.b16 %v2561
    %v2640 = vunpack.c.h.b16 %v2561
    %v2641 = vunpack.c.l.b16 %v2562
    %v2642 = vunpack.c.h.b16 %v2562
    %v2643 = vunpack.c.l.b16 %v2563
    %v2644 = vunpack.c.h.b16 %v2563
    %v2645 = vunpack.c.l.b16 %v2564
    %v2646 = vunpack.c.h.b16 %v2564
    %v2647 = vunpack.c.l.b16 %v2565
    %v2648 = vunpack.c.h.b16 %v2565
    %v2649 = vunpack.c.l.b16 %v2566
    %v2650 = vunpack.c.h.b16 %v2566
    %v2651 = vunpack.c.l.b16 %v2567
    %v2652 = vunpack.c.h.b16 %v2567
    %v2653 = vunpack.c.l.b16 %v2568
    %v2654 = vunpack.c.h.b16 %v2568
    %v2655 = vunpack.c.l.b16 %v2569
    %v2656 = vunpack.c.h.b16 %v2569
    %v2657 = vunpack.c.l.b16 %v2570
    %v2658 = vunpack.c.h.b16 %v2570
    %v2659 = vunpack.c.l.b16 %v2571
    %v2660 = vunpack.c.h.b16 %v2571
    %v2661 = vunpack.c.l.b16 %v2572
    %v2662 = vunpack.c.h.b16 %v2572
    %v2663 = vunpack.c.l.b16 %v2573
    %v2664 = vunpack.c.h.b16 %v2573
    %v2665 = vpack.c.b16 %v2635, %v2633
    %v2666 = vpack.c.b16 %v2636, %v2634
    %v2667 = vpack.c.b16 %v2639, %v2637
    %v2668 = vpack.c.b16 %v2640, %v2638
    %v2669 = vpack.c.b16 %v2643, %v2641
    %v2670 = vpack.c.b16 %v2644, %v2642
    %v2671 = vpack.c.b16 %v2647, %v2645
    %v2672 = vpack.c.b16 %v2648, %v2646
    %v2673 = vpack.c.b16 %v2651, %v2649
    %v2674 = vpack.c.b16 %v2652, %v2650
    %v2675 = vpack.c.b16 %v2655, %v2653
    %v2676 = vpack.c.b16 %v2656, %v2654
    %v2677 = vpack.c.b16 %v2659, %v2657
    %v2678 = vpack.c.b16 %v2660, %v2658
    %v2679 = vpack.c.b16 %v2663, %v2661
    %v2680 = vpack.c.b16 %v2664, %v2662
    %2697 = vmatpush.bf16.msra.mxu0 %v2679
    %2698 = vmatpush.bf16.msra.mxu0 %v2677
    %2699 = vmatpush.bf16.msra.mxu0 %v2675
    %2700 = vmatpush.bf16.msra.mxu0 %v2673
    %2701 = vmatpush.bf16.msra.mxu0 %v2671
    %2702 = vmatpush.bf16.msra.mxu0 %v2669
    %2703 = vmatpush.bf16.msra.mxu0 %v2667
    %2704 = vmatpush.bf16.msra.mxu0 %v2665
    %2705 = vmatmul.bf16.gmra.mxu0 %v2597
    %v2706 = vpop.f32.mrf.mxu0
    %v2707 = vadd.f32 0.0, %v2706
    %v2708 = vpop.f32.mrf.mxu0
    %v2709 = vadd.f32 0.0, %v2708
    %2710 = vmatmul.bf16.gmra.mxu0 %v2614
    %v2711 = vpop.f32.mrf.mxu0
    %v2712 = vadd.f32 0.0, %v2711
    %v2713 = vpop.f32.mrf.mxu0
    %v2714 = vadd.f32 0.0, %v2713
    %2715 = vdwg.mxu0
    %2716 = vmatpush.bf16.msra.mxu0 %v2680
    %2717 = vmatpush.bf16.msra.mxu0 %v2678
    %2718 = vmatpush.bf16.msra.mxu0 %v2676
    %2719 = vmatpush.bf16.msra.mxu0 %v2674
    %2720 = vmatpush.bf16.msra.mxu0 %v2672
    %2721 = vmatpush.bf16.msra.mxu0 %v2670
    %2722 = vmatpush.bf16.msra.mxu0 %v2668
    %2723 = vmatpush.bf16.msra.mxu0 %v2666
    %2724 = vmatmul.bf16.gmra.mxu0 %v2597
    %v2725 = vpop.f32.mrf.mxu0
    %v2726 = vadd.f32 0.0, %v2725
    %v2727 = vpop.f32.mrf.mxu0
    %v2728 = vadd.f32 0.0, %v2727
    %2729 = vmatmul.bf16.gmra.mxu0 %v2614
    %v2730 = vpop.f32.mrf.mxu0
    %v2731 = vadd.f32 0.0, %v2730
    %v2732 = vpop.f32.mrf.mxu0
    %v2733 = vadd.f32 0.0, %v2732
    %2734 = vdwg.mxu0
    %v2735 = vadd.f32 %v2513, %v2707
    %v2736 = vadd.f32 %v2532, %v2726
    %v2737 = vadd.f32 %v2515, %v2709
    %v2738 = vadd.f32 %v2534, %v2728
    %v2739 = vadd.f32 %v2518, %v2712
    %v2740 = vadd.f32 %v2537, %v2731
    %v2741 = vadd.f32 %v2520, %v2714
    %v2742 = vadd.f32 %v2539, %v2733
    %v2743 = vld [vmem:[%s1129] sm:$0x1]
    %v2744 = vld [vmem:[%s1129 + $0x1] sm:$0x1]
    %v2745 = vld [vmem:[%s1129 + $0x2] sm:$0x1]
    %v2746 = vld [vmem:[%s1129 + $0x3] sm:$0x1]
    %v2747 = vld [vmem:[%s1129 + $0x5] sm:$0x1]
    %v2748 = vld [vmem:[%s1129 + $0x6] sm:$0x1]
    %v2749 = vld [vmem:[%s1129 + $0x7] sm:$0x1]
    %v2750 = vld [vmem:[%s1129 + $0x8] sm:$0x1]
    %v2751 = vld [vmem:[%s1129 + $0xa] sm:$0x1]
    %v2752 = vld [vmem:[%s1129 + $0xb] sm:$0x1]
    %v2753 = vld [vmem:[%s1129 + $0xc] sm:$0x1]
    %v2754 = vld [vmem:[%s1129 + $0xd] sm:$0x1]
    %v2755 = vld [vmem:[%s1129 + $0xf] sm:$0x1]
    %v2756 = vld [vmem:[%s1129 + $0x10] sm:$0x1]
    %v2757 = vld [vmem:[%s1129 + $0x11] sm:$0x1]
    %v2758 = vld [vmem:[%s1129 + $0x12] sm:$0x1]
    %v2759 = vld [vmem:[%s740] sm:$0xff]
    %v2760 = vld [vmem:[%s740 + $0x8] sm:$0xff]
    %v2761 = vld [vmem:[%s740 + $0x10] sm:$0xff]
    %v2762 = vld [vmem:[%s740 + $0x18] sm:$0xff]
    %v2763 = vld [vmem:[%s740 + $0x20] sm:$0xff]
    %v2764 = vld [vmem:[%s740 + $0x28] sm:$0xff]
    %v2765 = vld [vmem:[%s740 + $0x30] sm:$0xff]
    %v2766 = vld [vmem:[%s740 + $0x38] sm:$0xff]
    %v2767 = vld [vmem:[%s740 + $0x40] sm:$0xff]
    %v2768 = vld [vmem:[%s740 + $0x48] sm:$0xff]
    %v2769 = vld [vmem:[%s740 + $0x50] sm:$0xff]
    %v2770 = vld [vmem:[%s740 + $0x58] sm:$0xff]
    %v2771 = vld [vmem:[%s740 + $0x60] sm:$0xff]
    %v2772 = vld [vmem:[%s740 + $0x68] sm:$0xff]
    %v2773 = vld [vmem:[%s740 + $0x70] sm:$0xff]
    %v2774 = vld [vmem:[%s740 + $0x78] sm:$0xff]
    %2776 = vst [vmem:[#allocation1] ss:$9 sm:$0xff] %v2743
    %s2778 = scalar_lea.vmem [#allocation1], 1
    %2779 = vst [vmem:[%s2778] ss:$9 sm:$0xff] %v2744
    %s2781 = scalar_lea.vmem [#allocation1], 2
    %2782 = vst [vmem:[%s2781] ss:$9 sm:$0xff] %v2745
    %s2784 = scalar_lea.vmem [#allocation1], 3
    %2785 = vst [vmem:[%s2784] ss:$9 sm:$0xff] %v2746
    %s2787 = scalar_lea.vmem [#allocation1], 4
    %2788 = vst [vmem:[%s2787] ss:$9 sm:$0xff] %v2747
    %s2790 = scalar_lea.vmem [#allocation1], 5
    %2791 = vst [vmem:[%s2790] ss:$9 sm:$0xff] %v2748
    %s2793 = scalar_lea.vmem [#allocation1], 6
    %2794 = vst [vmem:[%s2793] ss:$9 sm:$0xff] %v2749
    %s2796 = scalar_lea.vmem [#allocation1], 7
    %2797 = vst [vmem:[%s2796] ss:$9 sm:$0xff] %v2750
    %v2798 = vld [vmem:[#allocation1] sm:$0xff]
    %2800 = vst [vmem:[#allocation1] ss:$9 sm:$0xff] %v2751
    %2802 = vst [vmem:[%s2778] ss:$9 sm:$0xff] %v2752
    %2804 = vst [vmem:[%s2781] ss:$9 sm:$0xff] %v2753
    %2806 = vst [vmem:[%s2784] ss:$9 sm:$0xff] %v2754
    %2808 = vst [vmem:[%s2787] ss:$9 sm:$0xff] %v2755
    %2810 = vst [vmem:[%s2790] ss:$9 sm:$0xff] %v2756
    %2812 = vst [vmem:[%s2793] ss:$9 sm:$0xff] %v2757
    %2814 = vst [vmem:[%s2796] ss:$9 sm:$0xff] %v2758
    %v2815 = vld [vmem:[#allocation1] sm:$0xff]
    %v2834 = vunpack.c.l.b16 %v2759
    %v2835 = vunpack.c.h.b16 %v2759
    %v2836 = vunpack.c.l.b16 %v2760
    %v2837 = vunpack.c.h.b16 %v2760
    %v2838 = vunpack.c.l.b16 %v2761
    %v2839 = vunpack.c.h.b16 %v2761
    %v2840 = vunpack.c.l.b16 %v2762
    %v2841 = vunpack.c.h.b16 %v2762
    %v2842 = vunpack.c.l.b16 %v2763
    %v2843 = vunpack.c.h.b16 %v2763
    %v2844 = vunpack.c.l.b16 %v2764
    %v2845 = vunpack.c.h.b16 %v2764
    %v2846 = vunpack.c.l.b16 %v2765
    %v2847 = vunpack.c.h.b16 %v2765
    %v2848 = vunpack.c.l.b16 %v2766
    %v2849 = vunpack.c.h.b16 %v2766
    %v2850 = vunpack.c.l.b16 %v2767
    %v2851 = vunpack.c.h.b16 %v2767
    %v2852 = vunpack.c.l.b16 %v2768
    %v2853 = vunpack.c.h.b16 %v2768
    %v2854 = vunpack.c.l.b16 %v2769
    %v2855 = vunpack.c.h.b16 %v2769
    %v2856 = vunpack.c.l.b16 %v2770
    %v2857 = vunpack.c.h.b16 %v2770
    %v2858 = vunpack.c.l.b16 %v2771
    %v2859 = vunpack.c.h.b16 %v2771
    %v2860 = vunpack.c.l.b16 %v2772
    %v2861 = vunpack.c.h.b16 %v2772
    %v2862 = vunpack.c.l.b16 %v2773
    %v2863 = vunpack.c.h.b16 %v2773
    %v2864 = vunpack.c.l.b16 %v2774
    %v2865 = vunpack.c.h.b16 %v2774
    %v2866 = vpack.c.b16 %v2836, %v2834
    %v2867 = vpack.c.b16 %v2837, %v2835
    %v2868 = vpack.c.b16 %v2840, %v2838
    %v2869 = vpack.c.b16 %v2841, %v2839
    %v2870 = vpack.c.b16 %v2844, %v2842
    %v2871 = vpack.c.b16 %v2845, %v2843
    %v2872 = vpack.c.b16 %v2848, %v2846
    %v2873 = vpack.c.b16 %v2849, %v2847
    %v2874 = vpack.c.b16 %v2852, %v2850
    %v2875 = vpack.c.b16 %v2853, %v2851
    %v2876 = vpack.c.b16 %v2856, %v2854
    %v2877 = vpack.c.b16 %v2857, %v2855
    %v2878 = vpack.c.b16 %v2860, %v2858
    %v2879 = vpack.c.b16 %v2861, %v2859
    %v2880 = vpack.c.b16 %v2864, %v2862
    %v2881 = vpack.c.b16 %v2865, %v2863
    %2898 = vmatpush.bf16.msra.mxu0 %v2880
    %2899 = vmatpush.bf16.msra.mxu0 %v2878
    %2900 = vmatpush.bf16.msra.mxu0 %v2876
    %2901 = vmatpush.bf16.msra.mxu0 %v2874
    %2902 = vmatpush.bf16.msra.mxu0 %v2872
    %2903 = vmatpush.bf16.msra.mxu0 %v2870
    %2904 = vmatpush.bf16.msra.mxu0 %v2868
    %2905 = vmatpush.bf16.msra.mxu0 %v2866
    %2906 = vmatmul.bf16.gmra.mxu0 %v2798
    %v2907 = vpop.f32.mrf.mxu0
    %v2908 = vadd.f32 0.0, %v2907
    %v2909 = vpop.f32.mrf.mxu0
    %v2910 = vadd.f32 0.0, %v2909
    %2911 = vmatmul.bf16.gmra.mxu0 %v2815
    %v2912 = vpop.f32.mrf.mxu0
    %v2913 = vadd.f32 0.0, %v2912
    %v2914 = vpop.f32.mrf.mxu0
    %v2915 = vadd.f32 0.0, %v2914
    %2916 = vdwg.mxu0
    %2917 = vmatpush.bf16.msra.mxu0 %v2881
    %2918 = vmatpush.bf16.msra.mxu0 %v2879
    %2919 = vmatpush.bf16.msra.mxu0 %v2877
    %2920 = vmatpush.bf16.msra.mxu0 %v2875
    %2921 = vmatpush.bf16.msra.mxu0 %v2873
    %2922 = vmatpush.bf16.msra.mxu0 %v2871
    %2923 = vmatpush.bf16.msra.mxu0 %v2869
    %2924 = vmatpush.bf16.msra.mxu0 %v2867
    %2925 = vmatmul.bf16.gmra.mxu0 %v2798
    %v2926 = vpop.f32.mrf.mxu0
    %v2927 = vadd.f32 0.0, %v2926
    %v2928 = vpop.f32.mrf.mxu0
    %v2929 = vadd.f32 0.0, %v2928
    %2930 = vmatmul.bf16.gmra.mxu0 %v2815
    %v2931 = vpop.f32.mrf.mxu0
    %v2932 = vadd.f32 0.0, %v2931
    %v2933 = vpop.f32.mrf.mxu0
    %v2934 = vadd.f32 0.0, %v2933
    %2935 = vdwg.mxu0
    %v2936 = vadd.f32 %v2735, %v2908
    %v2937 = vadd.f32 %v2736, %v2927
    %v2938 = vadd.f32 %v2737, %v2910
    %v2939 = vadd.f32 %v2738, %v2929
    %v2940 = vadd.f32 %v2739, %v2913
    %v2941 = vadd.f32 %v2740, %v2932
    %v2942 = vadd.f32 %v2741, %v2915
    %v2943 = vadd.f32 %v2742, %v2934
    %s2944 = scalar_lea.vmem %s0, 56
    %v2945 = vld [vmem:[%s2944] sm:$0x1]
    %v2946 = vld [vmem:[%s2944 + $0x1] sm:$0x1]
    %v2947 = vld [vmem:[%s2944 + $0x2] sm:$0x1]
    %v2948 = vld [vmem:[%s2944 + $0x3] sm:$0x1]
    %v2949 = vld [vmem:[%s2944 + $0x5] sm:$0x1]
    %v2950 = vld [vmem:[%s2944 + $0x6] sm:$0x1]
    %v2951 = vld [vmem:[%s2944 + $0x7] sm:$0x1]
    %v2952 = vld [vmem:[%s2944 + $0x8] sm:$0x1]
    %v2953 = vld [vmem:[%s2944 + $0xa] sm:$0x1]
    %v2954 = vld [vmem:[%s2944 + $0xb] sm:$0x1]
    %v2955 = vld [vmem:[%s2944 + $0xc] sm:$0x1]
    %v2956 = vld [vmem:[%s2944 + $0xd] sm:$0x1]
    %v2957 = vld [vmem:[%s2944 + $0xf] sm:$0x1]
    %v2958 = vld [vmem:[%s2944 + $0x10] sm:$0x1]
    %v2959 = vld [vmem:[%s2944 + $0x11] sm:$0x1]
    %v2960 = vld [vmem:[%s2944 + $0x12] sm:$0x1]
    %v2961 = vld [vmem:[%s943] sm:$0xff]
    %v2962 = vld [vmem:[%s943 + $0x8] sm:$0xff]
    %v2963 = vld [vmem:[%s943 + $0x10] sm:$0xff]
    %v2964 = vld [vmem:[%s943 + $0x18] sm:$0xff]
    %v2965 = vld [vmem:[%s943 + $0x20] sm:$0xff]
    %v2966 = vld [vmem:[%s943 + $0x28] sm:$0xff]
    %v2967 = vld [vmem:[%s943 + $0x30] sm:$0xff]
    %v2968 = vld [vmem:[%s943 + $0x38] sm:$0xff]
    %v2969 = vld [vmem:[%s943 + $0x40] sm:$0xff]
    %v2970 = vld [vmem:[%s943 + $0x48] sm:$0xff]
    %v2971 = vld [vmem:[%s943 + $0x50] sm:$0xff]
    %v2972 = vld [vmem:[%s943 + $0x58] sm:$0xff]
    %v2973 = vld [vmem:[%s943 + $0x60] sm:$0xff]
    %v2974 = vld [vmem:[%s943 + $0x68] sm:$0xff]
    %v2975 = vld [vmem:[%s943 + $0x70] sm:$0xff]
    %v2976 = vld [vmem:[%s943 + $0x78] sm:$0xff]
    %2978 = vst [vmem:[#allocation1] ss:$9 sm:$0xff] %v2945
    %s2980 = scalar_lea.vmem [#allocation1], 1
    %2981 = vst [vmem:[%s2980] ss:$9 sm:$0xff] %v2946
    %s2983 = scalar_lea.vmem [#allocation1], 2
    %2984 = vst [vmem:[%s2983] ss:$9 sm:$0xff] %v2947
    %s2986 = scalar_lea.vmem [#allocation1], 3
    %2987 = vst [vmem:[%s2986] ss:$9 sm:$0xff] %v2948
    %s2989 = scalar_lea.vmem [#allocation1], 4
    %2990 = vst [vmem:[%s2989] ss:$9 sm:$0xff] %v2949
    %s2992 = scalar_lea.vmem [#allocation1], 5
    %2993 = vst [vmem:[%s2992] ss:$9 sm:$0xff] %v2950
    %s2995 = scalar_lea.vmem [#allocation1], 6
    %2996 = vst [vmem:[%s2995] ss:$9 sm:$0xff] %v2951
    %s2998 = scalar_lea.vmem [#allocation1], 7
    %2999 = vst [vmem:[%s2998] ss:$9 sm:$0xff] %v2952
    %v3000 = vld [vmem:[#allocation1] sm:$0xff]
    %3002 = vst [vmem:[#allocation1] ss:$9 sm:$0xff] %v2953
    %3004 = vst [vmem:[%s2980] ss:$9 sm:$0xff] %v2954
    %3006 = vst [vmem:[%s2983] ss:$9 sm:$0xff] %v2955
    %3008 = vst [vmem:[%s2986] ss:$9 sm:$0xff] %v2956
    %3010 = vst [vmem:[%s2989] ss:$9 sm:$0xff] %v2957
    %3012 = vst [vmem:[%s2992] ss:$9 sm:$0xff] %v2958
    %3014 = vst [vmem:[%s2995] ss:$9 sm:$0xff] %v2959
    %3016 = vst [vmem:[%s2998] ss:$9 sm:$0xff] %v2960
    %v3017 = vld [vmem:[#allocation1] sm:$0xff]
    %v3036 = vunpack.c.l.b16 %v2961
    %v3037 = vunpack.c.h.b16 %v2961
    %v3038 = vunpack.c.l.b16 %v2962
    %v3039 = vunpack.c.h.b16 %v2962
    %v3040 = vunpack.c.l.b16 %v2963
    %v3041 = vunpack.c.h.b16 %v2963
    %v3042 = vunpack.c.l.b16 %v2964
    %v3043 = vunpack.c.h.b16 %v2964
    %v3044 = vunpack.c.l.b16 %v2965
    %v3045 = vunpack.c.h.b16 %v2965
    %v3046 = vunpack.c.l.b16 %v2966
    %v3047 = vunpack.c.h.b16 %v2966
    %v3048 = vunpack.c.l.b16 %v2967
    %v3049 = vunpack.c.h.b16 %v2967
    %v3050 = vunpack.c.l.b16 %v2968
    %v3051 = vunpack.c.h.b16 %v2968
    %v3052 = vunpack.c.l.b16 %v2969
    %v3053 = vunpack.c.h.b16 %v2969
    %v3054 = vunpack.c.l.b16 %v2970
    %v3055 = vunpack.c.h.b16 %v2970
    %v3056 = vunpack.c.l.b16 %v2971
    %v3057 = vunpack.c.h.b16 %v2971
    %v3058 = vunpack.c.l.b16 %v2972
    %v3059 = vunpack.c.h.b16 %v2972
    %v3060 = vunpack.c.l.b16 %v2973
    %v3061 = vunpack.c.h.b16 %v2973
    %v3062 = vunpack.c.l.b16 %v2974
    %v3063 = vunpack.c.h.b16 %v2974
    %v3064 = vunpack.c.l.b16 %v2975
    %v3065 = vunpack.c.h.b16 %v2975
    %v3066 = vunpack.c.l.b16 %v2976
    %v3067 = vunpack.c.h.b16 %v2976
    %v3068 = vpack.c.b16 %v3038, %v3036
    %v3069 = vpack.c.b16 %v3039, %v3037
    %v3070 = vpack.c.b16 %v3042, %v3040
    %v3071 = vpack.c.b16 %v3043, %v3041
    %v3072 = vpack.c.b16 %v3046, %v3044
    %v3073 = vpack.c.b16 %v3047, %v3045
    %v3074 = vpack.c.b16 %v3050, %v3048
    %v3075 = vpack.c.b16 %v3051, %v3049
    %v3076 = vpack.c.b16 %v3054, %v3052
    %v3077 = vpack.c.b16 %v3055, %v3053
    %v3078 = vpack.c.b16 %v3058, %v3056
    %v3079 = vpack.c.b16 %v3059, %v3057
    %v3080 = vpack.c.b16 %v3062, %v3060
    %v3081 = vpack.c.b16 %v3063, %v3061
    %v3082 = vpack.c.b16 %v3066, %v3064
    %v3083 = vpack.c.b16 %v3067, %v3065
    %3100 = vmatpush.bf16.msra.mxu0 %v3082
    %3101 = vmatpush.bf16.msra.mxu0 %v3080
    %3102 = vmatpush.bf16.msra.mxu0 %v3078
    %3103 = vmatpush.bf16.msra.mxu0 %v3076
    %3104 = vmatpush.bf16.msra.mxu0 %v3074
    %3105 = vmatpush.bf16.msra.mxu0 %v3072
    %3106 = vmatpush.bf16.msra.mxu0 %v3070
    %3107 = vmatpush.bf16.msra.mxu0 %v3068
    %3108 = vmatmul.bf16.gmra.mxu0 %v3000
    %v3109 = vpop.f32.mrf.mxu0
    %v3110 = vadd.f32 0.0, %v3109
    %v3111 = vpop.f32.mrf.mxu0
    %v3112 = vadd.f32 0.0, %v3111
    %3113 = vmatmul.bf16.gmra.mxu0 %v3017
    %v3114 = vpop.f32.mrf.mxu0
    %v3115 = vadd.f32 0.0, %v3114
    %v3116 = vpop.f32.mrf.mxu0
    %v3117 = vadd.f32 0.0, %v3116
    %3118 = vdwg.mxu0
    %3119 = vmatpush.bf16.msra.mxu0 %v3083
    %3120 = vmatpush.bf16.msra.mxu0 %v3081
    %3121 = vmatpush.bf16.msra.mxu0 %v3079
    %3122 = vmatpush.bf16.msra.mxu0 %v3077
    %3123 = vmatpush.bf16.msra.mxu0 %v3075
    %3124 = vmatpush.bf16.msra.mxu0 %v3073
    %3125 = vmatpush.bf16.msra.mxu0 %v3071
    %3126 = vmatpush.bf16.msra.mxu0 %v3069
    %3127 = vmatmul.bf16.gmra.mxu0 %v3000
    %v3128 = vpop.f32.mrf.mxu0
    %v3129 = vadd.f32 0.0, %v3128
    %v3130 = vpop.f32.mrf.mxu0
    %v3131 = vadd.f32 0.0, %v3130
    %3132 = vmatmul.bf16.gmra.mxu0 %v3017
    %v3133 = vpop.f32.mrf.mxu0
    %v3134 = vadd.f32 0.0, %v3133
    %v3135 = vpop.f32.mrf.mxu0
    %v3136 = vadd.f32 0.0, %v3135
    %3137 = vdwg.mxu0
    %v3138 = vadd.f32 %v2936, %v3110
    %v3139 = vadd.f32 %v2937, %v3129
    %v3140 = vadd.f32 %v2938, %v3112
    %v3141 = vadd.f32 %v2939, %v3131
    %v3142 = vadd.f32 %v2940, %v3115
    %v3143 = vadd.f32 %v2941, %v3134
    %v3144 = vadd.f32 %v2942, %v3117
    %v3145 = vadd.f32 %v2943, %v3136
    %s3146 = scalar_lea.vmem %s0, 81
    %v3147 = vld [vmem:[%s3146] sm:$0x1]
    %v3148 = vld [vmem:[%s3146 + $0x1] sm:$0x1]
    %v3149 = vld [vmem:[%s3146 + $0x2] sm:$0x1]
    %v3150 = vld [vmem:[%s3146 + $0x3] sm:$0x1]
    %v3151 = vld [vmem:[%s3146 + $0x5] sm:$0x1]
    %v3152 = vld [vmem:[%s3146 + $0x6] sm:$0x1]
    %v3153 = vld [vmem:[%s3146 + $0x7] sm:$0x1]
    %v3154 = vld [vmem:[%s3146 + $0x8] sm:$0x1]
    %v3155 = vld [vmem:[%s3146 + $0xa] sm:$0x1]
    %v3156 = vld [vmem:[%s3146 + $0xb] sm:$0x1]
    %v3157 = vld [vmem:[%s3146 + $0xc] sm:$0x1]
    %v3158 = vld [vmem:[%s3146 + $0xd] sm:$0x1]
    %v3159 = vld [vmem:[%s3146 + $0xf] sm:$0x1]
    %v3160 = vld [vmem:[%s3146 + $0x10] sm:$0x1]
    %v3161 = vld [vmem:[%s3146 + $0x11] sm:$0x1]
    %v3162 = vld [vmem:[%s3146 + $0x12] sm:$0x1]
    %v3163 = vld [vmem:[%s1146] sm:$0xff]
    %v3164 = vld [vmem:[%s1146 + $0x8] sm:$0xff]
    %v3165 = vld [vmem:[%s1146 + $0x10] sm:$0xff]
    %v3166 = vld [vmem:[%s1146 + $0x18] sm:$0xff]
    %v3167 = vld [vmem:[%s1146 + $0x20] sm:$0xff]
    %v3168 = vld [vmem:[%s1146 + $0x28] sm:$0xff]
    %v3169 = vld [vmem:[%s1146 + $0x30] sm:$0xff]
    %v3170 = vld [vmem:[%s1146 + $0x38] sm:$0xff]
    %v3171 = vld [vmem:[%s1146 + $0x40] sm:$0xff]
    %v3172 = vld [vmem:[%s1146 + $0x48] sm:$0xff]
    %v3173 = vld [vmem:[%s1146 + $0x50] sm:$0xff]
    %v3174 = vld [vmem:[%s1146 + $0x58] sm:$0xff]
    %v3175 = vld [vmem:[%s1146 + $0x60] sm:$0xff]
    %v3176 = vld [vmem:[%s1146 + $0x68] sm:$0xff]
    %v3177 = vld [vmem:[%s1146 + $0x70] sm:$0xff]
    %v3178 = vld [vmem:[%s1146 + $0x78] sm:$0xff]
    %3180 = vst [vmem:[#allocation1] ss:$9 sm:$0xff] %v3147
    %s3182 = scalar_lea.vmem [#allocation1], 1
    %3183 = vst [vmem:[%s3182] ss:$9 sm:$0xff] %v3148
    %s3185 = scalar_lea.vmem [#allocation1], 2
    %3186 = vst [vmem:[%s3185] ss:$9 sm:$0xff] %v3149
    %s3188 = scalar_lea.vmem [#allocation1], 3
    %3189 = vst [vmem:[%s3188] ss:$9 sm:$0xff] %v3150
    %s3191 = scalar_lea.vmem [#allocation1], 4
    %3192 = vst [vmem:[%s3191] ss:$9 sm:$0xff] %v3151
    %s3194 = scalar_lea.vmem [#allocation1], 5
    %3195 = vst [vmem:[%s3194] ss:$9 sm:$0xff] %v3152
    %s3197 = scalar_lea.vmem [#allocation1], 6
    %3198 = vst [vmem:[%s3197] ss:$9 sm:$0xff] %v3153
    %s3200 = scalar_lea.vmem [#allocation1], 7
    %3201 = vst [vmem:[%s3200] ss:$9 sm:$0xff] %v3154
    %v3202 = vld [vmem:[#allocation1] sm:$0xff]
    %3204 = vst [vmem:[#allocation1] ss:$9 sm:$0xff] %v3155
    %3206 = vst [vmem:[%s3182] ss:$9 sm:$0xff] %v3156
    %3208 = vst [vmem:[%s3185] ss:$9 sm:$0xff] %v3157
    %3210 = vst [vmem:[%s3188] ss:$9 sm:$0xff] %v3158
    %3212 = vst [vmem:[%s3191] ss:$9 sm:$0xff] %v3159
    %3214 = vst [vmem:[%s3194] ss:$9 sm:$0xff] %v3160
    %3216 = vst [vmem:[%s3197] ss:$9 sm:$0xff] %v3161
    %3218 = vst [vmem:[%s3200] ss:$9 sm:$0xff] %v3162
    %v3219 = vld [vmem:[#allocation1] sm:$0xff]
    %v3238 = vunpack.c.l.b16 %v3163
    %v3239 = vunpack.c.h.b16 %v3163
    %v3240 = vunpack.c.l.b16 %v3164
    %v3241 = vunpack.c.h.b16 %v3164
    %v3242 = vunpack.c.l.b16 %v3165
    %v3243 = vunpack.c.h.b16 %v3165
    %v3244 = vunpack.c.l.b16 %v3166
    %v3245 = vunpack.c.h.b16 %v3166
    %v3246 = vunpack.c.l.b16 %v3167
    %v3247 = vunpack.c.h.b16 %v3167
    %v3248 = vunpack.c.l.b16 %v3168
    %v3249 = vunpack.c.h.b16 %v3168
    %v3250 = vunpack.c.l.b16 %v3169
    %v3251 = vunpack.c.h.b16 %v3169
    %v3252 = vunpack.c.l.b16 %v3170
    %v3253 = vunpack.c.h.b16 %v3170
    %v3254 = vunpack.c.l.b16 %v3171
    %v3255 = vunpack.c.h.b16 %v3171
    %v3256 = vunpack.c.l.b16 %v3172
    %v3257 = vunpack.c.h.b16 %v3172
    %v3258 = vunpack.c.l.b16 %v3173
    %v3259 = vunpack.c.h.b16 %v3173
    %v3260 = vunpack.c.l.b16 %v3174
    %v3261 = vunpack.c.h.b16 %v3174
    %v3262 = vunpack.c.l.b16 %v3175
    %v3263 = vunpack.c.h.b16 %v3175
    %v3264 = vunpack.c.l.b16 %v3176
    %v3265 = vunpack.c.h.b16 %v3176
    %v3266 = vunpack.c.l.b16 %v3177
    %v3267 = vunpack.c.h.b16 %v3177
    %v3268 = vunpack.c.l.b16 %v3178
    %v3269 = vunpack.c.h.b16 %v3178
    %v3270 = vpack.c.b16 %v3240, %v3238
    %v3271 = vpack.c.b16 %v3241, %v3239
    %v3272 = vpack.c.b16 %v3244, %v3242
    %v3273 = vpack.c.b16 %v3245, %v3243
    %v3274 = vpack.c.b16 %v3248, %v3246
    %v3275 = vpack.c.b16 %v3249, %v3247
    %v3276 = vpack.c.b16 %v3252, %v3250
    %v3277 = vpack.c.b16 %v3253, %v3251
    %v3278 = vpack.c.b16 %v3256, %v3254
    %v3279 = vpack.c.b16 %v3257, %v3255
    %v3280 = vpack.c.b16 %v3260, %v3258
    %v3281 = vpack.c.b16 %v3261, %v3259
    %v3282 = vpack.c.b16 %v3264, %v3262
    %v3283 = vpack.c.b16 %v3265, %v3263
    %v3284 = vpack.c.b16 %v3268, %v3266
    %v3285 = vpack.c.b16 %v3269, %v3267
    %3302 = vmatpush.bf16.msra.mxu0 %v3284
    %3303 = vmatpush.bf16.msra.mxu0 %v3282
    %3304 = vmatpush.bf16.msra.mxu0 %v3280
    %3305 = vmatpush.bf16.msra.mxu0 %v3278
    %3306 = vmatpush.bf16.msra.mxu0 %v3276
    %3307 = vmatpush.bf16.msra.mxu0 %v3274
    %3308 = vmatpush.bf16.msra.mxu0 %v3272
    %3309 = vmatpush.bf16.msra.mxu0 %v3270
    %3310 = vmatmul.bf16.gmra.mxu0 %v3202
    %v3311 = vpop.f32.mrf.mxu0
    %v3312 = vadd.f32 0.0, %v3311
    %v3313 = vpop.f32.mrf.mxu0
    %v3314 = vadd.f32 0.0, %v3313
    %3315 = vmatmul.bf16.gmra.mxu0 %v3219
    %v3316 = vpop.f32.mrf.mxu0
    %v3317 = vadd.f32 0.0, %v3316
    %v3318 = vpop.f32.mrf.mxu0
    %v3319 = vadd.f32 0.0, %v3318
    %3320 = vdwg.mxu0
    %3321 = vmatpush.bf16.msra.mxu0 %v3285
    %3322 = vmatpush.bf16.msra.mxu0 %v3283
    %3323 = vmatpush.bf16.msra.mxu0 %v3281
    %3324 = vmatpush.bf16.msra.mxu0 %v3279
    %3325 = vmatpush.bf16.msra.mxu0 %v3277
    %3326 = vmatpush.bf16.msra.mxu0 %v3275
    %3327 = vmatpush.bf16.msra.mxu0 %v3273
    %3328 = vmatpush.bf16.msra.mxu0 %v3271
    %3329 = vmatmul.bf16.gmra.mxu0 %v3202
    %v3330 = vpop.f32.mrf.mxu0
    %v3331 = vadd.f32 0.0, %v3330
    %v3332 = vpop.f32.mrf.mxu0
    %v3333 = vadd.f32 0.0, %v3332
    %3334 = vmatmul.bf16.gmra.mxu0 %v3219
    %v3335 = vpop.f32.mrf.mxu0
    %v3336 = vadd.f32 0.0, %v3335
    %v3337 = vpop.f32.mrf.mxu0
    %v3338 = vadd.f32 0.0, %v3337
    %3339 = vdwg.mxu0
    %v3340 = vadd.f32 %v3138, %v3312
    %v3341 = vadd.f32 %v3139, %v3331
    %v3342 = vadd.f32 %v3140, %v3314
    %v3343 = vadd.f32 %v3141, %v3333
    %v3344 = vadd.f32 %v3142, %v3317
    %v3345 = vadd.f32 %v3143, %v3336
    %v3346 = vadd.f32 %v3144, %v3319
    %v3347 = vadd.f32 %v3145, %v3338
    %v3348 = vld [vmem:[%s1738] sm:$0x1]
    %v3349 = vld [vmem:[%s1738 + $0x1] sm:$0x1]
    %v3350 = vld [vmem:[%s1738 + $0x2] sm:$0x1]
    %v3351 = vld [vmem:[%s1738 + $0x3] sm:$0x1]
    %v3352 = vld [vmem:[%s1738 + $0x5] sm:$0x1]
    %v3353 = vld [vmem:[%s1738 + $0x6] sm:$0x1]
    %v3354 = vld [vmem:[%s1738 + $0x7] sm:$0x1]
    %v3355 = vld [vmem:[%s1738 + $0x8] sm:$0x1]
    %v3356 = vld [vmem:[%s1738 + $0xa] sm:$0x1]
    %v3357 = vld [vmem:[%s1738 + $0xb] sm:$0x1]
    %v3358 = vld [vmem:[%s1738 + $0xc] sm:$0x1]
    %v3359 = vld [vmem:[%s1738 + $0xd] sm:$0x1]
    %v3360 = vld [vmem:[%s1738 + $0xf] sm:$0x1]
    %v3361 = vld [vmem:[%s1738 + $0x10] sm:$0x1]
    %v3362 = vld [vmem:[%s1738 + $0x11] sm:$0x1]
    %v3363 = vld [vmem:[%s1738 + $0x12] sm:$0x1]
    %v3364 = vld [vmem:[%s1349] sm:$0xff]
    %v3365 = vld [vmem:[%s1349 + $0x8] sm:$0xff]
    %v3366 = vld [vmem:[%s1349 + $0x10] sm:$0xff]
    %v3367 = vld [vmem:[%s1349 + $0x18] sm:$0xff]
    %v3368 = vld [vmem:[%s1349 + $0x20] sm:$0xff]
    %v3369 = vld [vmem:[%s1349 + $0x28] sm:$0xff]
    %v3370 = vld [vmem:[%s1349 + $0x30] sm:$0xff]
    %v3371 = vld [vmem:[%s1349 + $0x38] sm:$0xff]
    %v3372 = vld [vmem:[%s1349 + $0x40] sm:$0xff]
    %v3373 = vld [vmem:[%s1349 + $0x48] sm:$0xff]
    %v3374 = vld [vmem:[%s1349 + $0x50] sm:$0xff]
    %v3375 = vld [vmem:[%s1349 + $0x58] sm:$0xff]
    %v3376 = vld [vmem:[%s1349 + $0x60] sm:$0xff]
    %v3377 = vld [vmem:[%s1349 + $0x68] sm:$0xff]
    %v3378 = vld [vmem:[%s1349 + $0x70] sm:$0xff]
    %v3379 = vld [vmem:[%s1349 + $0x78] sm:$0xff]
    %3381 = vst [vmem:[#allocation1] ss:$9 sm:$0xff] %v3348
    %s3383 = scalar_lea.vmem [#allocation1], 1
    %3384 = vst [vmem:[%s3383] ss:$9 sm:$0xff] %v3349
    %s3386 = scalar_lea.vmem [#allocation1], 2
    %3387 = vst [vmem:[%s3386] ss:$9 sm:$0xff] %v3350
    %s3389 = scalar_lea.vmem [#allocation1], 3
    %3390 = vst [vmem:[%s3389] ss:$9 sm:$0xff] %v3351
    %s3392 = scalar_lea.vmem [#allocation1], 4
    %3393 = vst [vmem:[%s3392] ss:$9 sm:$0xff] %v3352
    %s3395 = scalar_lea.vmem [#allocation1], 5
    %3396 = vst [vmem:[%s3395] ss:$9 sm:$0xff] %v3353
    %s3398 = scalar_lea.vmem [#allocation1], 6
    %3399 = vst [vmem:[%s3398] ss:$9 sm:$0xff] %v3354
    %s3401 = scalar_lea.vmem [#allocation1], 7
    %3402 = vst [vmem:[%s3401] ss:$9 sm:$0xff] %v3355
    %v3403 = vld [vmem:[#allocation1] sm:$0xff]
    %3405 = vst [vmem:[#allocation1] ss:$9 sm:$0xff] %v3356
    %3407 = vst [vmem:[%s3383] ss:$9 sm:$0xff] %v3357
    %3409 = vst [vmem:[%s3386] ss:$9 sm:$0xff] %v3358
    %3411 = vst [vmem:[%s3389] ss:$9 sm:$0xff] %v3359
    %3413 = vst [vmem:[%s3392] ss:$9 sm:$0xff] %v3360
    %3415 = vst [vmem:[%s3395] ss:$9 sm:$0xff] %v3361
    %3417 = vst [vmem:[%s3398] ss:$9 sm:$0xff] %v3362
    %3419 = vst [vmem:[%s3401] ss:$9 sm:$0xff] %v3363
    %v3420 = vld [vmem:[#allocation1] sm:$0xff]
    %v3439 = vunpack.c.l.b16 %v3364
    %v3440 = vunpack.c.h.b16 %v3364
    %v3441 = vunpack.c.l.b16 %v3365
    %v3442 = vunpack.c.h.b16 %v3365
    %v3443 = vunpack.c.l.b16 %v3366
    %v3444 = vunpack.c.h.b16 %v3366
    %v3445 = vunpack.c.l.b16 %v3367
    %v3446 = vunpack.c.h.b16 %v3367
    %v3447 = vunpack.c.l.b16 %v3368
    %v3448 = vunpack.c.h.b16 %v3368
    %v3449 = vunpack.c.l.b16 %v3369
    %v3450 = vunpack.c.h.b16 %v3369
    %v3451 = vunpack.c.l.b16 %v3370
    %v3452 = vunpack.c.h.b16 %v3370
    %v3453 = vunpack.c.l.b16 %v3371
    %v3454 = vunpack.c.h.b16 %v3371
    %v3455 = vunpack.c.l.b16 %v3372
    %v3456 = vunpack.c.h.b16 %v3372
    %v3457 = vunpack.c.l.b16 %v3373
    %v3458 = vunpack.c.h.b16 %v3373
    %v3459 = vunpack.c.l.b16 %v3374
    %v3460 = vunpack.c.h.b16 %v3374
    %v3461 = vunpack.c.l.b16 %v3375
    %v3462 = vunpack.c.h.b16 %v3375
    %v3463 = vunpack.c.l.b16 %v3376
    %v3464 = vunpack.c.h.b16 %v3376
    %v3465 = vunpack.c.l.b16 %v3377
    %v3466 = vunpack.c.h.b16 %v3377
    %v3467 = vunpack.c.l.b16 %v3378
    %v3468 = vunpack.c.h.b16 %v3378
    %v3469 = vunpack.c.l.b16 %v3379
    %v3470 = vunpack.c.h.b16 %v3379
    %v3471 = vpack.c.b16 %v3441, %v3439
    %v3472 = vpack.c.b16 %v3442, %v3440
    %v3473 = vpack.c.b16 %v3445, %v3443
    %v3474 = vpack.c.b16 %v3446, %v3444
    %v3475 = vpack.c.b16 %v3449, %v3447
    %v3476 = vpack.c.b16 %v3450, %v3448
    %v3477 = vpack.c.b16 %v3453, %v3451
    %v3478 = vpack.c.b16 %v3454, %v3452
    %v3479 = vpack.c.b16 %v3457, %v3455
    %v3480 = vpack.c.b16 %v3458, %v3456
    %v3481 = vpack.c.b16 %v3461, %v3459
    %v3482 = vpack.c.b16 %v3462, %v3460
    %v3483 = vpack.c.b16 %v3465, %v3463
    %v3484 = vpack.c.b16 %v3466, %v3464
    %v3485 = vpack.c.b16 %v3469, %v3467
    %v3486 = vpack.c.b16 %v3470, %v3468
    %3503 = vmatpush.bf16.msra.mxu0 %v3485
    %3504 = vmatpush.bf16.msra.mxu0 %v3483
    %3505 = vmatpush.bf16.msra.mxu0 %v3481
    %3506 = vmatpush.bf16.msra.mxu0 %v3479
    %3507 = vmatpush.bf16.msra.mxu0 %v3477
    %3508 = vmatpush.bf16.msra.mxu0 %v3475
    %3509 = vmatpush.bf16.msra.mxu0 %v3473
    %3510 = vmatpush.bf16.msra.mxu0 %v3471
    %3511 = vmatmul.bf16.gmra.mxu0 %v3403
    %v3512 = vpop.f32.mrf.mxu0
    %v3513 = vadd.f32 0.0, %v3512
    %v3514 = vpop.f32.mrf.mxu0
    %v3515 = vadd.f32 0.0, %v3514
    %3516 = vmatmul.bf16.gmra.mxu0 %v3420
    %v3517 = vpop.f32.mrf.mxu0
    %v3518 = vadd.f32 0.0, %v3517
    %v3519 = vpop.f32.mrf.mxu0
    %v3520 = vadd.f32 0.0, %v3519
    %3521 = vdwg.mxu0
    %3522 = vmatpush.bf16.msra.mxu0 %v3486
    %3523 = vmatpush.bf16.msra.mxu0 %v3484
    %3524 = vmatpush.bf16.msra.mxu0 %v3482
    %3525 = vmatpush.bf16.msra.mxu0 %v3480
    %3526 = vmatpush.bf16.msra.mxu0 %v3478
    %3527 = vmatpush.bf16.msra.mxu0 %v3476
    %3528 = vmatpush.bf16.msra.mxu0 %v3474
    %3529 = vmatpush.bf16.msra.mxu0 %v3472
    %3530 = vmatmul.bf16.gmra.mxu0 %v3403
    %v3531 = vpop.f32.mrf.mxu0
    %v3532 = vadd.f32 0.0, %v3531
    %v3533 = vpop.f32.mrf.mxu0
    %v3534 = vadd.f32 0.0, %v3533
    %3535 = vmatmul.bf16.gmra.mxu0 %v3420
    %v3536 = vpop.f32.mrf.mxu0
    %v3537 = vadd.f32 0.0, %v3536
    %v3538 = vpop.f32.mrf.mxu0
    %v3539 = vadd.f32 0.0, %v3538
    %3540 = vdwg.mxu0
    %v3541 = vadd.f32 %v3340, %v3513
    %v3542 = vadd.f32 %v3341, %v3532
    %v3543 = vadd.f32 %v3342, %v3515
    %v3544 = vadd.f32 %v3343, %v3534
    %v3545 = vadd.f32 %v3344, %v3518
    %v3546 = vadd.f32 %v3345, %v3537
    %v3547 = vadd.f32 %v3346, %v3520
    %v3548 = vadd.f32 %v3347, %v3539
    %s3549 = scalar_lea.vmem %s0, 156
    %v3550 = vld [vmem:[%s3549] sm:$0x1]
    %v3551 = vld [vmem:[%s3549 + $0x1] sm:$0x1]
    %v3552 = vld [vmem:[%s3549 + $0x2] sm:$0x1]
    %v3553 = vld [vmem:[%s3549 + $0x3] sm:$0x1]
    %v3554 = vld [vmem:[%s3549 + $0x5] sm:$0x1]
    %v3555 = vld [vmem:[%s3549 + $0x6] sm:$0x1]
    %v3556 = vld [vmem:[%s3549 + $0x7] sm:$0x1]
    %v3557 = vld [vmem:[%s3549 + $0x8] sm:$0x1]
    %v3558 = vld [vmem:[%s3549 + $0xa] sm:$0x1]
    %v3559 = vld [vmem:[%s3549 + $0xb] sm:$0x1]
    %v3560 = vld [vmem:[%s3549 + $0xc] sm:$0x1]
    %v3561 = vld [vmem:[%s3549 + $0xd] sm:$0x1]
    %v3562 = vld [vmem:[%s3549 + $0xf] sm:$0x1]
    %v3563 = vld [vmem:[%s3549 + $0x10] sm:$0x1]
    %v3564 = vld [vmem:[%s3549 + $0x11] sm:$0x1]
    %v3565 = vld [vmem:[%s3549 + $0x12] sm:$0x1]
    %v3566 = vld [vmem:[%s1552] sm:$0xff]
    %v3567 = vld [vmem:[%s1552 + $0x8] sm:$0xff]
    %v3568 = vld [vmem:[%s1552 + $0x10] sm:$0xff]
    %v3569 = vld [vmem:[%s1552 + $0x18] sm:$0xff]
    %v3570 = vld [vmem:[%s1552 + $0x20] sm:$0xff]
    %v3571 = vld [vmem:[%s1552 + $0x28] sm:$0xff]
    %v3572 = vld [vmem:[%s1552 + $0x30] sm:$0xff]
    %v3573 = vld [vmem:[%s1552 + $0x38] sm:$0xff]
    %v3574 = vld [vmem:[%s1552 + $0x40] sm:$0xff]
    %v3575 = vld [vmem:[%s1552 + $0x48] sm:$0xff]
    %v3576 = vld [vmem:[%s1552 + $0x50] sm:$0xff]
    %v3577 = vld [vmem:[%s1552 + $0x58] sm:$0xff]
    %v3578 = vld [vmem:[%s1552 + $0x60] sm:$0xff]
    %v3579 = vld [vmem:[%s1552 + $0x68] sm:$0xff]
    %v3580 = vld [vmem:[%s1552 + $0x70] sm:$0xff]
    %v3581 = vld [vmem:[%s1552 + $0x78] sm:$0xff]
    %3583 = vst [vmem:[#allocation1] ss:$9 sm:$0xff] %v3550
    %s3585 = scalar_lea.vmem [#allocation1], 1
    %3586 = vst [vmem:[%s3585] ss:$9 sm:$0xff] %v3551
    %s3588 = scalar_lea.vmem [#allocation1], 2
    %3589 = vst [vmem:[%s3588] ss:$9 sm:$0xff] %v3552
    %s3591 = scalar_lea.vmem [#allocation1], 3
    %3592 = vst [vmem:[%s3591] ss:$9 sm:$0xff] %v3553
    %s3594 = scalar_lea.vmem [#allocation1], 4
    %3595 = vst [vmem:[%s3594] ss:$9 sm:$0xff] %v3554
    %s3597 = scalar_lea.vmem [#allocation1], 5
    %3598 = vst [vmem:[%s3597] ss:$9 sm:$0xff] %v3555
    %s3600 = scalar_lea.vmem [#allocation1], 6
    %3601 = vst [vmem:[%s3600] ss:$9 sm:$0xff] %v3556
    %s3603 = scalar_lea.vmem [#allocation1], 7
    %3604 = vst [vmem:[%s3603] ss:$9 sm:$0xff] %v3557
    %v3605 = vld [vmem:[#allocation1] sm:$0xff]
    %3607 = vst [vmem:[#allocation1] ss:$9 sm:$0xff] %v3558
    %3609 = vst [vmem:[%s3585] ss:$9 sm:$0xff] %v3559
    %3611 = vst [vmem:[%s3588] ss:$9 sm:$0xff] %v3560
    %3613 = vst [vmem:[%s3591] ss:$9 sm:$0xff] %v3561
    %3615 = vst [vmem:[%s3594] ss:$9 sm:$0xff] %v3562
    %3617 = vst [vmem:[%s3597] ss:$9 sm:$0xff] %v3563
    %3619 = vst [vmem:[%s3600] ss:$9 sm:$0xff] %v3564
    %3621 = vst [vmem:[%s3603] ss:$9 sm:$0xff] %v3565
    %v3622 = vld [vmem:[#allocation1] sm:$0xff]
    %v3641 = vunpack.c.l.b16 %v3566
    %v3642 = vunpack.c.h.b16 %v3566
    %v3643 = vunpack.c.l.b16 %v3567
    %v3644 = vunpack.c.h.b16 %v3567
    %v3645 = vunpack.c.l.b16 %v3568
    %v3646 = vunpack.c.h.b16 %v3568
    %v3647 = vunpack.c.l.b16 %v3569
    %v3648 = vunpack.c.h.b16 %v3569
    %v3649 = vunpack.c.l.b16 %v3570
    %v3650 = vunpack.c.h.b16 %v3570
    %v3651 = vunpack.c.l.b16 %v3571
    %v3652 = vunpack.c.h.b16 %v3571
    %v3653 = vunpack.c.l.b16 %v3572
    %v3654 = vunpack.c.h.b16 %v3572
    %v3655 = vunpack.c.l.b16 %v3573
    %v3656 = vunpack.c.h.b16 %v3573
    %v3657 = vunpack.c.l.b16 %v3574
    %v3658 = vunpack.c.h.b16 %v3574
    %v3659 = vunpack.c.l.b16 %v3575
    %v3660 = vunpack.c.h.b16 %v3575
    %v3661 = vunpack.c.l.b16 %v3576
    %v3662 = vunpack.c.h.b16 %v3576
    %v3663 = vunpack.c.l.b16 %v3577
    %v3664 = vunpack.c.h.b16 %v3577
    %v3665 = vunpack.c.l.b16 %v3578
    %v3666 = vunpack.c.h.b16 %v3578
    %v3667 = vunpack.c.l.b16 %v3579
    %v3668 = vunpack.c.h.b16 %v3579
    %v3669 = vunpack.c.l.b16 %v3580
    %v3670 = vunpack.c.h.b16 %v3580
    %v3671 = vunpack.c.l.b16 %v3581
    %v3672 = vunpack.c.h.b16 %v3581
    %v3673 = vpack.c.b16 %v3643, %v3641
    %v3674 = vpack.c.b16 %v3644, %v3642
    %v3675 = vpack.c.b16 %v3647, %v3645
    %v3676 = vpack.c.b16 %v3648, %v3646
    %v3677 = vpack.c.b16 %v3651, %v3649
    %v3678 = vpack.c.b16 %v3652, %v3650
    %v3679 = vpack.c.b16 %v3655, %v3653
    %v3680 = vpack.c.b16 %v3656, %v3654
    %v3681 = vpack.c.b16 %v3659, %v3657
    %v3682 = vpack.c.b16 %v3660, %v3658
    %v3683 = vpack.c.b16 %v3663, %v3661
    %v3684 = vpack.c.b16 %v3664, %v3662
    %v3685 = vpack.c.b16 %v3667, %v3665
    %v3686 = vpack.c.b16 %v3668, %v3666
    %v3687 = vpack.c.b16 %v3671, %v3669
    %v3688 = vpack.c.b16 %v3672, %v3670
    %3705 = vmatpush.bf16.msra.mxu0 %v3687
    %3706 = vmatpush.bf16.msra.mxu0 %v3685
    %3707 = vmatpush.bf16.msra.mxu0 %v3683
    %3708 = vmatpush.bf16.msra.mxu0 %v3681
    %3709 = vmatpush.bf16.msra.mxu0 %v3679
    %3710 = vmatpush.bf16.msra.mxu0 %v3677
    %3711 = vmatpush.bf16.msra.mxu0 %v3675
    %3712 = vmatpush.bf16.msra.mxu0 %v3673
    %3713 = vmatmul.bf16.gmra.mxu0 %v3605
    %v3714 = vpop.f32.mrf.mxu0
    %v3715 = vadd.f32 0.0, %v3714
    %v3716 = vpop.f32.mrf.mxu0
    %v3717 = vadd.f32 0.0, %v3716
    %3718 = vmatmul.bf16.gmra.mxu0 %v3622
    %v3719 = vpop.f32.mrf.mxu0
    %v3720 = vadd.f32 0.0, %v3719
    %v3721 = vpop.f32.mrf.mxu0
    %v3722 = vadd.f32 0.0, %v3721
    %3723 = vdwg.mxu0
    %3724 = vmatpush.bf16.msra.mxu0 %v3688
    %3725 = vmatpush.bf16.msra.mxu0 %v3686
    %3726 = vmatpush.bf16.msra.mxu0 %v3684
    %3727 = vmatpush.bf16.msra.mxu0 %v3682
    %3728 = vmatpush.bf16.msra.mxu0 %v3680
    %3729 = vmatpush.bf16.msra.mxu0 %v3678
    %3730 = vmatpush.bf16.msra.mxu0 %v3676
    %3731 = vmatpush.bf16.msra.mxu0 %v3674
    %3732 = vmatmul.bf16.gmra.mxu0 %v3605
    %v3733 = vpop.f32.mrf.mxu0
    %v3734 = vadd.f32 0.0, %v3733
    %v3735 = vpop.f32.mrf.mxu0
    %v3736 = vadd.f32 0.0, %v3735
    %3737 = vmatmul.bf16.gmra.mxu0 %v3622
    %v3738 = vpop.f32.mrf.mxu0
    %v3739 = vadd.f32 0.0, %v3738
    %v3740 = vpop.f32.mrf.mxu0
    %v3741 = vadd.f32 0.0, %v3740
    %3742 = vdwg.mxu0
    %v3743 = vadd.f32 %v3541, %v3715
    %v3744 = vadd.f32 %v3542, %v3734
    %v3745 = vadd.f32 %v3543, %v3717
    %v3746 = vadd.f32 %v3544, %v3736
    %v3747 = vadd.f32 %v3545, %v3720
    %v3748 = vadd.f32 %v3546, %v3739
    %v3749 = vadd.f32 %v3547, %v3722
    %v3750 = vadd.f32 %v3548, %v3741
    %s3751 = scalar_lea.vmem %s0, 181
    %v3752 = vld [vmem:[%s3751] sm:$0x1]
    %v3753 = vld [vmem:[%s3751 + $0x1] sm:$0x1]
    %v3754 = vld [vmem:[%s3751 + $0x2] sm:$0x1]
    %v3755 = vld [vmem:[%s3751 + $0x3] sm:$0x1]
    %v3756 = vld [vmem:[%s3751 + $0x5] sm:$0x1]
    %v3757 = vld [vmem:[%s3751 + $0x6] sm:$0x1]
    %v3758 = vld [vmem:[%s3751 + $0x7] sm:$0x1]
    %v3759 = vld [vmem:[%s3751 + $0x8] sm:$0x1]
    %v3760 = vld [vmem:[%s3751 + $0xa] sm:$0x1]
    %v3761 = vld [vmem:[%s3751 + $0xb] sm:$0x1]
    %v3762 = vld [vmem:[%s3751 + $0xc] sm:$0x1]
    %v3763 = vld [vmem:[%s3751 + $0xd] sm:$0x1]
    %v3764 = vld [vmem:[%s3751 + $0xf] sm:$0x1]
    %v3765 = vld [vmem:[%s3751 + $0x10] sm:$0x1]
    %v3766 = vld [vmem:[%s3751 + $0x11] sm:$0x1]
    %v3767 = vld [vmem:[%s3751 + $0x12] sm:$0x1]
    %v3768 = vld [vmem:[%s1755] sm:$0xff]
    %v3769 = vld [vmem:[%s1755 + $0x8] sm:$0xff]
    %v3770 = vld [vmem:[%s1755 + $0x10] sm:$0xff]
    %v3771 = vld [vmem:[%s1755 + $0x18] sm:$0xff]
    %v3772 = vld [vmem:[%s1755 + $0x20] sm:$0xff]
    %v3773 = vld [vmem:[%s1755 + $0x28] sm:$0xff]
    %v3774 = vld [vmem:[%s1755 + $0x30] sm:$0xff]
    %v3775 = vld [vmem:[%s1755 + $0x38] sm:$0xff]
    %v3776 = vld [vmem:[%s1755 + $0x40] sm:$0xff]
    %v3777 = vld [vmem:[%s1755 + $0x48] sm:$0xff]
    %v3778 = vld [vmem:[%s1755 + $0x50] sm:$0xff]
    %v3779 = vld [vmem:[%s1755 + $0x58] sm:$0xff]
    %v3780 = vld [vmem:[%s1755 + $0x60] sm:$0xff]
    %v3781 = vld [vmem:[%s1755 + $0x68] sm:$0xff]
    %v3782 = vld [vmem:[%s1755 + $0x70] sm:$0xff]
    %v3783 = vld [vmem:[%s1755 + $0x78] sm:$0xff]
    %3785 = vst [vmem:[#allocation1] ss:$9 sm:$0xff] %v3752
    %s3787 = scalar_lea.vmem [#allocation1], 1
    %3788 = vst [vmem:[%s3787] ss:$9 sm:$0xff] %v3753
    %s3790 = scalar_lea.vmem [#allocation1], 2
    %3791 = vst [vmem:[%s3790] ss:$9 sm:$0xff] %v3754
    %s3793 = scalar_lea.vmem [#allocation1], 3
    %3794 = vst [vmem:[%s3793] ss:$9 sm:$0xff] %v3755
    %s3796 = scalar_lea.vmem [#allocation1], 4
    %3797 = vst [vmem:[%s3796] ss:$9 sm:$0xff] %v3756
    %s3799 = scalar_lea.vmem [#allocation1], 5
    %3800 = vst [vmem:[%s3799] ss:$9 sm:$0xff] %v3757
    %s3802 = scalar_lea.vmem [#allocation1], 6
    %3803 = vst [vmem:[%s3802] ss:$9 sm:$0xff] %v3758
    %s3805 = scalar_lea.vmem [#allocation1], 7
    %3806 = vst [vmem:[%s3805] ss:$9 sm:$0xff] %v3759
    %v3807 = vld [vmem:[#allocation1] sm:$0xff]
    %3809 = vst [vmem:[#allocation1] ss:$9 sm:$0xff] %v3760
    %3811 = vst [vmem:[%s3787] ss:$9 sm:$0xff] %v3761
    %3813 = vst [vmem:[%s3790] ss:$9 sm:$0xff] %v3762
    %3815 = vst [vmem:[%s3793] ss:$9 sm:$0xff] %v3763
    %3817 = vst [vmem:[%s3796] ss:$9 sm:$0xff] %v3764
    %3819 = vst [vmem:[%s3799] ss:$9 sm:$0xff] %v3765
    %3821 = vst [vmem:[%s3802] ss:$9 sm:$0xff] %v3766
    %3823 = vst [vmem:[%s3805] ss:$9 sm:$0xff] %v3767
    %v3824 = vld [vmem:[#allocation1] sm:$0xff]
    %v3843 = vunpack.c.l.b16 %v3768
    %v3844 = vunpack.c.h.b16 %v3768
    %v3845 = vunpack.c.l.b16 %v3769
    %v3846 = vunpack.c.h.b16 %v3769
    %v3847 = vunpack.c.l.b16 %v3770
    %v3848 = vunpack.c.h.b16 %v3770
    %v3849 = vunpack.c.l.b16 %v3771
    %v3850 = vunpack.c.h.b16 %v3771
    %v3851 = vunpack.c.l.b16 %v3772
    %v3852 = vunpack.c.h.b16 %v3772
    %v3853 = vunpack.c.l.b16 %v3773
    %v3854 = vunpack.c.h.b16 %v3773
    %v3855 = vunpack.c.l.b16 %v3774
    %v3856 = vunpack.c.h.b16 %v3774
    %v3857 = vunpack.c.l.b16 %v3775
    %v3858 = vunpack.c.h.b16 %v3775
    %v3859 = vunpack.c.l.b16 %v3776
    %v3860 = vunpack.c.h.b16 %v3776
    %v3861 = vunpack.c.l.b16 %v3777
    %v3862 = vunpack.c.h.b16 %v3777
    %v3863 = vunpack.c.l.b16 %v3778
    %v3864 = vunpack.c.h.b16 %v3778
    %v3865 = vunpack.c.l.b16 %v3779
    %v3866 = vunpack.c.h.b16 %v3779
    %v3867 = vunpack.c.l.b16 %v3780
    %v3868 = vunpack.c.h.b16 %v3780
    %v3869 = vunpack.c.l.b16 %v3781
    %v3870 = vunpack.c.h.b16 %v3781
    %v3871 = vunpack.c.l.b16 %v3782
    %v3872 = vunpack.c.h.b16 %v3782
    %v3873 = vunpack.c.l.b16 %v3783
    %v3874 = vunpack.c.h.b16 %v3783
    %v3875 = vpack.c.b16 %v3845, %v3843
    %v3876 = vpack.c.b16 %v3846, %v3844
    %v3877 = vpack.c.b16 %v3849, %v3847
    %v3878 = vpack.c.b16 %v3850, %v3848
    %v3879 = vpack.c.b16 %v3853, %v3851
    %v3880 = vpack.c.b16 %v3854, %v3852
    %v3881 = vpack.c.b16 %v3857, %v3855
    %v3882 = vpack.c.b16 %v3858, %v3856
    %v3883 = vpack.c.b16 %v3861, %v3859
    %v3884 = vpack.c.b16 %v3862, %v3860
    %v3885 = vpack.c.b16 %v3865, %v3863
    %v3886 = vpack.c.b16 %v3866, %v3864
    %v3887 = vpack.c.b16 %v3869, %v3867
    %v3888 = vpack.c.b16 %v3870, %v3868
    %v3889 = vpack.c.b16 %v3873, %v3871
    %v3890 = vpack.c.b16 %v3874, %v3872
    %3907 = vmatpush.bf16.msra.mxu0 %v3889
    %3908 = vmatpush.bf16.msra.mxu0 %v3887
    %3909 = vmatpush.bf16.msra.mxu0 %v3885
    %3910 = vmatpush.bf16.msra.mxu0 %v3883
    %3911 = vmatpush.bf16.msra.mxu0 %v3881
    %3912 = vmatpush.bf16.msra.mxu0 %v3879
    %3913 = vmatpush.bf16.msra.mxu0 %v3877
    %3914 = vmatpush.bf16.msra.mxu0 %v3875
    %3915 = vmatmul.bf16.gmra.mxu0 %v3807
    %v3916 = vpop.f32.mrf.mxu0
    %v3917 = vadd.f32 0.0, %v3916
    %v3918 = vpop.f32.mrf.mxu0
    %v3919 = vadd.f32 0.0, %v3918
    %3920 = vmatmul.bf16.gmra.mxu0 %v3824
    %v3921 = vpop.f32.mrf.mxu0
    %v3922 = vadd.f32 0.0, %v3921
    %v3923 = vpop.f32.mrf.mxu0
    %v3924 = vadd.f32 0.0, %v3923
    %3925 = vdwg.mxu0
    %3926 = vmatpush.bf16.msra.mxu0 %v3890
    %3927 = vmatpush.bf16.msra.mxu0 %v3888
    %3928 = vmatpush.bf16.msra.mxu0 %v3886
    %3929 = vmatpush.bf16.msra.mxu0 %v3884
    %3930 = vmatpush.bf16.msra.mxu0 %v3882
    %3931 = vmatpush.bf16.msra.mxu0 %v3880
    %3932 = vmatpush.bf16.msra.mxu0 %v3878
    %3933 = vmatpush.bf16.msra.mxu0 %v3876
    %3934 = vmatmul.bf16.gmra.mxu0 %v3807
    %v3935 = vpop.f32.mrf.mxu0
    %v3936 = vadd.f32 0.0, %v3935
    %v3937 = vpop.f32.mrf.mxu0
    %v3938 = vadd.f32 0.0, %v3937
    %3939 = vmatmul.bf16.gmra.mxu0 %v3824
    %v3940 = vpop.f32.mrf.mxu0
    %v3941 = vadd.f32 0.0, %v3940
    %v3942 = vpop.f32.mrf.mxu0
    %v3943 = vadd.f32 0.0, %v3942
    %3944 = vdwg.mxu0
    %v3945 = vadd.f32 %v3743, %v3917
    %v3946 = vadd.f32 %v3744, %v3936
    %v3947 = vadd.f32 %v3745, %v3919
    %v3948 = vadd.f32 %v3746, %v3938
    %v3949 = vadd.f32 %v3747, %v3922
    %v3950 = vadd.f32 %v3748, %v3941
    %v3951 = vadd.f32 %v3749, %v3924
    %v3952 = vadd.f32 %v3750, %v3943
    %v3953 = vld [vmem:[%s3] ss:$2 sm:$0x3]
    %v3955 = vperm.slane %v3953, 0
    %v3956 = vperm.slane %v3953, 1
    %v3959 = vmul.f32 %v3945, %v3955
    %v3960 = vmul.f32 %v3946, %v3956
    %v3961 = vmul.f32 %v3947, %v3955
    %v3962 = vmul.f32 %v3948, %v3956
    %v3963 = vmul.f32 %v3949, %v3955
    %v3964 = vmul.f32 %v3950, %v3956
    %v3965 = vmul.f32 %v3951, %v3955
    %v3966 = vmul.f32 %v3952, %v3956
    %v3967 = vld [vmem:[%s1955] ss:$2 sm:$0x3]
    %v3969 = vperm.slane %v3967, 0
    %v3970 = vperm.slane %v3967, 1
    %v3973 = vadd.f32 %v3959, %v3969
    %v3974 = vadd.f32 %v3960, %v3970
    %v3975 = vadd.f32 %v3961, %v3969
    %v3976 = vadd.f32 %v3962, %v3970
    %v3977 = vadd.f32 %v3963, %v3969
    %v3978 = vadd.f32 %v3964, %v3970
    %v3979 = vadd.f32 %v3965, %v3969
    %v3980 = vadd.f32 %v3966, %v3970
    %v3981 = vmax.f32 %v3973, 0.0
    %v3982 = vmax.f32 %v3974, 0.0
    %v3983 = vmax.f32 %v3975, 0.0
    %v3984 = vmax.f32 %v3976, 0.0
    %v3985 = vmax.f32 %v3977, 0.0
    %v3986 = vmax.f32 %v3978, 0.0
    %v3987 = vmax.f32 %v3979, 0.0
    %v3988 = vmax.f32 %v3980, 0.0
    %s3989 = scalar_lea.vmem %s1, 64
    %v3990 = vld [vmem:[%s3989] sm:$0xf]
    %v3991 = vld [vmem:[%s3989 + $0x4] sm:$0xf]
    %v3992 = vld [vmem:[%s3989 + $0x8] sm:$0xf]
    %v3993 = vld [vmem:[%s3989 + $0xc] sm:$0xf]
    %v3994 = vld [vmem:[%s3989 + $0x10] sm:$0xf]
    %v3995 = vld [vmem:[%s3989 + $0x14] sm:$0xf]
    %v3996 = vld [vmem:[%s3989 + $0x18] sm:$0xf]
    %v3997 = vld [vmem:[%s3989 + $0x1c] sm:$0xf]
    %v3998 = vld [vmem:[%s3989 + $0x20] sm:$0xf]
    %v3999 = vld [vmem:[%s3989 + $0x24] sm:$0xf]
    %v4000 = vld [vmem:[%s3989 + $0x28] sm:$0xf]
    %v4001 = vld [vmem:[%s3989 + $0x2c] sm:$0xf]
    %v4002 = vld [vmem:[%s3989 + $0x30] sm:$0xf]
    %v4003 = vld [vmem:[%s3989 + $0x34] sm:$0xf]
    %v4004 = vld [vmem:[%s3989 + $0x38] sm:$0xf]
    %v4005 = vld [vmem:[%s3989 + $0x3c] sm:$0xf]
    %4022 = vst [vmem:[#allocation1] ss:$4 sm:$0xff] %v3990
    %s4023 = scalar_lea.vmem [#allocation1], 1
    %4024 = vst [vmem:[%s4023] ss:$4 sm:$0xff] %v3991
    %s4025 = scalar_lea.vmem [#allocation1], 2
    %4026 = vst [vmem:[%s4025] ss:$4 sm:$0xff] %v3992
    %s4027 = scalar_lea.vmem [#allocation1], 3
    %4028 = vst [vmem:[%s4027] ss:$4 sm:$0xff] %v3993
    %s4029 = scalar_lea.vmem [#allocation1], 32
    %4030 = vst [vmem:[%s4029] ss:$4 sm:$0xff] %v3994
    %s4031 = scalar_lea.vmem [#allocation1], 33
    %4032 = vst [vmem:[%s4031] ss:$4 sm:$0xff] %v3995
    %s4033 = scalar_lea.vmem [#allocation1], 34
    %4034 = vst [vmem:[%s4033] ss:$4 sm:$0xff] %v3996
    %s4035 = scalar_lea.vmem [#allocation1], 35
    %4036 = vst [vmem:[%s4035] ss:$4 sm:$0xff] %v3997
    %v4037 = vld.sshfl [vmem:[#allocation1] sm:$0xff pattern:$0x73625140]
    %v4038 = vld.sshfl [vmem:[#allocation1 + $0x8] sm:$0xff pattern:$0x73625140]
    %v4039 = vld.sshfl [vmem:[#allocation1 + $0x20] sm:$0xff pattern:$0x73625140]
    %v4040 = vld.sshfl [vmem:[#allocation1 + $0x28] sm:$0xff pattern:$0x73625140]
    %4041 = vst [vmem:[#allocation1] ss:$4 sm:$0xff] %v3998
    %4042 = vst [vmem:[%s4023] ss:$4 sm:$0xff] %v3999
    %4043 = vst [vmem:[%s4025] ss:$4 sm:$0xff] %v4000
    %4044 = vst [vmem:[%s4027] ss:$4 sm:$0xff] %v4001
    %4045 = vst [vmem:[%s4029] ss:$4 sm:$0xff] %v4002
    %4046 = vst [vmem:[%s4031] ss:$4 sm:$0xff] %v4003
    %4047 = vst [vmem:[%s4033] ss:$4 sm:$0xff] %v4004
    %4048 = vst [vmem:[%s4035] ss:$4 sm:$0xff] %v4005
    %v4049 = vld.sshfl [vmem:[#allocation1] sm:$0xff pattern:$0x73625140]
    %v4050 = vld.sshfl [vmem:[#allocation1 + $0x8] sm:$0xff pattern:$0x73625140]
    %v4051 = vld.sshfl [vmem:[#allocation1 + $0x20] sm:$0xff pattern:$0x73625140]
    %v4052 = vld.sshfl [vmem:[#allocation1 + $0x28] sm:$0xff pattern:$0x73625140]
    %v4061 = vadd.f32 %v3981, %v4037
    %v4062 = vadd.f32 %v3982, %v4038
    %v4063 = vadd.f32 %v3983, %v4039
    %v4064 = vadd.f32 %v3984, %v4040
    %v4065 = vadd.f32 %v3985, %v4049
    %v4066 = vadd.f32 %v3986, %v4050
    %v4067 = vadd.f32 %v3987, %v4051
    %v4068 = vadd.f32 %v3988, %v4052
    %v4069 = vpack.c.bf16 %v4062, %v4061
    %v4070 = vpack.c.bf16 %v4064, %v4063
    %v4071 = vpack.c.bf16 %v4066, %v4065
    %v4072 = vpack.c.bf16 %v4068, %v4067
    %v4077 = vrot.slane %v4069, 3
    %v4078 = vrot.slane %v4070, 3
    %v4079 = vrot.slane %v4071, 3
    %v4080 = vrot.slane %v4072, 3
    %v4083 = vsel %vm2069, %v4069, %v4077
    %v4084 = vsel %vm2073, %v4069, %v4077
    %v4086 = vrot.slane %v4084, 1
    %v4087 = vsel %vm2077, %v4069, %v4077
    %v4089 = vrot.slane %v4087, 2
    %v4090 = vsel %vm2081, %v4069, %v4077
    %v4092 = vrot.slane %v4090, 3
    %v4095 = vsel %vm2069, %v4070, %v4078
    %v4096 = vsel %vm2073, %v4070, %v4078
    %v4098 = vrot.slane %v4096, 1
    %v4099 = vsel %vm2077, %v4070, %v4078
    %v4101 = vrot.slane %v4099, 2
    %v4102 = vsel %vm2081, %v4070, %v4078
    %v4104 = vrot.slane %v4102, 3
    %v4107 = vsel %vm2069, %v4071, %v4079
    %v4108 = vsel %vm2073, %v4071, %v4079
    %v4110 = vrot.slane %v4108, 1
    %v4111 = vsel %vm2077, %v4071, %v4079
    %v4113 = vrot.slane %v4111, 2
    %v4114 = vsel %vm2081, %v4071, %v4079
    %v4116 = vrot.slane %v4114, 3
    %v4119 = vsel %vm2069, %v4072, %v4080
    %v4120 = vsel %vm2073, %v4072, %v4080
    %v4122 = vrot.slane %v4120, 1
    %v4123 = vsel %vm2077, %v4072, %v4080
    %v4125 = vrot.slane %v4123, 2
    %v4126 = vsel %vm2081, %v4072, %v4080
    %v4128 = vrot.slane %v4126, 3
    %s4145 = scalar_lea.vmem [#allocation2], 62
    %4146 = vst [vmem:[%s4145] sm:$0x3] %v4083
    %4147 = vst [vmem:[%s4145 + $0x2] sm:$0x3] %v4086
    %4148 = vst [vmem:[%s4145 + $0x4] sm:$0x3] %v4089
    %4149 = vst [vmem:[%s4145 + $0x6] sm:$0x3] %v4092
    %4150 = vst [vmem:[%s4145 + $0xa] sm:$0x3] %v4095
    %4151 = vst [vmem:[%s4145 + $0xc] sm:$0x3] %v4098
    %4152 = vst [vmem:[%s4145 + $0xe] sm:$0x3] %v4101
    %4153 = vst [vmem:[%s4145 + $0x10] sm:$0x3] %v4104
    %4154 = vst [vmem:[%s4145 + $0x14] sm:$0x3] %v4107
    %4155 = vst [vmem:[%s4145 + $0x16] sm:$0x3] %v4110
    %4156 = vst [vmem:[%s4145 + $0x18] sm:$0x3] %v4113
    %4157 = vst [vmem:[%s4145 + $0x1a] sm:$0x3] %v4116
    %4158 = vst [vmem:[%s4145 + $0x1e] sm:$0x3] %v4119
    %4159 = vst [vmem:[%s4145 + $0x20] sm:$0x3] %v4122
    %4160 = vst [vmem:[%s4145 + $0x22] sm:$0x3] %v4125
    %4161 = vst [vmem:[%s4145 + $0x24] sm:$0x3] %v4128
    %v4162 = vld [vmem:[%s1332] sm:$0x1]
    %v4163 = vld [vmem:[%s1332 + $0x1] sm:$0x1]
    %v4164 = vld [vmem:[%s1332 + $0x2] sm:$0x1]
    %v4165 = vld [vmem:[%s1332 + $0x3] sm:$0x1]
    %v4166 = vld [vmem:[%s1332 + $0x5] sm:$0x1]
    %v4167 = vld [vmem:[%s1332 + $0x6] sm:$0x1]
    %v4168 = vld [vmem:[%s1332 + $0x7] sm:$0x1]
    %v4169 = vld [vmem:[%s1332 + $0x8] sm:$0x1]
    %v4170 = vld [vmem:[%s1332 + $0xa] sm:$0x1]
    %v4171 = vld [vmem:[%s1332 + $0xb] sm:$0x1]
    %v4172 = vld [vmem:[%s1332 + $0xc] sm:$0x1]
    %v4173 = vld [vmem:[%s1332 + $0xd] sm:$0x1]
    %v4174 = vld [vmem:[%s1332 + $0xf] sm:$0x1]
    %v4175 = vld [vmem:[%s1332 + $0x10] sm:$0x1]
    %v4176 = vld [vmem:[%s1332 + $0x11] sm:$0x1]
    %v4177 = vld [vmem:[%s1332 + $0x12] sm:$0x1]
    %v4178 = vld [vmem:[%s2] sm:$0xff]
    %v4179 = vld [vmem:[%s2 + $0x8] sm:$0xff]
    %v4180 = vld [vmem:[%s2 + $0x10] sm:$0xff]
    %v4181 = vld [vmem:[%s2 + $0x18] sm:$0xff]
    %v4182 = vld [vmem:[%s2 + $0x20] sm:$0xff]
    %v4183 = vld [vmem:[%s2 + $0x28] sm:$0xff]
    %v4184 = vld [vmem:[%s2 + $0x30] sm:$0xff]
    %v4185 = vld [vmem:[%s2 + $0x38] sm:$0xff]
    %v4186 = vld [vmem:[%s2 + $0x40] sm:$0xff]
    %v4187 = vld [vmem:[%s2 + $0x48] sm:$0xff]
    %v4188 = vld [vmem:[%s2 + $0x50] sm:$0xff]
    %v4189 = vld [vmem:[%s2 + $0x58] sm:$0xff]
    %v4190 = vld [vmem:[%s2 + $0x60] sm:$0xff]
    %v4191 = vld [vmem:[%s2 + $0x68] sm:$0xff]
    %v4192 = vld [vmem:[%s2 + $0x70] sm:$0xff]
    %v4193 = vld [vmem:[%s2 + $0x78] sm:$0xff]
    %v4194 = vld [vmem:[%s1535] sm:$0x1]
    %v4195 = vld [vmem:[%s1535 + $0x1] sm:$0x1]
    %v4196 = vld [vmem:[%s1535 + $0x2] sm:$0x1]
    %v4197 = vld [vmem:[%s1535 + $0x3] sm:$0x1]
    %v4198 = vld [vmem:[%s1535 + $0x5] sm:$0x1]
    %v4199 = vld [vmem:[%s1535 + $0x6] sm:$0x1]
    %v4200 = vld [vmem:[%s1535 + $0x7] sm:$0x1]
    %v4201 = vld [vmem:[%s1535 + $0x8] sm:$0x1]
    %v4202 = vld [vmem:[%s1535 + $0xa] sm:$0x1]
    %v4203 = vld [vmem:[%s1535 + $0xb] sm:$0x1]
    %v4204 = vld [vmem:[%s1535 + $0xc] sm:$0x1]
    %v4205 = vld [vmem:[%s1535 + $0xd] sm:$0x1]
    %v4206 = vld [vmem:[%s1535 + $0xf] sm:$0x1]
    %v4207 = vld [vmem:[%s1535 + $0x10] sm:$0x1]
    %v4208 = vld [vmem:[%s1535 + $0x11] sm:$0x1]
    %v4209 = vld [vmem:[%s1535 + $0x12] sm:$0x1]
    %v4210 = vld [vmem:[%s181] sm:$0xff]
    %v4211 = vld [vmem:[%s181 + $0x8] sm:$0xff]
    %v4212 = vld [vmem:[%s181 + $0x10] sm:$0xff]
    %v4213 = vld [vmem:[%s181 + $0x18] sm:$0xff]
    %v4214 = vld [vmem:[%s181 + $0x20] sm:$0xff]
    %v4215 = vld [vmem:[%s181 + $0x28] sm:$0xff]
    %v4216 = vld [vmem:[%s181 + $0x30] sm:$0xff]
    %v4217 = vld [vmem:[%s181 + $0x38] sm:$0xff]
    %v4218 = vld [vmem:[%s181 + $0x40] sm:$0xff]
    %v4219 = vld [vmem:[%s181 + $0x48] sm:$0xff]
    %v4220 = vld [vmem:[%s181 + $0x50] sm:$0xff]
    %v4221 = vld [vmem:[%s181 + $0x58] sm:$0xff]
    %v4222 = vld [vmem:[%s181 + $0x60] sm:$0xff]
    %v4223 = vld [vmem:[%s181 + $0x68] sm:$0xff]
    %v4224 = vld [vmem:[%s181 + $0x70] sm:$0xff]
    %v4225 = vld [vmem:[%s181 + $0x78] sm:$0xff]
    %4227 = vst [vmem:[#allocation1] ss:$9 sm:$0xff] %v4194
    %s4229 = scalar_lea.vmem [#allocation1], 1
    %4230 = vst [vmem:[%s4229] ss:$9 sm:$0xff] %v4195
    %s4232 = scalar_lea.vmem [#allocation1], 2
    %4233 = vst [vmem:[%s4232] ss:$9 sm:$0xff] %v4196
    %s4235 = scalar_lea.vmem [#allocation1], 3
    %4236 = vst [vmem:[%s4235] ss:$9 sm:$0xff] %v4197
    %s4238 = scalar_lea.vmem [#allocation1], 4
    %4239 = vst [vmem:[%s4238] ss:$9 sm:$0xff] %v4198
    %s4241 = scalar_lea.vmem [#allocation1], 5
    %4242 = vst [vmem:[%s4241] ss:$9 sm:$0xff] %v4199
    %s4244 = scalar_lea.vmem [#allocation1], 6
    %4245 = vst [vmem:[%s4244] ss:$9 sm:$0xff] %v4200
    %s4247 = scalar_lea.vmem [#allocation1], 7
    %4248 = vst [vmem:[%s4247] ss:$9 sm:$0xff] %v4201
    %v4249 = vld [vmem:[#allocation1] sm:$0xff]
    %4251 = vst [vmem:[#allocation1] ss:$9 sm:$0xff] %v4202
    %4253 = vst [vmem:[%s4229] ss:$9 sm:$0xff] %v4203
    %4255 = vst [vmem:[%s4232] ss:$9 sm:$0xff] %v4204
    %4257 = vst [vmem:[%s4235] ss:$9 sm:$0xff] %v4205
    %4259 = vst [vmem:[%s4238] ss:$9 sm:$0xff] %v4206
    %4261 = vst [vmem:[%s4241] ss:$9 sm:$0xff] %v4207
    %4263 = vst [vmem:[%s4244] ss:$9 sm:$0xff] %v4208
    %4265 = vst [vmem:[%s4247] ss:$9 sm:$0xff] %v4209
    %v4266 = vld [vmem:[#allocation1] sm:$0xff]
    %v4285 = vunpack.c.l.b16 %v4210
    %v4286 = vunpack.c.h.b16 %v4210
    %v4287 = vunpack.c.l.b16 %v4211
    %v4288 = vunpack.c.h.b16 %v4211
    %v4289 = vunpack.c.l.b16 %v4212
    %v4290 = vunpack.c.h.b16 %v4212
    %v4291 = vunpack.c.l.b16 %v4213
    %v4292 = vunpack.c.h.b16 %v4213
    %v4293 = vunpack.c.l.b16 %v4214
    %v4294 = vunpack.c.h.b16 %v4214
    %v4295 = vunpack.c.l.b16 %v4215
    %v4296 = vunpack.c.h.b16 %v4215
    %v4297 = vunpack.c.l.b16 %v4216
    %v4298 = vunpack.c.h.b16 %v4216
    %v4299 = vunpack.c.l.b16 %v4217
    %v4300 = vunpack.c.h.b16 %v4217
    %v4301 = vunpack.c.l.b16 %v4218
    %v4302 = vunpack.c.h.b16 %v4218
    %v4303 = vunpack.c.l.b16 %v4219
    %v4304 = vunpack.c.h.b16 %v4219
    %v4305 = vunpack.c.l.b16 %v4220
    %v4306 = vunpack.c.h.b16 %v4220
    %v4307 = vunpack.c.l.b16 %v4221
    %v4308 = vunpack.c.h.b16 %v4221
    %v4309 = vunpack.c.l.b16 %v4222
    %v4310 = vunpack.c.h.b16 %v4222
    %v4311 = vunpack.c.l.b16 %v4223
    %v4312 = vunpack.c.h.b16 %v4223
    %v4313 = vunpack.c.l.b16 %v4224
    %v4314 = vunpack.c.h.b16 %v4224
    %v4315 = vunpack.c.l.b16 %v4225
    %v4316 = vunpack.c.h.b16 %v4225
    %v4317 = vpack.c.b16 %v4287, %v4285
    %v4318 = vpack.c.b16 %v4288, %v4286
    %v4319 = vpack.c.b16 %v4291, %v4289
    %v4320 = vpack.c.b16 %v4292, %v4290
    %v4321 = vpack.c.b16 %v4295, %v4293
    %v4322 = vpack.c.b16 %v4296, %v4294
    %v4323 = vpack.c.b16 %v4299, %v4297
    %v4324 = vpack.c.b16 %v4300, %v4298
    %v4325 = vpack.c.b16 %v4303, %v4301
    %v4326 = vpack.c.b16 %v4304, %v4302
    %v4327 = vpack.c.b16 %v4307, %v4305
    %v4328 = vpack.c.b16 %v4308, %v4306
    %v4329 = vpack.c.b16 %v4311, %v4309
    %v4330 = vpack.c.b16 %v4312, %v4310
    %v4331 = vpack.c.b16 %v4315, %v4313
    %v4332 = vpack.c.b16 %v4316, %v4314
    %4349 = vmatpush.bf16.msra.mxu0 %v4331
    %4350 = vmatpush.bf16.msra.mxu0 %v4329
    %4351 = vmatpush.bf16.msra.mxu0 %v4327
    %4352 = vmatpush.bf16.msra.mxu0 %v4325
    %4353 = vmatpush.bf16.msra.mxu0 %v4323
    %4354 = vmatpush.bf16.msra.mxu0 %v4321
    %4355 = vmatpush.bf16.msra.mxu0 %v4319
    %4356 = vmatpush.bf16.msra.mxu0 %v4317
    %4357 = vmatmul.bf16.gmra.mxu0 %v4249
    %v4358 = vpop.f32.mrf.mxu0
    %v4359 = vadd.f32 0.0, %v4358
    %v4360 = vpop.f32.mrf.mxu0
    %v4361 = vadd.f32 0.0, %v4360
    %4362 = vmatmul.bf16.gmra.mxu0 %v4266
    %v4363 = vpop.f32.mrf.mxu0
    %v4364 = vadd.f32 0.0, %v4363
    %v4365 = vpop.f32.mrf.mxu0
    %v4366 = vadd.f32 0.0, %v4365
    %4367 = vdwg.mxu0
    %4368 = vmatpush.bf16.msra.mxu0 %v4332
    %4369 = vmatpush.bf16.msra.mxu0 %v4330
    %4370 = vmatpush.bf16.msra.mxu0 %v4328
    %4371 = vmatpush.bf16.msra.mxu0 %v4326
    %4372 = vmatpush.bf16.msra.mxu0 %v4324
    %4373 = vmatpush.bf16.msra.mxu0 %v4322
    %4374 = vmatpush.bf16.msra.mxu0 %v4320
    %4375 = vmatpush.bf16.msra.mxu0 %v4318
    %4376 = vmatmul.bf16.gmra.mxu0 %v4249
    %v4377 = vpop.f32.mrf.mxu0
    %v4378 = vadd.f32 0.0, %v4377
    %v4379 = vpop.f32.mrf.mxu0
    %v4380 = vadd.f32 0.0, %v4379
    %4381 = vmatmul.bf16.gmra.mxu0 %v4266
    %v4382 = vpop.f32.mrf.mxu0
    %v4383 = vadd.f32 0.0, %v4382
    %v4384 = vpop.f32.mrf.mxu0
    %v4385 = vadd.f32 0.0, %v4384
    %4386 = vdwg.mxu0
    %4388 = vst [vmem:[#allocation1] ss:$9 sm:$0xff] %v4162
    %s4390 = scalar_lea.vmem [#allocation1], 1
    %4391 = vst [vmem:[%s4390] ss:$9 sm:$0xff] %v4163
    %s4393 = scalar_lea.vmem [#allocation1], 2
    %4394 = vst [vmem:[%s4393] ss:$9 sm:$0xff] %v4164
    %s4396 = scalar_lea.vmem [#allocation1], 3
    %4397 = vst [vmem:[%s4396] ss:$9 sm:$0xff] %v4165
    %s4399 = scalar_lea.vmem [#allocation1], 4
    %4400 = vst [vmem:[%s4399] ss:$9 sm:$0xff] %v4166
    %s4402 = scalar_lea.vmem [#allocation1], 5
    %4403 = vst [vmem:[%s4402] ss:$9 sm:$0xff] %v4167
    %s4405 = scalar_lea.vmem [#allocation1], 6
    %4406 = vst [vmem:[%s4405] ss:$9 sm:$0xff] %v4168
    %s4408 = scalar_lea.vmem [#allocation1], 7
    %4409 = vst [vmem:[%s4408] ss:$9 sm:$0xff] %v4169
    %v4410 = vld [vmem:[#allocation1] sm:$0xff]
    %4412 = vst [vmem:[#allocation1] ss:$9 sm:$0xff] %v4170
    %4414 = vst [vmem:[%s4390] ss:$9 sm:$0xff] %v4171
    %4416 = vst [vmem:[%s4393] ss:$9 sm:$0xff] %v4172
    %4418 = vst [vmem:[%s4396] ss:$9 sm:$0xff] %v4173
    %4420 = vst [vmem:[%s4399] ss:$9 sm:$0xff] %v4174
    %4422 = vst [vmem:[%s4402] ss:$9 sm:$0xff] %v4175
    %4424 = vst [vmem:[%s4405] ss:$9 sm:$0xff] %v4176
    %4426 = vst [vmem:[%s4408] ss:$9 sm:$0xff] %v4177
    %v4427 = vld [vmem:[#allocation1] sm:$0xff]
    %v4446 = vunpack.c.l.b16 %v4178
    %v4447 = vunpack.c.h.b16 %v4178
    %v4448 = vunpack.c.l.b16 %v4179
    %v4449 = vunpack.c.h.b16 %v4179
    %v4450 = vunpack.c.l.b16 %v4180
    %v4451 = vunpack.c.h.b16 %v4180
    %v4452 = vunpack.c.l.b16 %v4181
    %v4453 = vunpack.c.h.b16 %v4181
    %v4454 = vunpack.c.l.b16 %v4182
    %v4455 = vunpack.c.h.b16 %v4182
    %v4456 = vunpack.c.l.b16 %v4183
    %v4457 = vunpack.c.h.b16 %v4183
    %v4458 = vunpack.c.l.b16 %v4184
    %v4459 = vunpack.c.h.b16 %v4184
    %v4460 = vunpack.c.l.b16 %v4185
    %v4461 = vunpack.c.h.b16 %v4185
    %v4462 = vunpack.c.l.b16 %v4186
    %v4463 = vunpack.c.h.b16 %v4186
    %v4464 = vunpack.c.l.b16 %v4187
    %v4465 = vunpack.c.h.b16 %v4187
    %v4466 = vunpack.c.l.b16 %v4188
    %v4467 = vunpack.c.h.b16 %v4188
    %v4468 = vunpack.c.l.b16 %v4189
    %v4469 = vunpack.c.h.b16 %v4189
    %v4470 = vunpack.c.l.b16 %v4190
    %v4471 = vunpack.c.h.b16 %v4190
    %v4472 = vunpack.c.l.b16 %v4191
    %v4473 = vunpack.c.h.b16 %v4191
    %v4474 = vunpack.c.l.b16 %v4192
    %v4475 = vunpack.c.h.b16 %v4192
    %v4476 = vunpack.c.l.b16 %v4193
    %v4477 = vunpack.c.h.b16 %v4193
    %v4478 = vpack.c.b16 %v4448, %v4446
    %v4479 = vpack.c.b16 %v4449, %v4447
    %v4480 = vpack.c.b16 %v4452, %v4450
    %v4481 = vpack.c.b16 %v4453, %v4451
    %v4482 = vpack.c.b16 %v4456, %v4454
    %v4483 = vpack.c.b16 %v4457, %v4455
    %v4484 = vpack.c.b16 %v4460, %v4458
    %v4485 = vpack.c.b16 %v4461, %v4459
    %v4486 = vpack.c.b16 %v4464, %v4462
    %v4487 = vpack.c.b16 %v4465, %v4463
    %v4488 = vpack.c.b16 %v4468, %v4466
    %v4489 = vpack.c.b16 %v4469, %v4467
    %v4490 = vpack.c.b16 %v4472, %v4470
    %v4491 = vpack.c.b16 %v4473, %v4471
    %v4492 = vpack.c.b16 %v4476, %v4474
    %v4493 = vpack.c.b16 %v4477, %v4475
    %4510 = vmatpush.bf16.msra.mxu0 %v4492
    %4511 = vmatpush.bf16.msra.mxu0 %v4490
    %4512 = vmatpush.bf16.msra.mxu0 %v4488
    %4513 = vmatpush.bf16.msra.mxu0 %v4486
    %4514 = vmatpush.bf16.msra.mxu0 %v4484
    %4515 = vmatpush.bf16.msra.mxu0 %v4482
    %4516 = vmatpush.bf16.msra.mxu0 %v4480
    %4517 = vmatpush.bf16.msra.mxu0 %v4478
    %4518 = vmatmul.bf16.gmra.mxu0 %v4410
    %v4519 = vpop.f32.mrf.mxu0
    %v4520 = vadd.f32 %v4359, %v4519
    %v4521 = vpop.f32.mrf.mxu0
    %v4522 = vadd.f32 %v4361, %v4521
    %4523 = vmatmul.bf16.gmra.mxu0 %v4427
    %v4524 = vpop.f32.mrf.mxu0
    %v4525 = vadd.f32 %v4364, %v4524
    %v4526 = vpop.f32.mrf.mxu0
    %v4527 = vadd.f32 %v4366, %v4526
    %4528 = vdwg.mxu0
    %4529 = vmatpush.bf16.msra.mxu0 %v4493
    %4530 = vmatpush.bf16.msra.mxu0 %v4491
    %4531 = vmatpush.bf16.msra.mxu0 %v4489
    %4532 = vmatpush.bf16.msra.mxu0 %v4487
    %4533 = vmatpush.bf16.msra.mxu0 %v4485
    %4534 = vmatpush.bf16.msra.mxu0 %v4483
    %4535 = vmatpush.bf16.msra.mxu0 %v4481
    %4536 = vmatpush.bf16.msra.mxu0 %v4479
    %4537 = vmatmul.bf16.gmra.mxu0 %v4410
    %v4538 = vpop.f32.mrf.mxu0
    %v4539 = vadd.f32 %v4378, %v4538
    %v4540 = vpop.f32.mrf.mxu0
    %v4541 = vadd.f32 %v4380, %v4540
    %4542 = vmatmul.bf16.gmra.mxu0 %v4427
    %v4543 = vpop.f32.mrf.mxu0
    %v4544 = vadd.f32 %v4383, %v4543
    %v4545 = vpop.f32.mrf.mxu0
    %v4546 = vadd.f32 %v4385, %v4545
    %4547 = vdwg.mxu0
    %v4548 = vld [vmem:[%s1738] sm:$0x1]
    %v4549 = vld [vmem:[%s1738 + $0x1] sm:$0x1]
    %v4550 = vld [vmem:[%s1738 + $0x2] sm:$0x1]
    %v4551 = vld [vmem:[%s1738 + $0x3] sm:$0x1]
    %v4552 = vld [vmem:[%s1738 + $0x5] sm:$0x1]
    %v4553 = vld [vmem:[%s1738 + $0x6] sm:$0x1]
    %v4554 = vld [vmem:[%s1738 + $0x7] sm:$0x1]
    %v4555 = vld [vmem:[%s1738 + $0x8] sm:$0x1]
    %v4556 = vld [vmem:[%s1738 + $0xa] sm:$0x1]
    %v4557 = vld [vmem:[%s1738 + $0xb] sm:$0x1]
    %v4558 = vld [vmem:[%s1738 + $0xc] sm:$0x1]
    %v4559 = vld [vmem:[%s1738 + $0xd] sm:$0x1]
    %v4560 = vld [vmem:[%s1738 + $0xf] sm:$0x1]
    %v4561 = vld [vmem:[%s1738 + $0x10] sm:$0x1]
    %v4562 = vld [vmem:[%s1738 + $0x11] sm:$0x1]
    %v4563 = vld [vmem:[%s1738 + $0x12] sm:$0x1]
    %v4564 = vld [vmem:[%s537] sm:$0xff]
    %v4565 = vld [vmem:[%s537 + $0x8] sm:$0xff]
    %v4566 = vld [vmem:[%s537 + $0x10] sm:$0xff]
    %v4567 = vld [vmem:[%s537 + $0x18] sm:$0xff]
    %v4568 = vld [vmem:[%s537 + $0x20] sm:$0xff]
    %v4569 = vld [vmem:[%s537 + $0x28] sm:$0xff]
    %v4570 = vld [vmem:[%s537 + $0x30] sm:$0xff]
    %v4571 = vld [vmem:[%s537 + $0x38] sm:$0xff]
    %v4572 = vld [vmem:[%s537 + $0x40] sm:$0xff]
    %v4573 = vld [vmem:[%s537 + $0x48] sm:$0xff]
    %v4574 = vld [vmem:[%s537 + $0x50] sm:$0xff]
    %v4575 = vld [vmem:[%s537 + $0x58] sm:$0xff]
    %v4576 = vld [vmem:[%s537 + $0x60] sm:$0xff]
    %v4577 = vld [vmem:[%s537 + $0x68] sm:$0xff]
    %v4578 = vld [vmem:[%s537 + $0x70] sm:$0xff]
    %v4579 = vld [vmem:[%s537 + $0x78] sm:$0xff]
    %4581 = vst [vmem:[#allocation1] ss:$9 sm:$0xff] %v4548
    %s4583 = scalar_lea.vmem [#allocation1], 1
    %4584 = vst [vmem:[%s4583] ss:$9 sm:$0xff] %v4549
    %s4586 = scalar_lea.vmem [#allocation1], 2
    %4587 = vst [vmem:[%s4586] ss:$9 sm:$0xff] %v4550
    %s4589 = scalar_lea.vmem [#allocation1], 3
    %4590 = vst [vmem:[%s4589] ss:$9 sm:$0xff] %v4551
    %s4592 = scalar_lea.vmem [#allocation1], 4
    %4593 = vst [vmem:[%s4592] ss:$9 sm:$0xff] %v4552
    %s4595 = scalar_lea.vmem [#allocation1], 5
    %4596 = vst [vmem:[%s4595] ss:$9 sm:$0xff] %v4553
    %s4598 = scalar_lea.vmem [#allocation1], 6
    %4599 = vst [vmem:[%s4598] ss:$9 sm:$0xff] %v4554
    %s4601 = scalar_lea.vmem [#allocation1], 7
    %4602 = vst [vmem:[%s4601] ss:$9 sm:$0xff] %v4555
    %v4603 = vld [vmem:[#allocation1] sm:$0xff]
    %4605 = vst [vmem:[#allocation1] ss:$9 sm:$0xff] %v4556
    %4607 = vst [vmem:[%s4583] ss:$9 sm:$0xff] %v4557
    %4609 = vst [vmem:[%s4586] ss:$9 sm:$0xff] %v4558
    %4611 = vst [vmem:[%s4589] ss:$9 sm:$0xff] %v4559
    %4613 = vst [vmem:[%s4592] ss:$9 sm:$0xff] %v4560
    %4615 = vst [vmem:[%s4595] ss:$9 sm:$0xff] %v4561
    %4617 = vst [vmem:[%s4598] ss:$9 sm:$0xff] %v4562
    %4619 = vst [vmem:[%s4601] ss:$9 sm:$0xff] %v4563
    %v4620 = vld [vmem:[#allocation1] sm:$0xff]
    %v4639 = vunpack.c.l.b16 %v4564
    %v4640 = vunpack.c.h.b16 %v4564
    %v4641 = vunpack.c.l.b16 %v4565
    %v4642 = vunpack.c.h.b16 %v4565
    %v4643 = vunpack.c.l.b16 %v4566
    %v4644 = vunpack.c.h.b16 %v4566
    %v4645 = vunpack.c.l.b16 %v4567
    %v4646 = vunpack.c.h.b16 %v4567
    %v4647 = vunpack.c.l.b16 %v4568
    %v4648 = vunpack.c.h.b16 %v4568
    %v4649 = vunpack.c.l.b16 %v4569
    %v4650 = vunpack.c.h.b16 %v4569
    %v4651 = vunpack.c.l.b16 %v4570
    %v4652 = vunpack.c.h.b16 %v4570
    %v4653 = vunpack.c.l.b16 %v4571
    %v4654 = vunpack.c.h.b16 %v4571
    %v4655 = vunpack.c.l.b16 %v4572
    %v4656 = vunpack.c.h.b16 %v4572
    %v4657 = vunpack.c.l.b16 %v4573
    %v4658 = vunpack.c.h.b16 %v4573
    %v4659 = vunpack.c.l.b16 %v4574
    %v4660 = vunpack.c.h.b16 %v4574
    %v4661 = vunpack.c.l.b16 %v4575
    %v4662 = vunpack.c.h.b16 %v4575
    %v4663 = vunpack.c.l.b16 %v4576
    %v4664 = vunpack.c.h.b16 %v4576
    %v4665 = vunpack.c.l.b16 %v4577
    %v4666 = vunpack.c.h.b16 %v4577
    %v4667 = vunpack.c.l.b16 %v4578
    %v4668 = vunpack.c.h.b16 %v4578
    %v4669 = vunpack.c.l.b16 %v4579
    %v4670 = vunpack.c.h.b16 %v4579
    %v4671 = vpack.c.b16 %v4641, %v4639
    %v4672 = vpack.c.b16 %v4642, %v4640
    %v4673 = vpack.c.b16 %v4645, %v4643
    %v4674 = vpack.c.b16 %v4646, %v4644
    %v4675 = vpack.c.b16 %v4649, %v4647
    %v4676 = vpack.c.b16 %v4650, %v4648
    %v4677 = vpack.c.b16 %v4653, %v4651
    %v4678 = vpack.c.b16 %v4654, %v4652
    %v4679 = vpack.c.b16 %v4657, %v4655
    %v4680 = vpack.c.b16 %v4658, %v4656
    %v4681 = vpack.c.b16 %v4661, %v4659
    %v4682 = vpack.c.b16 %v4662, %v4660
    %v4683 = vpack.c.b16 %v4665, %v4663
    %v4684 = vpack.c.b16 %v4666, %v4664
    %v4685 = vpack.c.b16 %v4669, %v4667
    %v4686 = vpack.c.b16 %v4670, %v4668
    %4703 = vmatpush.bf16.msra.mxu0 %v4685
    %4704 = vmatpush.bf16.msra.mxu0 %v4683
    %4705 = vmatpush.bf16.msra.mxu0 %v4681
    %4706 = vmatpush.bf16.msra.mxu0 %v4679
    %4707 = vmatpush.bf16.msra.mxu0 %v4677
    %4708 = vmatpush.bf16.msra.mxu0 %v4675
    %4709 = vmatpush.bf16.msra.mxu0 %v4673
    %4710 = vmatpush.bf16.msra.mxu0 %v4671
    %4711 = vmatmul.bf16.gmra.mxu0 %v4603
    %v4712 = vpop.f32.mrf.mxu0
    %v4713 = vadd.f32 0.0, %v4712
    %v4714 = vpop.f32.mrf.mxu0
    %v4715 = vadd.f32 0.0, %v4714
    %4716 = vmatmul.bf16.gmra.mxu0 %v4620
    %v4717 = vpop.f32.mrf.mxu0
    %v4718 = vadd.f32 0.0, %v4717
    %v4719 = vpop.f32.mrf.mxu0
    %v4720 = vadd.f32 0.0, %v4719
    %4721 = vdwg.mxu0
    %4722 = vmatpush.bf16.msra.mxu0 %v4686
    %4723 = vmatpush.bf16.msra.mxu0 %v4684
    %4724 = vmatpush.bf16.msra.mxu0 %v4682
    %4725 = vmatpush.bf16.msra.mxu0 %v4680
    %4726 = vmatpush.bf16.msra.mxu0 %v4678
    %4727 = vmatpush.bf16.msra.mxu0 %v4676
    %4728 = vmatpush.bf16.msra.mxu0 %v4674
    %4729 = vmatpush.bf16.msra.mxu0 %v4672
    %4730 = vmatmul.bf16.gmra.mxu0 %v4603
    %v4731 = vpop.f32.mrf.mxu0
    %v4732 = vadd.f32 0.0, %v4731
    %v4733 = vpop.f32.mrf.mxu0
    %v4734 = vadd.f32 0.0, %v4733
    %4735 = vmatmul.bf16.gmra.mxu0 %v4620
    %v4736 = vpop.f32.mrf.mxu0
    %v4737 = vadd.f32 0.0, %v4736
    %v4738 = vpop.f32.mrf.mxu0
    %v4739 = vadd.f32 0.0, %v4738
    %4740 = vdwg.mxu0
    %v4741 = vadd.f32 %v4520, %v4713
    %v4742 = vadd.f32 %v4539, %v4732
    %v4743 = vadd.f32 %v4522, %v4715
    %v4744 = vadd.f32 %v4541, %v4734
    %v4745 = vadd.f32 %v4525, %v4718
    %v4746 = vadd.f32 %v4544, %v4737
    %v4747 = vadd.f32 %v4527, %v4720
    %v4748 = vadd.f32 %v4546, %v4739
    %s4749 = scalar_lea.vmem %s0, 280
    %v4750 = vld [vmem:[%s4749] sm:$0x1]
    %v4751 = vld [vmem:[%s4749 + $0x1] sm:$0x1]
    %v4752 = vld [vmem:[%s4749 + $0x2] sm:$0x1]
    %v4753 = vld [vmem:[%s4749 + $0x3] sm:$0x1]
    %v4754 = vld [vmem:[%s4749 + $0x5] sm:$0x1]
    %v4755 = vld [vmem:[%s4749 + $0x6] sm:$0x1]
    %v4756 = vld [vmem:[%s4749 + $0x7] sm:$0x1]
    %v4757 = vld [vmem:[%s4749 + $0x8] sm:$0x1]
    %v4758 = vld [vmem:[%s4749 + $0xa] sm:$0x1]
    %v4759 = vld [vmem:[%s4749 + $0xb] sm:$0x1]
    %v4760 = vld [vmem:[%s4749 + $0xc] sm:$0x1]
    %v4761 = vld [vmem:[%s4749 + $0xd] sm:$0x1]
    %v4762 = vld [vmem:[%s4749 + $0xf] sm:$0x1]
    %v4763 = vld [vmem:[%s4749 + $0x10] sm:$0x1]
    %v4764 = vld [vmem:[%s4749 + $0x11] sm:$0x1]
    %v4765 = vld [vmem:[%s4749 + $0x12] sm:$0x1]
    %v4766 = vld [vmem:[%s740] sm:$0xff]
    %v4767 = vld [vmem:[%s740 + $0x8] sm:$0xff]
    %v4768 = vld [vmem:[%s740 + $0x10] sm:$0xff]
    %v4769 = vld [vmem:[%s740 + $0x18] sm:$0xff]
    %v4770 = vld [vmem:[%s740 + $0x20] sm:$0xff]
    %v4771 = vld [vmem:[%s740 + $0x28] sm:$0xff]
    %v4772 = vld [vmem:[%s740 + $0x30] sm:$0xff]
    %v4773 = vld [vmem:[%s740 + $0x38] sm:$0xff]
    %v4774 = vld [vmem:[%s740 + $0x40] sm:$0xff]
    %v4775 = vld [vmem:[%s740 + $0x48] sm:$0xff]
    %v4776 = vld [vmem:[%s740 + $0x50] sm:$0xff]
    %v4777 = vld [vmem:[%s740 + $0x58] sm:$0xff]
    %v4778 = vld [vmem:[%s740 + $0x60] sm:$0xff]
    %v4779 = vld [vmem:[%s740 + $0x68] sm:$0xff]
    %v4780 = vld [vmem:[%s740 + $0x70] sm:$0xff]
    %v4781 = vld [vmem:[%s740 + $0x78] sm:$0xff]
    %4783 = vst [vmem:[#allocation1] ss:$9 sm:$0xff] %v4750
    %s4785 = scalar_lea.vmem [#allocation1], 1
    %4786 = vst [vmem:[%s4785] ss:$9 sm:$0xff] %v4751
    %s4788 = scalar_lea.vmem [#allocation1], 2
    %4789 = vst [vmem:[%s4788] ss:$9 sm:$0xff] %v4752
    %s4791 = scalar_lea.vmem [#allocation1], 3
    %4792 = vst [vmem:[%s4791] ss:$9 sm:$0xff] %v4753
    %s4794 = scalar_lea.vmem [#allocation1], 4
    %4795 = vst [vmem:[%s4794] ss:$9 sm:$0xff] %v4754
    %s4797 = scalar_lea.vmem [#allocation1], 5
    %4798 = vst [vmem:[%s4797] ss:$9 sm:$0xff] %v4755
    %s4800 = scalar_lea.vmem [#allocation1], 6
    %4801 = vst [vmem:[%s4800] ss:$9 sm:$0xff] %v4756
    %s4803 = scalar_lea.vmem [#allocation1], 7
    %4804 = vst [vmem:[%s4803] ss:$9 sm:$0xff] %v4757
    %v4805 = vld [vmem:[#allocation1] sm:$0xff]
    %4807 = vst [vmem:[#allocation1] ss:$9 sm:$0xff] %v4758
    %4809 = vst [vmem:[%s4785] ss:$9 sm:$0xff] %v4759
    %4811 = vst [vmem:[%s4788] ss:$9 sm:$0xff] %v4760
    %4813 = vst [vmem:[%s4791] ss:$9 sm:$0xff] %v4761
    %4815 = vst [vmem:[%s4794] ss:$9 sm:$0xff] %v4762
    %4817 = vst [vmem:[%s4797] ss:$9 sm:$0xff] %v4763
    %4819 = vst [vmem:[%s4800] ss:$9 sm:$0xff] %v4764
    %4821 = vst [vmem:[%s4803] ss:$9 sm:$0xff] %v4765
    %v4822 = vld [vmem:[#allocation1] sm:$0xff]
    %v4841 = vunpack.c.l.b16 %v4766
    %v4842 = vunpack.c.h.b16 %v4766
    %v4843 = vunpack.c.l.b16 %v4767
    %v4844 = vunpack.c.h.b16 %v4767
    %v4845 = vunpack.c.l.b16 %v4768
    %v4846 = vunpack.c.h.b16 %v4768
    %v4847 = vunpack.c.l.b16 %v4769
    %v4848 = vunpack.c.h.b16 %v4769
    %v4849 = vunpack.c.l.b16 %v4770
    %v4850 = vunpack.c.h.b16 %v4770
    %v4851 = vunpack.c.l.b16 %v4771
    %v4852 = vunpack.c.h.b16 %v4771
    %v4853 = vunpack.c.l.b16 %v4772
    %v4854 = vunpack.c.h.b16 %v4772
    %v4855 = vunpack.c.l.b16 %v4773
    %v4856 = vunpack.c.h.b16 %v4773
    %v4857 = vunpack.c.l.b16 %v4774
    %v4858 = vunpack.c.h.b16 %v4774
    %v4859 = vunpack.c.l.b16 %v4775
    %v4860 = vunpack.c.h.b16 %v4775
    %v4861 = vunpack.c.l.b16 %v4776
    %v4862 = vunpack.c.h.b16 %v4776
    %v4863 = vunpack.c.l.b16 %v4777
    %v4864 = vunpack.c.h.b16 %v4777
    %v4865 = vunpack.c.l.b16 %v4778
    %v4866 = vunpack.c.h.b16 %v4778
    %v4867 = vunpack.c.l.b16 %v4779
    %v4868 = vunpack.c.h.b16 %v4779
    %v4869 = vunpack.c.l.b16 %v4780
    %v4870 = vunpack.c.h.b16 %v4780
    %v4871 = vunpack.c.l.b16 %v4781
    %v4872 = vunpack.c.h.b16 %v4781
    %v4873 = vpack.c.b16 %v4843, %v4841
    %v4874 = vpack.c.b16 %v4844, %v4842
    %v4875 = vpack.c.b16 %v4847, %v4845
    %v4876 = vpack.c.b16 %v4848, %v4846
    %v4877 = vpack.c.b16 %v4851, %v4849
    %v4878 = vpack.c.b16 %v4852, %v4850
    %v4879 = vpack.c.b16 %v4855, %v4853
    %v4880 = vpack.c.b16 %v4856, %v4854
    %v4881 = vpack.c.b16 %v4859, %v4857
    %v4882 = vpack.c.b16 %v4860, %v4858
    %v4883 = vpack.c.b16 %v4863, %v4861
    %v4884 = vpack.c.b16 %v4864, %v4862
    %v4885 = vpack.c.b16 %v4867, %v4865
    %v4886 = vpack.c.b16 %v4868, %v4866
    %v4887 = vpack.c.b16 %v4871, %v4869
    %v4888 = vpack.c.b16 %v4872, %v4870
    %4905 = vmatpush.bf16.msra.mxu0 %v4887
    %4906 = vmatpush.bf16.msra.mxu0 %v4885
    %4907 = vmatpush.bf16.msra.mxu0 %v4883
    %4908 = vmatpush.bf16.msra.mxu0 %v4881
    %4909 = vmatpush.bf16.msra.mxu0 %v4879
    %4910 = vmatpush.bf16.msra.mxu0 %v4877
    %4911 = vmatpush.bf16.msra.mxu0 %v4875
    %4912 = vmatpush.bf16.msra.mxu0 %v4873
    %4913 = vmatmul.bf16.gmra.mxu0 %v4805
    %v4914 = vpop.f32.mrf.mxu0
    %v4915 = vadd.f32 0.0, %v4914
    %v4916 = vpop.f32.mrf.mxu0
    %v4917 = vadd.f32 0.0, %v4916
    %4918 = vmatmul.bf16.gmra.mxu0 %v4822
    %v4919 = vpop.f32.mrf.mxu0
    %v4920 = vadd.f32 0.0, %v4919
    %v4921 = vpop.f32.mrf.mxu0
    %v4922 = vadd.f32 0.0, %v4921
    %4923 = vdwg.mxu0
    %4924 = vmatpush.bf16.msra.mxu0 %v4888
    %4925 = vmatpush.bf16.msra.mxu0 %v4886
    %4926 = vmatpush.bf16.msra.mxu0 %v4884
    %4927 = vmatpush.bf16.msra.mxu0 %v4882
    %4928 = vmatpush.bf16.msra.mxu0 %v4880
    %4929 = vmatpush.bf16.msra.mxu0 %v4878
    %4930 = vmatpush.bf16.msra.mxu0 %v4876
    %4931 = vmatpush.bf16.msra.mxu0 %v4874
    %4932 = vmatmul.bf16.gmra.mxu0 %v4805
    %v4933 = vpop.f32.mrf.mxu0
    %v4934 = vadd.f32 0.0, %v4933
    %v4935 = vpop.f32.mrf.mxu0
    %v4936 = vadd.f32 0.0, %v4935
    %4937 = vmatmul.bf16.gmra.mxu0 %v4822
    %v4938 = vpop.f32.mrf.mxu0
    %v4939 = vadd.f32 0.0, %v4938
    %v4940 = vpop.f32.mrf.mxu0
    %v4941 = vadd.f32 0.0, %v4940
    %4942 = vdwg.mxu0
    %v4943 = vadd.f32 %v4741, %v4915
    %v4944 = vadd.f32 %v4742, %v4934
    %v4945 = vadd.f32 %v4743, %v4917
    %v4946 = vadd.f32 %v4744, %v4936
    %v4947 = vadd.f32 %v4745, %v4920
    %v4948 = vadd.f32 %v4746, %v4939
    %v4949 = vadd.f32 %v4747, %v4922
    %v4950 = vadd.f32 %v4748, %v4941
    %s4951 = scalar_lea.vmem %s0, 206
    %v4952 = vld [vmem:[%s4951] sm:$0x1]
    %v4953 = vld [vmem:[%s4951 + $0x1] sm:$0x1]
    %v4954 = vld [vmem:[%s4951 + $0x2] sm:$0x1]
    %v4955 = vld [vmem:[%s4951 + $0x3] sm:$0x1]
    %v4956 = vld [vmem:[%s4951 + $0x5] sm:$0x1]
    %v4957 = vld [vmem:[%s4951 + $0x6] sm:$0x1]
    %v4958 = vld [vmem:[%s4951 + $0x7] sm:$0x1]
    %v4959 = vld [vmem:[%s4951 + $0x8] sm:$0x1]
    %v4960 = vld [vmem:[%s4951 + $0xa] sm:$0x1]
    %v4961 = vld [vmem:[%s4951 + $0xb] sm:$0x1]
    %v4962 = vld [vmem:[%s4951 + $0xc] sm:$0x1]
    %v4963 = vld [vmem:[%s4951 + $0xd] sm:$0x1]
    %v4964 = vld [vmem:[%s4951 + $0xf] sm:$0x1]
    %v4965 = vld [vmem:[%s4951 + $0x10] sm:$0x1]
    %v4966 = vld [vmem:[%s4951 + $0x11] sm:$0x1]
    %v4967 = vld [vmem:[%s4951 + $0x12] sm:$0x1]
    %v4968 = vld [vmem:[%s943] sm:$0xff]
    %v4969 = vld [vmem:[%s943 + $0x8] sm:$0xff]
    %v4970 = vld [vmem:[%s943 + $0x10] sm:$0xff]
    %v4971 = vld [vmem:[%s943 + $0x18] sm:$0xff]
    %v4972 = vld [vmem:[%s943 + $0x20] sm:$0xff]
    %v4973 = vld [vmem:[%s943 + $0x28] sm:$0xff]
    %v4974 = vld [vmem:[%s943 + $0x30] sm:$0xff]
    %v4975 = vld [vmem:[%s943 + $0x38] sm:$0xff]
    %v4976 = vld [vmem:[%s943 + $0x40] sm:$0xff]
    %v4977 = vld [vmem:[%s943 + $0x48] sm:$0xff]
    %v4978 = vld [vmem:[%s943 + $0x50] sm:$0xff]
    %v4979 = vld [vmem:[%s943 + $0x58] sm:$0xff]
    %v4980 = vld [vmem:[%s943 + $0x60] sm:$0xff]
    %v4981 = vld [vmem:[%s943 + $0x68] sm:$0xff]
    %v4982 = vld [vmem:[%s943 + $0x70] sm:$0xff]
    %v4983 = vld [vmem:[%s943 + $0x78] sm:$0xff]
    %4985 = vst [vmem:[#allocation1] ss:$9 sm:$0xff] %v4952
    %s4987 = scalar_lea.vmem [#allocation1], 1
    %4988 = vst [vmem:[%s4987] ss:$9 sm:$0xff] %v4953
    %s4990 = scalar_lea.vmem [#allocation1], 2
    %4991 = vst [vmem:[%s4990] ss:$9 sm:$0xff] %v4954
    %s4993 = scalar_lea.vmem [#allocation1], 3
    %4994 = vst [vmem:[%s4993] ss:$9 sm:$0xff] %v4955
    %s4996 = scalar_lea.vmem [#allocation1], 4
    %4997 = vst [vmem:[%s4996] ss:$9 sm:$0xff] %v4956
    %s4999 = scalar_lea.vmem [#allocation1], 5
    %5000 = vst [vmem:[%s4999] ss:$9 sm:$0xff] %v4957
    %s5002 = scalar_lea.vmem [#allocation1], 6
    %5003 = vst [vmem:[%s5002] ss:$9 sm:$0xff] %v4958
    %s5005 = scalar_lea.vmem [#allocation1], 7
    %5006 = vst [vmem:[%s5005] ss:$9 sm:$0xff] %v4959
    %v5007 = vld [vmem:[#allocation1] sm:$0xff]
    %5009 = vst [vmem:[#allocation1] ss:$9 sm:$0xff] %v4960
    %5011 = vst [vmem:[%s4987] ss:$9 sm:$0xff] %v4961
    %5013 = vst [vmem:[%s4990] ss:$9 sm:$0xff] %v4962
    %5015 = vst [vmem:[%s4993] ss:$9 sm:$0xff] %v4963
    %5017 = vst [vmem:[%s4996] ss:$9 sm:$0xff] %v4964
    %5019 = vst [vmem:[%s4999] ss:$9 sm:$0xff] %v4965
    %5021 = vst [vmem:[%s5002] ss:$9 sm:$0xff] %v4966
    %5023 = vst [vmem:[%s5005] ss:$9 sm:$0xff] %v4967
    %v5024 = vld [vmem:[#allocation1] sm:$0xff]
    %v5043 = vunpack.c.l.b16 %v4968
    %v5044 = vunpack.c.h.b16 %v4968
    %v5045 = vunpack.c.l.b16 %v4969
    %v5046 = vunpack.c.h.b16 %v4969
    %v5047 = vunpack.c.l.b16 %v4970
    %v5048 = vunpack.c.h.b16 %v4970
    %v5049 = vunpack.c.l.b16 %v4971
    %v5050 = vunpack.c.h.b16 %v4971
    %v5051 = vunpack.c.l.b16 %v4972
    %v5052 = vunpack.c.h.b16 %v4972
    %v5053 = vunpack.c.l.b16 %v4973
    %v5054 = vunpack.c.h.b16 %v4973
    %v5055 = vunpack.c.l.b16 %v4974
    %v5056 = vunpack.c.h.b16 %v4974
    %v5057 = vunpack.c.l.b16 %v4975
    %v5058 = vunpack.c.h.b16 %v4975
    %v5059 = vunpack.c.l.b16 %v4976
    %v5060 = vunpack.c.h.b16 %v4976
    %v5061 = vunpack.c.l.b16 %v4977
    %v5062 = vunpack.c.h.b16 %v4977
    %v5063 = vunpack.c.l.b16 %v4978
    %v5064 = vunpack.c.h.b16 %v4978
    %v5065 = vunpack.c.l.b16 %v4979
    %v5066 = vunpack.c.h.b16 %v4979
    %v5067 = vunpack.c.l.b16 %v4980
    %v5068 = vunpack.c.h.b16 %v4980
    %v5069 = vunpack.c.l.b16 %v4981
    %v5070 = vunpack.c.h.b16 %v4981
    %v5071 = vunpack.c.l.b16 %v4982
    %v5072 = vunpack.c.h.b16 %v4982
    %v5073 = vunpack.c.l.b16 %v4983
    %v5074 = vunpack.c.h.b16 %v4983
    %v5075 = vpack.c.b16 %v5045, %v5043
    %v5076 = vpack.c.b16 %v5046, %v5044
    %v5077 = vpack.c.b16 %v5049, %v5047
    %v5078 = vpack.c.b16 %v5050, %v5048
    %v5079 = vpack.c.b16 %v5053, %v5051
    %v5080 = vpack.c.b16 %v5054, %v5052
    %v5081 = vpack.c.b16 %v5057, %v5055
    %v5082 = vpack.c.b16 %v5058, %v5056
    %v5083 = vpack.c.b16 %v5061, %v5059
    %v5084 = vpack.c.b16 %v5062, %v5060
    %v5085 = vpack.c.b16 %v5065, %v5063
    %v5086 = vpack.c.b16 %v5066, %v5064
    %v5087 = vpack.c.b16 %v5069, %v5067
    %v5088 = vpack.c.b16 %v5070, %v5068
    %v5089 = vpack.c.b16 %v5073, %v5071
    %v5090 = vpack.c.b16 %v5074, %v5072
    %5107 = vmatpush.bf16.msra.mxu0 %v5089
    %5108 = vmatpush.bf16.msra.mxu0 %v5087
    %5109 = vmatpush.bf16.msra.mxu0 %v5085
    %5110 = vmatpush.bf16.msra.mxu0 %v5083
    %5111 = vmatpush.bf16.msra.mxu0 %v5081
    %5112 = vmatpush.bf16.msra.mxu0 %v5079
    %5113 = vmatpush.bf16.msra.mxu0 %v5077
    %5114 = vmatpush.bf16.msra.mxu0 %v5075
    %5115 = vmatmul.bf16.gmra.mxu0 %v5007
    %v5116 = vpop.f32.mrf.mxu0
    %v5117 = vadd.f32 0.0, %v5116
    %v5118 = vpop.f32.mrf.mxu0
    %v5119 = vadd.f32 0.0, %v5118
    %5120 = vmatmul.bf16.gmra.mxu0 %v5024
    %v5121 = vpop.f32.mrf.mxu0
    %v5122 = vadd.f32 0.0, %v5121
    %v5123 = vpop.f32.mrf.mxu0
    %v5124 = vadd.f32 0.0, %v5123
    %5125 = vdwg.mxu0
    %5126 = vmatpush.bf16.msra.mxu0 %v5090
    %5127 = vmatpush.bf16.msra.mxu0 %v5088
    %5128 = vmatpush.bf16.msra.mxu0 %v5086
    %5129 = vmatpush.bf16.msra.mxu0 %v5084
    %5130 = vmatpush.bf16.msra.mxu0 %v5082
    %5131 = vmatpush.bf16.msra.mxu0 %v5080
    %5132 = vmatpush.bf16.msra.mxu0 %v5078
    %5133 = vmatpush.bf16.msra.mxu0 %v5076
    %5134 = vmatmul.bf16.gmra.mxu0 %v5007
    %v5135 = vpop.f32.mrf.mxu0
    %v5136 = vadd.f32 0.0, %v5135
    %v5137 = vpop.f32.mrf.mxu0
    %v5138 = vadd.f32 0.0, %v5137
    %5139 = vmatmul.bf16.gmra.mxu0 %v5024
    %v5140 = vpop.f32.mrf.mxu0
    %v5141 = vadd.f32 0.0, %v5140
    %v5142 = vpop.f32.mrf.mxu0
    %v5143 = vadd.f32 0.0, %v5142
    %5144 = vdwg.mxu0
    %v5145 = vadd.f32 %v4943, %v5117
    %v5146 = vadd.f32 %v4944, %v5136
    %v5147 = vadd.f32 %v4945, %v5119
    %v5148 = vadd.f32 %v4946, %v5138
    %v5149 = vadd.f32 %v4947, %v5122
    %v5150 = vadd.f32 %v4948, %v5141
    %v5151 = vadd.f32 %v4949, %v5124
    %v5152 = vadd.f32 %v4950, %v5143
    %s5153 = scalar_lea.vmem %s0, 231
    %v5154 = vld [vmem:[%s5153] sm:$0x1]
    %v5155 = vld [vmem:[%s5153 + $0x1] sm:$0x1]
    %v5156 = vld [vmem:[%s5153 + $0x2] sm:$0x1]
    %v5157 = vld [vmem:[%s5153 + $0x3] sm:$0x1]
    %v5158 = vld [vmem:[%s5153 + $0x5] sm:$0x1]
    %v5159 = vld [vmem:[%s5153 + $0x6] sm:$0x1]
    %v5160 = vld [vmem:[%s5153 + $0x7] sm:$0x1]
    %v5161 = vld [vmem:[%s5153 + $0x8] sm:$0x1]
    %v5162 = vld [vmem:[%s5153 + $0xa] sm:$0x1]
    %v5163 = vld [vmem:[%s5153 + $0xb] sm:$0x1]
    %v5164 = vld [vmem:[%s5153 + $0xc] sm:$0x1]
    %v5165 = vld [vmem:[%s5153 + $0xd] sm:$0x1]
    %v5166 = vld [vmem:[%s5153 + $0xf] sm:$0x1]
    %v5167 = vld [vmem:[%s5153 + $0x10] sm:$0x1]
    %v5168 = vld [vmem:[%s5153 + $0x11] sm:$0x1]
    %v5169 = vld [vmem:[%s5153 + $0x12] sm:$0x1]
    %v5170 = vld [vmem:[%s1146] sm:$0xff]
    %v5171 = vld [vmem:[%s1146 + $0x8] sm:$0xff]
    %v5172 = vld [vmem:[%s1146 + $0x10] sm:$0xff]
    %v5173 = vld [vmem:[%s1146 + $0x18] sm:$0xff]
    %v5174 = vld [vmem:[%s1146 + $0x20] sm:$0xff]
    %v5175 = vld [vmem:[%s1146 + $0x28] sm:$0xff]
    %v5176 = vld [vmem:[%s1146 + $0x30] sm:$0xff]
    %v5177 = vld [vmem:[%s1146 + $0x38] sm:$0xff]
    %v5178 = vld [vmem:[%s1146 + $0x40] sm:$0xff]
    %v5179 = vld [vmem:[%s1146 + $0x48] sm:$0xff]
    %v5180 = vld [vmem:[%s1146 + $0x50] sm:$0xff]
    %v5181 = vld [vmem:[%s1146 + $0x58] sm:$0xff]
    %v5182 = vld [vmem:[%s1146 + $0x60] sm:$0xff]
    %v5183 = vld [vmem:[%s1146 + $0x68] sm:$0xff]
    %v5184 = vld [vmem:[%s1146 + $0x70] sm:$0xff]
    %v5185 = vld [vmem:[%s1146 + $0x78] sm:$0xff]
    %5187 = vst [vmem:[#allocation1] ss:$9 sm:$0xff] %v5154
    %s5189 = scalar_lea.vmem [#allocation1], 1
    %5190 = vst [vmem:[%s5189] ss:$9 sm:$0xff] %v5155
    %s5192 = scalar_lea.vmem [#allocation1], 2
    %5193 = vst [vmem:[%s5192] ss:$9 sm:$0xff] %v5156
    %s5195 = scalar_lea.vmem [#allocation1], 3
    %5196 = vst [vmem:[%s5195] ss:$9 sm:$0xff] %v5157
    %s5198 = scalar_lea.vmem [#allocation1], 4
    %5199 = vst [vmem:[%s5198] ss:$9 sm:$0xff] %v5158
    %s5201 = scalar_lea.vmem [#allocation1], 5
    %5202 = vst [vmem:[%s5201] ss:$9 sm:$0xff] %v5159
    %s5204 = scalar_lea.vmem [#allocation1], 6
    %5205 = vst [vmem:[%s5204] ss:$9 sm:$0xff] %v5160
    %s5207 = scalar_lea.vmem [#allocation1], 7
    %5208 = vst [vmem:[%s5207] ss:$9 sm:$0xff] %v5161
    %v5209 = vld [vmem:[#allocation1] sm:$0xff]
    %5211 = vst [vmem:[#allocation1] ss:$9 sm:$0xff] %v5162
    %5213 = vst [vmem:[%s5189] ss:$9 sm:$0xff] %v5163
    %5215 = vst [vmem:[%s5192] ss:$9 sm:$0xff] %v5164
    %5217 = vst [vmem:[%s5195] ss:$9 sm:$0xff] %v5165
    %5219 = vst [vmem:[%s5198] ss:$9 sm:$0xff] %v5166
    %5221 = vst [vmem:[%s5201] ss:$9 sm:$0xff] %v5167
    %5223 = vst [vmem:[%s5204] ss:$9 sm:$0xff] %v5168
    %5225 = vst [vmem:[%s5207] ss:$9 sm:$0xff] %v5169
    %v5226 = vld [vmem:[#allocation1] sm:$0xff]
    %v5245 = vunpack.c.l.b16 %v5170
    %v5246 = vunpack.c.h.b16 %v5170
    %v5247 = vunpack.c.l.b16 %v5171
    %v5248 = vunpack.c.h.b16 %v5171
    %v5249 = vunpack.c.l.b16 %v5172
    %v5250 = vunpack.c.h.b16 %v5172
    %v5251 = vunpack.c.l.b16 %v5173
    %v5252 = vunpack.c.h.b16 %v5173
    %v5253 = vunpack.c.l.b16 %v5174
    %v5254 = vunpack.c.h.b16 %v5174
    %v5255 = vunpack.c.l.b16 %v5175
    %v5256 = vunpack.c.h.b16 %v5175
    %v5257 = vunpack.c.l.b16 %v5176
    %v5258 = vunpack.c.h.b16 %v5176
    %v5259 = vunpack.c.l.b16 %v5177
    %v5260 = vunpack.c.h.b16 %v5177
    %v5261 = vunpack.c.l.b16 %v5178
    %v5262 = vunpack.c.h.b16 %v5178
    %v5263 = vunpack.c.l.b16 %v5179
    %v5264 = vunpack.c.h.b16 %v5179
    %v5265 = vunpack.c.l.b16 %v5180
    %v5266 = vunpack.c.h.b16 %v5180
    %v5267 = vunpack.c.l.b16 %v5181
    %v5268 = vunpack.c.h.b16 %v5181
    %v5269 = vunpack.c.l.b16 %v5182
    %v5270 = vunpack.c.h.b16 %v5182
    %v5271 = vunpack.c.l.b16 %v5183
    %v5272 = vunpack.c.h.b16 %v5183
    %v5273 = vunpack.c.l.b16 %v5184
    %v5274 = vunpack.c.h.b16 %v5184
    %v5275 = vunpack.c.l.b16 %v5185
    %v5276 = vunpack.c.h.b16 %v5185
    %v5277 = vpack.c.b16 %v5247, %v5245
    %v5278 = vpack.c.b16 %v5248, %v5246
    %v5279 = vpack.c.b16 %v5251, %v5249
    %v5280 = vpack.c.b16 %v5252, %v5250
    %v5281 = vpack.c.b16 %v5255, %v5253
    %v5282 = vpack.c.b16 %v5256, %v5254
    %v5283 = vpack.c.b16 %v5259, %v5257
    %v5284 = vpack.c.b16 %v5260, %v5258
    %v5285 = vpack.c.b16 %v5263, %v5261
    %v5286 = vpack.c.b16 %v5264, %v5262
    %v5287 = vpack.c.b16 %v5267, %v5265
    %v5288 = vpack.c.b16 %v5268, %v5266
    %v5289 = vpack.c.b16 %v5271, %v5269
    %v5290 = vpack.c.b16 %v5272, %v5270
    %v5291 = vpack.c.b16 %v5275, %v5273
    %v5292 = vpack.c.b16 %v5276, %v5274
    %5309 = vmatpush.bf16.msra.mxu0 %v5291
    %5310 = vmatpush.bf16.msra.mxu0 %v5289
    %5311 = vmatpush.bf16.msra.mxu0 %v5287
    %5312 = vmatpush.bf16.msra.mxu0 %v5285
    %5313 = vmatpush.bf16.msra.mxu0 %v5283
    %5314 = vmatpush.bf16.msra.mxu0 %v5281
    %5315 = vmatpush.bf16.msra.mxu0 %v5279
    %5316 = vmatpush.bf16.msra.mxu0 %v5277
    %5317 = vmatmul.bf16.gmra.mxu0 %v5209
    %v5318 = vpop.f32.mrf.mxu0
    %v5319 = vadd.f32 0.0, %v5318
    %v5320 = vpop.f32.mrf.mxu0
    %v5321 = vadd.f32 0.0, %v5320
    %5322 = vmatmul.bf16.gmra.mxu0 %v5226
    %v5323 = vpop.f32.mrf.mxu0
    %v5324 = vadd.f32 0.0, %v5323
    %v5325 = vpop.f32.mrf.mxu0
    %v5326 = vadd.f32 0.0, %v5325
    %5327 = vdwg.mxu0
    %5328 = vmatpush.bf16.msra.mxu0 %v5292
    %5329 = vmatpush.bf16.msra.mxu0 %v5290
    %5330 = vmatpush.bf16.msra.mxu0 %v5288
    %5331 = vmatpush.bf16.msra.mxu0 %v5286
    %5332 = vmatpush.bf16.msra.mxu0 %v5284
    %5333 = vmatpush.bf16.msra.mxu0 %v5282
    %5334 = vmatpush.bf16.msra.mxu0 %v5280
    %5335 = vmatpush.bf16.msra.mxu0 %v5278
    %5336 = vmatmul.bf16.gmra.mxu0 %v5209
    %v5337 = vpop.f32.mrf.mxu0
    %v5338 = vadd.f32 0.0, %v5337
    %v5339 = vpop.f32.mrf.mxu0
    %v5340 = vadd.f32 0.0, %v5339
    %5341 = vmatmul.bf16.gmra.mxu0 %v5226
    %v5342 = vpop.f32.mrf.mxu0
    %v5343 = vadd.f32 0.0, %v5342
    %v5344 = vpop.f32.mrf.mxu0
    %v5345 = vadd.f32 0.0, %v5344
    %5346 = vdwg.mxu0
    %v5347 = vadd.f32 %v5145, %v5319
    %v5348 = vadd.f32 %v5146, %v5338
    %v5349 = vadd.f32 %v5147, %v5321
    %v5350 = vadd.f32 %v5148, %v5340
    %v5351 = vadd.f32 %v5149, %v5324
    %v5352 = vadd.f32 %v5150, %v5343
    %v5353 = vadd.f32 %v5151, %v5326
    %v5354 = vadd.f32 %v5152, %v5345
    %s5355 = scalar_lea.vmem %s0, 380
    %v5356 = vld [vmem:[%s5355] sm:$0x1]
    %v5357 = vld [vmem:[%s5355 + $0x1] sm:$0x1]
    %v5358 = vld [vmem:[%s5355 + $0x2] sm:$0x1]
    %v5359 = vld [vmem:[%s5355 + $0x3] sm:$0x1]
    %v5360 = vld [vmem:[%s5355 + $0x5] sm:$0x1]
    %v5361 = vld [vmem:[%s5355 + $0x6] sm:$0x1]
    %v5362 = vld [vmem:[%s5355 + $0x7] sm:$0x1]
    %v5363 = vld [vmem:[%s5355 + $0x8] sm:$0x1]
    %v5364 = vld [vmem:[%s5355 + $0xa] sm:$0x1]
    %v5365 = vld [vmem:[%s5355 + $0xb] sm:$0x1]
    %v5366 = vld [vmem:[%s5355 + $0xc] sm:$0x1]
    %v5367 = vld [vmem:[%s5355 + $0xd] sm:$0x1]
    %v5368 = vld [vmem:[%s5355 + $0xf] sm:$0x1]
    %v5369 = vld [vmem:[%s5355 + $0x10] sm:$0x1]
    %v5370 = vld [vmem:[%s5355 + $0x11] sm:$0x1]
    %v5371 = vld [vmem:[%s5355 + $0x12] sm:$0x1]
    %v5372 = vld [vmem:[%s1349] sm:$0xff]
    %v5373 = vld [vmem:[%s1349 + $0x8] sm:$0xff]
    %v5374 = vld [vmem:[%s1349 + $0x10] sm:$0xff]
    %v5375 = vld [vmem:[%s1349 + $0x18] sm:$0xff]
    %v5376 = vld [vmem:[%s1349 + $0x20] sm:$0xff]
    %v5377 = vld [vmem:[%s1349 + $0x28] sm:$0xff]
    %v5378 = vld [vmem:[%s1349 + $0x30] sm:$0xff]
    %v5379 = vld [vmem:[%s1349 + $0x38] sm:$0xff]
    %v5380 = vld [vmem:[%s1349 + $0x40] sm:$0xff]
    %v5381 = vld [vmem:[%s1349 + $0x48] sm:$0xff]
    %v5382 = vld [vmem:[%s1349 + $0x50] sm:$0xff]
    %v5383 = vld [vmem:[%s1349 + $0x58] sm:$0xff]
    %v5384 = vld [vmem:[%s1349 + $0x60] sm:$0xff]
    %v5385 = vld [vmem:[%s1349 + $0x68] sm:$0xff]
    %v5386 = vld [vmem:[%s1349 + $0x70] sm:$0xff]
    %v5387 = vld [vmem:[%s1349 + $0x78] sm:$0xff]
    %5389 = vst [vmem:[#allocation1] ss:$9 sm:$0xff] %v5356
    %s5391 = scalar_lea.vmem [#allocation1], 1
    %5392 = vst [vmem:[%s5391] ss:$9 sm:$0xff] %v5357
    %s5394 = scalar_lea.vmem [#allocation1], 2
    %5395 = vst [vmem:[%s5394] ss:$9 sm:$0xff] %v5358
    %s5397 = scalar_lea.vmem [#allocation1], 3
    %5398 = vst [vmem:[%s5397] ss:$9 sm:$0xff] %v5359
    %s5400 = scalar_lea.vmem [#allocation1], 4
    %5401 = vst [vmem:[%s5400] ss:$9 sm:$0xff] %v5360
    %s5403 = scalar_lea.vmem [#allocation1], 5
    %5404 = vst [vmem:[%s5403] ss:$9 sm:$0xff] %v5361
    %s5406 = scalar_lea.vmem [#allocation1], 6
    %5407 = vst [vmem:[%s5406] ss:$9 sm:$0xff] %v5362
    %s5409 = scalar_lea.vmem [#allocation1], 7
    %5410 = vst [vmem:[%s5409] ss:$9 sm:$0xff] %v5363
    %v5411 = vld [vmem:[#allocation1] sm:$0xff]
    %5413 = vst [vmem:[#allocation1] ss:$9 sm:$0xff] %v5364
    %5415 = vst [vmem:[%s5391] ss:$9 sm:$0xff] %v5365
    %5417 = vst [vmem:[%s5394] ss:$9 sm:$0xff] %v5366
    %5419 = vst [vmem:[%s5397] ss:$9 sm:$0xff] %v5367
    %5421 = vst [vmem:[%s5400] ss:$9 sm:$0xff] %v5368
    %5423 = vst [vmem:[%s5403] ss:$9 sm:$0xff] %v5369
    %5425 = vst [vmem:[%s5406] ss:$9 sm:$0xff] %v5370
    %5427 = vst [vmem:[%s5409] ss:$9 sm:$0xff] %v5371
    %v5428 = vld [vmem:[#allocation1] sm:$0xff]
    %v5447 = vunpack.c.l.b16 %v5372
    %v5448 = vunpack.c.h.b16 %v5372
    %v5449 = vunpack.c.l.b16 %v5373
    %v5450 = vunpack.c.h.b16 %v5373
    %v5451 = vunpack.c.l.b16 %v5374
    %v5452 = vunpack.c.h.b16 %v5374
    %v5453 = vunpack.c.l.b16 %v5375
    %v5454 = vunpack.c.h.b16 %v5375
    %v5455 = vunpack.c.l.b16 %v5376
    %v5456 = vunpack.c.h.b16 %v5376
    %v5457 = vunpack.c.l.b16 %v5377
    %v5458 = vunpack.c.h.b16 %v5377
    %v5459 = vunpack.c.l.b16 %v5378
    %v5460 = vunpack.c.h.b16 %v5378
    %v5461 = vunpack.c.l.b16 %v5379
    %v5462 = vunpack.c.h.b16 %v5379
    %v5463 = vunpack.c.l.b16 %v5380
    %v5464 = vunpack.c.h.b16 %v5380
    %v5465 = vunpack.c.l.b16 %v5381
    %v5466 = vunpack.c.h.b16 %v5381
    %v5467 = vunpack.c.l.b16 %v5382
    %v5468 = vunpack.c.h.b16 %v5382
    %v5469 = vunpack.c.l.b16 %v5383
    %v5470 = vunpack.c.h.b16 %v5383
    %v5471 = vunpack.c.l.b16 %v5384
    %v5472 = vunpack.c.h.b16 %v5384
    %v5473 = vunpack.c.l.b16 %v5385
    %v5474 = vunpack.c.h.b16 %v5385
    %v5475 = vunpack.c.l.b16 %v5386
    %v5476 = vunpack.c.h.b16 %v5386
    %v5477 = vunpack.c.l.b16 %v5387
    %v5478 = vunpack.c.h.b16 %v5387
    %v5479 = vpack.c.b16 %v5449, %v5447
    %v5480 = vpack.c.b16 %v5450, %v5448
    %v5481 = vpack.c.b16 %v5453, %v5451
    %v5482 = vpack.c.b16 %v5454, %v5452
    %v5483 = vpack.c.b16 %v5457, %v5455
    %v5484 = vpack.c.b16 %v5458, %v5456
    %v5485 = vpack.c.b16 %v5461, %v5459
    %v5486 = vpack.c.b16 %v5462, %v5460
    %v5487 = vpack.c.b16 %v5465, %v5463
    %v5488 = vpack.c.b16 %v5466, %v5464
    %v5489 = vpack.c.b16 %v5469, %v5467
    %v5490 = vpack.c.b16 %v5470, %v5468
    %v5491 = vpack.c.b16 %v5473, %v5471
    %v5492 = vpack.c.b16 %v5474, %v5472
    %v5493 = vpack.c.b16 %v5477, %v5475
    %v5494 = vpack.c.b16 %v5478, %v5476
    %5511 = vmatpush.bf16.msra.mxu0 %v5493
    %5512 = vmatpush.bf16.msra.mxu0 %v5491
    %5513 = vmatpush.bf16.msra.mxu0 %v5489
    %5514 = vmatpush.bf16.msra.mxu0 %v5487
    %5515 = vmatpush.bf16.msra.mxu0 %v5485
    %5516 = vmatpush.bf16.msra.mxu0 %v5483
    %5517 = vmatpush.bf16.msra.mxu0 %v5481
    %5518 = vmatpush.bf16.msra.mxu0 %v5479
    %5519 = vmatmul.bf16.gmra.mxu0 %v5411
    %v5520 = vpop.f32.mrf.mxu0
    %v5521 = vadd.f32 0.0, %v5520
    %v5522 = vpop.f32.mrf.mxu0
    %v5523 = vadd.f32 0.0, %v5522
    %5524 = vmatmul.bf16.gmra.mxu0 %v5428
    %v5525 = vpop.f32.mrf.mxu0
    %v5526 = vadd.f32 0.0, %v5525
    %v5527 = vpop.f32.mrf.mxu0
    %v5528 = vadd.f32 0.0, %v5527
    %5529 = vdwg.mxu0
    %5530 = vmatpush.bf16.msra.mxu0 %v5494
    %5531 = vmatpush.bf16.msra.mxu0 %v5492
    %5532 = vmatpush.bf16.msra.mxu0 %v5490
    %5533 = vmatpush.bf16.msra.mxu0 %v5488
    %5534 = vmatpush.bf16.msra.mxu0 %v5486
    %5535 = vmatpush.bf16.msra.mxu0 %v5484
    %5536 = vmatpush.bf16.msra.mxu0 %v5482
    %5537 = vmatpush.bf16.msra.mxu0 %v5480
    %5538 = vmatmul.bf16.gmra.mxu0 %v5411
    %v5539 = vpop.f32.mrf.mxu0
    %v5540 = vadd.f32 0.0, %v5539
    %v5541 = vpop.f32.mrf.mxu0
    %v5542 = vadd.f32 0.0, %v5541
    %5543 = vmatmul.bf16.gmra.mxu0 %v5428
    %v5544 = vpop.f32.mrf.mxu0
    %v5545 = vadd.f32 0.0, %v5544
    %v5546 = vpop.f32.mrf.mxu0
    %v5547 = vadd.f32 0.0, %v5546
    %5548 = vdwg.mxu0
    %v5549 = vadd.f32 %v5347, %v5521
    %v5550 = vadd.f32 %v5348, %v5540
    %v5551 = vadd.f32 %v5349, %v5523
    %v5552 = vadd.f32 %v5350, %v5542
    %v5553 = vadd.f32 %v5351, %v5526
    %v5554 = vadd.f32 %v5352, %v5545
    %v5555 = vadd.f32 %v5353, %v5528
    %v5556 = vadd.f32 %v5354, %v5547
    %s5557 = scalar_lea.vmem %s0, 306
    %v5558 = vld [vmem:[%s5557] sm:$0x1]
    %v5559 = vld [vmem:[%s5557 + $0x1] sm:$0x1]
    %v5560 = vld [vmem:[%s5557 + $0x2] sm:$0x1]
    %v5561 = vld [vmem:[%s5557 + $0x3] sm:$0x1]
    %v5562 = vld [vmem:[%s5557 + $0x5] sm:$0x1]
    %v5563 = vld [vmem:[%s5557 + $0x6] sm:$0x1]
    %v5564 = vld [vmem:[%s5557 + $0x7] sm:$0x1]
    %v5565 = vld [vmem:[%s5557 + $0x8] sm:$0x1]
    %v5566 = vld [vmem:[%s5557 + $0xa] sm:$0x1]
    %v5567 = vld [vmem:[%s5557 + $0xb] sm:$0x1]
    %v5568 = vld [vmem:[%s5557 + $0xc] sm:$0x1]
    %v5569 = vld [vmem:[%s5557 + $0xd] sm:$0x1]
    %v5570 = vld [vmem:[%s5557 + $0xf] sm:$0x1]
    %v5571 = vld [vmem:[%s5557 + $0x10] sm:$0x1]
    %v5572 = vld [vmem:[%s5557 + $0x11] sm:$0x1]
    %v5573 = vld [vmem:[%s5557 + $0x12] sm:$0x1]
    %v5574 = vld [vmem:[%s1552] sm:$0xff]
    %v5575 = vld [vmem:[%s1552 + $0x8] sm:$0xff]
    %v5576 = vld [vmem:[%s1552 + $0x10] sm:$0xff]
    %v5577 = vld [vmem:[%s1552 + $0x18] sm:$0xff]
    %v5578 = vld [vmem:[%s1552 + $0x20] sm:$0xff]
    %v5579 = vld [vmem:[%s1552 + $0x28] sm:$0xff]
    %v5580 = vld [vmem:[%s1552 + $0x30] sm:$0xff]
    %v5581 = vld [vmem:[%s1552 + $0x38] sm:$0xff]
    %v5582 = vld [vmem:[%s1552 + $0x40] sm:$0xff]
    %v5583 = vld [vmem:[%s1552 + $0x48] sm:$0xff]
    %v5584 = vld [vmem:[%s1552 + $0x50] sm:$0xff]
    %v5585 = vld [vmem:[%s1552 + $0x58] sm:$0xff]
    %v5586 = vld [vmem:[%s1552 + $0x60] sm:$0xff]
    %v5587 = vld [vmem:[%s1552 + $0x68] sm:$0xff]
    %v5588 = vld [vmem:[%s1552 + $0x70] sm:$0xff]
    %v5589 = vld [vmem:[%s1552 + $0x78] sm:$0xff]
    %5591 = vst [vmem:[#allocation1] ss:$9 sm:$0xff] %v5558
    %s5593 = scalar_lea.vmem [#allocation1], 1
    %5594 = vst [vmem:[%s5593] ss:$9 sm:$0xff] %v5559
    %s5596 = scalar_lea.vmem [#allocation1], 2
    %5597 = vst [vmem:[%s5596] ss:$9 sm:$0xff] %v5560
    %s5599 = scalar_lea.vmem [#allocation1], 3
    %5600 = vst [vmem:[%s5599] ss:$9 sm:$0xff] %v5561
    %s5602 = scalar_lea.vmem [#allocation1], 4
    %5603 = vst [vmem:[%s5602] ss:$9 sm:$0xff] %v5562
    %s5605 = scalar_lea.vmem [#allocation1], 5
    %5606 = vst [vmem:[%s5605] ss:$9 sm:$0xff] %v5563
    %s5608 = scalar_lea.vmem [#allocation1], 6
    %5609 = vst [vmem:[%s5608] ss:$9 sm:$0xff] %v5564
    %s5611 = scalar_lea.vmem [#allocation1], 7
    %5612 = vst [vmem:[%s5611] ss:$9 sm:$0xff] %v5565
    %v5613 = vld [vmem:[#allocation1] sm:$0xff]
    %5615 = vst [vmem:[#allocation1] ss:$9 sm:$0xff] %v5566
    %5617 = vst [vmem:[%s5593] ss:$9 sm:$0xff] %v5567
    %5619 = vst [vmem:[%s5596] ss:$9 sm:$0xff] %v5568
    %5621 = vst [vmem:[%s5599] ss:$9 sm:$0xff] %v5569
    %5623 = vst [vmem:[%s5602] ss:$9 sm:$0xff] %v5570
    %5625 = vst [vmem:[%s5605] ss:$9 sm:$0xff] %v5571
    %5627 = vst [vmem:[%s5608] ss:$9 sm:$0xff] %v5572
    %5629 = vst [vmem:[%s5611] ss:$9 sm:$0xff] %v5573
    %v5630 = vld [vmem:[#allocation1] sm:$0xff]
    %v5649 = vunpack.c.l.b16 %v5574
    %v5650 = vunpack.c.h.b16 %v5574
    %v5651 = vunpack.c.l.b16 %v5575
    %v5652 = vunpack.c.h.b16 %v5575
    %v5653 = vunpack.c.l.b16 %v5576
    %v5654 = vunpack.c.h.b16 %v5576
    %v5655 = vunpack.c.l.b16 %v5577
    %v5656 = vunpack.c.h.b16 %v5577
    %v5657 = vunpack.c.l.b16 %v5578
    %v5658 = vunpack.c.h.b16 %v5578
    %v5659 = vunpack.c.l.b16 %v5579
    %v5660 = vunpack.c.h.b16 %v5579
    %v5661 = vunpack.c.l.b16 %v5580
    %v5662 = vunpack.c.h.b16 %v5580
    %v5663 = vunpack.c.l.b16 %v5581
    %v5664 = vunpack.c.h.b16 %v5581
    %v5665 = vunpack.c.l.b16 %v5582
    %v5666 = vunpack.c.h.b16 %v5582
    %v5667 = vunpack.c.l.b16 %v5583
    %v5668 = vunpack.c.h.b16 %v5583
    %v5669 = vunpack.c.l.b16 %v5584
    %v5670 = vunpack.c.h.b16 %v5584
    %v5671 = vunpack.c.l.b16 %v5585
    %v5672 = vunpack.c.h.b16 %v5585
    %v5673 = vunpack.c.l.b16 %v5586
    %v5674 = vunpack.c.h.b16 %v5586
    %v5675 = vunpack.c.l.b16 %v5587
    %v5676 = vunpack.c.h.b16 %v5587
    %v5677 = vunpack.c.l.b16 %v5588
    %v5678 = vunpack.c.h.b16 %v5588
    %v5679 = vunpack.c.l.b16 %v5589
    %v5680 = vunpack.c.h.b16 %v5589
    %v5681 = vpack.c.b16 %v5651, %v5649
    %v5682 = vpack.c.b16 %v5652, %v5650
    %v5683 = vpack.c.b16 %v5655, %v5653
    %v5684 = vpack.c.b16 %v5656, %v5654
    %v5685 = vpack.c.b16 %v5659, %v5657
    %v5686 = vpack.c.b16 %v5660, %v5658
    %v5687 = vpack.c.b16 %v5663, %v5661
    %v5688 = vpack.c.b16 %v5664, %v5662
    %v5689 = vpack.c.b16 %v5667, %v5665
    %v5690 = vpack.c.b16 %v5668, %v5666
    %v5691 = vpack.c.b16 %v5671, %v5669
    %v5692 = vpack.c.b16 %v5672, %v5670
    %v5693 = vpack.c.b16 %v5675, %v5673
    %v5694 = vpack.c.b16 %v5676, %v5674
    %v5695 = vpack.c.b16 %v5679, %v5677
    %v5696 = vpack.c.b16 %v5680, %v5678
    %5713 = vmatpush.bf16.msra.mxu0 %v5695
    %5714 = vmatpush.bf16.msra.mxu0 %v5693
    %5715 = vmatpush.bf16.msra.mxu0 %v5691
    %5716 = vmatpush.bf16.msra.mxu0 %v5689
    %5717 = vmatpush.bf16.msra.mxu0 %v5687
    %5718 = vmatpush.bf16.msra.mxu0 %v5685
    %5719 = vmatpush.bf16.msra.mxu0 %v5683
    %5720 = vmatpush.bf16.msra.mxu0 %v5681
    %5721 = vmatmul.bf16.gmra.mxu0 %v5613
    %v5722 = vpop.f32.mrf.mxu0
    %v5723 = vadd.f32 0.0, %v5722
    %v5724 = vpop.f32.mrf.mxu0
    %v5725 = vadd.f32 0.0, %v5724
    %5726 = vmatmul.bf16.gmra.mxu0 %v5630
    %v5727 = vpop.f32.mrf.mxu0
    %v5728 = vadd.f32 0.0, %v5727
    %v5729 = vpop.f32.mrf.mxu0
    %v5730 = vadd.f32 0.0, %v5729
    %5731 = vdwg.mxu0
    %5732 = vmatpush.bf16.msra.mxu0 %v5696
    %5733 = vmatpush.bf16.msra.mxu0 %v5694
    %5734 = vmatpush.bf16.msra.mxu0 %v5692
    %5735 = vmatpush.bf16.msra.mxu0 %v5690
    %5736 = vmatpush.bf16.msra.mxu0 %v5688
    %5737 = vmatpush.bf16.msra.mxu0 %v5686
    %5738 = vmatpush.bf16.msra.mxu0 %v5684
    %5739 = vmatpush.bf16.msra.mxu0 %v5682
    %5740 = vmatmul.bf16.gmra.mxu0 %v5613
    %v5741 = vpop.f32.mrf.mxu0
    %v5742 = vadd.f32 0.0, %v5741
    %v5743 = vpop.f32.mrf.mxu0
    %v5744 = vadd.f32 0.0, %v5743
    %5745 = vmatmul.bf16.gmra.mxu0 %v5630
    %v5746 = vpop.f32.mrf.mxu0
    %v5747 = vadd.f32 0.0, %v5746
    %v5748 = vpop.f32.mrf.mxu0
    %v5749 = vadd.f32 0.0, %v5748
    %5750 = vdwg.mxu0
    %v5751 = vadd.f32 %v5549, %v5723
    %v5752 = vadd.f32 %v5550, %v5742
    %v5753 = vadd.f32 %v5551, %v5725
    %v5754 = vadd.f32 %v5552, %v5744
    %v5755 = vadd.f32 %v5553, %v5728
    %v5756 = vadd.f32 %v5554, %v5747
    %v5757 = vadd.f32 %v5555, %v5730
    %v5758 = vadd.f32 %v5556, %v5749
    %s5759 = scalar_lea.vmem %s0, 331
    %v5760 = vld [vmem:[%s5759] sm:$0x1]
    %v5761 = vld [vmem:[%s5759 + $0x1] sm:$0x1]
    %v5762 = vld [vmem:[%s5759 + $0x2] sm:$0x1]
    %v5763 = vld [vmem:[%s5759 + $0x3] sm:$0x1]
    %v5764 = vld [vmem:[%s5759 + $0x5] sm:$0x1]
    %v5765 = vld [vmem:[%s5759 + $0x6] sm:$0x1]
    %v5766 = vld [vmem:[%s5759 + $0x7] sm:$0x1]
    %v5767 = vld [vmem:[%s5759 + $0x8] sm:$0x1]
    %v5768 = vld [vmem:[%s5759 + $0xa] sm:$0x1]
    %v5769 = vld [vmem:[%s5759 + $0xb] sm:$0x1]
    %v5770 = vld [vmem:[%s5759 + $0xc] sm:$0x1]
    %v5771 = vld [vmem:[%s5759 + $0xd] sm:$0x1]
    %v5772 = vld [vmem:[%s5759 + $0xf] sm:$0x1]
    %v5773 = vld [vmem:[%s5759 + $0x10] sm:$0x1]
    %v5774 = vld [vmem:[%s5759 + $0x11] sm:$0x1]
    %v5775 = vld [vmem:[%s5759 + $0x12] sm:$0x1]
    %v5776 = vld [vmem:[%s1755] sm:$0xff]
    %v5777 = vld [vmem:[%s1755 + $0x8] sm:$0xff]
    %v5778 = vld [vmem:[%s1755 + $0x10] sm:$0xff]
    %v5779 = vld [vmem:[%s1755 + $0x18] sm:$0xff]
    %v5780 = vld [vmem:[%s1755 + $0x20] sm:$0xff]
    %v5781 = vld [vmem:[%s1755 + $0x28] sm:$0xff]
    %v5782 = vld [vmem:[%s1755 + $0x30] sm:$0xff]
    %v5783 = vld [vmem:[%s1755 + $0x38] sm:$0xff]
    %v5784 = vld [vmem:[%s1755 + $0x40] sm:$0xff]
    %v5785 = vld [vmem:[%s1755 + $0x48] sm:$0xff]
    %v5786 = vld [vmem:[%s1755 + $0x50] sm:$0xff]
    %v5787 = vld [vmem:[%s1755 + $0x58] sm:$0xff]
    %v5788 = vld [vmem:[%s1755 + $0x60] sm:$0xff]
    %v5789 = vld [vmem:[%s1755 + $0x68] sm:$0xff]
    %v5790 = vld [vmem:[%s1755 + $0x70] sm:$0xff]
    %v5791 = vld [vmem:[%s1755 + $0x78] sm:$0xff]
    %5793 = vst [vmem:[#allocation1] ss:$9 sm:$0xff] %v5760
    %s5795 = scalar_lea.vmem [#allocation1], 1
    %5796 = vst [vmem:[%s5795] ss:$9 sm:$0xff] %v5761
    %s5798 = scalar_lea.vmem [#allocation1], 2
    %5799 = vst [vmem:[%s5798] ss:$9 sm:$0xff] %v5762
    %s5801 = scalar_lea.vmem [#allocation1], 3
    %5802 = vst [vmem:[%s5801] ss:$9 sm:$0xff] %v5763
    %s5804 = scalar_lea.vmem [#allocation1], 4
    %5805 = vst [vmem:[%s5804] ss:$9 sm:$0xff] %v5764
    %s5807 = scalar_lea.vmem [#allocation1], 5
    %5808 = vst [vmem:[%s5807] ss:$9 sm:$0xff] %v5765
    %s5810 = scalar_lea.vmem [#allocation1], 6
    %5811 = vst [vmem:[%s5810] ss:$9 sm:$0xff] %v5766
    %s5813 = scalar_lea.vmem [#allocation1], 7
    %5814 = vst [vmem:[%s5813] ss:$9 sm:$0xff] %v5767
    %v5815 = vld [vmem:[#allocation1] sm:$0xff]
    %5817 = vst [vmem:[#allocation1] ss:$9 sm:$0xff] %v5768
    %5819 = vst [vmem:[%s5795] ss:$9 sm:$0xff] %v5769
    %5821 = vst [vmem:[%s5798] ss:$9 sm:$0xff] %v5770
    %5823 = vst [vmem:[%s5801] ss:$9 sm:$0xff] %v5771
    %5825 = vst [vmem:[%s5804] ss:$9 sm:$0xff] %v5772
    %5827 = vst [vmem:[%s5807] ss:$9 sm:$0xff] %v5773
    %5829 = vst [vmem:[%s5810] ss:$9 sm:$0xff] %v5774
    %5831 = vst [vmem:[%s5813] ss:$9 sm:$0xff] %v5775
    %v5832 = vld [vmem:[#allocation1] sm:$0xff]
    %v5851 = vunpack.c.l.b16 %v5776
    %v5852 = vunpack.c.h.b16 %v5776
    %v5853 = vunpack.c.l.b16 %v5777
    %v5854 = vunpack.c.h.b16 %v5777
    %v5855 = vunpack.c.l.b16 %v5778
    %v5856 = vunpack.c.h.b16 %v5778
    %v5857 = vunpack.c.l.b16 %v5779
    %v5858 = vunpack.c.h.b16 %v5779
    %v5859 = vunpack.c.l.b16 %v5780
    %v5860 = vunpack.c.h.b16 %v5780
    %v5861 = vunpack.c.l.b16 %v5781
    %v5862 = vunpack.c.h.b16 %v5781
    %v5863 = vunpack.c.l.b16 %v5782
    %v5864 = vunpack.c.h.b16 %v5782
    %v5865 = vunpack.c.l.b16 %v5783
    %v5866 = vunpack.c.h.b16 %v5783
    %v5867 = vunpack.c.l.b16 %v5784
    %v5868 = vunpack.c.h.b16 %v5784
    %v5869 = vunpack.c.l.b16 %v5785
    %v5870 = vunpack.c.h.b16 %v5785
    %v5871 = vunpack.c.l.b16 %v5786
    %v5872 = vunpack.c.h.b16 %v5786
    %v5873 = vunpack.c.l.b16 %v5787
    %v5874 = vunpack.c.h.b16 %v5787
    %v5875 = vunpack.c.l.b16 %v5788
    %v5876 = vunpack.c.h.b16 %v5788
    %v5877 = vunpack.c.l.b16 %v5789
    %v5878 = vunpack.c.h.b16 %v5789
    %v5879 = vunpack.c.l.b16 %v5790
    %v5880 = vunpack.c.h.b16 %v5790
    %v5881 = vunpack.c.l.b16 %v5791
    %v5882 = vunpack.c.h.b16 %v5791
    %v5883 = vpack.c.b16 %v5853, %v5851
    %v5884 = vpack.c.b16 %v5854, %v5852
    %v5885 = vpack.c.b16 %v5857, %v5855
    %v5886 = vpack.c.b16 %v5858, %v5856
    %v5887 = vpack.c.b16 %v5861, %v5859
    %v5888 = vpack.c.b16 %v5862, %v5860
    %v5889 = vpack.c.b16 %v5865, %v5863
    %v5890 = vpack.c.b16 %v5866, %v5864
    %v5891 = vpack.c.b16 %v5869, %v5867
    %v5892 = vpack.c.b16 %v5870, %v5868
    %v5893 = vpack.c.b16 %v5873, %v5871
    %v5894 = vpack.c.b16 %v5874, %v5872
    %v5895 = vpack.c.b16 %v5877, %v5875
    %v5896 = vpack.c.b16 %v5878, %v5876
    %v5897 = vpack.c.b16 %v5881, %v5879
    %v5898 = vpack.c.b16 %v5882, %v5880
    %5915 = vmatpush.bf16.msra.mxu0 %v5897
    %5916 = vmatpush.bf16.msra.mxu0 %v5895
    %5917 = vmatpush.bf16.msra.mxu0 %v5893
    %5918 = vmatpush.bf16.msra.mxu0 %v5891
    %5919 = vmatpush.bf16.msra.mxu0 %v5889
    %5920 = vmatpush.bf16.msra.mxu0 %v5887
    %5921 = vmatpush.bf16.msra.mxu0 %v5885
    %5922 = vmatpush.bf16.msra.mxu0 %v5883
    %5923 = vmatmul.bf16.gmra.mxu0 %v5815
    %v5924 = vpop.f32.mrf.mxu0
    %v5925 = vadd.f32 0.0, %v5924
    %v5926 = vpop.f32.mrf.mxu0
    %v5927 = vadd.f32 0.0, %v5926
    %5928 = vmatmul.bf16.gmra.mxu0 %v5832
    %v5929 = vpop.f32.mrf.mxu0
    %v5930 = vadd.f32 0.0, %v5929
    %v5931 = vpop.f32.mrf.mxu0
    %v5932 = vadd.f32 0.0, %v5931
    %5933 = vdwg.mxu0
    %5934 = vmatpush.bf16.msra.mxu0 %v5898
    %5935 = vmatpush.bf16.msra.mxu0 %v5896
    %5936 = vmatpush.bf16.msra.mxu0 %v5894
    %5937 = vmatpush.bf16.msra.mxu0 %v5892
    %5938 = vmatpush.bf16.msra.mxu0 %v5890
    %5939 = vmatpush.bf16.msra.mxu0 %v5888
    %5940 = vmatpush.bf16.msra.mxu0 %v5886
    %5941 = vmatpush.bf16.msra.mxu0 %v5884
    %5942 = vmatmul.bf16.gmra.mxu0 %v5815
    %v5943 = vpop.f32.mrf.mxu0
    %v5944 = vadd.f32 0.0, %v5943
    %v5945 = vpop.f32.mrf.mxu0
    %v5946 = vadd.f32 0.0, %v5945
    %5947 = vmatmul.bf16.gmra.mxu0 %v5832
    %v5948 = vpop.f32.mrf.mxu0
    %v5949 = vadd.f32 0.0, %v5948
    %v5950 = vpop.f32.mrf.mxu0
    %v5951 = vadd.f32 0.0, %v5950
    %5952 = vdwg.mxu0
    %v5953 = vadd.f32 %v5751, %v5925
    %v5954 = vadd.f32 %v5752, %v5944
    %v5955 = vadd.f32 %v5753, %v5927
    %v5956 = vadd.f32 %v5754, %v5946
    %v5957 = vadd.f32 %v5755, %v5930
    %v5958 = vadd.f32 %v5756, %v5949
    %v5959 = vadd.f32 %v5757, %v5932
    %v5960 = vadd.f32 %v5758, %v5951
    %v5961 = vld [vmem:[%s3] ss:$2 sm:$0x3]
    %v5963 = vperm.slane %v5961, 0
    %v5964 = vperm.slane %v5961, 1
    %v5967 = vmul.f32 %v5953, %v5963
    %v5968 = vmul.f32 %v5954, %v5964
    %v5969 = vmul.f32 %v5955, %v5963
    %v5970 = vmul.f32 %v5956, %v5964
    %v5971 = vmul.f32 %v5957, %v5963
    %v5972 = vmul.f32 %v5958, %v5964
    %v5973 = vmul.f32 %v5959, %v5963
    %v5974 = vmul.f32 %v5960, %v5964
    %v5975 = vld [vmem:[%s1955] ss:$2 sm:$0x3]
    %v5977 = vperm.slane %v5975, 0
    %v5978 = vperm.slane %v5975, 1
    %v5981 = vadd.f32 %v5967, %v5977
    %v5982 = vadd.f32 %v5968, %v5978
    %v5983 = vadd.f32 %v5969, %v5977
    %v5984 = vadd.f32 %v5970, %v5978
    %v5985 = vadd.f32 %v5971, %v5977
    %v5986 = vadd.f32 %v5972, %v5978
    %v5987 = vadd.f32 %v5973, %v5977
    %v5988 = vadd.f32 %v5974, %v5978
    %v5989 = vmax.f32 %v5981, 0.0
    %v5990 = vmax.f32 %v5982, 0.0
    %v5991 = vmax.f32 %v5983, 0.0
    %v5992 = vmax.f32 %v5984, 0.0
    %v5993 = vmax.f32 %v5985, 0.0
    %v5994 = vmax.f32 %v5986, 0.0
    %v5995 = vmax.f32 %v5987, 0.0
    %v5996 = vmax.f32 %v5988, 0.0
    %s5997 = scalar_lea.vmem %s1, 128
    %v5998 = vld [vmem:[%s5997] sm:$0xf]
    %v5999 = vld [vmem:[%s5997 + $0x4] sm:$0xf]
    %v6000 = vld [vmem:[%s5997 + $0x8] sm:$0xf]
    %v6001 = vld [vmem:[%s5997 + $0xc] sm:$0xf]
    %v6002 = vld [vmem:[%s5997 + $0x10] sm:$0xf]
    %v6003 = vld [vmem:[%s5997 + $0x14] sm:$0xf]
    %v6004 = vld [vmem:[%s5997 + $0x18] sm:$0xf]
    %v6005 = vld [vmem:[%s5997 + $0x1c] sm:$0xf]
    %v6006 = vld [vmem:[%s5997 + $0x20] sm:$0xf]
    %v6007 = vld [vmem:[%s5997 + $0x24] sm:$0xf]
    %v6008 = vld [vmem:[%s5997 + $0x28] sm:$0xf]
    %v6009 = vld [vmem:[%s5997 + $0x2c] sm:$0xf]
    %v6010 = vld [vmem:[%s5997 + $0x30] sm:$0xf]
    %v6011 = vld [vmem:[%s5997 + $0x34] sm:$0xf]
    %v6012 = vld [vmem:[%s5997 + $0x38] sm:$0xf]
    %v6013 = vld [vmem:[%s5997 + $0x3c] sm:$0xf]
    %6030 = vst [vmem:[#allocation1] ss:$4 sm:$0xff] %v5998
    %s6031 = scalar_lea.vmem [#allocation1], 1
    %6032 = vst [vmem:[%s6031] ss:$4 sm:$0xff] %v5999
    %s6033 = scalar_lea.vmem [#allocation1], 2
    %6034 = vst [vmem:[%s6033] ss:$4 sm:$0xff] %v6000
    %s6035 = scalar_lea.vmem [#allocation1], 3
    %6036 = vst [vmem:[%s6035] ss:$4 sm:$0xff] %v6001
    %s6037 = scalar_lea.vmem [#allocation1], 32
    %6038 = vst [vmem:[%s6037] ss:$4 sm:$0xff] %v6002
    %s6039 = scalar_lea.vmem [#allocation1], 33
    %6040 = vst [vmem:[%s6039] ss:$4 sm:$0xff] %v6003
    %s6041 = scalar_lea.vmem [#allocation1], 34
    %6042 = vst [vmem:[%s6041] ss:$4 sm:$0xff] %v6004
    %s6043 = scalar_lea.vmem [#allocation1], 35
    %6044 = vst [vmem:[%s6043] ss:$4 sm:$0xff] %v6005
    %v6045 = vld.sshfl [vmem:[#allocation1] sm:$0xff pattern:$0x73625140]
    %v6046 = vld.sshfl [vmem:[#allocation1 + $0x8] sm:$0xff pattern:$0x73625140]
    %v6047 = vld.sshfl [vmem:[#allocation1 + $0x20] sm:$0xff pattern:$0x73625140]
    %v6048 = vld.sshfl [vmem:[#allocation1 + $0x28] sm:$0xff pattern:$0x73625140]
    %6049 = vst [vmem:[#allocation1] ss:$4 sm:$0xff] %v6006
    %6050 = vst [vmem:[%s6031] ss:$4 sm:$0xff] %v6007
    %6051 = vst [vmem:[%s6033] ss:$4 sm:$0xff] %v6008
    %6052 = vst [vmem:[%s6035] ss:$4 sm:$0xff] %v6009
    %6053 = vst [vmem:[%s6037] ss:$4 sm:$0xff] %v6010
    %6054 = vst [vmem:[%s6039] ss:$4 sm:$0xff] %v6011
    %6055 = vst [vmem:[%s6041] ss:$4 sm:$0xff] %v6012
    %6056 = vst [vmem:[%s6043] ss:$4 sm:$0xff] %v6013
    %v6057 = vld.sshfl [vmem:[#allocation1] sm:$0xff pattern:$0x73625140]
    %v6058 = vld.sshfl [vmem:[#allocation1 + $0x8] sm:$0xff pattern:$0x73625140]
    %v6059 = vld.sshfl [vmem:[#allocation1 + $0x20] sm:$0xff pattern:$0x73625140]
    %v6060 = vld.sshfl [vmem:[#allocation1 + $0x28] sm:$0xff pattern:$0x73625140]
    %v6069 = vadd.f32 %v5989, %v6045
    %v6070 = vadd.f32 %v5990, %v6046
    %v6071 = vadd.f32 %v5991, %v6047
    %v6072 = vadd.f32 %v5992, %v6048
    %v6073 = vadd.f32 %v5993, %v6057
    %v6074 = vadd.f32 %v5994, %v6058
    %v6075 = vadd.f32 %v5995, %v6059
    %v6076 = vadd.f32 %v5996, %v6060
    %v6077 = vpack.c.bf16 %v6070, %v6069
    %v6078 = vpack.c.bf16 %v6072, %v6071
    %v6079 = vpack.c.bf16 %v6074, %v6073
    %v6080 = vpack.c.bf16 %v6076, %v6075
    %v6085 = vrot.slane %v6077, 3
    %v6086 = vrot.slane %v6078, 3
    %v6087 = vrot.slane %v6079, 3
    %v6088 = vrot.slane %v6080, 3
    %v6091 = vsel %vm2069, %v6077, %v6085
    %v6092 = vsel %vm2073, %v6077, %v6085
    %v6094 = vrot.slane %v6092, 1
    %v6095 = vsel %vm2077, %v6077, %v6085
    %v6097 = vrot.slane %v6095, 2
    %v6098 = vsel %vm2081, %v6077, %v6085
    %v6100 = vrot.slane %v6098, 3
    %v6103 = vsel %vm2069, %v6078, %v6086
    %v6104 = vsel %vm2073, %v6078, %v6086
    %v6106 = vrot.slane %v6104, 1
    %v6107 = vsel %vm2077, %v6078, %v6086
    %v6109 = vrot.slane %v6107, 2
    %v6110 = vsel %vm2081, %v6078, %v6086
    %v6112 = vrot.slane %v6110, 3
    %v6115 = vsel %vm2069, %v6079, %v6087
    %v6116 = vsel %vm2073, %v6079, %v6087
    %v6118 = vrot.slane %v6116, 1
    %v6119 = vsel %vm2077, %v6079, %v6087
    %v6121 = vrot.slane %v6119, 2
    %v6122 = vsel %vm2081, %v6079, %v6087
    %v6124 = vrot.slane %v6122, 3
    %v6127 = vsel %vm2069, %v6080, %v6088
    %v6128 = vsel %vm2073, %v6080, %v6088
    %v6130 = vrot.slane %v6128, 1
    %v6131 = vsel %vm2077, %v6080, %v6088
    %v6133 = vrot.slane %v6131, 2
    %v6134 = vsel %vm2081, %v6080, %v6088
    %v6136 = vrot.slane %v6134, 3
    %s6153 = scalar_lea.vmem [#allocation2], 112
    %6154 = vst [vmem:[%s6153] sm:$0x3] %v6091
    %6155 = vst [vmem:[%s6153 + $0x2] sm:$0x3] %v6094
    %6156 = vst [vmem:[%s6153 + $0x4] sm:$0x3] %v6097
    %6157 = vst [vmem:[%s6153 + $0x6] sm:$0x3] %v6100
    %6158 = vst [vmem:[%s6153 + $0xa] sm:$0x3] %v6103
    %6159 = vst [vmem:[%s6153 + $0xc] sm:$0x3] %v6106
    %6160 = vst [vmem:[%s6153 + $0xe] sm:$0x3] %v6109
    %6161 = vst [vmem:[%s6153 + $0x10] sm:$0x3] %v6112
    %6162 = vst [vmem:[%s6153 + $0x14] sm:$0x3] %v6115
    %6163 = vst [vmem:[%s6153 + $0x16] sm:$0x3] %v6118
    %6164 = vst [vmem:[%s6153 + $0x18] sm:$0x3] %v6121
    %6165 = vst [vmem:[%s6153 + $0x1a] sm:$0x3] %v6124
    %6166 = vst [vmem:[%s6153 + $0x1e] sm:$0x3] %v6127
    %6167 = vst [vmem:[%s6153 + $0x20] sm:$0x3] %v6130
    %6168 = vst [vmem:[%s6153 + $0x22] sm:$0x3] %v6133
    %6169 = vst [vmem:[%s6153 + $0x24] sm:$0x3] %v6136
    %v6170 = vld [vmem:[%s1738] sm:$0x1]
    %v6171 = vld [vmem:[%s1738 + $0x1] sm:$0x1]
    %v6172 = vld [vmem:[%s1738 + $0x2] sm:$0x1]
    %v6173 = vld [vmem:[%s1738 + $0x3] sm:$0x1]
    %v6174 = vld [vmem:[%s1738 + $0x5] sm:$0x1]
    %v6175 = vld [vmem:[%s1738 + $0x6] sm:$0x1]
    %v6176 = vld [vmem:[%s1738 + $0x7] sm:$0x1]
    %v6177 = vld [vmem:[%s1738 + $0x8] sm:$0x1]
    %v6178 = vld [vmem:[%s1738 + $0xa] sm:$0x1]
    %v6179 = vld [vmem:[%s1738 + $0xb] sm:$0x1]
    %v6180 = vld [vmem:[%s1738 + $0xc] sm:$0x1]
    %v6181 = vld [vmem:[%s1738 + $0xd] sm:$0x1]
    %v6182 = vld [vmem:[%s1738 + $0xf] sm:$0x1]
    %v6183 = vld [vmem:[%s1738 + $0x10] sm:$0x1]
    %v6184 = vld [vmem:[%s1738 + $0x11] sm:$0x1]
    %v6185 = vld [vmem:[%s1738 + $0x12] sm:$0x1]
    %v6186 = vld [vmem:[%s2] sm:$0xff]
    %v6187 = vld [vmem:[%s2 + $0x8] sm:$0xff]
    %v6188 = vld [vmem:[%s2 + $0x10] sm:$0xff]
    %v6189 = vld [vmem:[%s2 + $0x18] sm:$0xff]
    %v6190 = vld [vmem:[%s2 + $0x20] sm:$0xff]
    %v6191 = vld [vmem:[%s2 + $0x28] sm:$0xff]
    %v6192 = vld [vmem:[%s2 + $0x30] sm:$0xff]
    %v6193 = vld [vmem:[%s2 + $0x38] sm:$0xff]
    %v6194 = vld [vmem:[%s2 + $0x40] sm:$0xff]
    %v6195 = vld [vmem:[%s2 + $0x48] sm:$0xff]
    %v6196 = vld [vmem:[%s2 + $0x50] sm:$0xff]
    %v6197 = vld [vmem:[%s2 + $0x58] sm:$0xff]
    %v6198 = vld [vmem:[%s2 + $0x60] sm:$0xff]
    %v6199 = vld [vmem:[%s2 + $0x68] sm:$0xff]
    %v6200 = vld [vmem:[%s2 + $0x70] sm:$0xff]
    %v6201 = vld [vmem:[%s2 + $0x78] sm:$0xff]
    %v6202 = vld [vmem:[%s3549] sm:$0x1]
    %v6203 = vld [vmem:[%s3549 + $0x1] sm:$0x1]
    %v6204 = vld [vmem:[%s3549 + $0x2] sm:$0x1]
    %v6205 = vld [vmem:[%s3549 + $0x3] sm:$0x1]
    %v6206 = vld [vmem:[%s3549 + $0x5] sm:$0x1]
    %v6207 = vld [vmem:[%s3549 + $0x6] sm:$0x1]
    %v6208 = vld [vmem:[%s3549 + $0x7] sm:$0x1]
    %v6209 = vld [vmem:[%s3549 + $0x8] sm:$0x1]
    %v6210 = vld [vmem:[%s3549 + $0xa] sm:$0x1]
    %v6211 = vld [vmem:[%s3549 + $0xb] sm:$0x1]
    %v6212 = vld [vmem:[%s3549 + $0xc] sm:$0x1]
    %v6213 = vld [vmem:[%s3549 + $0xd] sm:$0x1]
    %v6214 = vld [vmem:[%s3549 + $0xf] sm:$0x1]
    %v6215 = vld [vmem:[%s3549 + $0x10] sm:$0x1]
    %v6216 = vld [vmem:[%s3549 + $0x11] sm:$0x1]
    %v6217 = vld [vmem:[%s3549 + $0x12] sm:$0x1]
    %v6218 = vld [vmem:[%s181] sm:$0xff]
    %v6219 = vld [vmem:[%s181 + $0x8] sm:$0xff]
    %v6220 = vld [vmem:[%s181 + $0x10] sm:$0xff]
    %v6221 = vld [vmem:[%s181 + $0x18] sm:$0xff]
    %v6222 = vld [vmem:[%s181 + $0x20] sm:$0xff]
    %v6223 = vld [vmem:[%s181 + $0x28] sm:$0xff]
    %v6224 = vld [vmem:[%s181 + $0x30] sm:$0xff]
    %v6225 = vld [vmem:[%s181 + $0x38] sm:$0xff]
    %v6226 = vld [vmem:[%s181 + $0x40] sm:$0xff]
    %v6227 = vld [vmem:[%s181 + $0x48] sm:$0xff]
    %v6228 = vld [vmem:[%s181 + $0x50] sm:$0xff]
    %v6229 = vld [vmem:[%s181 + $0x58] sm:$0xff]
    %v6230 = vld [vmem:[%s181 + $0x60] sm:$0xff]
    %v6231 = vld [vmem:[%s181 + $0x68] sm:$0xff]
    %v6232 = vld [vmem:[%s181 + $0x70] sm:$0xff]
    %v6233 = vld [vmem:[%s181 + $0x78] sm:$0xff]
    %6235 = vst [vmem:[#allocation1] ss:$9 sm:$0xff] %v6202
    %s6237 = scalar_lea.vmem [#allocation1], 1
    %6238 = vst [vmem:[%s6237] ss:$9 sm:$0xff] %v6203
    %s6240 = scalar_lea.vmem [#allocation1], 2
    %6241 = vst [vmem:[%s6240] ss:$9 sm:$0xff] %v6204
    %s6243 = scalar_lea.vmem [#allocation1], 3
    %6244 = vst [vmem:[%s6243] ss:$9 sm:$0xff] %v6205
    %s6246 = scalar_lea.vmem [#allocation1], 4
    %6247 = vst [vmem:[%s6246] ss:$9 sm:$0xff] %v6206
    %s6249 = scalar_lea.vmem [#allocation1], 5
    %6250 = vst [vmem:[%s6249] ss:$9 sm:$0xff] %v6207
    %s6252 = scalar_lea.vmem [#allocation1], 6
    %6253 = vst [vmem:[%s6252] ss:$9 sm:$0xff] %v6208
    %s6255 = scalar_lea.vmem [#allocation1], 7
    %6256 = vst [vmem:[%s6255] ss:$9 sm:$0xff] %v6209
    %v6257 = vld [vmem:[#allocation1] sm:$0xff]
    %6259 = vst [vmem:[#allocation1] ss:$9 sm:$0xff] %v6210
    %6261 = vst [vmem:[%s6237] ss:$9 sm:$0xff] %v6211
    %6263 = vst [vmem:[%s6240] ss:$9 sm:$0xff] %v6212
    %6265 = vst [vmem:[%s6243] ss:$9 sm:$0xff] %v6213
    %6267 = vst [vmem:[%s6246] ss:$9 sm:$0xff] %v6214
    %6269 = vst [vmem:[%s6249] ss:$9 sm:$0xff] %v6215
    %6271 = vst [vmem:[%s6252] ss:$9 sm:$0xff] %v6216
    %6273 = vst [vmem:[%s6255] ss:$9 sm:$0xff] %v6217
    %v6274 = vld [vmem:[#allocation1] sm:$0xff]
    %v6293 = vunpack.c.l.b16 %v6218
    %v6294 = vunpack.c.h.b16 %v6218
    %v6295 = vunpack.c.l.b16 %v6219
    %v6296 = vunpack.c.h.b16 %v6219
    %v6297 = vunpack.c.l.b16 %v6220
    %v6298 = vunpack.c.h.b16 %v6220
    %v6299 = vunpack.c.l.b16 %v6221
    %v6300 = vunpack.c.h.b16 %v6221
    %v6301 = vunpack.c.l.b16 %v6222
    %v6302 = vunpack.c.h.b16 %v6222
    %v6303 = vunpack.c.l.b16 %v6223
    %v6304 = vunpack.c.h.b16 %v6223
    %v6305 = vunpack.c.l.b16 %v6224
    %v6306 = vunpack.c.h.b16 %v6224
    %v6307 = vunpack.c.l.b16 %v6225
    %v6308 = vunpack.c.h.b16 %v6225
    %v6309 = vunpack.c.l.b16 %v6226
    %v6310 = vunpack.c.h.b16 %v6226
    %v6311 = vunpack.c.l.b16 %v6227
    %v6312 = vunpack.c.h.b16 %v6227
    %v6313 = vunpack.c.l.b16 %v6228
    %v6314 = vunpack.c.h.b16 %v6228
    %v6315 = vunpack.c.l.b16 %v6229
    %v6316 = vunpack.c.h.b16 %v6229
    %v6317 = vunpack.c.l.b16 %v6230
    %v6318 = vunpack.c.h.b16 %v6230
    %v6319 = vunpack.c.l.b16 %v6231
    %v6320 = vunpack.c.h.b16 %v6231
    %v6321 = vunpack.c.l.b16 %v6232
    %v6322 = vunpack.c.h.b16 %v6232
    %v6323 = vunpack.c.l.b16 %v6233
    %v6324 = vunpack.c.h.b16 %v6233
    %v6325 = vpack.c.b16 %v6295, %v6293
    %v6326 = vpack.c.b16 %v6296, %v6294
    %v6327 = vpack.c.b16 %v6299, %v6297
    %v6328 = vpack.c.b16 %v6300, %v6298
    %v6329 = vpack.c.b16 %v6303, %v6301
    %v6330 = vpack.c.b16 %v6304, %v6302
    %v6331 = vpack.c.b16 %v6307, %v6305
    %v6332 = vpack.c.b16 %v6308, %v6306
    %v6333 = vpack.c.b16 %v6311, %v6309
    %v6334 = vpack.c.b16 %v6312, %v6310
    %v6335 = vpack.c.b16 %v6315, %v6313
    %v6336 = vpack.c.b16 %v6316, %v6314
    %v6337 = vpack.c.b16 %v6319, %v6317
    %v6338 = vpack.c.b16 %v6320, %v6318
    %v6339 = vpack.c.b16 %v6323, %v6321
    %v6340 = vpack.c.b16 %v6324, %v6322
    %6357 = vmatpush.bf16.msra.mxu0 %v6339
    %6358 = vmatpush.bf16.msra.mxu0 %v6337
    %6359 = vmatpush.bf16.msra.mxu0 %v6335
    %6360 = vmatpush.bf16.msra.mxu0 %v6333
    %6361 = vmatpush.bf16.msra.mxu0 %v6331
    %6362 = vmatpush.bf16.msra.mxu0 %v6329
    %6363 = vmatpush.bf16.msra.mxu0 %v6327
    %6364 = vmatpush.bf16.msra.mxu0 %v6325
    %6365 = vmatmul.bf16.gmra.mxu0 %v6257
    %v6366 = vpop.f32.mrf.mxu0
    %v6367 = vadd.f32 0.0, %v6366
    %v6368 = vpop.f32.mrf.mxu0
    %v6369 = vadd.f32 0.0, %v6368
    %6370 = vmatmul.bf16.gmra.mxu0 %v6274
    %v6371 = vpop.f32.mrf.mxu0
    %v6372 = vadd.f32 0.0, %v6371
    %v6373 = vpop.f32.mrf.mxu0
    %v6374 = vadd.f32 0.0, %v6373
    %6375 = vdwg.mxu0
    %6376 = vmatpush.bf16.msra.mxu0 %v6340
    %6377 = vmatpush.bf16.msra.mxu0 %v6338
    %6378 = vmatpush.bf16.msra.mxu0 %v6336
    %6379 = vmatpush.bf16.msra.mxu0 %v6334
    %6380 = vmatpush.bf16.msra.mxu0 %v6332
    %6381 = vmatpush.bf16.msra.mxu0 %v6330
    %6382 = vmatpush.bf16.msra.mxu0 %v6328
    %6383 = vmatpush.bf16.msra.mxu0 %v6326
    %6384 = vmatmul.bf16.gmra.mxu0 %v6257
    %v6385 = vpop.f32.mrf.mxu0
    %v6386 = vadd.f32 0.0, %v6385
    %v6387 = vpop.f32.mrf.mxu0
    %v6388 = vadd.f32 0.0, %v6387
    %6389 = vmatmul.bf16.gmra.mxu0 %v6274
    %v6390 = vpop.f32.mrf.mxu0
    %v6391 = vadd.f32 0.0, %v6390
    %v6392 = vpop.f32.mrf.mxu0
    %v6393 = vadd.f32 0.0, %v6392
    %6394 = vdwg.mxu0
    %6396 = vst [vmem:[#allocation1] ss:$9 sm:$0xff] %v6170
    %s6398 = scalar_lea.vmem [#allocation1], 1
    %6399 = vst [vmem:[%s6398] ss:$9 sm:$0xff] %v6171
    %s6401 = scalar_lea.vmem [#allocation1], 2
    %6402 = vst [vmem:[%s6401] ss:$9 sm:$0xff] %v6172
    %s6404 = scalar_lea.vmem [#allocation1], 3
    %6405 = vst [vmem:[%s6404] ss:$9 sm:$0xff] %v6173
    %s6407 = scalar_lea.vmem [#allocation1], 4
    %6408 = vst [vmem:[%s6407] ss:$9 sm:$0xff] %v6174
    %s6410 = scalar_lea.vmem [#allocation1], 5
    %6411 = vst [vmem:[%s6410] ss:$9 sm:$0xff] %v6175
    %s6413 = scalar_lea.vmem [#allocation1], 6
    %6414 = vst [vmem:[%s6413] ss:$9 sm:$0xff] %v6176
    %s6416 = scalar_lea.vmem [#allocation1], 7
    %6417 = vst [vmem:[%s6416] ss:$9 sm:$0xff] %v6177
    %v6418 = vld [vmem:[#allocation1] sm:$0xff]
    %6420 = vst [vmem:[#allocation1] ss:$9 sm:$0xff] %v6178
    %6422 = vst [vmem:[%s6398] ss:$9 sm:$0xff] %v6179
    %6424 = vst [vmem:[%s6401] ss:$9 sm:$0xff] %v6180
    %6426 = vst [vmem:[%s6404] ss:$9 sm:$0xff] %v6181
    %6428 = vst [vmem:[%s6407] ss:$9 sm:$0xff] %v6182
    %6430 = vst [vmem:[%s6410] ss:$9 sm:$0xff] %v6183
    %6432 = vst [vmem:[%s6413] ss:$9 sm:$0xff] %v6184
    %6434 = vst [vmem:[%s6416] ss:$9 sm:$0xff] %v6185
    %v6435 = vld [vmem:[#allocation1] sm:$0xff]
    %v6454 = vunpack.c.l.b16 %v6186
    %v6455 = vunpack.c.h.b16 %v6186
    %v6456 = vunpack.c.l.b16 %v6187
    %v6457 = vunpack.c.h.b16 %v6187
    %v6458 = vunpack.c.l.b16 %v6188
    %v6459 = vunpack.c.h.b16 %v6188
    %v6460 = vunpack.c.l.b16 %v6189
    %v6461 = vunpack.c.h.b16 %v6189
    %v6462 = vunpack.c.l.b16 %v6190
    %v6463 = vunpack.c.h.b16 %v6190
    %v6464 = vunpack.c.l.b16 %v6191
    %v6465 = vunpack.c.h.b16 %v6191
    %v6466 = vunpack.c.l.b16 %v6192
    %v6467 = vunpack.c.h.b16 %v6192
    %v6468 = vunpack.c.l.b16 %v6193
    %v6469 = vunpack.c.h.b16 %v6193
    %v6470 = vunpack.c.l.b16 %v6194
    %v6471 = vunpack.c.h.b16 %v6194
    %v6472 = vunpack.c.l.b16 %v6195
    %v6473 = vunpack.c.h.b16 %v6195
    %v6474 = vunpack.c.l.b16 %v6196
    %v6475 = vunpack.c.h.b16 %v6196
    %v6476 = vunpack.c.l.b16 %v6197
    %v6477 = vunpack.c.h.b16 %v6197
    %v6478 = vunpack.c.l.b16 %v6198
    %v6479 = vunpack.c.h.b16 %v6198
    %v6480 = vunpack.c.l.b16 %v6199
    %v6481 = vunpack.c.h.b16 %v6199
    %v6482 = vunpack.c.l.b16 %v6200
    %v6483 = vunpack.c.h.b16 %v6200
    %v6484 = vunpack.c.l.b16 %v6201
    %v6485 = vunpack.c.h.b16 %v6201
    %v6486 = vpack.c.b16 %v6456, %v6454
    %v6487 = vpack.c.b16 %v6457, %v6455
    %v6488 = vpack.c.b16 %v6460, %v6458
    %v6489 = vpack.c.b16 %v6461, %v6459
    %v6490 = vpack.c.b16 %v6464, %v6462
    %v6491 = vpack.c.b16 %v6465, %v6463
    %v6492 = vpack.c.b16 %v6468, %v6466
    %v6493 = vpack.c.b16 %v6469, %v6467
    %v6494 = vpack.c.b16 %v6472, %v6470
    %v6495 = vpack.c.b16 %v6473, %v6471
    %v6496 = vpack.c.b16 %v6476, %v6474
    %v6497 = vpack.c.b16 %v6477, %v6475
    %v6498 = vpack.c.b16 %v6480, %v6478
    %v6499 = vpack.c.b16 %v6481, %v6479
    %v6500 = vpack.c.b16 %v6484, %v6482
    %v6501 = vpack.c.b16 %v6485, %v6483
    %6518 = vmatpush.bf16.msra.mxu0 %v6500
    %6519 = vmatpush.bf16.msra.mxu0 %v6498
    %6520 = vmatpush.bf16.msra.mxu0 %v6496
    %6521 = vmatpush.bf16.msra.mxu0 %v6494
    %6522 = vmatpush.bf16.msra.mxu0 %v6492
    %6523 = vmatpush.bf16.msra.mxu0 %v6490
    %6524 = vmatpush.bf16.msra.mxu0 %v6488
    %6525 = vmatpush.bf16.msra.mxu0 %v6486
    %6526 = vmatmul.bf16.gmra.mxu0 %v6418
    %v6527 = vpop.f32.mrf.mxu0
    %v6528 = vadd.f32 %v6367, %v6527
    %v6529 = vpop.f32.mrf.mxu0
    %v6530 = vadd.f32 %v6369, %v6529
    %6531 = vmatmul.bf16.gmra.mxu0 %v6435
    %v6532 = vpop.f32.mrf.mxu0
    %v6533 = vadd.f32 %v6372, %v6532
    %v6534 = vpop.f32.mrf.mxu0
    %v6535 = vadd.f32 %v6374, %v6534
    %6536 = vdwg.mxu0
    %6537 = vmatpush.bf16.msra.mxu0 %v6501
    %6538 = vmatpush.bf16.msra.mxu0 %v6499
    %6539 = vmatpush.bf16.msra.mxu0 %v6497
    %6540 = vmatpush.bf16.msra.mxu0 %v6495
    %6541 = vmatpush.bf16.msra.mxu0 %v6493
    %6542 = vmatpush.bf16.msra.mxu0 %v6491
    %6543 = vmatpush.bf16.msra.mxu0 %v6489
    %6544 = vmatpush.bf16.msra.mxu0 %v6487
    %6545 = vmatmul.bf16.gmra.mxu0 %v6418
    %v6546 = vpop.f32.mrf.mxu0
    %v6547 = vadd.f32 %v6386, %v6546
    %v6548 = vpop.f32.mrf.mxu0
    %v6549 = vadd.f32 %v6388, %v6548
    %6550 = vmatmul.bf16.gmra.mxu0 %v6435
    %v6551 = vpop.f32.mrf.mxu0
    %v6552 = vadd.f32 %v6391, %v6551
    %v6553 = vpop.f32.mrf.mxu0
    %v6554 = vadd.f32 %v6393, %v6553
    %6555 = vdwg.mxu0
    %v6556 = vld [vmem:[%s3751] sm:$0x1]
    %v6557 = vld [vmem:[%s3751 + $0x1] sm:$0x1]
    %v6558 = vld [vmem:[%s3751 + $0x2] sm:$0x1]
    %v6559 = vld [vmem:[%s3751 + $0x3] sm:$0x1]
    %v6560 = vld [vmem:[%s3751 + $0x5] sm:$0x1]
    %v6561 = vld [vmem:[%s3751 + $0x6] sm:$0x1]
    %v6562 = vld [vmem:[%s3751 + $0x7] sm:$0x1]
    %v6563 = vld [vmem:[%s3751 + $0x8] sm:$0x1]
    %v6564 = vld [vmem:[%s3751 + $0xa] sm:$0x1]
    %v6565 = vld [vmem:[%s3751 + $0xb] sm:$0x1]
    %v6566 = vld [vmem:[%s3751 + $0xc] sm:$0x1]
    %v6567 = vld [vmem:[%s3751 + $0xd] sm:$0x1]
    %v6568 = vld [vmem:[%s3751 + $0xf] sm:$0x1]
    %v6569 = vld [vmem:[%s3751 + $0x10] sm:$0x1]
    %v6570 = vld [vmem:[%s3751 + $0x11] sm:$0x1]
    %v6571 = vld [vmem:[%s3751 + $0x12] sm:$0x1]
    %v6572 = vld [vmem:[%s537] sm:$0xff]
    %v6573 = vld [vmem:[%s537 + $0x8] sm:$0xff]
    %v6574 = vld [vmem:[%s537 + $0x10] sm:$0xff]
    %v6575 = vld [vmem:[%s537 + $0x18] sm:$0xff]
    %v6576 = vld [vmem:[%s537 + $0x20] sm:$0xff]
    %v6577 = vld [vmem:[%s537 + $0x28] sm:$0xff]
    %v6578 = vld [vmem:[%s537 + $0x30] sm:$0xff]
    %v6579 = vld [vmem:[%s537 + $0x38] sm:$0xff]
    %v6580 = vld [vmem:[%s537 + $0x40] sm:$0xff]
    %v6581 = vld [vmem:[%s537 + $0x48] sm:$0xff]
    %v6582 = vld [vmem:[%s537 + $0x50] sm:$0xff]
    %v6583 = vld [vmem:[%s537 + $0x58] sm:$0xff]
    %v6584 = vld [vmem:[%s537 + $0x60] sm:$0xff]
    %v6585 = vld [vmem:[%s537 + $0x68] sm:$0xff]
    %v6586 = vld [vmem:[%s537 + $0x70] sm:$0xff]
    %v6587 = vld [vmem:[%s537 + $0x78] sm:$0xff]
    %6589 = vst [vmem:[#allocation1] ss:$9 sm:$0xff] %v6556
    %s6591 = scalar_lea.vmem [#allocation1], 1
    %6592 = vst [vmem:[%s6591] ss:$9 sm:$0xff] %v6557
    %s6594 = scalar_lea.vmem [#allocation1], 2
    %6595 = vst [vmem:[%s6594] ss:$9 sm:$0xff] %v6558
    %s6597 = scalar_lea.vmem [#allocation1], 3
    %6598 = vst [vmem:[%s6597] ss:$9 sm:$0xff] %v6559
    %s6600 = scalar_lea.vmem [#allocation1], 4
    %6601 = vst [vmem:[%s6600] ss:$9 sm:$0xff] %v6560
    %s6603 = scalar_lea.vmem [#allocation1], 5
    %6604 = vst [vmem:[%s6603] ss:$9 sm:$0xff] %v6561
    %s6606 = scalar_lea.vmem [#allocation1], 6
    %6607 = vst [vmem:[%s6606] ss:$9 sm:$0xff] %v6562
    %s6609 = scalar_lea.vmem [#allocation1], 7
    %6610 = vst [vmem:[%s6609] ss:$9 sm:$0xff] %v6563
    %v6611 = vld [vmem:[#allocation1] sm:$0xff]
    %6613 = vst [vmem:[#allocation1] ss:$9 sm:$0xff] %v6564
    %6615 = vst [vmem:[%s6591] ss:$9 sm:$0xff] %v6565
    %6617 = vst [vmem:[%s6594] ss:$9 sm:$0xff] %v6566
    %6619 = vst [vmem:[%s6597] ss:$9 sm:$0xff] %v6567
    %6621 = vst [vmem:[%s6600] ss:$9 sm:$0xff] %v6568
    %6623 = vst [vmem:[%s6603] ss:$9 sm:$0xff] %v6569
    %6625 = vst [vmem:[%s6606] ss:$9 sm:$0xff] %v6570
    %6627 = vst [vmem:[%s6609] ss:$9 sm:$0xff] %v6571
    %v6628 = vld [vmem:[#allocation1] sm:$0xff]
    %v6647 = vunpack.c.l.b16 %v6572
    %v6648 = vunpack.c.h.b16 %v6572
    %v6649 = vunpack.c.l.b16 %v6573
    %v6650 = vunpack.c.h.b16 %v6573
    %v6651 = vunpack.c.l.b16 %v6574
    %v6652 = vunpack.c.h.b16 %v6574
    %v6653 = vunpack.c.l.b16 %v6575
    %v6654 = vunpack.c.h.b16 %v6575
    %v6655 = vunpack.c.l.b16 %v6576
    %v6656 = vunpack.c.h.b16 %v6576
    %v6657 = vunpack.c.l.b16 %v6577
    %v6658 = vunpack.c.h.b16 %v6577
    %v6659 = vunpack.c.l.b16 %v6578
    %v6660 = vunpack.c.h.b16 %v6578
    %v6661 = vunpack.c.l.b16 %v6579
    %v6662 = vunpack.c.h.b16 %v6579
    %v6663 = vunpack.c.l.b16 %v6580
    %v6664 = vunpack.c.h.b16 %v6580
    %v6665 = vunpack.c.l.b16 %v6581
    %v6666 = vunpack.c.h.b16 %v6581
    %v6667 = vunpack.c.l.b16 %v6582
    %v6668 = vunpack.c.h.b16 %v6582
    %v6669 = vunpack.c.l.b16 %v6583
    %v6670 = vunpack.c.h.b16 %v6583
    %v6671 = vunpack.c.l.b16 %v6584
    %v6672 = vunpack.c.h.b16 %v6584
    %v6673 = vunpack.c.l.b16 %v6585
    %v6674 = vunpack.c.h.b16 %v6585
    %v6675 = vunpack.c.l.b16 %v6586
    %v6676 = vunpack.c.h.b16 %v6586
    %v6677 = vunpack.c.l.b16 %v6587
    %v6678 = vunpack.c.h.b16 %v6587
    %v6679 = vpack.c.b16 %v6649, %v6647
    %v6680 = vpack.c.b16 %v6650, %v6648
    %v6681 = vpack.c.b16 %v6653, %v6651
    %v6682 = vpack.c.b16 %v6654, %v6652
    %v6683 = vpack.c.b16 %v6657, %v6655
    %v6684 = vpack.c.b16 %v6658, %v6656
    %v6685 = vpack.c.b16 %v6661, %v6659
    %v6686 = vpack.c.b16 %v6662, %v6660
    %v6687 = vpack.c.b16 %v6665, %v6663
    %v6688 = vpack.c.b16 %v6666, %v6664
    %v6689 = vpack.c.b16 %v6669, %v6667
    %v6690 = vpack.c.b16 %v6670, %v6668
    %v6691 = vpack.c.b16 %v6673, %v6671
    %v6692 = vpack.c.b16 %v6674, %v6672
    %v6693 = vpack.c.b16 %v6677, %v6675
    %v6694 = vpack.c.b16 %v6678, %v6676
    %6711 = vmatpush.bf16.msra.mxu0 %v6693
    %6712 = vmatpush.bf16.msra.mxu0 %v6691
    %6713 = vmatpush.bf16.msra.mxu0 %v6689
    %6714 = vmatpush.bf16.msra.mxu0 %v6687
    %6715 = vmatpush.bf16.msra.mxu0 %v6685
    %6716 = vmatpush.bf16.msra.mxu0 %v6683
    %6717 = vmatpush.bf16.msra.mxu0 %v6681
    %6718 = vmatpush.bf16.msra.mxu0 %v6679
    %6719 = vmatmul.bf16.gmra.mxu0 %v6611
    %v6720 = vpop.f32.mrf.mxu0
    %v6721 = vadd.f32 0.0, %v6720
    %v6722 = vpop.f32.mrf.mxu0
    %v6723 = vadd.f32 0.0, %v6722
    %6724 = vmatmul.bf16.gmra.mxu0 %v6628
    %v6725 = vpop.f32.mrf.mxu0
    %v6726 = vadd.f32 0.0, %v6725
    %v6727 = vpop.f32.mrf.mxu0
    %v6728 = vadd.f32 0.0, %v6727
    %6729 = vdwg.mxu0
    %6730 = vmatpush.bf16.msra.mxu0 %v6694
    %6731 = vmatpush.bf16.msra.mxu0 %v6692
    %6732 = vmatpush.bf16.msra.mxu0 %v6690
    %6733 = vmatpush.bf16.msra.mxu0 %v6688
    %6734 = vmatpush.bf16.msra.mxu0 %v6686
    %6735 = vmatpush.bf16.msra.mxu0 %v6684
    %6736 = vmatpush.bf16.msra.mxu0 %v6682
    %6737 = vmatpush.bf16.msra.mxu0 %v6680
    %6738 = vmatmul.bf16.gmra.mxu0 %v6611
    %v6739 = vpop.f32.mrf.mxu0
    %v6740 = vadd.f32 0.0, %v6739
    %v6741 = vpop.f32.mrf.mxu0
    %v6742 = vadd.f32 0.0, %v6741
    %6743 = vmatmul.bf16.gmra.mxu0 %v6628
    %v6744 = vpop.f32.mrf.mxu0
    %v6745 = vadd.f32 0.0, %v6744
    %v6746 = vpop.f32.mrf.mxu0
    %v6747 = vadd.f32 0.0, %v6746
    %6748 = vdwg.mxu0
    %v6749 = vadd.f32 %v6528, %v6721
    %v6750 = vadd.f32 %v6547, %v6740
    %v6751 = vadd.f32 %v6530, %v6723
    %v6752 = vadd.f32 %v6549, %v6742
    %v6753 = vadd.f32 %v6533, %v6726
    %v6754 = vadd.f32 %v6552, %v6745
    %v6755 = vadd.f32 %v6535, %v6728
    %v6756 = vadd.f32 %v6554, %v6747
    %v6757 = vld [vmem:[%s5153] sm:$0x1]
    %v6758 = vld [vmem:[%s5153 + $0x1] sm:$0x1]
    %v6759 = vld [vmem:[%s5153 + $0x2] sm:$0x1]
    %v6760 = vld [vmem:[%s5153 + $0x3] sm:$0x1]
    %v6761 = vld [vmem:[%s5153 + $0x5] sm:$0x1]
    %v6762 = vld [vmem:[%s5153 + $0x6] sm:$0x1]
    %v6763 = vld [vmem:[%s5153 + $0x7] sm:$0x1]
    %v6764 = vld [vmem:[%s5153 + $0x8] sm:$0x1]
    %v6765 = vld [vmem:[%s5153 + $0xa] sm:$0x1]
    %v6766 = vld [vmem:[%s5153 + $0xb] sm:$0x1]
    %v6767 = vld [vmem:[%s5153 + $0xc] sm:$0x1]
    %v6768 = vld [vmem:[%s5153 + $0xd] sm:$0x1]
    %v6769 = vld [vmem:[%s5153 + $0xf] sm:$0x1]
    %v6770 = vld [vmem:[%s5153 + $0x10] sm:$0x1]
    %v6771 = vld [vmem:[%s5153 + $0x11] sm:$0x1]
    %v6772 = vld [vmem:[%s5153 + $0x12] sm:$0x1]
    %v6773 = vld [vmem:[%s740] sm:$0xff]
    %v6774 = vld [vmem:[%s740 + $0x8] sm:$0xff]
    %v6775 = vld [vmem:[%s740 + $0x10] sm:$0xff]
    %v6776 = vld [vmem:[%s740 + $0x18] sm:$0xff]
    %v6777 = vld [vmem:[%s740 + $0x20] sm:$0xff]
    %v6778 = vld [vmem:[%s740 + $0x28] sm:$0xff]
    %v6779 = vld [vmem:[%s740 + $0x30] sm:$0xff]
    %v6780 = vld [vmem:[%s740 + $0x38] sm:$0xff]
    %v6781 = vld [vmem:[%s740 + $0x40] sm:$0xff]
    %v6782 = vld [vmem:[%s740 + $0x48] sm:$0xff]
    %v6783 = vld [vmem:[%s740 + $0x50] sm:$0xff]
    %v6784 = vld [vmem:[%s740 + $0x58] sm:$0xff]
    %v6785 = vld [vmem:[%s740 + $0x60] sm:$0xff]
    %v6786 = vld [vmem:[%s740 + $0x68] sm:$0xff]
    %v6787 = vld [vmem:[%s740 + $0x70] sm:$0xff]
    %v6788 = vld [vmem:[%s740 + $0x78] sm:$0xff]
    %6790 = vst [vmem:[#allocation1] ss:$9 sm:$0xff] %v6757
    %s6792 = scalar_lea.vmem [#allocation1], 1
    %6793 = vst [vmem:[%s6792] ss:$9 sm:$0xff] %v6758
    %s6795 = scalar_lea.vmem [#allocation1], 2
    %6796 = vst [vmem:[%s6795] ss:$9 sm:$0xff] %v6759
    %s6798 = scalar_lea.vmem [#allocation1], 3
    %6799 = vst [vmem:[%s6798] ss:$9 sm:$0xff] %v6760
    %s6801 = scalar_lea.vmem [#allocation1], 4
    %6802 = vst [vmem:[%s6801] ss:$9 sm:$0xff] %v6761
    %s6804 = scalar_lea.vmem [#allocation1], 5
    %6805 = vst [vmem:[%s6804] ss:$9 sm:$0xff] %v6762
    %s6807 = scalar_lea.vmem [#allocation1], 6
    %6808 = vst [vmem:[%s6807] ss:$9 sm:$0xff] %v6763
    %s6810 = scalar_lea.vmem [#allocation1], 7
    %6811 = vst [vmem:[%s6810] ss:$9 sm:$0xff] %v6764
    %v6812 = vld [vmem:[#allocation1] sm:$0xff]
    %6814 = vst [vmem:[#allocation1] ss:$9 sm:$0xff] %v6765
    %6816 = vst [vmem:[%s6792] ss:$9 sm:$0xff] %v6766
    %6818 = vst [vmem:[%s6795] ss:$9 sm:$0xff] %v6767
    %6820 = vst [vmem:[%s6798] ss:$9 sm:$0xff] %v6768
    %6822 = vst [vmem:[%s6801] ss:$9 sm:$0xff] %v6769
    %6824 = vst [vmem:[%s6804] ss:$9 sm:$0xff] %v6770
    %6826 = vst [vmem:[%s6807] ss:$9 sm:$0xff] %v6771
    %6828 = vst [vmem:[%s6810] ss:$9 sm:$0xff] %v6772
    %v6829 = vld [vmem:[#allocation1] sm:$0xff]
    %v6848 = vunpack.c.l.b16 %v6773
    %v6849 = vunpack.c.h.b16 %v6773
    %v6850 = vunpack.c.l.b16 %v6774
    %v6851 = vunpack.c.h.b16 %v6774
    %v6852 = vunpack.c.l.b16 %v6775
    %v6853 = vunpack.c.h.b16 %v6775
    %v6854 = vunpack.c.l.b16 %v6776
    %v6855 = vunpack.c.h.b16 %v6776
    %v6856 = vunpack.c.l.b16 %v6777
    %v6857 = vunpack.c.h.b16 %v6777
    %v6858 = vunpack.c.l.b16 %v6778
    %v6859 = vunpack.c.h.b16 %v6778
    %v6860 = vunpack.c.l.b16 %v6779
    %v6861 = vunpack.c.h.b16 %v6779
    %v6862 = vunpack.c.l.b16 %v6780
    %v6863 = vunpack.c.h.b16 %v6780
    %v6864 = vunpack.c.l.b16 %v6781
    %v6865 = vunpack.c.h.b16 %v6781
    %v6866 = vunpack.c.l.b16 %v6782
    %v6867 = vunpack.c.h.b16 %v6782
    %v6868 = vunpack.c.l.b16 %v6783
    %v6869 = vunpack.c.h.b16 %v6783
    %v6870 = vunpack.c.l.b16 %v6784
    %v6871 = vunpack.c.h.b16 %v6784
    %v6872 = vunpack.c.l.b16 %v6785
    %v6873 = vunpack.c.h.b16 %v6785
    %v6874 = vunpack.c.l.b16 %v6786
    %v6875 = vunpack.c.h.b16 %v6786
    %v6876 = vunpack.c.l.b16 %v6787
    %v6877 = vunpack.c.h.b16 %v6787
    %v6878 = vunpack.c.l.b16 %v6788
    %v6879 = vunpack.c.h.b16 %v6788
    %v6880 = vpack.c.b16 %v6850, %v6848
    %v6881 = vpack.c.b16 %v6851, %v6849
    %v6882 = vpack.c.b16 %v6854, %v6852
    %v6883 = vpack.c.b16 %v6855, %v6853
    %v6884 = vpack.c.b16 %v6858, %v6856
    %v6885 = vpack.c.b16 %v6859, %v6857
    %v6886 = vpack.c.b16 %v6862, %v6860
    %v6887 = vpack.c.b16 %v6863, %v6861
    %v6888 = vpack.c.b16 %v6866, %v6864
    %v6889 = vpack.c.b16 %v6867, %v6865
    %v6890 = vpack.c.b16 %v6870, %v6868
    %v6891 = vpack.c.b16 %v6871, %v6869
    %v6892 = vpack.c.b16 %v6874, %v6872
    %v6893 = vpack.c.b16 %v6875, %v6873
    %v6894 = vpack.c.b16 %v6878, %v6876
    %v6895 = vpack.c.b16 %v6879, %v6877
    %6912 = vmatpush.bf16.msra.mxu0 %v6894
    %6913 = vmatpush.bf16.msra.mxu0 %v6892
    %6914 = vmatpush.bf16.msra.mxu0 %v6890
    %6915 = vmatpush.bf16.msra.mxu0 %v6888
    %6916 = vmatpush.bf16.msra.mxu0 %v6886
    %6917 = vmatpush.bf16.msra.mxu0 %v6884
    %6918 = vmatpush.bf16.msra.mxu0 %v6882
    %6919 = vmatpush.bf16.msra.mxu0 %v6880
    %6920 = vmatmul.bf16.gmra.mxu0 %v6812
    %v6921 = vpop.f32.mrf.mxu0
    %v6922 = vadd.f32 0.0, %v6921
    %v6923 = vpop.f32.mrf.mxu0
    %v6924 = vadd.f32 0.0, %v6923
    %6925 = vmatmul.bf16.gmra.mxu0 %v6829
    %v6926 = vpop.f32.mrf.mxu0
    %v6927 = vadd.f32 0.0, %v6926
    %v6928 = vpop.f32.mrf.mxu0
    %v6929 = vadd.f32 0.0, %v6928
    %6930 = vdwg.mxu0
    %6931 = vmatpush.bf16.msra.mxu0 %v6895
    %6932 = vmatpush.bf16.msra.mxu0 %v6893
    %6933 = vmatpush.bf16.msra.mxu0 %v6891
    %6934 = vmatpush.bf16.msra.mxu0 %v6889
    %6935 = vmatpush.bf16.msra.mxu0 %v6887
    %6936 = vmatpush.bf16.msra.mxu0 %v6885
    %6937 = vmatpush.bf16.msra.mxu0 %v6883
    %6938 = vmatpush.bf16.msra.mxu0 %v6881
    %6939 = vmatmul.bf16.gmra.mxu0 %v6812
    %v6940 = vpop.f32.mrf.mxu0
    %v6941 = vadd.f32 0.0, %v6940
    %v6942 = vpop.f32.mrf.mxu0
    %v6943 = vadd.f32 0.0, %v6942
    %6944 = vmatmul.bf16.gmra.mxu0 %v6829
    %v6945 = vpop.f32.mrf.mxu0
    %v6946 = vadd.f32 0.0, %v6945
    %v6947 = vpop.f32.mrf.mxu0
    %v6948 = vadd.f32 0.0, %v6947
    %6949 = vdwg.mxu0
    %v6950 = vadd.f32 %v6749, %v6922
    %v6951 = vadd.f32 %v6750, %v6941
    %v6952 = vadd.f32 %v6751, %v6924
    %v6953 = vadd.f32 %v6752, %v6943
    %v6954 = vadd.f32 %v6753, %v6927
    %v6955 = vadd.f32 %v6754, %v6946
    %v6956 = vadd.f32 %v6755, %v6929
    %v6957 = vadd.f32 %v6756, %v6948
    %s6958 = scalar_lea.vmem %s0, 256
    %v6959 = vld [vmem:[%s6958] sm:$0x1]
    %v6960 = vld [vmem:[%s6958 + $0x1] sm:$0x1]
    %v6961 = vld [vmem:[%s6958 + $0x2] sm:$0x1]
    %v6962 = vld [vmem:[%s6958 + $0x3] sm:$0x1]
    %v6963 = vld [vmem:[%s6958 + $0x5] sm:$0x1]
    %v6964 = vld [vmem:[%s6958 + $0x6] sm:$0x1]
    %v6965 = vld [vmem:[%s6958 + $0x7] sm:$0x1]
    %v6966 = vld [vmem:[%s6958 + $0x8] sm:$0x1]
    %v6967 = vld [vmem:[%s6958 + $0xa] sm:$0x1]
    %v6968 = vld [vmem:[%s6958 + $0xb] sm:$0x1]
    %v6969 = vld [vmem:[%s6958 + $0xc] sm:$0x1]
    %v6970 = vld [vmem:[%s6958 + $0xd] sm:$0x1]
    %v6971 = vld [vmem:[%s6958 + $0xf] sm:$0x1]
    %v6972 = vld [vmem:[%s6958 + $0x10] sm:$0x1]
    %v6973 = vld [vmem:[%s6958 + $0x11] sm:$0x1]
    %v6974 = vld [vmem:[%s6958 + $0x12] sm:$0x1]
    %v6975 = vld [vmem:[%s943] sm:$0xff]
    %v6976 = vld [vmem:[%s943 + $0x8] sm:$0xff]
    %v6977 = vld [vmem:[%s943 + $0x10] sm:$0xff]
    %v6978 = vld [vmem:[%s943 + $0x18] sm:$0xff]
    %v6979 = vld [vmem:[%s943 + $0x20] sm:$0xff]
    %v6980 = vld [vmem:[%s943 + $0x28] sm:$0xff]
    %v6981 = vld [vmem:[%s943 + $0x30] sm:$0xff]
    %v6982 = vld [vmem:[%s943 + $0x38] sm:$0xff]
    %v6983 = vld [vmem:[%s943 + $0x40] sm:$0xff]
    %v6984 = vld [vmem:[%s943 + $0x48] sm:$0xff]
    %v6985 = vld [vmem:[%s943 + $0x50] sm:$0xff]
    %v6986 = vld [vmem:[%s943 + $0x58] sm:$0xff]
    %v6987 = vld [vmem:[%s943 + $0x60] sm:$0xff]
    %v6988 = vld [vmem:[%s943 + $0x68] sm:$0xff]
    %v6989 = vld [vmem:[%s943 + $0x70] sm:$0xff]
    %v6990 = vld [vmem:[%s943 + $0x78] sm:$0xff]
    %6992 = vst [vmem:[#allocation1] ss:$9 sm:$0xff] %v6959
    %s6994 = scalar_lea.vmem [#allocation1], 1
    %6995 = vst [vmem:[%s6994] ss:$9 sm:$0xff] %v6960
    %s6997 = scalar_lea.vmem [#allocation1], 2
    %6998 = vst [vmem:[%s6997] ss:$9 sm:$0xff] %v6961
    %s7000 = scalar_lea.vmem [#allocation1], 3
    %7001 = vst [vmem:[%s7000] ss:$9 sm:$0xff] %v6962
    %s7003 = scalar_lea.vmem [#allocation1], 4
    %7004 = vst [vmem:[%s7003] ss:$9 sm:$0xff] %v6963
    %s7006 = scalar_lea.vmem [#allocation1], 5
    %7007 = vst [vmem:[%s7006] ss:$9 sm:$0xff] %v6964
    %s7009 = scalar_lea.vmem [#allocation1], 6
    %7010 = vst [vmem:[%s7009] ss:$9 sm:$0xff] %v6965
    %s7012 = scalar_lea.vmem [#allocation1], 7
    %7013 = vst [vmem:[%s7012] ss:$9 sm:$0xff] %v6966
    %v7014 = vld [vmem:[#allocation1] sm:$0xff]
    %7016 = vst [vmem:[#allocation1] ss:$9 sm:$0xff] %v6967
    %7018 = vst [vmem:[%s6994] ss:$9 sm:$0xff] %v6968
    %7020 = vst [vmem:[%s6997] ss:$9 sm:$0xff] %v6969
    %7022 = vst [vmem:[%s7000] ss:$9 sm:$0xff] %v6970
    %7024 = vst [vmem:[%s7003] ss:$9 sm:$0xff] %v6971
    %7026 = vst [vmem:[%s7006] ss:$9 sm:$0xff] %v6972
    %7028 = vst [vmem:[%s7009] ss:$9 sm:$0xff] %v6973
    %7030 = vst [vmem:[%s7012] ss:$9 sm:$0xff] %v6974
    %v7031 = vld [vmem:[#allocation1] sm:$0xff]
    %v7050 = vunpack.c.l.b16 %v6975
    %v7051 = vunpack.c.h.b16 %v6975
    %v7052 = vunpack.c.l.b16 %v6976
    %v7053 = vunpack.c.h.b16 %v6976
    %v7054 = vunpack.c.l.b16 %v6977
    %v7055 = vunpack.c.h.b16 %v6977
    %v7056 = vunpack.c.l.b16 %v6978
    %v7057 = vunpack.c.h.b16 %v6978
    %v7058 = vunpack.c.l.b16 %v6979
    %v7059 = vunpack.c.h.b16 %v6979
    %v7060 = vunpack.c.l.b16 %v6980
    %v7061 = vunpack.c.h.b16 %v6980
    %v7062 = vunpack.c.l.b16 %v6981
    %v7063 = vunpack.c.h.b16 %v6981
    %v7064 = vunpack.c.l.b16 %v6982
    %v7065 = vunpack.c.h.b16 %v6982
    %v7066 = vunpack.c.l.b16 %v6983
    %v7067 = vunpack.c.h.b16 %v6983
    %v7068 = vunpack.c.l.b16 %v6984
    %v7069 = vunpack.c.h.b16 %v6984
    %v7070 = vunpack.c.l.b16 %v6985
    %v7071 = vunpack.c.h.b16 %v6985
    %v7072 = vunpack.c.l.b16 %v6986
    %v7073 = vunpack.c.h.b16 %v6986
    %v7074 = vunpack.c.l.b16 %v6987
    %v7075 = vunpack.c.h.b16 %v6987
    %v7076 = vunpack.c.l.b16 %v6988
    %v7077 = vunpack.c.h.b16 %v6988
    %v7078 = vunpack.c.l.b16 %v6989
    %v7079 = vunpack.c.h.b16 %v6989
    %v7080 = vunpack.c.l.b16 %v6990
    %v7081 = vunpack.c.h.b16 %v6990
    %v7082 = vpack.c.b16 %v7052, %v7050
    %v7083 = vpack.c.b16 %v7053, %v7051
    %v7084 = vpack.c.b16 %v7056, %v7054
    %v7085 = vpack.c.b16 %v7057, %v7055
    %v7086 = vpack.c.b16 %v7060, %v7058
    %v7087 = vpack.c.b16 %v7061, %v7059
    %v7088 = vpack.c.b16 %v7064, %v7062
    %v7089 = vpack.c.b16 %v7065, %v7063
    %v7090 = vpack.c.b16 %v7068, %v7066
    %v7091 = vpack.c.b16 %v7069, %v7067
    %v7092 = vpack.c.b16 %v7072, %v7070
    %v7093 = vpack.c.b16 %v7073, %v7071
    %v7094 = vpack.c.b16 %v7076, %v7074
    %v7095 = vpack.c.b16 %v7077, %v7075
    %v7096 = vpack.c.b16 %v7080, %v7078
    %v7097 = vpack.c.b16 %v7081, %v7079
    %7114 = vmatpush.bf16.msra.mxu0 %v7096
    %7115 = vmatpush.bf16.msra.mxu0 %v7094
    %7116 = vmatpush.bf16.msra.mxu0 %v7092
    %7117 = vmatpush.bf16.msra.mxu0 %v7090
    %7118 = vmatpush.bf16.msra.mxu0 %v7088
    %7119 = vmatpush.bf16.msra.mxu0 %v7086
    %7120 = vmatpush.bf16.msra.mxu0 %v7084
    %7121 = vmatpush.bf16.msra.mxu0 %v7082
    %7122 = vmatmul.bf16.gmra.mxu0 %v7014
    %v7123 = vpop.f32.mrf.mxu0
    %v7124 = vadd.f32 0.0, %v7123
    %v7125 = vpop.f32.mrf.mxu0
    %v7126 = vadd.f32 0.0, %v7125
    %7127 = vmatmul.bf16.gmra.mxu0 %v7031
    %v7128 = vpop.f32.mrf.mxu0
    %v7129 = vadd.f32 0.0, %v7128
    %v7130 = vpop.f32.mrf.mxu0
    %v7131 = vadd.f32 0.0, %v7130
    %7132 = vdwg.mxu0
    %7133 = vmatpush.bf16.msra.mxu0 %v7097
    %7134 = vmatpush.bf16.msra.mxu0 %v7095
    %7135 = vmatpush.bf16.msra.mxu0 %v7093
    %7136 = vmatpush.bf16.msra.mxu0 %v7091
    %7137 = vmatpush.bf16.msra.mxu0 %v7089
    %7138 = vmatpush.bf16.msra.mxu0 %v7087
    %7139 = vmatpush.bf16.msra.mxu0 %v7085
    %7140 = vmatpush.bf16.msra.mxu0 %v7083
    %7141 = vmatmul.bf16.gmra.mxu0 %v7014
    %v7142 = vpop.f32.mrf.mxu0
    %v7143 = vadd.f32 0.0, %v7142
    %v7144 = vpop.f32.mrf.mxu0
    %v7145 = vadd.f32 0.0, %v7144
    %7146 = vmatmul.bf16.gmra.mxu0 %v7031
    %v7147 = vpop.f32.mrf.mxu0
    %v7148 = vadd.f32 0.0, %v7147
    %v7149 = vpop.f32.mrf.mxu0
    %v7150 = vadd.f32 0.0, %v7149
    %7151 = vdwg.mxu0
    %v7152 = vadd.f32 %v6950, %v7124
    %v7153 = vadd.f32 %v6951, %v7143
    %v7154 = vadd.f32 %v6952, %v7126
    %v7155 = vadd.f32 %v6953, %v7145
    %v7156 = vadd.f32 %v6954, %v7129
    %v7157 = vadd.f32 %v6955, %v7148
    %v7158 = vadd.f32 %v6956, %v7131
    %v7159 = vadd.f32 %v6957, %v7150
    %s7160 = scalar_lea.vmem %s0, 281
    %v7161 = vld [vmem:[%s7160] sm:$0x1]
    %v7162 = vld [vmem:[%s7160 + $0x1] sm:$0x1]
    %v7163 = vld [vmem:[%s7160 + $0x2] sm:$0x1]
    %v7164 = vld [vmem:[%s7160 + $0x3] sm:$0x1]
    %v7165 = vld [vmem:[%s7160 + $0x5] sm:$0x1]
    %v7166 = vld [vmem:[%s7160 + $0x6] sm:$0x1]
    %v7167 = vld [vmem:[%s7160 + $0x7] sm:$0x1]
    %v7168 = vld [vmem:[%s7160 + $0x8] sm:$0x1]
    %v7169 = vld [vmem:[%s7160 + $0xa] sm:$0x1]
    %v7170 = vld [vmem:[%s7160 + $0xb] sm:$0x1]
    %v7171 = vld [vmem:[%s7160 + $0xc] sm:$0x1]
    %v7172 = vld [vmem:[%s7160 + $0xd] sm:$0x1]
    %v7173 = vld [vmem:[%s7160 + $0xf] sm:$0x1]
    %v7174 = vld [vmem:[%s7160 + $0x10] sm:$0x1]
    %v7175 = vld [vmem:[%s7160 + $0x11] sm:$0x1]
    %v7176 = vld [vmem:[%s7160 + $0x12] sm:$0x1]
    %v7177 = vld [vmem:[%s1146] sm:$0xff]
    %v7178 = vld [vmem:[%s1146 + $0x8] sm:$0xff]
    %v7179 = vld [vmem:[%s1146 + $0x10] sm:$0xff]
    %v7180 = vld [vmem:[%s1146 + $0x18] sm:$0xff]
    %v7181 = vld [vmem:[%s1146 + $0x20] sm:$0xff]
    %v7182 = vld [vmem:[%s1146 + $0x28] sm:$0xff]
    %v7183 = vld [vmem:[%s1146 + $0x30] sm:$0xff]
    %v7184 = vld [vmem:[%s1146 + $0x38] sm:$0xff]
    %v7185 = vld [vmem:[%s1146 + $0x40] sm:$0xff]
    %v7186 = vld [vmem:[%s1146 + $0x48] sm:$0xff]
    %v7187 = vld [vmem:[%s1146 + $0x50] sm:$0xff]
    %v7188 = vld [vmem:[%s1146 + $0x58] sm:$0xff]
    %v7189 = vld [vmem:[%s1146 + $0x60] sm:$0xff]
    %v7190 = vld [vmem:[%s1146 + $0x68] sm:$0xff]
    %v7191 = vld [vmem:[%s1146 + $0x70] sm:$0xff]
    %v7192 = vld [vmem:[%s1146 + $0x78] sm:$0xff]
    %7194 = vst [vmem:[#allocation1] ss:$9 sm:$0xff] %v7161
    %s7196 = scalar_lea.vmem [#allocation1], 1
    %7197 = vst [vmem:[%s7196] ss:$9 sm:$0xff] %v7162
    %s7199 = scalar_lea.vmem [#allocation1], 2
    %7200 = vst [vmem:[%s7199] ss:$9 sm:$0xff] %v7163
    %s7202 = scalar_lea.vmem [#allocation1], 3
    %7203 = vst [vmem:[%s7202] ss:$9 sm:$0xff] %v7164
    %s7205 = scalar_lea.vmem [#allocation1], 4
    %7206 = vst [vmem:[%s7205] ss:$9 sm:$0xff] %v7165
    %s7208 = scalar_lea.vmem [#allocation1], 5
    %7209 = vst [vmem:[%s7208] ss:$9 sm:$0xff] %v7166
    %s7211 = scalar_lea.vmem [#allocation1], 6
    %7212 = vst [vmem:[%s7211] ss:$9 sm:$0xff] %v7167
    %s7214 = scalar_lea.vmem [#allocation1], 7
    %7215 = vst [vmem:[%s7214] ss:$9 sm:$0xff] %v7168
    %v7216 = vld [vmem:[#allocation1] sm:$0xff]
    %7218 = vst [vmem:[#allocation1] ss:$9 sm:$0xff] %v7169
    %7220 = vst [vmem:[%s7196] ss:$9 sm:$0xff] %v7170
    %7222 = vst [vmem:[%s7199] ss:$9 sm:$0xff] %v7171
    %7224 = vst [vmem:[%s7202] ss:$9 sm:$0xff] %v7172
    %7226 = vst [vmem:[%s7205] ss:$9 sm:$0xff] %v7173
    %7228 = vst [vmem:[%s7208] ss:$9 sm:$0xff] %v7174
    %7230 = vst [vmem:[%s7211] ss:$9 sm:$0xff] %v7175
    %7232 = vst [vmem:[%s7214] ss:$9 sm:$0xff] %v7176
    %v7233 = vld [vmem:[#allocation1] sm:$0xff]
    %v7252 = vunpack.c.l.b16 %v7177
    %v7253 = vunpack.c.h.b16 %v7177
    %v7254 = vunpack.c.l.b16 %v7178
    %v7255 = vunpack.c.h.b16 %v7178
    %v7256 = vunpack.c.l.b16 %v7179
    %v7257 = vunpack.c.h.b16 %v7179
    %v7258 = vunpack.c.l.b16 %v7180
    %v7259 = vunpack.c.h.b16 %v7180
    %v7260 = vunpack.c.l.b16 %v7181
    %v7261 = vunpack.c.h.b16 %v7181
    %v7262 = vunpack.c.l.b16 %v7182
    %v7263 = vunpack.c.h.b16 %v7182
    %v7264 = vunpack.c.l.b16 %v7183
    %v7265 = vunpack.c.h.b16 %v7183
    %v7266 = vunpack.c.l.b16 %v7184
    %v7267 = vunpack.c.h.b16 %v7184
    %v7268 = vunpack.c.l.b16 %v7185
    %v7269 = vunpack.c.h.b16 %v7185
    %v7270 = vunpack.c.l.b16 %v7186
    %v7271 = vunpack.c.h.b16 %v7186
    %v7272 = vunpack.c.l.b16 %v7187
    %v7273 = vunpack.c.h.b16 %v7187
    %v7274 = vunpack.c.l.b16 %v7188
    %v7275 = vunpack.c.h.b16 %v7188
    %v7276 = vunpack.c.l.b16 %v7189
    %v7277 = vunpack.c.h.b16 %v7189
    %v7278 = vunpack.c.l.b16 %v7190
    %v7279 = vunpack.c.h.b16 %v7190
    %v7280 = vunpack.c.l.b16 %v7191
    %v7281 = vunpack.c.h.b16 %v7191
    %v7282 = vunpack.c.l.b16 %v7192
    %v7283 = vunpack.c.h.b16 %v7192
    %v7284 = vpack.c.b16 %v7254, %v7252
    %v7285 = vpack.c.b16 %v7255, %v7253
    %v7286 = vpack.c.b16 %v7258, %v7256
    %v7287 = vpack.c.b16 %v7259, %v7257
    %v7288 = vpack.c.b16 %v7262, %v7260
    %v7289 = vpack.c.b16 %v7263, %v7261
    %v7290 = vpack.c.b16 %v7266, %v7264
    %v7291 = vpack.c.b16 %v7267, %v7265
    %v7292 = vpack.c.b16 %v7270, %v7268
    %v7293 = vpack.c.b16 %v7271, %v7269
    %v7294 = vpack.c.b16 %v7274, %v7272
    %v7295 = vpack.c.b16 %v7275, %v7273
    %v7296 = vpack.c.b16 %v7278, %v7276
    %v7297 = vpack.c.b16 %v7279, %v7277
    %v7298 = vpack.c.b16 %v7282, %v7280
    %v7299 = vpack.c.b16 %v7283, %v7281
    %7316 = vmatpush.bf16.msra.mxu0 %v7298
    %7317 = vmatpush.bf16.msra.mxu0 %v7296
    %7318 = vmatpush.bf16.msra.mxu0 %v7294
    %7319 = vmatpush.bf16.msra.mxu0 %v7292
    %7320 = vmatpush.bf16.msra.mxu0 %v7290
    %7321 = vmatpush.bf16.msra.mxu0 %v7288
    %7322 = vmatpush.bf16.msra.mxu0 %v7286
    %7323 = vmatpush.bf16.msra.mxu0 %v7284
    %7324 = vmatmul.bf16.gmra.mxu0 %v7216
    %v7325 = vpop.f32.mrf.mxu0
    %v7326 = vadd.f32 0.0, %v7325
    %v7327 = vpop.f32.mrf.mxu0
    %v7328 = vadd.f32 0.0, %v7327
    %7329 = vmatmul.bf16.gmra.mxu0 %v7233
    %v7330 = vpop.f32.mrf.mxu0
    %v7331 = vadd.f32 0.0, %v7330
    %v7332 = vpop.f32.mrf.mxu0
    %v7333 = vadd.f32 0.0, %v7332
    %7334 = vdwg.mxu0
    %7335 = vmatpush.bf16.msra.mxu0 %v7299
    %7336 = vmatpush.bf16.msra.mxu0 %v7297
    %7337 = vmatpush.bf16.msra.mxu0 %v7295
    %7338 = vmatpush.bf16.msra.mxu0 %v7293
    %7339 = vmatpush.bf16.msra.mxu0 %v7291
    %7340 = vmatpush.bf16.msra.mxu0 %v7289
    %7341 = vmatpush.bf16.msra.mxu0 %v7287
    %7342 = vmatpush.bf16.msra.mxu0 %v7285
    %7343 = vmatmul.bf16.gmra.mxu0 %v7216
    %v7344 = vpop.f32.mrf.mxu0
    %v7345 = vadd.f32 0.0, %v7344
    %v7346 = vpop.f32.mrf.mxu0
    %v7347 = vadd.f32 0.0, %v7346
    %7348 = vmatmul.bf16.gmra.mxu0 %v7233
    %v7349 = vpop.f32.mrf.mxu0
    %v7350 = vadd.f32 0.0, %v7349
    %v7351 = vpop.f32.mrf.mxu0
    %v7352 = vadd.f32 0.0, %v7351
    %7353 = vdwg.mxu0
    %v7354 = vadd.f32 %v7152, %v7326
    %v7355 = vadd.f32 %v7153, %v7345
    %v7356 = vadd.f32 %v7154, %v7328
    %v7357 = vadd.f32 %v7155, %v7347
    %v7358 = vadd.f32 %v7156, %v7331
    %v7359 = vadd.f32 %v7157, %v7350
    %v7360 = vadd.f32 %v7158, %v7333
    %v7361 = vadd.f32 %v7159, %v7352
    %v7362 = vld [vmem:[%s5759] sm:$0x1]
    %v7363 = vld [vmem:[%s5759 + $0x1] sm:$0x1]
    %v7364 = vld [vmem:[%s5759 + $0x2] sm:$0x1]
    %v7365 = vld [vmem:[%s5759 + $0x3] sm:$0x1]
    %v7366 = vld [vmem:[%s5759 + $0x5] sm:$0x1]
    %v7367 = vld [vmem:[%s5759 + $0x6] sm:$0x1]
    %v7368 = vld [vmem:[%s5759 + $0x7] sm:$0x1]
    %v7369 = vld [vmem:[%s5759 + $0x8] sm:$0x1]
    %v7370 = vld [vmem:[%s5759 + $0xa] sm:$0x1]
    %v7371 = vld [vmem:[%s5759 + $0xb] sm:$0x1]
    %v7372 = vld [vmem:[%s5759 + $0xc] sm:$0x1]
    %v7373 = vld [vmem:[%s5759 + $0xd] sm:$0x1]
    %v7374 = vld [vmem:[%s5759 + $0xf] sm:$0x1]
    %v7375 = vld [vmem:[%s5759 + $0x10] sm:$0x1]
    %v7376 = vld [vmem:[%s5759 + $0x11] sm:$0x1]
    %v7377 = vld [vmem:[%s5759 + $0x12] sm:$0x1]
    %v7378 = vld [vmem:[%s1349] sm:$0xff]
    %v7379 = vld [vmem:[%s1349 + $0x8] sm:$0xff]
    %v7380 = vld [vmem:[%s1349 + $0x10] sm:$0xff]
    %v7381 = vld [vmem:[%s1349 + $0x18] sm:$0xff]
    %v7382 = vld [vmem:[%s1349 + $0x20] sm:$0xff]
    %v7383 = vld [vmem:[%s1349 + $0x28] sm:$0xff]
    %v7384 = vld [vmem:[%s1349 + $0x30] sm:$0xff]
    %v7385 = vld [vmem:[%s1349 + $0x38] sm:$0xff]
    %v7386 = vld [vmem:[%s1349 + $0x40] sm:$0xff]
    %v7387 = vld [vmem:[%s1349 + $0x48] sm:$0xff]
    %v7388 = vld [vmem:[%s1349 + $0x50] sm:$0xff]
    %v7389 = vld [vmem:[%s1349 + $0x58] sm:$0xff]
    %v7390 = vld [vmem:[%s1349 + $0x60] sm:$0xff]
    %v7391 = vld [vmem:[%s1349 + $0x68] sm:$0xff]
    %v7392 = vld [vmem:[%s1349 + $0x70] sm:$0xff]
    %v7393 = vld [vmem:[%s1349 + $0x78] sm:$0xff]
    %7395 = vst [vmem:[#allocation1] ss:$9 sm:$0xff] %v7362
    %s7397 = scalar_lea.vmem [#allocation1], 1
    %7398 = vst [vmem:[%s7397] ss:$9 sm:$0xff] %v7363
    %s7400 = scalar_lea.vmem [#allocation1], 2
    %7401 = vst [vmem:[%s7400] ss:$9 sm:$0xff] %v7364
    %s7403 = scalar_lea.vmem [#allocation1], 3
    %7404 = vst [vmem:[%s7403] ss:$9 sm:$0xff] %v7365
    %s7406 = scalar_lea.vmem [#allocation1], 4
    %7407 = vst [vmem:[%s7406] ss:$9 sm:$0xff] %v7366
    %s7409 = scalar_lea.vmem [#allocation1], 5
    %7410 = vst [vmem:[%s7409] ss:$9 sm:$0xff] %v7367
    %s7412 = scalar_lea.vmem [#allocation1], 6
    %7413 = vst [vmem:[%s7412] ss:$9 sm:$0xff] %v7368
    %s7415 = scalar_lea.vmem [#allocation1], 7
    %7416 = vst [vmem:[%s7415] ss:$9 sm:$0xff] %v7369
    %v7417 = vld [vmem:[#allocation1] sm:$0xff]
    %7419 = vst [vmem:[#allocation1] ss:$9 sm:$0xff] %v7370
    %7421 = vst [vmem:[%s7397] ss:$9 sm:$0xff] %v7371
    %7423 = vst [vmem:[%s7400] ss:$9 sm:$0xff] %v7372
    %7425 = vst [vmem:[%s7403] ss:$9 sm:$0xff] %v7373
    %7427 = vst [vmem:[%s7406] ss:$9 sm:$0xff] %v7374
    %7429 = vst [vmem:[%s7409] ss:$9 sm:$0xff] %v7375
    %7431 = vst [vmem:[%s7412] ss:$9 sm:$0xff] %v7376
    %7433 = vst [vmem:[%s7415] ss:$9 sm:$0xff] %v7377
    %v7434 = vld [vmem:[#allocation1] sm:$0xff]
    %v7453 = vunpack.c.l.b16 %v7378
    %v7454 = vunpack.c.h.b16 %v7378
    %v7455 = vunpack.c.l.b16 %v7379
    %v7456 = vunpack.c.h.b16 %v7379
    %v7457 = vunpack.c.l.b16 %v7380
    %v7458 = vunpack.c.h.b16 %v7380
    %v7459 = vunpack.c.l.b16 %v7381
    %v7460 = vunpack.c.h.b16 %v7381
    %v7461 = vunpack.c.l.b16 %v7382
    %v7462 = vunpack.c.h.b16 %v7382
    %v7463 = vunpack.c.l.b16 %v7383
    %v7464 = vunpack.c.h.b16 %v7383
    %v7465 = vunpack.c.l.b16 %v7384
    %v7466 = vunpack.c.h.b16 %v7384
    %v7467 = vunpack.c.l.b16 %v7385
    %v7468 = vunpack.c.h.b16 %v7385
    %v7469 = vunpack.c.l.b16 %v7386
    %v7470 = vunpack.c.h.b16 %v7386
    %v7471 = vunpack.c.l.b16 %v7387
    %v7472 = vunpack.c.h.b16 %v7387
    %v7473 = vunpack.c.l.b16 %v7388
    %v7474 = vunpack.c.h.b16 %v7388
    %v7475 = vunpack.c.l.b16 %v7389
    %v7476 = vunpack.c.h.b16 %v7389
    %v7477 = vunpack.c.l.b16 %v7390
    %v7478 = vunpack.c.h.b16 %v7390
    %v7479 = vunpack.c.l.b16 %v7391
    %v7480 = vunpack.c.h.b16 %v7391
    %v7481 = vunpack.c.l.b16 %v7392
    %v7482 = vunpack.c.h.b16 %v7392
    %v7483 = vunpack.c.l.b16 %v7393
    %v7484 = vunpack.c.h.b16 %v7393
    %v7485 = vpack.c.b16 %v7455, %v7453
    %v7486 = vpack.c.b16 %v7456, %v7454
    %v7487 = vpack.c.b16 %v7459, %v7457
    %v7488 = vpack.c.b16 %v7460, %v7458
    %v7489 = vpack.c.b16 %v7463, %v7461
    %v7490 = vpack.c.b16 %v7464, %v7462
    %v7491 = vpack.c.b16 %v7467, %v7465
    %v7492 = vpack.c.b16 %v7468, %v7466
    %v7493 = vpack.c.b16 %v7471, %v7469
    %v7494 = vpack.c.b16 %v7472, %v7470
    %v7495 = vpack.c.b16 %v7475, %v7473
    %v7496 = vpack.c.b16 %v7476, %v7474
    %v7497 = vpack.c.b16 %v7479, %v7477
    %v7498 = vpack.c.b16 %v7480, %v7478
    %v7499 = vpack.c.b16 %v7483, %v7481
    %v7500 = vpack.c.b16 %v7484, %v7482
    %7517 = vmatpush.bf16.msra.mxu0 %v7499
    %7518 = vmatpush.bf16.msra.mxu0 %v7497
    %7519 = vmatpush.bf16.msra.mxu0 %v7495
    %7520 = vmatpush.bf16.msra.mxu0 %v7493
    %7521 = vmatpush.bf16.msra.mxu0 %v7491
    %7522 = vmatpush.bf16.msra.mxu0 %v7489
    %7523 = vmatpush.bf16.msra.mxu0 %v7487
    %7524 = vmatpush.bf16.msra.mxu0 %v7485
    %7525 = vmatmul.bf16.gmra.mxu0 %v7417
    %v7526 = vpop.f32.mrf.mxu0
    %v7527 = vadd.f32 0.0, %v7526
    %v7528 = vpop.f32.mrf.mxu0
    %v7529 = vadd.f32 0.0, %v7528
    %7530 = vmatmul.bf16.gmra.mxu0 %v7434
    %v7531 = vpop.f32.mrf.mxu0
    %v7532 = vadd.f32 0.0, %v7531
    %v7533 = vpop.f32.mrf.mxu0
    %v7534 = vadd.f32 0.0, %v7533
    %7535 = vdwg.mxu0
    %7536 = vmatpush.bf16.msra.mxu0 %v7500
    %7537 = vmatpush.bf16.msra.mxu0 %v7498
    %7538 = vmatpush.bf16.msra.mxu0 %v7496
    %7539 = vmatpush.bf16.msra.mxu0 %v7494
    %7540 = vmatpush.bf16.msra.mxu0 %v7492
    %7541 = vmatpush.bf16.msra.mxu0 %v7490
    %7542 = vmatpush.bf16.msra.mxu0 %v7488
    %7543 = vmatpush.bf16.msra.mxu0 %v7486
    %7544 = vmatmul.bf16.gmra.mxu0 %v7417
    %v7545 = vpop.f32.mrf.mxu0
    %v7546 = vadd.f32 0.0, %v7545
    %v7547 = vpop.f32.mrf.mxu0
    %v7548 = vadd.f32 0.0, %v7547
    %7549 = vmatmul.bf16.gmra.mxu0 %v7434
    %v7550 = vpop.f32.mrf.mxu0
    %v7551 = vadd.f32 0.0, %v7550
    %v7552 = vpop.f32.mrf.mxu0
    %v7553 = vadd.f32 0.0, %v7552
    %7554 = vdwg.mxu0
    %v7555 = vadd.f32 %v7354, %v7527
    %v7556 = vadd.f32 %v7355, %v7546
    %v7557 = vadd.f32 %v7356, %v7529
    %v7558 = vadd.f32 %v7357, %v7548
    %v7559 = vadd.f32 %v7358, %v7532
    %v7560 = vadd.f32 %v7359, %v7551
    %v7561 = vadd.f32 %v7360, %v7534
    %v7562 = vadd.f32 %v7361, %v7553
    %s7563 = scalar_lea.vmem %s0, 356
    %v7564 = vld [vmem:[%s7563] sm:$0x1]
    %v7565 = vld [vmem:[%s7563 + $0x1] sm:$0x1]
    %v7566 = vld [vmem:[%s7563 + $0x2] sm:$0x1]
    %v7567 = vld [vmem:[%s7563 + $0x3] sm:$0x1]
    %v7568 = vld [vmem:[%s7563 + $0x5] sm:$0x1]
    %v7569 = vld [vmem:[%s7563 + $0x6] sm:$0x1]
    %v7570 = vld [vmem:[%s7563 + $0x7] sm:$0x1]
    %v7571 = vld [vmem:[%s7563 + $0x8] sm:$0x1]
    %v7572 = vld [vmem:[%s7563 + $0xa] sm:$0x1]
    %v7573 = vld [vmem:[%s7563 + $0xb] sm:$0x1]
    %v7574 = vld [vmem:[%s7563 + $0xc] sm:$0x1]
    %v7575 = vld [vmem:[%s7563 + $0xd] sm:$0x1]
    %v7576 = vld [vmem:[%s7563 + $0xf] sm:$0x1]
    %v7577 = vld [vmem:[%s7563 + $0x10] sm:$0x1]
    %v7578 = vld [vmem:[%s7563 + $0x11] sm:$0x1]
    %v7579 = vld [vmem:[%s7563 + $0x12] sm:$0x1]
    %v7580 = vld [vmem:[%s1552] sm:$0xff]
    %v7581 = vld [vmem:[%s1552 + $0x8] sm:$0xff]
    %v7582 = vld [vmem:[%s1552 + $0x10] sm:$0xff]
    %v7583 = vld [vmem:[%s1552 + $0x18] sm:$0xff]
    %v7584 = vld [vmem:[%s1552 + $0x20] sm:$0xff]
    %v7585 = vld [vmem:[%s1552 + $0x28] sm:$0xff]
    %v7586 = vld [vmem:[%s1552 + $0x30] sm:$0xff]
    %v7587 = vld [vmem:[%s1552 + $0x38] sm:$0xff]
    %v7588 = vld [vmem:[%s1552 + $0x40] sm:$0xff]
    %v7589 = vld [vmem:[%s1552 + $0x48] sm:$0xff]
    %v7590 = vld [vmem:[%s1552 + $0x50] sm:$0xff]
    %v7591 = vld [vmem:[%s1552 + $0x58] sm:$0xff]
    %v7592 = vld [vmem:[%s1552 + $0x60] sm:$0xff]
    %v7593 = vld [vmem:[%s1552 + $0x68] sm:$0xff]
    %v7594 = vld [vmem:[%s1552 + $0x70] sm:$0xff]
    %v7595 = vld [vmem:[%s1552 + $0x78] sm:$0xff]
    %7597 = vst [vmem:[#allocation1] ss:$9 sm:$0xff] %v7564
    %s7599 = scalar_lea.vmem [#allocation1], 1
    %7600 = vst [vmem:[%s7599] ss:$9 sm:$0xff] %v7565
    %s7602 = scalar_lea.vmem [#allocation1], 2
    %7603 = vst [vmem:[%s7602] ss:$9 sm:$0xff] %v7566
    %s7605 = scalar_lea.vmem [#allocation1], 3
    %7606 = vst [vmem:[%s7605] ss:$9 sm:$0xff] %v7567
    %s7608 = scalar_lea.vmem [#allocation1], 4
    %7609 = vst [vmem:[%s7608] ss:$9 sm:$0xff] %v7568
    %s7611 = scalar_lea.vmem [#allocation1], 5
    %7612 = vst [vmem:[%s7611] ss:$9 sm:$0xff] %v7569
    %s7614 = scalar_lea.vmem [#allocation1], 6
    %7615 = vst [vmem:[%s7614] ss:$9 sm:$0xff] %v7570
    %s7617 = scalar_lea.vmem [#allocation1], 7
    %7618 = vst [vmem:[%s7617] ss:$9 sm:$0xff] %v7571
    %v7619 = vld [vmem:[#allocation1] sm:$0xff]
    %7621 = vst [vmem:[#allocation1] ss:$9 sm:$0xff] %v7572
    %7623 = vst [vmem:[%s7599] ss:$9 sm:$0xff] %v7573
    %7625 = vst [vmem:[%s7602] ss:$9 sm:$0xff] %v7574
    %7627 = vst [vmem:[%s7605] ss:$9 sm:$0xff] %v7575
    %7629 = vst [vmem:[%s7608] ss:$9 sm:$0xff] %v7576
    %7631 = vst [vmem:[%s7611] ss:$9 sm:$0xff] %v7577
    %7633 = vst [vmem:[%s7614] ss:$9 sm:$0xff] %v7578
    %7635 = vst [vmem:[%s7617] ss:$9 sm:$0xff] %v7579
    %v7636 = vld [vmem:[#allocation1] sm:$0xff]
    %v7655 = vunpack.c.l.b16 %v7580
    %v7656 = vunpack.c.h.b16 %v7580
    %v7657 = vunpack.c.l.b16 %v7581
    %v7658 = vunpack.c.h.b16 %v7581
    %v7659 = vunpack.c.l.b16 %v7582
    %v7660 = vunpack.c.h.b16 %v7582
    %v7661 = vunpack.c.l.b16 %v7583
    %v7662 = vunpack.c.h.b16 %v7583
    %v7663 = vunpack.c.l.b16 %v7584
    %v7664 = vunpack.c.h.b16 %v7584
    %v7665 = vunpack.c.l.b16 %v7585
    %v7666 = vunpack.c.h.b16 %v7585
    %v7667 = vunpack.c.l.b16 %v7586
    %v7668 = vunpack.c.h.b16 %v7586
    %v7669 = vunpack.c.l.b16 %v7587
    %v7670 = vunpack.c.h.b16 %v7587
    %v7671 = vunpack.c.l.b16 %v7588
    %v7672 = vunpack.c.h.b16 %v7588
    %v7673 = vunpack.c.l.b16 %v7589
    %v7674 = vunpack.c.h.b16 %v7589
    %v7675 = vunpack.c.l.b16 %v7590
    %v7676 = vunpack.c.h.b16 %v7590
    %v7677 = vunpack.c.l.b16 %v7591
    %v7678 = vunpack.c.h.b16 %v7591
    %v7679 = vunpack.c.l.b16 %v7592
    %v7680 = vunpack.c.h.b16 %v7592
    %v7681 = vunpack.c.l.b16 %v7593
    %v7682 = vunpack.c.h.b16 %v7593
    %v7683 = vunpack.c.l.b16 %v7594
    %v7684 = vunpack.c.h.b16 %v7594
    %v7685 = vunpack.c.l.b16 %v7595
    %v7686 = vunpack.c.h.b16 %v7595
    %v7687 = vpack.c.b16 %v7657, %v7655
    %v7688 = vpack.c.b16 %v7658, %v7656
    %v7689 = vpack.c.b16 %v7661, %v7659
    %v7690 = vpack.c.b16 %v7662, %v7660
    %v7691 = vpack.c.b16 %v7665, %v7663
    %v7692 = vpack.c.b16 %v7666, %v7664
    %v7693 = vpack.c.b16 %v7669, %v7667
    %v7694 = vpack.c.b16 %v7670, %v7668
    %v7695 = vpack.c.b16 %v7673, %v7671
    %v7696 = vpack.c.b16 %v7674, %v7672
    %v7697 = vpack.c.b16 %v7677, %v7675
    %v7698 = vpack.c.b16 %v7678, %v7676
    %v7699 = vpack.c.b16 %v7681, %v7679
    %v7700 = vpack.c.b16 %v7682, %v7680
    %v7701 = vpack.c.b16 %v7685, %v7683
    %v7702 = vpack.c.b16 %v7686, %v7684
    %7719 = vmatpush.bf16.msra.mxu0 %v7701
    %7720 = vmatpush.bf16.msra.mxu0 %v7699
    %7721 = vmatpush.bf16.msra.mxu0 %v7697
    %7722 = vmatpush.bf16.msra.mxu0 %v7695
    %7723 = vmatpush.bf16.msra.mxu0 %v7693
    %7724 = vmatpush.bf16.msra.mxu0 %v7691
    %7725 = vmatpush.bf16.msra.mxu0 %v7689
    %7726 = vmatpush.bf16.msra.mxu0 %v7687
    %7727 = vmatmul.bf16.gmra.mxu0 %v7619
    %v7728 = vpop.f32.mrf.mxu0
    %v7729 = vadd.f32 0.0, %v7728
    %v7730 = vpop.f32.mrf.mxu0
    %v7731 = vadd.f32 0.0, %v7730
    %7732 = vmatmul.bf16.gmra.mxu0 %v7636
    %v7733 = vpop.f32.mrf.mxu0
    %v7734 = vadd.f32 0.0, %v7733
    %v7735 = vpop.f32.mrf.mxu0
    %v7736 = vadd.f32 0.0, %v7735
    %7737 = vdwg.mxu0
    %7738 = vmatpush.bf16.msra.mxu0 %v7702
    %7739 = vmatpush.bf16.msra.mxu0 %v7700
    %7740 = vmatpush.bf16.msra.mxu0 %v7698
    %7741 = vmatpush.bf16.msra.mxu0 %v7696
    %7742 = vmatpush.bf16.msra.mxu0 %v7694
    %7743 = vmatpush.bf16.msra.mxu0 %v7692
    %7744 = vmatpush.bf16.msra.mxu0 %v7690
    %7745 = vmatpush.bf16.msra.mxu0 %v7688
    %7746 = vmatmul.bf16.gmra.mxu0 %v7619
    %v7747 = vpop.f32.mrf.mxu0
    %v7748 = vadd.f32 0.0, %v7747
    %v7749 = vpop.f32.mrf.mxu0
    %v7750 = vadd.f32 0.0, %v7749
    %7751 = vmatmul.bf16.gmra.mxu0 %v7636
    %v7752 = vpop.f32.mrf.mxu0
    %v7753 = vadd.f32 0.0, %v7752
    %v7754 = vpop.f32.mrf.mxu0
    %v7755 = vadd.f32 0.0, %v7754
    %7756 = vdwg.mxu0
    %v7757 = vadd.f32 %v7555, %v7729
    %v7758 = vadd.f32 %v7556, %v7748
    %v7759 = vadd.f32 %v7557, %v7731
    %v7760 = vadd.f32 %v7558, %v7750
    %v7761 = vadd.f32 %v7559, %v7734
    %v7762 = vadd.f32 %v7560, %v7753
    %v7763 = vadd.f32 %v7561, %v7736
    %v7764 = vadd.f32 %v7562, %v7755
    %s7765 = scalar_lea.vmem %s0, 381
    %v7766 = vld [vmem:[%s7765] sm:$0x1]
    %v7767 = vld [vmem:[%s7765 + $0x1] sm:$0x1]
    %v7768 = vld [vmem:[%s7765 + $0x2] sm:$0x1]
    %v7769 = vld [vmem:[%s7765 + $0x3] sm:$0x1]
    %v7770 = vld [vmem:[%s7765 + $0x5] sm:$0x1]
    %v7771 = vld [vmem:[%s7765 + $0x6] sm:$0x1]
    %v7772 = vld [vmem:[%s7765 + $0x7] sm:$0x1]
    %v7773 = vld [vmem:[%s7765 + $0x8] sm:$0x1]
    %v7774 = vld [vmem:[%s7765 + $0xa] sm:$0x1]
    %v7775 = vld [vmem:[%s7765 + $0xb] sm:$0x1]
    %v7776 = vld [vmem:[%s7765 + $0xc] sm:$0x1]
    %v7777 = vld [vmem:[%s7765 + $0xd] sm:$0x1]
    %v7778 = vld [vmem:[%s7765 + $0xf] sm:$0x1]
    %v7779 = vld [vmem:[%s7765 + $0x10] sm:$0x1]
    %v7780 = vld [vmem:[%s7765 + $0x11] sm:$0x1]
    %v7781 = vld [vmem:[%s7765 + $0x12] sm:$0x1]
    %v7782 = vld [vmem:[%s1755] sm:$0xff]
    %v7783 = vld [vmem:[%s1755 + $0x8] sm:$0xff]
    %v7784 = vld [vmem:[%s1755 + $0x10] sm:$0xff]
    %v7785 = vld [vmem:[%s1755 + $0x18] sm:$0xff]
    %v7786 = vld [vmem:[%s1755 + $0x20] sm:$0xff]
    %v7787 = vld [vmem:[%s1755 + $0x28] sm:$0xff]
    %v7788 = vld [vmem:[%s1755 + $0x30] sm:$0xff]
    %v7789 = vld [vmem:[%s1755 + $0x38] sm:$0xff]
    %v7790 = vld [vmem:[%s1755 + $0x40] sm:$0xff]
    %v7791 = vld [vmem:[%s1755 + $0x48] sm:$0xff]
    %v7792 = vld [vmem:[%s1755 + $0x50] sm:$0xff]
    %v7793 = vld [vmem:[%s1755 + $0x58] sm:$0xff]
    %v7794 = vld [vmem:[%s1755 + $0x60] sm:$0xff]
    %v7795 = vld [vmem:[%s1755 + $0x68] sm:$0xff]
    %v7796 = vld [vmem:[%s1755 + $0x70] sm:$0xff]
    %v7797 = vld [vmem:[%s1755 + $0x78] sm:$0xff]
    %7799 = vst [vmem:[#allocation1] ss:$9 sm:$0xff] %v7766
    %s7801 = scalar_lea.vmem [#allocation1], 1
    %7802 = vst [vmem:[%s7801] ss:$9 sm:$0xff] %v7767
    %s7804 = scalar_lea.vmem [#allocation1], 2
    %7805 = vst [vmem:[%s7804] ss:$9 sm:$0xff] %v7768
    %s7807 = scalar_lea.vmem [#allocation1], 3
    %7808 = vst [vmem:[%s7807] ss:$9 sm:$0xff] %v7769
    %s7810 = scalar_lea.vmem [#allocation1], 4
    %7811 = vst [vmem:[%s7810] ss:$9 sm:$0xff] %v7770
    %s7813 = scalar_lea.vmem [#allocation1], 5
    %7814 = vst [vmem:[%s7813] ss:$9 sm:$0xff] %v7771
    %s7816 = scalar_lea.vmem [#allocation1], 6
    %7817 = vst [vmem:[%s7816] ss:$9 sm:$0xff] %v7772
    %s7819 = scalar_lea.vmem [#allocation1], 7
    %7820 = vst [vmem:[%s7819] ss:$9 sm:$0xff] %v7773
    %v7821 = vld [vmem:[#allocation1] sm:$0xff]
    %7823 = vst [vmem:[#allocation1] ss:$9 sm:$0xff] %v7774
    %7825 = vst [vmem:[%s7801] ss:$9 sm:$0xff] %v7775
    %7827 = vst [vmem:[%s7804] ss:$9 sm:$0xff] %v7776
    %7829 = vst [vmem:[%s7807] ss:$9 sm:$0xff] %v7777
    %7831 = vst [vmem:[%s7810] ss:$9 sm:$0xff] %v7778
    %7833 = vst [vmem:[%s7813] ss:$9 sm:$0xff] %v7779
    %7835 = vst [vmem:[%s7816] ss:$9 sm:$0xff] %v7780
    %7837 = vst [vmem:[%s7819] ss:$9 sm:$0xff] %v7781
    %v7838 = vld [vmem:[#allocation1] sm:$0xff]
    %v7857 = vunpack.c.l.b16 %v7782
    %v7858 = vunpack.c.h.b16 %v7782
    %v7859 = vunpack.c.l.b16 %v7783
    %v7860 = vunpack.c.h.b16 %v7783
    %v7861 = vunpack.c.l.b16 %v7784
    %v7862 = vunpack.c.h.b16 %v7784
    %v7863 = vunpack.c.l.b16 %v7785
    %v7864 = vunpack.c.h.b16 %v7785
    %v7865 = vunpack.c.l.b16 %v7786
    %v7866 = vunpack.c.h.b16 %v7786
    %v7867 = vunpack.c.l.b16 %v7787
    %v7868 = vunpack.c.h.b16 %v7787
    %v7869 = vunpack.c.l.b16 %v7788
    %v7870 = vunpack.c.h.b16 %v7788
    %v7871 = vunpack.c.l.b16 %v7789
    %v7872 = vunpack.c.h.b16 %v7789
    %v7873 = vunpack.c.l.b16 %v7790
    %v7874 = vunpack.c.h.b16 %v7790
    %v7875 = vunpack.c.l.b16 %v7791
    %v7876 = vunpack.c.h.b16 %v7791
    %v7877 = vunpack.c.l.b16 %v7792
    %v7878 = vunpack.c.h.b16 %v7792
    %v7879 = vunpack.c.l.b16 %v7793
    %v7880 = vunpack.c.h.b16 %v7793
    %v7881 = vunpack.c.l.b16 %v7794
    %v7882 = vunpack.c.h.b16 %v7794
    %v7883 = vunpack.c.l.b16 %v7795
    %v7884 = vunpack.c.h.b16 %v7795
    %v7885 = vunpack.c.l.b16 %v7796
    %v7886 = vunpack.c.h.b16 %v7796
    %v7887 = vunpack.c.l.b16 %v7797
    %v7888 = vunpack.c.h.b16 %v7797
    %v7889 = vpack.c.b16 %v7859, %v7857
    %v7890 = vpack.c.b16 %v7860, %v7858
    %v7891 = vpack.c.b16 %v7863, %v7861
    %v7892 = vpack.c.b16 %v7864, %v7862
    %v7893 = vpack.c.b16 %v7867, %v7865
    %v7894 = vpack.c.b16 %v7868, %v7866
    %v7895 = vpack.c.b16 %v7871, %v7869
    %v7896 = vpack.c.b16 %v7872, %v7870
    %v7897 = vpack.c.b16 %v7875, %v7873
    %v7898 = vpack.c.b16 %v7876, %v7874
    %v7899 = vpack.c.b16 %v7879, %v7877
    %v7900 = vpack.c.b16 %v7880, %v7878
    %v7901 = vpack.c.b16 %v7883, %v7881
    %v7902 = vpack.c.b16 %v7884, %v7882
    %v7903 = vpack.c.b16 %v7887, %v7885
    %v7904 = vpack.c.b16 %v7888, %v7886
    %7921 = vmatpush.bf16.msra.mxu0 %v7903
    %7922 = vmatpush.bf16.msra.mxu0 %v7901
    %7923 = vmatpush.bf16.msra.mxu0 %v7899
    %7924 = vmatpush.bf16.msra.mxu0 %v7897
    %7925 = vmatpush.bf16.msra.mxu0 %v7895
    %7926 = vmatpush.bf16.msra.mxu0 %v7893
    %7927 = vmatpush.bf16.msra.mxu0 %v7891
    %7928 = vmatpush.bf16.msra.mxu0 %v7889
    %7929 = vmatmul.bf16.gmra.mxu0 %v7821
    %v7930 = vpop.f32.mrf.mxu0
    %v7931 = vadd.f32 0.0, %v7930
    %v7932 = vpop.f32.mrf.mxu0
    %v7933 = vadd.f32 0.0, %v7932
    %7934 = vmatmul.bf16.gmra.mxu0 %v7838
    %v7935 = vpop.f32.mrf.mxu0
    %v7936 = vadd.f32 0.0, %v7935
    %v7937 = vpop.f32.mrf.mxu0
    %v7938 = vadd.f32 0.0, %v7937
    %7939 = vdwg.mxu0
    %7940 = vmatpush.bf16.msra.mxu0 %v7904
    %7941 = vmatpush.bf16.msra.mxu0 %v7902
    %7942 = vmatpush.bf16.msra.mxu0 %v7900
    %7943 = vmatpush.bf16.msra.mxu0 %v7898
    %7944 = vmatpush.bf16.msra.mxu0 %v7896
    %7945 = vmatpush.bf16.msra.mxu0 %v7894
    %7946 = vmatpush.bf16.msra.mxu0 %v7892
    %7947 = vmatpush.bf16.msra.mxu0 %v7890
    %7948 = vmatmul.bf16.gmra.mxu0 %v7821
    %v7949 = vpop.f32.mrf.mxu0
    %v7950 = vadd.f32 0.0, %v7949
    %v7951 = vpop.f32.mrf.mxu0
    %v7952 = vadd.f32 0.0, %v7951
    %7953 = vmatmul.bf16.gmra.mxu0 %v7838
    %v7954 = vpop.f32.mrf.mxu0
    %v7955 = vadd.f32 0.0, %v7954
    %v7956 = vpop.f32.mrf.mxu0
    %v7957 = vadd.f32 0.0, %v7956
    %7958 = vdwg.mxu0
    %v7959 = vadd.f32 %v7757, %v7931
    %v7960 = vadd.f32 %v7758, %v7950
    %v7961 = vadd.f32 %v7759, %v7933
    %v7962 = vadd.f32 %v7760, %v7952
    %v7963 = vadd.f32 %v7761, %v7936
    %v7964 = vadd.f32 %v7762, %v7955
    %v7965 = vadd.f32 %v7763, %v7938
    %v7966 = vadd.f32 %v7764, %v7957
    %v7967 = vld [vmem:[%s3] ss:$2 sm:$0x3]
    %v7969 = vperm.slane %v7967, 0
    %v7970 = vperm.slane %v7967, 1
    %v7973 = vmul.f32 %v7959, %v7969
    %v7974 = vmul.f32 %v7960, %v7970
    %v7975 = vmul.f32 %v7961, %v7969
    %v7976 = vmul.f32 %v7962, %v7970
    %v7977 = vmul.f32 %v7963, %v7969
    %v7978 = vmul.f32 %v7964, %v7970
    %v7979 = vmul.f32 %v7965, %v7969
    %v7980 = vmul.f32 %v7966, %v7970
    %v7981 = vld [vmem:[%s1955] ss:$2 sm:$0x3]
    %v7983 = vperm.slane %v7981, 0
    %v7984 = vperm.slane %v7981, 1
    %v7987 = vadd.f32 %v7973, %v7983
    %v7988 = vadd.f32 %v7974, %v7984
    %v7989 = vadd.f32 %v7975, %v7983
    %v7990 = vadd.f32 %v7976, %v7984
    %v7991 = vadd.f32 %v7977, %v7983
    %v7992 = vadd.f32 %v7978, %v7984
    %v7993 = vadd.f32 %v7979, %v7983
    %v7994 = vadd.f32 %v7980, %v7984
    %v7995 = vmax.f32 %v7987, 0.0
    %v7996 = vmax.f32 %v7988, 0.0
    %v7997 = vmax.f32 %v7989, 0.0
    %v7998 = vmax.f32 %v7990, 0.0
    %v7999 = vmax.f32 %v7991, 0.0
    %v8000 = vmax.f32 %v7992, 0.0
    %v8001 = vmax.f32 %v7993, 0.0
    %v8002 = vmax.f32 %v7994, 0.0
    %s8003 = scalar_lea.vmem %s1, 192
    %v8004 = vld [vmem:[%s8003] sm:$0xf]
    %v8005 = vld [vmem:[%s8003 + $0x4] sm:$0xf]
    %v8006 = vld [vmem:[%s8003 + $0x8] sm:$0xf]
    %v8007 = vld [vmem:[%s8003 + $0xc] sm:$0xf]
    %v8008 = vld [vmem:[%s8003 + $0x10] sm:$0xf]
    %v8009 = vld [vmem:[%s8003 + $0x14] sm:$0xf]
    %v8010 = vld [vmem:[%s8003 + $0x18] sm:$0xf]
    %v8011 = vld [vmem:[%s8003 + $0x1c] sm:$0xf]
    %v8012 = vld [vmem:[%s8003 + $0x20] sm:$0xf]
    %v8013 = vld [vmem:[%s8003 + $0x24] sm:$0xf]
    %v8014 = vld [vmem:[%s8003 + $0x28] sm:$0xf]
    %v8015 = vld [vmem:[%s8003 + $0x2c] sm:$0xf]
    %v8016 = vld [vmem:[%s8003 + $0x30] sm:$0xf]
    %v8017 = vld [vmem:[%s8003 + $0x34] sm:$0xf]
    %v8018 = vld [vmem:[%s8003 + $0x38] sm:$0xf]
    %v8019 = vld [vmem:[%s8003 + $0x3c] sm:$0xf]
    %8036 = vst [vmem:[#allocation1] ss:$4 sm:$0xff] %v8004
    %s8037 = scalar_lea.vmem [#allocation1], 1
    %8038 = vst [vmem:[%s8037] ss:$4 sm:$0xff] %v8005
    %s8039 = scalar_lea.vmem [#allocation1], 2
    %8040 = vst [vmem:[%s8039] ss:$4 sm:$0xff] %v8006
    %s8041 = scalar_lea.vmem [#allocation1], 3
    %8042 = vst [vmem:[%s8041] ss:$4 sm:$0xff] %v8007
    %s8043 = scalar_lea.vmem [#allocation1], 32
    %8044 = vst [vmem:[%s8043] ss:$4 sm:$0xff] %v8008
    %s8045 = scalar_lea.vmem [#allocation1], 33
    %8046 = vst [vmem:[%s8045] ss:$4 sm:$0xff] %v8009
    %s8047 = scalar_lea.vmem [#allocation1], 34
    %8048 = vst [vmem:[%s8047] ss:$4 sm:$0xff] %v8010
    %s8049 = scalar_lea.vmem [#allocation1], 35
    %8050 = vst [vmem:[%s8049] ss:$4 sm:$0xff] %v8011
    %v8051 = vld.sshfl [vmem:[#allocation1] sm:$0xff pattern:$0x73625140]
    %v8052 = vld.sshfl [vmem:[#allocation1 + $0x8] sm:$0xff pattern:$0x73625140]
    %v8053 = vld.sshfl [vmem:[#allocation1 + $0x20] sm:$0xff pattern:$0x73625140]
    %v8054 = vld.sshfl [vmem:[#allocation1 + $0x28] sm:$0xff pattern:$0x73625140]
    %8055 = vst [vmem:[#allocation1] ss:$4 sm:$0xff] %v8012
    %8056 = vst [vmem:[%s8037] ss:$4 sm:$0xff] %v8013
    %8057 = vst [vmem:[%s8039] ss:$4 sm:$0xff] %v8014
    %8058 = vst [vmem:[%s8041] ss:$4 sm:$0xff] %v8015
    %8059 = vst [vmem:[%s8043] ss:$4 sm:$0xff] %v8016
    %8060 = vst [vmem:[%s8045] ss:$4 sm:$0xff] %v8017
    %8061 = vst [vmem:[%s8047] ss:$4 sm:$0xff] %v8018
    %8062 = vst [vmem:[%s8049] ss:$4 sm:$0xff] %v8019
    %v8063 = vld.sshfl [vmem:[#allocation1] sm:$0xff pattern:$0x73625140]
    %v8064 = vld.sshfl [vmem:[#allocation1 + $0x8] sm:$0xff pattern:$0x73625140]
    %v8065 = vld.sshfl [vmem:[#allocation1 + $0x20] sm:$0xff pattern:$0x73625140]
    %v8066 = vld.sshfl [vmem:[#allocation1 + $0x28] sm:$0xff pattern:$0x73625140]
    %v8075 = vadd.f32 %v7995, %v8051
    %v8076 = vadd.f32 %v7996, %v8052
    %v8077 = vadd.f32 %v7997, %v8053
    %v8078 = vadd.f32 %v7998, %v8054
    %v8079 = vadd.f32 %v7999, %v8063
    %v8080 = vadd.f32 %v8000, %v8064
    %v8081 = vadd.f32 %v8001, %v8065
    %v8082 = vadd.f32 %v8002, %v8066
    %v8083 = vpack.c.bf16 %v8076, %v8075
    %v8084 = vpack.c.bf16 %v8078, %v8077
    %v8085 = vpack.c.bf16 %v8080, %v8079
    %v8086 = vpack.c.bf16 %v8082, %v8081
    %v8091 = vrot.slane %v8083, 3
    %v8092 = vrot.slane %v8084, 3
    %v8093 = vrot.slane %v8085, 3
    %v8094 = vrot.slane %v8086, 3
    %v8097 = vsel %vm2069, %v8083, %v8091
    %v8098 = vsel %vm2073, %v8083, %v8091
    %v8100 = vrot.slane %v8098, 1
    %v8101 = vsel %vm2077, %v8083, %v8091
    %v8103 = vrot.slane %v8101, 2
    %v8104 = vsel %vm2081, %v8083, %v8091
    %v8106 = vrot.slane %v8104, 3
    %v8109 = vsel %vm2069, %v8084, %v8092
    %v8110 = vsel %vm2073, %v8084, %v8092
    %v8112 = vrot.slane %v8110, 1
    %v8113 = vsel %vm2077, %v8084, %v8092
    %v8115 = vrot.slane %v8113, 2
    %v8116 = vsel %vm2081, %v8084, %v8092
    %v8118 = vrot.slane %v8116, 3
    %v8121 = vsel %vm2069, %v8085, %v8093
    %v8122 = vsel %vm2073, %v8085, %v8093
    %v8124 = vrot.slane %v8122, 1
    %v8125 = vsel %vm2077, %v8085, %v8093
    %v8127 = vrot.slane %v8125, 2
    %v8128 = vsel %vm2081, %v8085, %v8093
    %v8130 = vrot.slane %v8128, 3
    %v8133 = vsel %vm2069, %v8086, %v8094
    %v8134 = vsel %vm2073, %v8086, %v8094
    %v8136 = vrot.slane %v8134, 1
    %v8137 = vsel %vm2077, %v8086, %v8094
    %v8139 = vrot.slane %v8137, 2
    %v8140 = vsel %vm2081, %v8086, %v8094
    %v8142 = vrot.slane %v8140, 3
    %s8159 = scalar_lea.vmem [#allocation2], 162
    %8160 = vst [vmem:[%s8159] sm:$0x3] %v8097
    %8161 = vst [vmem:[%s8159 + $0x2] sm:$0x3] %v8100
    %8162 = vst [vmem:[%s8159 + $0x4] sm:$0x3] %v8103
    %8163 = vst [vmem:[%s8159 + $0x6] sm:$0x3] %v8106
    %8164 = vst [vmem:[%s8159 + $0xa] sm:$0x3] %v8109
    %8165 = vst [vmem:[%s8159 + $0xc] sm:$0x3] %v8112
    %8166 = vst [vmem:[%s8159 + $0xe] sm:$0x3] %v8115
    %8167 = vst [vmem:[%s8159 + $0x10] sm:$0x3] %v8118
    %8168 = vst [vmem:[%s8159 + $0x14] sm:$0x3] %v8121
    %8169 = vst [vmem:[%s8159 + $0x16] sm:$0x3] %v8124
    %8170 = vst [vmem:[%s8159 + $0x18] sm:$0x3] %v8127
    %8171 = vst [vmem:[%s8159 + $0x1a] sm:$0x3] %v8130
    %8172 = vst [vmem:[%s8159 + $0x1e] sm:$0x3] %v8133
    %8173 = vst [vmem:[%s8159 + $0x20] sm:$0x3] %v8136
    %8174 = vst [vmem:[%s8159 + $0x22] sm:$0x3] %v8139
    %8175 = vst [vmem:[%s8159 + $0x24] sm:$0x3] %v8142
    %s8176 = scalar_lea.vmem [#allocation2], 150
    %v8177 = vld [vmem:[%s8176] sm:$0x3]
    %v8178 = vld [vmem:[%s8176 + $0x2] sm:$0x3]
    %v8179 = vld [vmem:[%s8176 + $0x4] sm:$0x3]
    %v8180 = vld [vmem:[%s8176 + $0x6] sm:$0x3]
    %v8181 = vld [vmem:[%s8176 + $0xa] sm:$0x3]
    %v8182 = vld [vmem:[%s8176 + $0xc] sm:$0x3]
    %v8183 = vld [vmem:[%s8176 + $0xe] sm:$0x3]
    %v8184 = vld [vmem:[%s8176 + $0x10] sm:$0x3]
    %v8185 = vld [vmem:[%s8176 + $0x14] sm:$0x3]
    %v8186 = vld [vmem:[%s8176 + $0x16] sm:$0x3]
    %v8187 = vld [vmem:[%s8176 + $0x18] sm:$0x3]
    %v8188 = vld [vmem:[%s8176 + $0x1a] sm:$0x3]
    %v8189 = vld [vmem:[%s8176 + $0x1e] sm:$0x3]
    %v8190 = vld [vmem:[%s8176 + $0x20] sm:$0x3]
    %v8191 = vld [vmem:[%s8176 + $0x22] sm:$0x3]
    %v8192 = vld [vmem:[%s8176 + $0x24] sm:$0x3]
    %v8193 = vld [vmem:[%s4] sm:$0xf]
    %v8194 = vld [vmem:[%s4 + $0x4] sm:$0xf]
    %v8195 = vld [vmem:[%s4 + $0x8] sm:$0xf]
    %v8196 = vld [vmem:[%s4 + $0xc] sm:$0xf]
    %v8197 = vld [vmem:[%s4 + $0x10] sm:$0xf]
    %v8198 = vld [vmem:[%s4 + $0x14] sm:$0xf]
    %v8199 = vld [vmem:[%s4 + $0x18] sm:$0xf]
    %v8200 = vld [vmem:[%s4 + $0x1c] sm:$0xf]
    %v8201 = vld [vmem:[%s4 + $0x20] sm:$0xf]
    %v8202 = vld [vmem:[%s4 + $0x24] sm:$0xf]
    %v8203 = vld [vmem:[%s4 + $0x28] sm:$0xf]
    %v8204 = vld [vmem:[%s4 + $0x2c] sm:$0xf]
    %v8205 = vld [vmem:[%s4 + $0x30] sm:$0xf]
    %v8206 = vld [vmem:[%s4 + $0x34] sm:$0xf]
    %v8207 = vld [vmem:[%s4 + $0x38] sm:$0xf]
    %v8208 = vld [vmem:[%s4 + $0x3c] sm:$0xf]
    %v8209 = vld [vmem:[%s4 + $0x40] sm:$0xf]
    %v8210 = vld [vmem:[%s4 + $0x44] sm:$0xf]
    %v8211 = vld [vmem:[%s4 + $0x48] sm:$0xf]
    %v8212 = vld [vmem:[%s4 + $0x4c] sm:$0xf]
    %v8213 = vld [vmem:[%s4 + $0x50] sm:$0xf]
    %v8214 = vld [vmem:[%s4 + $0x54] sm:$0xf]
    %v8215 = vld [vmem:[%s4 + $0x58] sm:$0xf]
    %v8216 = vld [vmem:[%s4 + $0x5c] sm:$0xf]
    %v8217 = vld [vmem:[%s4 + $0x60] sm:$0xf]
    %v8218 = vld [vmem:[%s4 + $0x64] sm:$0xf]
    %v8219 = vld [vmem:[%s4 + $0x68] sm:$0xf]
    %v8220 = vld [vmem:[%s4 + $0x6c] sm:$0xf]
    %v8221 = vld [vmem:[%s4 + $0x70] sm:$0xf]
    %v8222 = vld [vmem:[%s4 + $0x74] sm:$0xf]
    %v8223 = vld [vmem:[%s4 + $0x78] sm:$0xf]
    %v8224 = vld [vmem:[%s4 + $0x7c] sm:$0xf]
    %s8225 = scalar_lea.vmem [#allocation2], 102
    %v8226 = vld [vmem:[%s8225] sm:$0x3]
    %v8227 = vld [vmem:[%s8225 + $0x2] sm:$0x3]
    %v8228 = vld [vmem:[%s8225 + $0x4] sm:$0x3]
    %v8229 = vld [vmem:[%s8225 + $0x6] sm:$0x3]
    %v8230 = vld [vmem:[%s8225 + $0xa] sm:$0x3]
    %v8231 = vld [vmem:[%s8225 + $0xc] sm:$0x3]
    %v8232 = vld [vmem:[%s8225 + $0xe] sm:$0x3]
    %v8233 = vld [vmem:[%s8225 + $0x10] sm:$0x3]
    %v8234 = vld [vmem:[%s8225 + $0x14] sm:$0x3]
    %v8235 = vld [vmem:[%s8225 + $0x16] sm:$0x3]
    %v8236 = vld [vmem:[%s8225 + $0x18] sm:$0x3]
    %v8237 = vld [vmem:[%s8225 + $0x1a] sm:$0x3]
    %v8238 = vld [vmem:[%s8225 + $0x1e] sm:$0x3]
    %v8239 = vld [vmem:[%s8225 + $0x20] sm:$0x3]
    %v8240 = vld [vmem:[%s8225 + $0x22] sm:$0x3]
    %v8241 = vld [vmem:[%s8225 + $0x24] sm:$0x3]
    %s8242 = scalar_lea.vmem %s4, 128
    %v8243 = vld [vmem:[%s8242] sm:$0xf]
    %v8244 = vld [vmem:[%s8242 + $0x4] sm:$0xf]
    %v8245 = vld [vmem:[%s8242 + $0x8] sm:$0xf]
    %v8246 = vld [vmem:[%s8242 + $0xc] sm:$0xf]
    %v8247 = vld [vmem:[%s8242 + $0x10] sm:$0xf]
    %v8248 = vld [vmem:[%s8242 + $0x14] sm:$0xf]
    %v8249 = vld [vmem:[%s8242 + $0x18] sm:$0xf]
    %v8250 = vld [vmem:[%s8242 + $0x1c] sm:$0xf]
    %v8251 = vld [vmem:[%s8242 + $0x20] sm:$0xf]
    %v8252 = vld [vmem:[%s8242 + $0x24] sm:$0xf]
    %v8253 = vld [vmem:[%s8242 + $0x28] sm:$0xf]
    %v8254 = vld [vmem:[%s8242 + $0x2c] sm:$0xf]
    %v8255 = vld [vmem:[%s8242 + $0x30] sm:$0xf]
    %v8256 = vld [vmem:[%s8242 + $0x34] sm:$0xf]
    %v8257 = vld [vmem:[%s8242 + $0x38] sm:$0xf]
    %v8258 = vld [vmem:[%s8242 + $0x3c] sm:$0xf]
    %v8259 = vld [vmem:[%s8242 + $0x40] sm:$0xf]
    %v8260 = vld [vmem:[%s8242 + $0x44] sm:$0xf]
    %v8261 = vld [vmem:[%s8242 + $0x48] sm:$0xf]
    %v8262 = vld [vmem:[%s8242 + $0x4c] sm:$0xf]
    %v8263 = vld [vmem:[%s8242 + $0x50] sm:$0xf]
    %v8264 = vld [vmem:[%s8242 + $0x54] sm:$0xf]
    %v8265 = vld [vmem:[%s8242 + $0x58] sm:$0xf]
    %v8266 = vld [vmem:[%s8242 + $0x5c] sm:$0xf]
    %v8267 = vld [vmem:[%s8242 + $0x60] sm:$0xf]
    %v8268 = vld [vmem:[%s8242 + $0x64] sm:$0xf]
    %v8269 = vld [vmem:[%s8242 + $0x68] sm:$0xf]
    %v8270 = vld [vmem:[%s8242 + $0x6c] sm:$0xf]
    %v8271 = vld [vmem:[%s8242 + $0x70] sm:$0xf]
    %v8272 = vld [vmem:[%s8242 + $0x74] sm:$0xf]
    %v8273 = vld [vmem:[%s8242 + $0x78] sm:$0xf]
    %v8274 = vld [vmem:[%s8242 + $0x7c] sm:$0xf]
    %8276 = vst [vmem:[#allocation1] ss:$9 sm:$0xff] %v8226
    %s8278 = scalar_lea.vmem [#allocation1], 1
    %8279 = vst [vmem:[%s8278] ss:$9 sm:$0xff] %v8227
    %s8281 = scalar_lea.vmem [#allocation1], 2
    %8282 = vst [vmem:[%s8281] ss:$9 sm:$0xff] %v8228
    %s8284 = scalar_lea.vmem [#allocation1], 3
    %8285 = vst [vmem:[%s8284] ss:$9 sm:$0xff] %v8229
    %s8287 = scalar_lea.vmem [#allocation1], 4
    %8288 = vst [vmem:[%s8287] ss:$9 sm:$0xff] %v8230
    %s8290 = scalar_lea.vmem [#allocation1], 5
    %8291 = vst [vmem:[%s8290] ss:$9 sm:$0xff] %v8231
    %s8293 = scalar_lea.vmem [#allocation1], 6
    %8294 = vst [vmem:[%s8293] ss:$9 sm:$0xff] %v8232
    %s8296 = scalar_lea.vmem [#allocation1], 7
    %8297 = vst [vmem:[%s8296] ss:$9 sm:$0xff] %v8233
    %v8298 = vld [vmem:[#allocation1] sm:$0xff]
    %v8299 = vld [vmem:[#allocation1 + $0x9] sm:$0xff]
    %8301 = vst [vmem:[#allocation1] ss:$9 sm:$0xff] %v8234
    %8303 = vst [vmem:[%s8278] ss:$9 sm:$0xff] %v8235
    %8305 = vst [vmem:[%s8281] ss:$9 sm:$0xff] %v8236
    %8307 = vst [vmem:[%s8284] ss:$9 sm:$0xff] %v8237
    %8309 = vst [vmem:[%s8287] ss:$9 sm:$0xff] %v8238
    %8311 = vst [vmem:[%s8290] ss:$9 sm:$0xff] %v8239
    %8313 = vst [vmem:[%s8293] ss:$9 sm:$0xff] %v8240
    %8315 = vst [vmem:[%s8296] ss:$9 sm:$0xff] %v8241
    %v8316 = vld [vmem:[#allocation1] sm:$0xff]
    %v8317 = vld [vmem:[#allocation1 + $0x9] sm:$0xff]
    %v8354 = vunpack.c.l.b16 %v8243
    %v8355 = vunpack.c.l.b16 %v8244
    %v8356 = vunpack.c.l.b16 %v8245
    %v8357 = vunpack.c.l.b16 %v8246
    %v8358 = vunpack.c.l.b16 %v8247
    %v8359 = vunpack.c.l.b16 %v8248
    %v8360 = vunpack.c.l.b16 %v8249
    %v8361 = vunpack.c.l.b16 %v8250
    %v8362 = vunpack.c.l.b16 %v8251
    %v8363 = vunpack.c.l.b16 %v8252
    %v8364 = vunpack.c.l.b16 %v8253
    %v8365 = vunpack.c.l.b16 %v8254
    %v8366 = vunpack.c.l.b16 %v8255
    %v8367 = vunpack.c.l.b16 %v8256
    %v8368 = vunpack.c.l.b16 %v8257
    %v8369 = vunpack.c.l.b16 %v8258
    %v8370 = vunpack.c.l.b16 %v8259
    %v8371 = vunpack.c.l.b16 %v8260
    %v8372 = vunpack.c.l.b16 %v8261
    %v8373 = vunpack.c.l.b16 %v8262
    %v8374 = vunpack.c.l.b16 %v8263
    %v8375 = vunpack.c.l.b16 %v8264
    %v8376 = vunpack.c.l.b16 %v8265
    %v8377 = vunpack.c.l.b16 %v8266
    %v8378 = vunpack.c.l.b16 %v8267
    %v8379 = vunpack.c.l.b16 %v8268
    %v8380 = vunpack.c.l.b16 %v8269
    %v8381 = vunpack.c.l.b16 %v8270
    %v8382 = vunpack.c.l.b16 %v8271
    %v8383 = vunpack.c.l.b16 %v8272
    %v8384 = vunpack.c.l.b16 %v8273
    %v8385 = vunpack.c.l.b16 %v8274
    %v8386 = vpack.c.b16 %v8355, %v8354
    %v8387 = vpack.c.b16 %v8357, %v8356
    %v8388 = vpack.c.b16 %v8359, %v8358
    %v8389 = vpack.c.b16 %v8361, %v8360
    %v8390 = vpack.c.b16 %v8363, %v8362
    %v8391 = vpack.c.b16 %v8365, %v8364
    %v8392 = vpack.c.b16 %v8367, %v8366
    %v8393 = vpack.c.b16 %v8369, %v8368
    %v8394 = vpack.c.b16 %v8371, %v8370
    %v8395 = vpack.c.b16 %v8373, %v8372
    %v8396 = vpack.c.b16 %v8375, %v8374
    %v8397 = vpack.c.b16 %v8377, %v8376
    %v8398 = vpack.c.b16 %v8379, %v8378
    %v8399 = vpack.c.b16 %v8381, %v8380
    %v8400 = vpack.c.b16 %v8383, %v8382
    %v8401 = vpack.c.b16 %v8385, %v8384
    %8418 = vmatpush.bf16.msra.mxu0 %v8393
    %8419 = vmatpush.bf16.msra.mxu0 %v8392
    %8420 = vmatpush.bf16.msra.mxu0 %v8391
    %8421 = vmatpush.bf16.msra.mxu0 %v8390
    %8422 = vmatpush.bf16.msra.mxu0 %v8389
    %8423 = vmatpush.bf16.msra.mxu0 %v8388
    %8424 = vmatpush.bf16.msra.mxu0 %v8387
    %8425 = vmatpush.bf16.msra.mxu0 %v8386
    %8426 = vmatmul.bf16.gmra.mxu0 %v8298
    %v8427 = vpop.f32.mrf.mxu0
    %v8428 = vadd.f32 0.0, %v8427
    %v8429 = vpop.f32.mrf.mxu0
    %v8430 = vadd.f32 0.0, %v8429
    %8431 = vmatmul.bf16.gmra.mxu0 %v8316
    %v8432 = vpop.f32.mrf.mxu0
    %v8433 = vadd.f32 0.0, %v8432
    %v8434 = vpop.f32.mrf.mxu0
    %v8435 = vadd.f32 0.0, %v8434
    %8436 = vdwg.mxu0
    %8437 = vmatpush.bf16.msra.mxu0 %v8401
    %8438 = vmatpush.bf16.msra.mxu0 %v8400
    %8439 = vmatpush.bf16.msra.mxu0 %v8399
    %8440 = vmatpush.bf16.msra.mxu0 %v8398
    %8441 = vmatpush.bf16.msra.mxu0 %v8397
    %8442 = vmatpush.bf16.msra.mxu0 %v8396
    %8443 = vmatpush.bf16.msra.mxu0 %v8395
    %8444 = vmatpush.bf16.msra.mxu0 %v8394
    %8445 = vmatmul.bf16.gmra.mxu0 %v8299
    %v8446 = vpop.f32.mrf.mxu0
    %v8447 = vadd.f32 %v8428, %v8446
    %v8448 = vpop.f32.mrf.mxu0
    %v8449 = vadd.f32 %v8430, %v8448
    %8450 = vmatmul.bf16.gmra.mxu0 %v8317
    %v8451 = vpop.f32.mrf.mxu0
    %v8452 = vadd.f32 %v8433, %v8451
    %v8453 = vpop.f32.mrf.mxu0
    %v8454 = vadd.f32 %v8435, %v8453
    %8455 = vdwg.mxu0
    %8457 = vst [vmem:[#allocation1] ss:$9 sm:$0xff] %v8177
    %s8459 = scalar_lea.vmem [#allocation1], 1
    %8460 = vst [vmem:[%s8459] ss:$9 sm:$0xff] %v8178
    %s8462 = scalar_lea.vmem [#allocation1], 2
    %8463 = vst [vmem:[%s8462] ss:$9 sm:$0xff] %v8179
    %s8465 = scalar_lea.vmem [#allocation1], 3
    %8466 = vst [vmem:[%s8465] ss:$9 sm:$0xff] %v8180
    %s8468 = scalar_lea.vmem [#allocation1], 4
    %8469 = vst [vmem:[%s8468] ss:$9 sm:$0xff] %v8181
    %s8471 = scalar_lea.vmem [#allocation1], 5
    %8472 = vst [vmem:[%s8471] ss:$9 sm:$0xff] %v8182
    %s8474 = scalar_lea.vmem [#allocation1], 6
    %8475 = vst [vmem:[%s8474] ss:$9 sm:$0xff] %v8183
    %s8477 = scalar_lea.vmem [#allocation1], 7
    %8478 = vst [vmem:[%s8477] ss:$9 sm:$0xff] %v8184
    %v8479 = vld [vmem:[#allocation1] sm:$0xff]
    %v8480 = vld [vmem:[#allocation1 + $0x9] sm:$0xff]
    %8482 = vst [vmem:[#allocation1] ss:$9 sm:$0xff] %v8185
    %8484 = vst [vmem:[%s8459] ss:$9 sm:$0xff] %v8186
    %8486 = vst [vmem:[%s8462] ss:$9 sm:$0xff] %v8187
    %8488 = vst [vmem:[%s8465] ss:$9 sm:$0xff] %v8188
    %8490 = vst [vmem:[%s8468] ss:$9 sm:$0xff] %v8189
    %8492 = vst [vmem:[%s8471] ss:$9 sm:$0xff] %v8190
    %8494 = vst [vmem:[%s8474] ss:$9 sm:$0xff] %v8191
    %8496 = vst [vmem:[%s8477] ss:$9 sm:$0xff] %v8192
    %v8497 = vld [vmem:[#allocation1] sm:$0xff]
    %v8498 = vld [vmem:[#allocation1 + $0x9] sm:$0xff]
    %v8535 = vunpack.c.l.b16 %v8193
    %v8536 = vunpack.c.l.b16 %v8194
    %v8537 = vunpack.c.l.b16 %v8195
    %v8538 = vunpack.c.l.b16 %v8196
    %v8539 = vunpack.c.l.b16 %v8197
    %v8540 = vunpack.c.l.b16 %v8198
    %v8541 = vunpack.c.l.b16 %v8199
    %v8542 = vunpack.c.l.b16 %v8200
    %v8543 = vunpack.c.l.b16 %v8201
    %v8544 = vunpack.c.l.b16 %v8202
    %v8545 = vunpack.c.l.b16 %v8203
    %v8546 = vunpack.c.l.b16 %v8204
    %v8547 = vunpack.c.l.b16 %v8205
    %v8548 = vunpack.c.l.b16 %v8206
    %v8549 = vunpack.c.l.b16 %v8207
    %v8550 = vunpack.c.l.b16 %v8208
    %v8551 = vunpack.c.l.b16 %v8209
    %v8552 = vunpack.c.l.b16 %v8210
    %v8553 = vunpack.c.l.b16 %v8211
    %v8554 = vunpack.c.l.b16 %v8212
    %v8555 = vunpack.c.l.b16 %v8213
    %v8556 = vunpack.c.l.b16 %v8214
    %v8557 = vunpack.c.l.b16 %v8215
    %v8558 = vunpack.c.l.b16 %v8216
    %v8559 = vunpack.c.l.b16 %v8217
    %v8560 = vunpack.c.l.b16 %v8218
    %v8561 = vunpack.c.l.b16 %v8219
    %v8562 = vunpack.c.l.b16 %v8220
    %v8563 = vunpack.c.l.b16 %v8221
    %v8564 = vunpack.c.l.b16 %v8222
    %v8565 = vunpack.c.l.b16 %v8223
    %v8566 = vunpack.c.l.b16 %v8224
    %v8567 = vpack.c.b16 %v8536, %v8535
    %v8568 = vpack.c.b16 %v8538, %v8537
    %v8569 = vpack.c.b16 %v8540, %v8539
    %v8570 = vpack.c.b16 %v8542, %v8541
    %v8571 = vpack.c.b16 %v8544, %v8543
    %v8572 = vpack.c.b16 %v8546, %v8545
    %v8573 = vpack.c.b16 %v8548, %v8547
    %v8574 = vpack.c.b16 %v8550, %v8549
    %v8575 = vpack.c.b16 %v8552, %v8551
    %v8576 = vpack.c.b16 %v8554, %v8553
    %v8577 = vpack.c.b16 %v8556, %v8555
    %v8578 = vpack.c.b16 %v8558, %v8557
    %v8579 = vpack.c.b16 %v8560, %v8559
    %v8580 = vpack.c.b16 %v8562, %v8561
    %v8581 = vpack.c.b16 %v8564, %v8563
    %v8582 = vpack.c.b16 %v8566, %v8565
    %8599 = vmatpush.bf16.msra.mxu0 %v8574
    %8600 = vmatpush.bf16.msra.mxu0 %v8573
    %8601 = vmatpush.bf16.msra.mxu0 %v8572
    %8602 = vmatpush.bf16.msra.mxu0 %v8571
    %8603 = vmatpush.bf16.msra.mxu0 %v8570
    %8604 = vmatpush.bf16.msra.mxu0 %v8569
    %8605 = vmatpush.bf16.msra.mxu0 %v8568
    %8606 = vmatpush.bf16.msra.mxu0 %v8567
    %8607 = vmatmul.bf16.gmra.mxu0 %v8479
    %v8608 = vpop.f32.mrf.mxu0
    %v8609 = vadd.f32 %v8447, %v8608
    %v8610 = vpop.f32.mrf.mxu0
    %v8611 = vadd.f32 %v8449, %v8610
    %8612 = vmatmul.bf16.gmra.mxu0 %v8497
    %v8613 = vpop.f32.mrf.mxu0
    %v8614 = vadd.f32 %v8452, %v8613
    %v8615 = vpop.f32.mrf.mxu0
    %v8616 = vadd.f32 %v8454, %v8615
    %8617 = vdwg.mxu0
    %8618 = vmatpush.bf16.msra.mxu0 %v8582
    %8619 = vmatpush.bf16.msra.mxu0 %v8581
    %8620 = vmatpush.bf16.msra.mxu0 %v8580
    %8621 = vmatpush.bf16.msra.mxu0 %v8579
    %8622 = vmatpush.bf16.msra.mxu0 %v8578
    %8623 = vmatpush.bf16.msra.mxu0 %v8577
    %8624 = vmatpush.bf16.msra.mxu0 %v8576
    %8625 = vmatpush.bf16.msra.mxu0 %v8575
    %8626 = vmatmul.bf16.gmra.mxu0 %v8480
    %v8627 = vpop.f32.mrf.mxu0
    %v8628 = vadd.f32 %v8609, %v8627
    %v8629 = vpop.f32.mrf.mxu0
    %v8630 = vadd.f32 %v8611, %v8629
    %8631 = vmatmul.bf16.gmra.mxu0 %v8498
    %v8632 = vpop.f32.mrf.mxu0
    %v8633 = vadd.f32 %v8614, %v8632
    %v8634 = vpop.f32.mrf.mxu0
    %v8635 = vadd.f32 %v8616, %v8634
    %8636 = vdwg.mxu0
    %s8637 = scalar_lea.vmem [#allocation2], 152
    %v8638 = vld [vmem:[%s8637] sm:$0x3]
    %v8639 = vld [vmem:[%s8637 + $0x2] sm:$0x3]
    %v8640 = vld [vmem:[%s8637 + $0x4] sm:$0x3]
    %v8641 = vld [vmem:[%s8637 + $0x6] sm:$0x3]
    %v8642 = vld [vmem:[%s8637 + $0xa] sm:$0x3]
    %v8643 = vld [vmem:[%s8637 + $0xc] sm:$0x3]
    %v8644 = vld [vmem:[%s8637 + $0xe] sm:$0x3]
    %v8645 = vld [vmem:[%s8637 + $0x10] sm:$0x3]
    %v8646 = vld [vmem:[%s8637 + $0x14] sm:$0x3]
    %v8647 = vld [vmem:[%s8637 + $0x16] sm:$0x3]
    %v8648 = vld [vmem:[%s8637 + $0x18] sm:$0x3]
    %v8649 = vld [vmem:[%s8637 + $0x1a] sm:$0x3]
    %v8650 = vld [vmem:[%s8637 + $0x1e] sm:$0x3]
    %v8651 = vld [vmem:[%s8637 + $0x20] sm:$0x3]
    %v8652 = vld [vmem:[%s8637 + $0x22] sm:$0x3]
    %v8653 = vld [vmem:[%s8637 + $0x24] sm:$0x3]
    %s8654 = scalar_lea.vmem %s4, 256
    %v8655 = vld [vmem:[%s8654] sm:$0xf]
    %v8656 = vld [vmem:[%s8654 + $0x4] sm:$0xf]
    %v8657 = vld [vmem:[%s8654 + $0x8] sm:$0xf]
    %v8658 = vld [vmem:[%s8654 + $0xc] sm:$0xf]
    %v8659 = vld [vmem:[%s8654 + $0x10] sm:$0xf]
    %v8660 = vld [vmem:[%s8654 + $0x14] sm:$0xf]
    %v8661 = vld [vmem:[%s8654 + $0x18] sm:$0xf]
    %v8662 = vld [vmem:[%s8654 + $0x1c] sm:$0xf]
    %v8663 = vld [vmem:[%s8654 + $0x20] sm:$0xf]
    %v8664 = vld [vmem:[%s8654 + $0x24] sm:$0xf]
    %v8665 = vld [vmem:[%s8654 + $0x28] sm:$0xf]
    %v8666 = vld [vmem:[%s8654 + $0x2c] sm:$0xf]
    %v8667 = vld [vmem:[%s8654 + $0x30] sm:$0xf]
    %v8668 = vld [vmem:[%s8654 + $0x34] sm:$0xf]
    %v8669 = vld [vmem:[%s8654 + $0x38] sm:$0xf]
    %v8670 = vld [vmem:[%s8654 + $0x3c] sm:$0xf]
    %v8671 = vld [vmem:[%s8654 + $0x40] sm:$0xf]
    %v8672 = vld [vmem:[%s8654 + $0x44] sm:$0xf]
    %v8673 = vld [vmem:[%s8654 + $0x48] sm:$0xf]
    %v8674 = vld [vmem:[%s8654 + $0x4c] sm:$0xf]
    %v8675 = vld [vmem:[%s8654 + $0x50] sm:$0xf]
    %v8676 = vld [vmem:[%s8654 + $0x54] sm:$0xf]
    %v8677 = vld [vmem:[%s8654 + $0x58] sm:$0xf]
    %v8678 = vld [vmem:[%s8654 + $0x5c] sm:$0xf]
    %v8679 = vld [vmem:[%s8654 + $0x60] sm:$0xf]
    %v8680 = vld [vmem:[%s8654 + $0x64] sm:$0xf]
    %v8681 = vld [vmem:[%s8654 + $0x68] sm:$0xf]
    %v8682 = vld [vmem:[%s8654 + $0x6c] sm:$0xf]
    %v8683 = vld [vmem:[%s8654 + $0x70] sm:$0xf]
    %v8684 = vld [vmem:[%s8654 + $0x74] sm:$0xf]
    %v8685 = vld [vmem:[%s8654 + $0x78] sm:$0xf]
    %v8686 = vld [vmem:[%s8654 + $0x7c] sm:$0xf]
    %8688 = vst [vmem:[#allocation1] ss:$9 sm:$0xff] %v8638
    %s8690 = scalar_lea.vmem [#allocation1], 1
    %8691 = vst [vmem:[%s8690] ss:$9 sm:$0xff] %v8639
    %s8693 = scalar_lea.vmem [#allocation1], 2
    %8694 = vst [vmem:[%s8693] ss:$9 sm:$0xff] %v8640
    %s8696 = scalar_lea.vmem [#allocation1], 3
    %8697 = vst [vmem:[%s8696] ss:$9 sm:$0xff] %v8641
    %s8699 = scalar_lea.vmem [#allocation1], 4
    %8700 = vst [vmem:[%s8699] ss:$9 sm:$0xff] %v8642
    %s8702 = scalar_lea.vmem [#allocation1], 5
    %8703 = vst [vmem:[%s8702] ss:$9 sm:$0xff] %v8643
    %s8705 = scalar_lea.vmem [#allocation1], 6
    %8706 = vst [vmem:[%s8705] ss:$9 sm:$0xff] %v8644
    %s8708 = scalar_lea.vmem [#allocation1], 7
    %8709 = vst [vmem:[%s8708] ss:$9 sm:$0xff] %v8645
    %v8710 = vld [vmem:[#allocation1] sm:$0xff]
    %v8711 = vld [vmem:[#allocation1 + $0x9] sm:$0xff]
    %8713 = vst [vmem:[#allocation1] ss:$9 sm:$0xff] %v8646
    %8715 = vst [vmem:[%s8690] ss:$9 sm:$0xff] %v8647
    %8717 = vst [vmem:[%s8693] ss:$9 sm:$0xff] %v8648
    %8719 = vst [vmem:[%s8696] ss:$9 sm:$0xff] %v8649
    %8721 = vst [vmem:[%s8699] ss:$9 sm:$0xff] %v8650
    %8723 = vst [vmem:[%s8702] ss:$9 sm:$0xff] %v8651
    %8725 = vst [vmem:[%s8705] ss:$9 sm:$0xff] %v8652
    %8727 = vst [vmem:[%s8708] ss:$9 sm:$0xff] %v8653
    %v8728 = vld [vmem:[#allocation1] sm:$0xff]
    %v8729 = vld [vmem:[#allocation1 + $0x9] sm:$0xff]
    %v8766 = vunpack.c.l.b16 %v8655
    %v8767 = vunpack.c.l.b16 %v8656
    %v8768 = vunpack.c.l.b16 %v8657
    %v8769 = vunpack.c.l.b16 %v8658
    %v8770 = vunpack.c.l.b16 %v8659
    %v8771 = vunpack.c.l.b16 %v8660
    %v8772 = vunpack.c.l.b16 %v8661
    %v8773 = vunpack.c.l.b16 %v8662
    %v8774 = vunpack.c.l.b16 %v8663
    %v8775 = vunpack.c.l.b16 %v8664
    %v8776 = vunpack.c.l.b16 %v8665
    %v8777 = vunpack.c.l.b16 %v8666
    %v8778 = vunpack.c.l.b16 %v8667
    %v8779 = vunpack.c.l.b16 %v8668
    %v8780 = vunpack.c.l.b16 %v8669
    %v8781 = vunpack.c.l.b16 %v8670
    %v8782 = vunpack.c.l.b16 %v8671
    %v8783 = vunpack.c.l.b16 %v8672
    %v8784 = vunpack.c.l.b16 %v8673
    %v8785 = vunpack.c.l.b16 %v8674
    %v8786 = vunpack.c.l.b16 %v8675
    %v8787 = vunpack.c.l.b16 %v8676
    %v8788 = vunpack.c.l.b16 %v8677
    %v8789 = vunpack.c.l.b16 %v8678
    %v8790 = vunpack.c.l.b16 %v8679
    %v8791 = vunpack.c.l.b16 %v8680
    %v8792 = vunpack.c.l.b16 %v8681
    %v8793 = vunpack.c.l.b16 %v8682
    %v8794 = vunpack.c.l.b16 %v8683
    %v8795 = vunpack.c.l.b16 %v8684
    %v8796 = vunpack.c.l.b16 %v8685
    %v8797 = vunpack.c.l.b16 %v8686
    %v8798 = vpack.c.b16 %v8767, %v8766
    %v8799 = vpack.c.b16 %v8769, %v8768
    %v8800 = vpack.c.b16 %v8771, %v8770
    %v8801 = vpack.c.b16 %v8773, %v8772
    %v8802 = vpack.c.b16 %v8775, %v8774
    %v8803 = vpack.c.b16 %v8777, %v8776
    %v8804 = vpack.c.b16 %v8779, %v8778
    %v8805 = vpack.c.b16 %v8781, %v8780
    %v8806 = vpack.c.b16 %v8783, %v8782
    %v8807 = vpack.c.b16 %v8785, %v8784
    %v8808 = vpack.c.b16 %v8787, %v8786
    %v8809 = vpack.c.b16 %v8789, %v8788
    %v8810 = vpack.c.b16 %v8791, %v8790
    %v8811 = vpack.c.b16 %v8793, %v8792
    %v8812 = vpack.c.b16 %v8795, %v8794
    %v8813 = vpack.c.b16 %v8797, %v8796
    %8830 = vmatpush.bf16.msra.mxu0 %v8805
    %8831 = vmatpush.bf16.msra.mxu0 %v8804
    %8832 = vmatpush.bf16.msra.mxu0 %v8803
    %8833 = vmatpush.bf16.msra.mxu0 %v8802
    %8834 = vmatpush.bf16.msra.mxu0 %v8801
    %8835 = vmatpush.bf16.msra.mxu0 %v8800
    %8836 = vmatpush.bf16.msra.mxu0 %v8799
    %8837 = vmatpush.bf16.msra.mxu0 %v8798
    %8838 = vmatmul.bf16.gmra.mxu0 %v8710
    %v8839 = vpop.f32.mrf.mxu0
    %v8840 = vadd.f32 0.0, %v8839
    %v8841 = vpop.f32.mrf.mxu0
    %v8842 = vadd.f32 0.0, %v8841
    %8843 = vmatmul.bf16.gmra.mxu0 %v8728
    %v8844 = vpop.f32.mrf.mxu0
    %v8845 = vadd.f32 0.0, %v8844
    %v8846 = vpop.f32.mrf.mxu0
    %v8847 = vadd.f32 0.0, %v8846
    %8848 = vdwg.mxu0
    %8849 = vmatpush.bf16.msra.mxu0 %v8813
    %8850 = vmatpush.bf16.msra.mxu0 %v8812
    %8851 = vmatpush.bf16.msra.mxu0 %v8811
    %8852 = vmatpush.bf16.msra.mxu0 %v8810
    %8853 = vmatpush.bf16.msra.mxu0 %v8809
    %8854 = vmatpush.bf16.msra.mxu0 %v8808
    %8855 = vmatpush.bf16.msra.mxu0 %v8807
    %8856 = vmatpush.bf16.msra.mxu0 %v8806
    %8857 = vmatmul.bf16.gmra.mxu0 %v8711
    %v8858 = vpop.f32.mrf.mxu0
    %v8859 = vadd.f32 %v8840, %v8858
    %v8860 = vpop.f32.mrf.mxu0
    %v8861 = vadd.f32 %v8842, %v8860
    %8862 = vmatmul.bf16.gmra.mxu0 %v8729
    %v8863 = vpop.f32.mrf.mxu0
    %v8864 = vadd.f32 %v8845, %v8863
    %v8865 = vpop.f32.mrf.mxu0
    %v8866 = vadd.f32 %v8847, %v8865
    %8867 = vdwg.mxu0
    %v8868 = vadd.f32 %v8628, %v8859
    %v8869 = vadd.f32 %v8630, %v8861
    %v8870 = vadd.f32 %v8633, %v8864
    %v8871 = vadd.f32 %v8635, %v8866
    %s8872 = scalar_lea.vmem [#allocation2], 60
    %v8873 = vld [vmem:[%s8872] sm:$0x3]
    %v8874 = vld [vmem:[%s8872 + $0x2] sm:$0x3]
    %v8875 = vld [vmem:[%s8872 + $0x4] sm:$0x3]
    %v8876 = vld [vmem:[%s8872 + $0x6] sm:$0x3]
    %v8877 = vld [vmem:[%s8872 + $0xa] sm:$0x3]
    %v8878 = vld [vmem:[%s8872 + $0xc] sm:$0x3]
    %v8879 = vld [vmem:[%s8872 + $0xe] sm:$0x3]
    %v8880 = vld [vmem:[%s8872 + $0x10] sm:$0x3]
    %v8881 = vld [vmem:[%s8872 + $0x14] sm:$0x3]
    %v8882 = vld [vmem:[%s8872 + $0x16] sm:$0x3]
    %v8883 = vld [vmem:[%s8872 + $0x18] sm:$0x3]
    %v8884 = vld [vmem:[%s8872 + $0x1a] sm:$0x3]
    %v8885 = vld [vmem:[%s8872 + $0x1e] sm:$0x3]
    %v8886 = vld [vmem:[%s8872 + $0x20] sm:$0x3]
    %v8887 = vld [vmem:[%s8872 + $0x22] sm:$0x3]
    %v8888 = vld [vmem:[%s8872 + $0x24] sm:$0x3]
    %s8889 = scalar_lea.vmem %s4, 384
    %v8890 = vld [vmem:[%s8889] sm:$0xf]
    %v8891 = vld [vmem:[%s8889 + $0x4] sm:$0xf]
    %v8892 = vld [vmem:[%s8889 + $0x8] sm:$0xf]
    %v8893 = vld [vmem:[%s8889 + $0xc] sm:$0xf]
    %v8894 = vld [vmem:[%s8889 + $0x10] sm:$0xf]
    %v8895 = vld [vmem:[%s8889 + $0x14] sm:$0xf]
    %v8896 = vld [vmem:[%s8889 + $0x18] sm:$0xf]
    %v8897 = vld [vmem:[%s8889 + $0x1c] sm:$0xf]
    %v8898 = vld [vmem:[%s8889 + $0x20] sm:$0xf]
    %v8899 = vld [vmem:[%s8889 + $0x24] sm:$0xf]
    %v8900 = vld [vmem:[%s8889 + $0x28] sm:$0xf]
    %v8901 = vld [vmem:[%s8889 + $0x2c] sm:$0xf]
    %v8902 = vld [vmem:[%s8889 + $0x30] sm:$0xf]
    %v8903 = vld [vmem:[%s8889 + $0x34] sm:$0xf]
    %v8904 = vld [vmem:[%s8889 + $0x38] sm:$0xf]
    %v8905 = vld [vmem:[%s8889 + $0x3c] sm:$0xf]
    %v8906 = vld [vmem:[%s8889 + $0x40] sm:$0xf]
    %v8907 = vld [vmem:[%s8889 + $0x44] sm:$0xf]
    %v8908 = vld [vmem:[%s8889 + $0x48] sm:$0xf]
    %v8909 = vld [vmem:[%s8889 + $0x4c] sm:$0xf]
    %v8910 = vld [vmem:[%s8889 + $0x50] sm:$0xf]
    %v8911 = vld [vmem:[%s8889 + $0x54] sm:$0xf]
    %v8912 = vld [vmem:[%s8889 + $0x58] sm:$0xf]
    %v8913 = vld [vmem:[%s8889 + $0x5c] sm:$0xf]
    %v8914 = vld [vmem:[%s8889 + $0x60] sm:$0xf]
    %v8915 = vld [vmem:[%s8889 + $0x64] sm:$0xf]
    %v8916 = vld [vmem:[%s8889 + $0x68] sm:$0xf]
    %v8917 = vld [vmem:[%s8889 + $0x6c] sm:$0xf]
    %v8918 = vld [vmem:[%s8889 + $0x70] sm:$0xf]
    %v8919 = vld [vmem:[%s8889 + $0x74] sm:$0xf]
    %v8920 = vld [vmem:[%s8889 + $0x78] sm:$0xf]
    %v8921 = vld [vmem:[%s8889 + $0x7c] sm:$0xf]
    %8923 = vst [vmem:[#allocation1] ss:$9 sm:$0xff] %v8873
    %s8925 = scalar_lea.vmem [#allocation1], 1
    %8926 = vst [vmem:[%s8925] ss:$9 sm:$0xff] %v8874
    %s8928 = scalar_lea.vmem [#allocation1], 2
    %8929 = vst [vmem:[%s8928] ss:$9 sm:$0xff] %v8875
    %s8931 = scalar_lea.vmem [#allocation1], 3
    %8932 = vst [vmem:[%s8931] ss:$9 sm:$0xff] %v8876
    %s8934 = scalar_lea.vmem [#allocation1], 4
    %8935 = vst [vmem:[%s8934] ss:$9 sm:$0xff] %v8877
    %s8937 = scalar_lea.vmem [#allocation1], 5
    %8938 = vst [vmem:[%s8937] ss:$9 sm:$0xff] %v8878
    %s8940 = scalar_lea.vmem [#allocation1], 6
    %8941 = vst [vmem:[%s8940] ss:$9 sm:$0xff] %v8879
    %s8943 = scalar_lea.vmem [#allocation1], 7
    %8944 = vst [vmem:[%s8943] ss:$9 sm:$0xff] %v8880
    %v8945 = vld [vmem:[#allocation1] sm:$0xff]
    %v8946 = vld [vmem:[#allocation1 + $0x9] sm:$0xff]
    %8948 = vst [vmem:[#allocation1] ss:$9 sm:$0xff] %v8881
    %8950 = vst [vmem:[%s8925] ss:$9 sm:$0xff] %v8882
    %8952 = vst [vmem:[%s8928] ss:$9 sm:$0xff] %v8883
    %8954 = vst [vmem:[%s8931] ss:$9 sm:$0xff] %v8884
    %8956 = vst [vmem:[%s8934] ss:$9 sm:$0xff] %v8885
    %8958 = vst [vmem:[%s8937] ss:$9 sm:$0xff] %v8886
    %8960 = vst [vmem:[%s8940] ss:$9 sm:$0xff] %v8887
    %8962 = vst [vmem:[%s8943] ss:$9 sm:$0xff] %v8888
    %v8963 = vld [vmem:[#allocation1] sm:$0xff]
    %v8964 = vld [vmem:[#allocation1 + $0x9] sm:$0xff]
    %v9001 = vunpack.c.l.b16 %v8890
    %v9002 = vunpack.c.l.b16 %v8891
    %v9003 = vunpack.c.l.b16 %v8892
    %v9004 = vunpack.c.l.b16 %v8893
    %v9005 = vunpack.c.l.b16 %v8894
    %v9006 = vunpack.c.l.b16 %v8895
    %v9007 = vunpack.c.l.b16 %v8896
    %v9008 = vunpack.c.l.b16 %v8897
    %v9009 = vunpack.c.l.b16 %v8898
    %v9010 = vunpack.c.l.b16 %v8899
    %v9011 = vunpack.c.l.b16 %v8900
    %v9012 = vunpack.c.l.b16 %v8901
    %v9013 = vunpack.c.l.b16 %v8902
    %v9014 = vunpack.c.l.b16 %v8903
    %v9015 = vunpack.c.l.b16 %v8904
    %v9016 = vunpack.c.l.b16 %v8905
    %v9017 = vunpack.c.l.b16 %v8906
    %v9018 = vunpack.c.l.b16 %v8907
    %v9019 = vunpack.c.l.b16 %v8908
    %v9020 = vunpack.c.l.b16 %v8909
    %v9021 = vunpack.c.l.b16 %v8910
    %v9022 = vunpack.c.l.b16 %v8911
    %v9023 = vunpack.c.l.b16 %v8912
    %v9024 = vunpack.c.l.b16 %v8913
    %v9025 = vunpack.c.l.b16 %v8914
    %v9026 = vunpack.c.l.b16 %v8915
    %v9027 = vunpack.c.l.b16 %v8916
    %v9028 = vunpack.c.l.b16 %v8917
    %v9029 = vunpack.c.l.b16 %v8918
    %v9030 = vunpack.c.l.b16 %v8919
    %v9031 = vunpack.c.l.b16 %v8920
    %v9032 = vunpack.c.l.b16 %v8921
    %v9033 = vpack.c.b16 %v9002, %v9001
    %v9034 = vpack.c.b16 %v9004, %v9003
    %v9035 = vpack.c.b16 %v9006, %v9005
    %v9036 = vpack.c.b16 %v9008, %v9007
    %v9037 = vpack.c.b16 %v9010, %v9009
    %v9038 = vpack.c.b16 %v9012, %v9011
    %v9039 = vpack.c.b16 %v9014, %v9013
    %v9040 = vpack.c.b16 %v9016, %v9015
    %v9041 = vpack.c.b16 %v9018, %v9017
    %v9042 = vpack.c.b16 %v9020, %v9019
    %v9043 = vpack.c.b16 %v9022, %v9021
    %v9044 = vpack.c.b16 %v9024, %v9023
    %v9045 = vpack.c.b16 %v9026, %v9025
    %v9046 = vpack.c.b16 %v9028, %v9027
    %v9047 = vpack.c.b16 %v9030, %v9029
    %v9048 = vpack.c.b16 %v9032, %v9031
    %9065 = vmatpush.bf16.msra.mxu0 %v9040
    %9066 = vmatpush.bf16.msra.mxu0 %v9039
    %9067 = vmatpush.bf16.msra.mxu0 %v9038
    %9068 = vmatpush.bf16.msra.mxu0 %v9037
    %9069 = vmatpush.bf16.msra.mxu0 %v9036
    %9070 = vmatpush.bf16.msra.mxu0 %v9035
    %9071 = vmatpush.bf16.msra.mxu0 %v9034
    %9072 = vmatpush.bf16.msra.mxu0 %v9033
    %9073 = vmatmul.bf16.gmra.mxu0 %v8945
    %v9074 = vpop.f32.mrf.mxu0
    %v9075 = vadd.f32 0.0, %v9074
    %v9076 = vpop.f32.mrf.mxu0
    %v9077 = vadd.f32 0.0, %v9076
    %9078 = vmatmul.bf16.gmra.mxu0 %v8963
    %v9079 = vpop.f32.mrf.mxu0
    %v9080 = vadd.f32 0.0, %v9079
    %v9081 = vpop.f32.mrf.mxu0
    %v9082 = vadd.f32 0.0, %v9081
    %9083 = vdwg.mxu0
    %9084 = vmatpush.bf16.msra.mxu0 %v9048
    %9085 = vmatpush.bf16.msra.mxu0 %v9047
    %9086 = vmatpush.bf16.msra.mxu0 %v9046
    %9087 = vmatpush.bf16.msra.mxu0 %v9045
    %9088 = vmatpush.bf16.msra.mxu0 %v9044
    %9089 = vmatpush.bf16.msra.mxu0 %v9043
    %9090 = vmatpush.bf16.msra.mxu0 %v9042
    %9091 = vmatpush.bf16.msra.mxu0 %v9041
    %9092 = vmatmul.bf16.gmra.mxu0 %v8946
    %v9093 = vpop.f32.mrf.mxu0
    %v9094 = vadd.f32 %v9075, %v9093
    %v9095 = vpop.f32.mrf.mxu0
    %v9096 = vadd.f32 %v9077, %v9095
    %9097 = vmatmul.bf16.gmra.mxu0 %v8964
    %v9098 = vpop.f32.mrf.mxu0
    %v9099 = vadd.f32 %v9080, %v9098
    %v9100 = vpop.f32.mrf.mxu0
    %v9101 = vadd.f32 %v9082, %v9100
    %9102 = vdwg.mxu0
    %v9103 = vadd.f32 %v8868, %v9094
    %v9104 = vadd.f32 %v8869, %v9096
    %v9105 = vadd.f32 %v8870, %v9099
    %v9106 = vadd.f32 %v8871, %v9101
    %v9107 = vld [vmem:[%s2137] sm:$0x3]
    %v9108 = vld [vmem:[%s2137 + $0x2] sm:$0x3]
    %v9109 = vld [vmem:[%s2137 + $0x4] sm:$0x3]
    %v9110 = vld [vmem:[%s2137 + $0x6] sm:$0x3]
    %v9111 = vld [vmem:[%s2137 + $0xa] sm:$0x3]
    %v9112 = vld [vmem:[%s2137 + $0xc] sm:$0x3]
    %v9113 = vld [vmem:[%s2137 + $0xe] sm:$0x3]
    %v9114 = vld [vmem:[%s2137 + $0x10] sm:$0x3]
    %v9115 = vld [vmem:[%s2137 + $0x14] sm:$0x3]
    %v9116 = vld [vmem:[%s2137 + $0x16] sm:$0x3]
    %v9117 = vld [vmem:[%s2137 + $0x18] sm:$0x3]
    %v9118 = vld [vmem:[%s2137 + $0x1a] sm:$0x3]
    %v9119 = vld [vmem:[%s2137 + $0x1e] sm:$0x3]
    %v9120 = vld [vmem:[%s2137 + $0x20] sm:$0x3]
    %v9121 = vld [vmem:[%s2137 + $0x22] sm:$0x3]
    %v9122 = vld [vmem:[%s2137 + $0x24] sm:$0x3]
    %s9123 = scalar_lea.vmem %s4, 512
    %v9124 = vld [vmem:[%s9123] sm:$0xf]
    %v9125 = vld [vmem:[%s9123 + $0x4] sm:$0xf]
    %v9126 = vld [vmem:[%s9123 + $0x8] sm:$0xf]
    %v9127 = vld [vmem:[%s9123 + $0xc] sm:$0xf]
    %v9128 = vld [vmem:[%s9123 + $0x10] sm:$0xf]
    %v9129 = vld [vmem:[%s9123 + $0x14] sm:$0xf]
    %v9130 = vld [vmem:[%s9123 + $0x18] sm:$0xf]
    %v9131 = vld [vmem:[%s9123 + $0x1c] sm:$0xf]
    %v9132 = vld [vmem:[%s9123 + $0x20] sm:$0xf]
    %v9133 = vld [vmem:[%s9123 + $0x24] sm:$0xf]
    %v9134 = vld [vmem:[%s9123 + $0x28] sm:$0xf]
    %v9135 = vld [vmem:[%s9123 + $0x2c] sm:$0xf]
    %v9136 = vld [vmem:[%s9123 + $0x30] sm:$0xf]
    %v9137 = vld [vmem:[%s9123 + $0x34] sm:$0xf]
    %v9138 = vld [vmem:[%s9123 + $0x38] sm:$0xf]
    %v9139 = vld [vmem:[%s9123 + $0x3c] sm:$0xf]
    %v9140 = vld [vmem:[%s9123 + $0x40] sm:$0xf]
    %v9141 = vld [vmem:[%s9123 + $0x44] sm:$0xf]
    %v9142 = vld [vmem:[%s9123 + $0x48] sm:$0xf]
    %v9143 = vld [vmem:[%s9123 + $0x4c] sm:$0xf]
    %v9144 = vld [vmem:[%s9123 + $0x50] sm:$0xf]
    %v9145 = vld [vmem:[%s9123 + $0x54] sm:$0xf]
    %v9146 = vld [vmem:[%s9123 + $0x58] sm:$0xf]
    %v9147 = vld [vmem:[%s9123 + $0x5c] sm:$0xf]
    %v9148 = vld [vmem:[%s9123 + $0x60] sm:$0xf]
    %v9149 = vld [vmem:[%s9123 + $0x64] sm:$0xf]
    %v9150 = vld [vmem:[%s9123 + $0x68] sm:$0xf]
    %v9151 = vld [vmem:[%s9123 + $0x6c] sm:$0xf]
    %v9152 = vld [vmem:[%s9123 + $0x70] sm:$0xf]
    %v9153 = vld [vmem:[%s9123 + $0x74] sm:$0xf]
    %v9154 = vld [vmem:[%s9123 + $0x78] sm:$0xf]
    %v9155 = vld [vmem:[%s9123 + $0x7c] sm:$0xf]
    %9157 = vst [vmem:[#allocation1] ss:$9 sm:$0xff] %v9107
    %s9159 = scalar_lea.vmem [#allocation1], 1
    %9160 = vst [vmem:[%s9159] ss:$9 sm:$0xff] %v9108
    %s9162 = scalar_lea.vmem [#allocation1], 2
    %9163 = vst [vmem:[%s9162] ss:$9 sm:$0xff] %v9109
    %s9165 = scalar_lea.vmem [#allocation1], 3
    %9166 = vst [vmem:[%s9165] ss:$9 sm:$0xff] %v9110
    %s9168 = scalar_lea.vmem [#allocation1], 4
    %9169 = vst [vmem:[%s9168] ss:$9 sm:$0xff] %v9111
    %s9171 = scalar_lea.vmem [#allocation1], 5
    %9172 = vst [vmem:[%s9171] ss:$9 sm:$0xff] %v9112
    %s9174 = scalar_lea.vmem [#allocation1], 6
    %9175 = vst [vmem:[%s9174] ss:$9 sm:$0xff] %v9113
    %s9177 = scalar_lea.vmem [#allocation1], 7
    %9178 = vst [vmem:[%s9177] ss:$9 sm:$0xff] %v9114
    %v9179 = vld [vmem:[#allocation1] sm:$0xff]
    %v9180 = vld [vmem:[#allocation1 + $0x9] sm:$0xff]
    %9182 = vst [vmem:[#allocation1] ss:$9 sm:$0xff] %v9115
    %9184 = vst [vmem:[%s9159] ss:$9 sm:$0xff] %v9116
    %9186 = vst [vmem:[%s9162] ss:$9 sm:$0xff] %v9117
    %9188 = vst [vmem:[%s9165] ss:$9 sm:$0xff] %v9118
    %9190 = vst [vmem:[%s9168] ss:$9 sm:$0xff] %v9119
    %9192 = vst [vmem:[%s9171] ss:$9 sm:$0xff] %v9120
    %9194 = vst [vmem:[%s9174] ss:$9 sm:$0xff] %v9121
    %9196 = vst [vmem:[%s9177] ss:$9 sm:$0xff] %v9122
    %v9197 = vld [vmem:[#allocation1] sm:$0xff]
    %v9198 = vld [vmem:[#allocation1 + $0x9] sm:$0xff]
    %v9235 = vunpack.c.l.b16 %v9124
    %v9236 = vunpack.c.l.b16 %v9125
    %v9237 = vunpack.c.l.b16 %v9126
    %v9238 = vunpack.c.l.b16 %v9127
    %v9239 = vunpack.c.l.b16 %v9128
    %v9240 = vunpack.c.l.b16 %v9129
    %v9241 = vunpack.c.l.b16 %v9130
    %v9242 = vunpack.c.l.b16 %v9131
    %v9243 = vunpack.c.l.b16 %v9132
    %v9244 = vunpack.c.l.b16 %v9133
    %v9245 = vunpack.c.l.b16 %v9134
    %v9246 = vunpack.c.l.b16 %v9135
    %v9247 = vunpack.c.l.b16 %v9136
    %v9248 = vunpack.c.l.b16 %v9137
    %v9249 = vunpack.c.l.b16 %v9138
    %v9250 = vunpack.c.l.b16 %v9139
    %v9251 = vunpack.c.l.b16 %v9140
    %v9252 = vunpack.c.l.b16 %v9141
    %v9253 = vunpack.c.l.b16 %v9142
    %v9254 = vunpack.c.l.b16 %v9143
    %v9255 = vunpack.c.l.b16 %v9144
    %v9256 = vunpack.c.l.b16 %v9145
    %v9257 = vunpack.c.l.b16 %v9146
    %v9258 = vunpack.c.l.b16 %v9147
    %v9259 = vunpack.c.l.b16 %v9148
    %v9260 = vunpack.c.l.b16 %v9149
    %v9261 = vunpack.c.l.b16 %v9150
    %v9262 = vunpack.c.l.b16 %v9151
    %v9263 = vunpack.c.l.b16 %v9152
    %v9264 = vunpack.c.l.b16 %v9153
    %v9265 = vunpack.c.l.b16 %v9154
    %v9266 = vunpack.c.l.b16 %v9155
    %v9267 = vpack.c.b16 %v9236, %v9235
    %v9268 = vpack.c.b16 %v9238, %v9237
    %v9269 = vpack.c.b16 %v9240, %v9239
    %v9270 = vpack.c.b16 %v9242, %v9241
    %v9271 = vpack.c.b16 %v9244, %v9243
    %v9272 = vpack.c.b16 %v9246, %v9245
    %v9273 = vpack.c.b16 %v9248, %v9247
    %v9274 = vpack.c.b16 %v9250, %v9249
    %v9275 = vpack.c.b16 %v9252, %v9251
    %v9276 = vpack.c.b16 %v9254, %v9253
    %v9277 = vpack.c.b16 %v9256, %v9255
    %v9278 = vpack.c.b16 %v9258, %v9257
    %v9279 = vpack.c.b16 %v9260, %v9259
    %v9280 = vpack.c.b16 %v9262, %v9261
    %v9281 = vpack.c.b16 %v9264, %v9263
    %v9282 = vpack.c.b16 %v9266, %v9265
    %9299 = vmatpush.bf16.msra.mxu0 %v9274
    %9300 = vmatpush.bf16.msra.mxu0 %v9273
    %9301 = vmatpush.bf16.msra.mxu0 %v9272
    %9302 = vmatpush.bf16.msra.mxu0 %v9271
    %9303 = vmatpush.bf16.msra.mxu0 %v9270
    %9304 = vmatpush.bf16.msra.mxu0 %v9269
    %9305 = vmatpush.bf16.msra.mxu0 %v9268
    %9306 = vmatpush.bf16.msra.mxu0 %v9267
    %9307 = vmatmul.bf16.gmra.mxu0 %v9179
    %v9308 = vpop.f32.mrf.mxu0
    %v9309 = vadd.f32 0.0, %v9308
    %v9310 = vpop.f32.mrf.mxu0
    %v9311 = vadd.f32 0.0, %v9310
    %9312 = vmatmul.bf16.gmra.mxu0 %v9197
    %v9313 = vpop.f32.mrf.mxu0
    %v9314 = vadd.f32 0.0, %v9313
    %v9315 = vpop.f32.mrf.mxu0
    %v9316 = vadd.f32 0.0, %v9315
    %9317 = vdwg.mxu0
    %9318 = vmatpush.bf16.msra.mxu0 %v9282
    %9319 = vmatpush.bf16.msra.mxu0 %v9281
    %9320 = vmatpush.bf16.msra.mxu0 %v9280
    %9321 = vmatpush.bf16.msra.mxu0 %v9279
    %9322 = vmatpush.bf16.msra.mxu0 %v9278
    %9323 = vmatpush.bf16.msra.mxu0 %v9277
    %9324 = vmatpush.bf16.msra.mxu0 %v9276
    %9325 = vmatpush.bf16.msra.mxu0 %v9275
    %9326 = vmatmul.bf16.gmra.mxu0 %v9180
    %v9327 = vpop.f32.mrf.mxu0
    %v9328 = vadd.f32 %v9309, %v9327
    %v9329 = vpop.f32.mrf.mxu0
    %v9330 = vadd.f32 %v9311, %v9329
    %9331 = vmatmul.bf16.gmra.mxu0 %v9198
    %v9332 = vpop.f32.mrf.mxu0
    %v9333 = vadd.f32 %v9314, %v9332
    %v9334 = vpop.f32.mrf.mxu0
    %v9335 = vadd.f32 %v9316, %v9334
    %9336 = vdwg.mxu0
    %v9337 = vadd.f32 %v9103, %v9328
    %v9338 = vadd.f32 %v9104, %v9330
    %v9339 = vadd.f32 %v9105, %v9333
    %v9340 = vadd.f32 %v9106, %v9335
    %v9341 = vld [vmem:[%s4145] sm:$0x3]
    %v9342 = vld [vmem:[%s4145 + $0x2] sm:$0x3]
    %v9343 = vld [vmem:[%s4145 + $0x4] sm:$0x3]
    %v9344 = vld [vmem:[%s4145 + $0x6] sm:$0x3]
    %v9345 = vld [vmem:[%s4145 + $0xa] sm:$0x3]
    %v9346 = vld [vmem:[%s4145 + $0xc] sm:$0x3]
    %v9347 = vld [vmem:[%s4145 + $0xe] sm:$0x3]
    %v9348 = vld [vmem:[%s4145 + $0x10] sm:$0x3]
    %v9349 = vld [vmem:[%s4145 + $0x14] sm:$0x3]
    %v9350 = vld [vmem:[%s4145 + $0x16] sm:$0x3]
    %v9351 = vld [vmem:[%s4145 + $0x18] sm:$0x3]
    %v9352 = vld [vmem:[%s4145 + $0x1a] sm:$0x3]
    %v9353 = vld [vmem:[%s4145 + $0x1e] sm:$0x3]
    %v9354 = vld [vmem:[%s4145 + $0x20] sm:$0x3]
    %v9355 = vld [vmem:[%s4145 + $0x22] sm:$0x3]
    %v9356 = vld [vmem:[%s4145 + $0x24] sm:$0x3]
    %s9357 = scalar_lea.vmem %s4, 640
    %v9358 = vld [vmem:[%s9357] sm:$0xf]
    %v9359 = vld [vmem:[%s9357 + $0x4] sm:$0xf]
    %v9360 = vld [vmem:[%s9357 + $0x8] sm:$0xf]
    %v9361 = vld [vmem:[%s9357 + $0xc] sm:$0xf]
    %v9362 = vld [vmem:[%s9357 + $0x10] sm:$0xf]
    %v9363 = vld [vmem:[%s9357 + $0x14] sm:$0xf]
    %v9364 = vld [vmem:[%s9357 + $0x18] sm:$0xf]
    %v9365 = vld [vmem:[%s9357 + $0x1c] sm:$0xf]
    %v9366 = vld [vmem:[%s9357 + $0x20] sm:$0xf]
    %v9367 = vld [vmem:[%s9357 + $0x24] sm:$0xf]
    %v9368 = vld [vmem:[%s9357 + $0x28] sm:$0xf]
    %v9369 = vld [vmem:[%s9357 + $0x2c] sm:$0xf]
    %v9370 = vld [vmem:[%s9357 + $0x30] sm:$0xf]
    %v9371 = vld [vmem:[%s9357 + $0x34] sm:$0xf]
    %v9372 = vld [vmem:[%s9357 + $0x38] sm:$0xf]
    %v9373 = vld [vmem:[%s9357 + $0x3c] sm:$0xf]
    %v9374 = vld [vmem:[%s9357 + $0x40] sm:$0xf]
    %v9375 = vld [vmem:[%s9357 + $0x44] sm:$0xf]
    %v9376 = vld [vmem:[%s9357 + $0x48] sm:$0xf]
    %v9377 = vld [vmem:[%s9357 + $0x4c] sm:$0xf]
    %v9378 = vld [vmem:[%s9357 + $0x50] sm:$0xf]
    %v9379 = vld [vmem:[%s9357 + $0x54] sm:$0xf]
    %v9380 = vld [vmem:[%s9357 + $0x58] sm:$0xf]
    %v9381 = vld [vmem:[%s9357 + $0x5c] sm:$0xf]
    %v9382 = vld [vmem:[%s9357 + $0x60] sm:$0xf]
    %v9383 = vld [vmem:[%s9357 + $0x64] sm:$0xf]
    %v9384 = vld [vmem:[%s9357 + $0x68] sm:$0xf]
    %v9385 = vld [vmem:[%s9357 + $0x6c] sm:$0xf]
    %v9386 = vld [vmem:[%s9357 + $0x70] sm:$0xf]
    %v9387 = vld [vmem:[%s9357 + $0x74] sm:$0xf]
    %v9388 = vld [vmem:[%s9357 + $0x78] sm:$0xf]
    %v9389 = vld [vmem:[%s9357 + $0x7c] sm:$0xf]
    %9391 = vst [vmem:[#allocation1] ss:$9 sm:$0xff] %v9341
    %s9393 = scalar_lea.vmem [#allocation1], 1
    %9394 = vst [vmem:[%s9393] ss:$9 sm:$0xff] %v9342
    %s9396 = scalar_lea.vmem [#allocation1], 2
    %9397 = vst [vmem:[%s9396] ss:$9 sm:$0xff] %v9343
    %s9399 = scalar_lea.vmem [#allocation1], 3
    %9400 = vst [vmem:[%s9399] ss:$9 sm:$0xff] %v9344
    %s9402 = scalar_lea.vmem [#allocation1], 4
    %9403 = vst [vmem:[%s9402] ss:$9 sm:$0xff] %v9345
    %s9405 = scalar_lea.vmem [#allocation1], 5
    %9406 = vst [vmem:[%s9405] ss:$9 sm:$0xff] %v9346
    %s9408 = scalar_lea.vmem [#allocation1], 6
    %9409 = vst [vmem:[%s9408] ss:$9 sm:$0xff] %v9347
    %s9411 = scalar_lea.vmem [#allocation1], 7
    %9412 = vst [vmem:[%s9411] ss:$9 sm:$0xff] %v9348
    %v9413 = vld [vmem:[#allocation1] sm:$0xff]
    %v9414 = vld [vmem:[#allocation1 + $0x9] sm:$0xff]
    %9416 = vst [vmem:[#allocation1] ss:$9 sm:$0xff] %v9349
    %9418 = vst [vmem:[%s9393] ss:$9 sm:$0xff] %v9350
    %9420 = vst [vmem:[%s9396] ss:$9 sm:$0xff] %v9351
    %9422 = vst [vmem:[%s9399] ss:$9 sm:$0xff] %v9352
    %9424 = vst [vmem:[%s9402] ss:$9 sm:$0xff] %v9353
    %9426 = vst [vmem:[%s9405] ss:$9 sm:$0xff] %v9354
    %9428 = vst [vmem:[%s9408] ss:$9 sm:$0xff] %v9355
    %9430 = vst [vmem:[%s9411] ss:$9 sm:$0xff] %v9356
    %v9431 = vld [vmem:[#allocation1] sm:$0xff]
    %v9432 = vld [vmem:[#allocation1 + $0x9] sm:$0xff]
    %v9469 = vunpack.c.l.b16 %v9358
    %v9470 = vunpack.c.l.b16 %v9359
    %v9471 = vunpack.c.l.b16 %v9360
    %v9472 = vunpack.c.l.b16 %v9361
    %v9473 = vunpack.c.l.b16 %v9362
    %v9474 = vunpack.c.l.b16 %v9363
    %v9475 = vunpack.c.l.b16 %v9364
    %v9476 = vunpack.c.l.b16 %v9365
    %v9477 = vunpack.c.l.b16 %v9366
    %v9478 = vunpack.c.l.b16 %v9367
    %v9479 = vunpack.c.l.b16 %v9368
    %v9480 = vunpack.c.l.b16 %v9369
    %v9481 = vunpack.c.l.b16 %v9370
    %v9482 = vunpack.c.l.b16 %v9371
    %v9483 = vunpack.c.l.b16 %v9372
    %v9484 = vunpack.c.l.b16 %v9373
    %v9485 = vunpack.c.l.b16 %v9374
    %v9486 = vunpack.c.l.b16 %v9375
    %v9487 = vunpack.c.l.b16 %v9376
    %v9488 = vunpack.c.l.b16 %v9377
    %v9489 = vunpack.c.l.b16 %v9378
    %v9490 = vunpack.c.l.b16 %v9379
    %v9491 = vunpack.c.l.b16 %v9380
    %v9492 = vunpack.c.l.b16 %v9381
    %v9493 = vunpack.c.l.b16 %v9382
    %v9494 = vunpack.c.l.b16 %v9383
    %v9495 = vunpack.c.l.b16 %v9384
    %v9496 = vunpack.c.l.b16 %v9385
    %v9497 = vunpack.c.l.b16 %v9386
    %v9498 = vunpack.c.l.b16 %v9387
    %v9499 = vunpack.c.l.b16 %v9388
    %v9500 = vunpack.c.l.b16 %v9389
    %v9501 = vpack.c.b16 %v9470, %v9469
    %v9502 = vpack.c.b16 %v9472, %v9471
    %v9503 = vpack.c.b16 %v9474, %v9473
    %v9504 = vpack.c.b16 %v9476, %v9475
    %v9505 = vpack.c.b16 %v9478, %v9477
    %v9506 = vpack.c.b16 %v9480, %v9479
    %v9507 = vpack.c.b16 %v9482, %v9481
    %v9508 = vpack.c.b16 %v9484, %v9483
    %v9509 = vpack.c.b16 %v9486, %v9485
    %v9510 = vpack.c.b16 %v9488, %v9487
    %v9511 = vpack.c.b16 %v9490, %v9489
    %v9512 = vpack.c.b16 %v9492, %v9491
    %v9513 = vpack.c.b16 %v9494, %v9493
    %v9514 = vpack.c.b16 %v9496, %v9495
    %v9515 = vpack.c.b16 %v9498, %v9497
    %v9516 = vpack.c.b16 %v9500, %v9499
    %9533 = vmatpush.bf16.msra.mxu0 %v9508
    %9534 = vmatpush.bf16.msra.mxu0 %v9507
    %9535 = vmatpush.bf16.msra.mxu0 %v9506
    %9536 = vmatpush.bf16.msra.mxu0 %v9505
    %9537 = vmatpush.bf16.msra.mxu0 %v9504
    %9538 = vmatpush.bf16.msra.mxu0 %v9503
    %9539 = vmatpush.bf16.msra.mxu0 %v9502
    %9540 = vmatpush.bf16.msra.mxu0 %v9501
    %9541 = vmatmul.bf16.gmra.mxu0 %v9413
    %v9542 = vpop.f32.mrf.mxu0
    %v9543 = vadd.f32 0.0, %v9542
    %v9544 = vpop.f32.mrf.mxu0
    %v9545 = vadd.f32 0.0, %v9544
    %9546 = vmatmul.bf16.gmra.mxu0 %v9431
    %v9547 = vpop.f32.mrf.mxu0
    %v9548 = vadd.f32 0.0, %v9547
    %v9549 = vpop.f32.mrf.mxu0
    %v9550 = vadd.f32 0.0, %v9549
    %9551 = vdwg.mxu0
    %9552 = vmatpush.bf16.msra.mxu0 %v9516
    %9553 = vmatpush.bf16.msra.mxu0 %v9515
    %9554 = vmatpush.bf16.msra.mxu0 %v9514
    %9555 = vmatpush.bf16.msra.mxu0 %v9513
    %9556 = vmatpush.bf16.msra.mxu0 %v9512
    %9557 = vmatpush.bf16.msra.mxu0 %v9511
    %9558 = vmatpush.bf16.msra.mxu0 %v9510
    %9559 = vmatpush.bf16.msra.mxu0 %v9509
    %9560 = vmatmul.bf16.gmra.mxu0 %v9414
    %v9561 = vpop.f32.mrf.mxu0
    %v9562 = vadd.f32 %v9543, %v9561
    %v9563 = vpop.f32.mrf.mxu0
    %v9564 = vadd.f32 %v9545, %v9563
    %9565 = vmatmul.bf16.gmra.mxu0 %v9432
    %v9566 = vpop.f32.mrf.mxu0
    %v9567 = vadd.f32 %v9548, %v9566
    %v9568 = vpop.f32.mrf.mxu0
    %v9569 = vadd.f32 %v9550, %v9568
    %9570 = vdwg.mxu0
    %v9571 = vadd.f32 %v9337, %v9562
    %v9572 = vadd.f32 %v9338, %v9564
    %v9573 = vadd.f32 %v9339, %v9567
    %v9574 = vadd.f32 %v9340, %v9569
    %s9575 = scalar_lea.vmem [#allocation2], 160
    %v9576 = vld [vmem:[%s9575] sm:$0x3]
    %v9577 = vld [vmem:[%s9575 + $0x2] sm:$0x3]
    %v9578 = vld [vmem:[%s9575 + $0x4] sm:$0x3]
    %v9579 = vld [vmem:[%s9575 + $0x6] sm:$0x3]
    %v9580 = vld [vmem:[%s9575 + $0xa] sm:$0x3]
    %v9581 = vld [vmem:[%s9575 + $0xc] sm:$0x3]
    %v9582 = vld [vmem:[%s9575 + $0xe] sm:$0x3]
    %v9583 = vld [vmem:[%s9575 + $0x10] sm:$0x3]
    %v9584 = vld [vmem:[%s9575 + $0x14] sm:$0x3]
    %v9585 = vld [vmem:[%s9575 + $0x16] sm:$0x3]
    %v9586 = vld [vmem:[%s9575 + $0x18] sm:$0x3]
    %v9587 = vld [vmem:[%s9575 + $0x1a] sm:$0x3]
    %v9588 = vld [vmem:[%s9575 + $0x1e] sm:$0x3]
    %v9589 = vld [vmem:[%s9575 + $0x20] sm:$0x3]
    %v9590 = vld [vmem:[%s9575 + $0x22] sm:$0x3]
    %v9591 = vld [vmem:[%s9575 + $0x24] sm:$0x3]
    %s9592 = scalar_lea.vmem %s4, 768
    %v9593 = vld [vmem:[%s9592] sm:$0xf]
    %v9594 = vld [vmem:[%s9592 + $0x4] sm:$0xf]
    %v9595 = vld [vmem:[%s9592 + $0x8] sm:$0xf]
    %v9596 = vld [vmem:[%s9592 + $0xc] sm:$0xf]
    %v9597 = vld [vmem:[%s9592 + $0x10] sm:$0xf]
    %v9598 = vld [vmem:[%s9592 + $0x14] sm:$0xf]
    %v9599 = vld [vmem:[%s9592 + $0x18] sm:$0xf]
    %v9600 = vld [vmem:[%s9592 + $0x1c] sm:$0xf]
    %v9601 = vld [vmem:[%s9592 + $0x20] sm:$0xf]
    %v9602 = vld [vmem:[%s9592 + $0x24] sm:$0xf]
    %v9603 = vld [vmem:[%s9592 + $0x28] sm:$0xf]
    %v9604 = vld [vmem:[%s9592 + $0x2c] sm:$0xf]
    %v9605 = vld [vmem:[%s9592 + $0x30] sm:$0xf]
    %v9606 = vld [vmem:[%s9592 + $0x34] sm:$0xf]
    %v9607 = vld [vmem:[%s9592 + $0x38] sm:$0xf]
    %v9608 = vld [vmem:[%s9592 + $0x3c] sm:$0xf]
    %v9609 = vld [vmem:[%s9592 + $0x40] sm:$0xf]
    %v9610 = vld [vmem:[%s9592 + $0x44] sm:$0xf]
    %v9611 = vld [vmem:[%s9592 + $0x48] sm:$0xf]
    %v9612 = vld [vmem:[%s9592 + $0x4c] sm:$0xf]
    %v9613 = vld [vmem:[%s9592 + $0x50] sm:$0xf]
    %v9614 = vld [vmem:[%s9592 + $0x54] sm:$0xf]
    %v9615 = vld [vmem:[%s9592 + $0x58] sm:$0xf]
    %v9616 = vld [vmem:[%s9592 + $0x5c] sm:$0xf]
    %v9617 = vld [vmem:[%s9592 + $0x60] sm:$0xf]
    %v9618 = vld [vmem:[%s9592 + $0x64] sm:$0xf]
    %v9619 = vld [vmem:[%s9592 + $0x68] sm:$0xf]
    %v9620 = vld [vmem:[%s9592 + $0x6c] sm:$0xf]
    %v9621 = vld [vmem:[%s9592 + $0x70] sm:$0xf]
    %v9622 = vld [vmem:[%s9592 + $0x74] sm:$0xf]
    %v9623 = vld [vmem:[%s9592 + $0x78] sm:$0xf]
    %v9624 = vld [vmem:[%s9592 + $0x7c] sm:$0xf]
    %9626 = vst [vmem:[#allocation1] ss:$9 sm:$0xff] %v9576
    %s9628 = scalar_lea.vmem [#allocation1], 1
    %9629 = vst [vmem:[%s9628] ss:$9 sm:$0xff] %v9577
    %s9631 = scalar_lea.vmem [#allocation1], 2
    %9632 = vst [vmem:[%s9631] ss:$9 sm:$0xff] %v9578
    %s9634 = scalar_lea.vmem [#allocation1], 3
    %9635 = vst [vmem:[%s9634] ss:$9 sm:$0xff] %v9579
    %s9637 = scalar_lea.vmem [#allocation1], 4
    %9638 = vst [vmem:[%s9637] ss:$9 sm:$0xff] %v9580
    %s9640 = scalar_lea.vmem [#allocation1], 5
    %9641 = vst [vmem:[%s9640] ss:$9 sm:$0xff] %v9581
    %s9643 = scalar_lea.vmem [#allocation1], 6
    %9644 = vst [vmem:[%s9643] ss:$9 sm:$0xff] %v9582
    %s9646 = scalar_lea.vmem [#allocation1], 7
    %9647 = vst [vmem:[%s9646] ss:$9 sm:$0xff] %v9583
    %v9648 = vld [vmem:[#allocation1] sm:$0xff]
    %v9649 = vld [vmem:[#allocation1 + $0x9] sm:$0xff]
    %9651 = vst [vmem:[#allocation1] ss:$9 sm:$0xff] %v9584
    %9653 = vst [vmem:[%s9628] ss:$9 sm:$0xff] %v9585
    %9655 = vst [vmem:[%s9631] ss:$9 sm:$0xff] %v9586
    %9657 = vst [vmem:[%s9634] ss:$9 sm:$0xff] %v9587
    %9659 = vst [vmem:[%s9637] ss:$9 sm:$0xff] %v9588
    %9661 = vst [vmem:[%s9640] ss:$9 sm:$0xff] %v9589
    %9663 = vst [vmem:[%s9643] ss:$9 sm:$0xff] %v9590
    %9665 = vst [vmem:[%s9646] ss:$9 sm:$0xff] %v9591
    %v9666 = vld [vmem:[#allocation1] sm:$0xff]
    %v9667 = vld [vmem:[#allocation1 + $0x9] sm:$0xff]
    %v9704 = vunpack.c.l.b16 %v9593
    %v9705 = vunpack.c.l.b16 %v9594
    %v9706 = vunpack.c.l.b16 %v9595
    %v9707 = vunpack.c.l.b16 %v9596
    %v9708 = vunpack.c.l.b16 %v9597
    %v9709 = vunpack.c.l.b16 %v9598
    %v9710 = vunpack.c.l.b16 %v9599
    %v9711 = vunpack.c.l.b16 %v9600
    %v9712 = vunpack.c.l.b16 %v9601
    %v9713 = vunpack.c.l.b16 %v9602
    %v9714 = vunpack.c.l.b16 %v9603
    %v9715 = vunpack.c.l.b16 %v9604
    %v9716 = vunpack.c.l.b16 %v9605
    %v9717 = vunpack.c.l.b16 %v9606
    %v9718 = vunpack.c.l.b16 %v9607
    %v9719 = vunpack.c.l.b16 %v9608
    %v9720 = vunpack.c.l.b16 %v9609
    %v9721 = vunpack.c.l.b16 %v9610
    %v9722 = vunpack.c.l.b16 %v9611
    %v9723 = vunpack.c.l.b16 %v9612
    %v9724 = vunpack.c.l.b16 %v9613
    %v9725 = vunpack.c.l.b16 %v9614
    %v9726 = vunpack.c.l.b16 %v9615
    %v9727 = vunpack.c.l.b16 %v9616
    %v9728 = vunpack.c.l.b16 %v9617
    %v9729 = vunpack.c.l.b16 %v9618
    %v9730 = vunpack.c.l.b16 %v9619
    %v9731 = vunpack.c.l.b16 %v9620
    %v9732 = vunpack.c.l.b16 %v9621
    %v9733 = vunpack.c.l.b16 %v9622
    %v9734 = vunpack.c.l.b16 %v9623
    %v9735 = vunpack.c.l.b16 %v9624
    %v9736 = vpack.c.b16 %v9705, %v9704
    %v9737 = vpack.c.b16 %v9707, %v9706
    %v9738 = vpack.c.b16 %v9709, %v9708
    %v9739 = vpack.c.b16 %v9711, %v9710
    %v9740 = vpack.c.b16 %v9713, %v9712
    %v9741 = vpack.c.b16 %v9715, %v9714
    %v9742 = vpack.c.b16 %v9717, %v9716
    %v9743 = vpack.c.b16 %v9719, %v9718
    %v9744 = vpack.c.b16 %v9721, %v9720
    %v9745 = vpack.c.b16 %v9723, %v9722
    %v9746 = vpack.c.b16 %v9725, %v9724
    %v9747 = vpack.c.b16 %v9727, %v9726
    %v9748 = vpack.c.b16 %v9729, %v9728
    %v9749 = vpack.c.b16 %v9731, %v9730
    %v9750 = vpack.c.b16 %v9733, %v9732
    %v9751 = vpack.c.b16 %v9735, %v9734
    %9768 = vmatpush.bf16.msra.mxu0 %v9743
    %9769 = vmatpush.bf16.msra.mxu0 %v9742
    %9770 = vmatpush.bf16.msra.mxu0 %v9741
    %9771 = vmatpush.bf16.msra.mxu0 %v9740
    %9772 = vmatpush.bf16.msra.mxu0 %v9739
    %9773 = vmatpush.bf16.msra.mxu0 %v9738
    %9774 = vmatpush.bf16.msra.mxu0 %v9737
    %9775 = vmatpush.bf16.msra.mxu0 %v9736
    %9776 = vmatmul.bf16.gmra.mxu0 %v9648
    %v9777 = vpop.f32.mrf.mxu0
    %v9778 = vadd.f32 0.0, %v9777
    %v9779 = vpop.f32.mrf.mxu0
    %v9780 = vadd.f32 0.0, %v9779
    %9781 = vmatmul.bf16.gmra.mxu0 %v9666
    %v9782 = vpop.f32.mrf.mxu0
    %v9783 = vadd.f32 0.0, %v9782
    %v9784 = vpop.f32.mrf.mxu0
    %v9785 = vadd.f32 0.0, %v9784
    %9786 = vdwg.mxu0
    %9787 = vmatpush.bf16.msra.mxu0 %v9751
    %9788 = vmatpush.bf16.msra.mxu0 %v9750
    %9789 = vmatpush.bf16.msra.mxu0 %v9749
    %9790 = vmatpush.bf16.msra.mxu0 %v9748
    %9791 = vmatpush.bf16.msra.mxu0 %v9747
    %9792 = vmatpush.bf16.msra.mxu0 %v9746
    %9793 = vmatpush.bf16.msra.mxu0 %v9745
    %9794 = vmatpush.bf16.msra.mxu0 %v9744
    %9795 = vmatmul.bf16.gmra.mxu0 %v9649
    %v9796 = vpop.f32.mrf.mxu0
    %v9797 = vadd.f32 %v9778, %v9796
    %v9798 = vpop.f32.mrf.mxu0
    %v9799 = vadd.f32 %v9780, %v9798
    %9800 = vmatmul.bf16.gmra.mxu0 %v9667
    %v9801 = vpop.f32.mrf.mxu0
    %v9802 = vadd.f32 %v9783, %v9801
    %v9803 = vpop.f32.mrf.mxu0
    %v9804 = vadd.f32 %v9785, %v9803
    %9805 = vdwg.mxu0
    %v9806 = vadd.f32 %v9571, %v9797
    %v9807 = vadd.f32 %v9572, %v9799
    %v9808 = vadd.f32 %v9573, %v9802
    %v9809 = vadd.f32 %v9574, %v9804
    %v9810 = vld [vmem:[%s6153] sm:$0x3]
    %v9811 = vld [vmem:[%s6153 + $0x2] sm:$0x3]
    %v9812 = vld [vmem:[%s6153 + $0x4] sm:$0x3]
    %v9813 = vld [vmem:[%s6153 + $0x6] sm:$0x3]
    %v9814 = vld [vmem:[%s6153 + $0xa] sm:$0x3]
    %v9815 = vld [vmem:[%s6153 + $0xc] sm:$0x3]
    %v9816 = vld [vmem:[%s6153 + $0xe] sm:$0x3]
    %v9817 = vld [vmem:[%s6153 + $0x10] sm:$0x3]
    %v9818 = vld [vmem:[%s6153 + $0x14] sm:$0x3]
    %v9819 = vld [vmem:[%s6153 + $0x16] sm:$0x3]
    %v9820 = vld [vmem:[%s6153 + $0x18] sm:$0x3]
    %v9821 = vld [vmem:[%s6153 + $0x1a] sm:$0x3]
    %v9822 = vld [vmem:[%s6153 + $0x1e] sm:$0x3]
    %v9823 = vld [vmem:[%s6153 + $0x20] sm:$0x3]
    %v9824 = vld [vmem:[%s6153 + $0x22] sm:$0x3]
    %v9825 = vld [vmem:[%s6153 + $0x24] sm:$0x3]
    %s9826 = scalar_lea.vmem %s4, 896
    %v9827 = vld [vmem:[%s9826] sm:$0xf]
    %v9828 = vld [vmem:[%s9826 + $0x4] sm:$0xf]
    %v9829 = vld [vmem:[%s9826 + $0x8] sm:$0xf]
    %v9830 = vld [vmem:[%s9826 + $0xc] sm:$0xf]
    %v9831 = vld [vmem:[%s9826 + $0x10] sm:$0xf]
    %v9832 = vld [vmem:[%s9826 + $0x14] sm:$0xf]
    %v9833 = vld [vmem:[%s9826 + $0x18] sm:$0xf]
    %v9834 = vld [vmem:[%s9826 + $0x1c] sm:$0xf]
    %v9835 = vld [vmem:[%s9826 + $0x20] sm:$0xf]
    %v9836 = vld [vmem:[%s9826 + $0x24] sm:$0xf]
    %v9837 = vld [vmem:[%s9826 + $0x28] sm:$0xf]
    %v9838 = vld [vmem:[%s9826 + $0x2c] sm:$0xf]
    %v9839 = vld [vmem:[%s9826 + $0x30] sm:$0xf]
    %v9840 = vld [vmem:[%s9826 + $0x34] sm:$0xf]
    %v9841 = vld [vmem:[%s9826 + $0x38] sm:$0xf]
    %v9842 = vld [vmem:[%s9826 + $0x3c] sm:$0xf]
    %v9843 = vld [vmem:[%s9826 + $0x40] sm:$0xf]
    %v9844 = vld [vmem:[%s9826 + $0x44] sm:$0xf]
    %v9845 = vld [vmem:[%s9826 + $0x48] sm:$0xf]
    %v9846 = vld [vmem:[%s9826 + $0x4c] sm:$0xf]
    %v9847 = vld [vmem:[%s9826 + $0x50] sm:$0xf]
    %v9848 = vld [vmem:[%s9826 + $0x54] sm:$0xf]
    %v9849 = vld [vmem:[%s9826 + $0x58] sm:$0xf]
    %v9850 = vld [vmem:[%s9826 + $0x5c] sm:$0xf]
    %v9851 = vld [vmem:[%s9826 + $0x60] sm:$0xf]
    %v9852 = vld [vmem:[%s9826 + $0x64] sm:$0xf]
    %v9853 = vld [vmem:[%s9826 + $0x68] sm:$0xf]
    %v9854 = vld [vmem:[%s9826 + $0x6c] sm:$0xf]
    %v9855 = vld [vmem:[%s9826 + $0x70] sm:$0xf]
    %v9856 = vld [vmem:[%s9826 + $0x74] sm:$0xf]
    %v9857 = vld [vmem:[%s9826 + $0x78] sm:$0xf]
    %v9858 = vld [vmem:[%s9826 + $0x7c] sm:$0xf]
    %9860 = vst [vmem:[#allocation1] ss:$9 sm:$0xff] %v9810
    %s9862 = scalar_lea.vmem [#allocation1], 1
    %9863 = vst [vmem:[%s9862] ss:$9 sm:$0xff] %v9811
    %s9865 = scalar_lea.vmem [#allocation1], 2
    %9866 = vst [vmem:[%s9865] ss:$9 sm:$0xff] %v9812
    %s9868 = scalar_lea.vmem [#allocation1], 3
    %9869 = vst [vmem:[%s9868] ss:$9 sm:$0xff] %v9813
    %s9871 = scalar_lea.vmem [#allocation1], 4
    %9872 = vst [vmem:[%s9871] ss:$9 sm:$0xff] %v9814
    %s9874 = scalar_lea.vmem [#allocation1], 5
    %9875 = vst [vmem:[%s9874] ss:$9 sm:$0xff] %v9815
    %s9877 = scalar_lea.vmem [#allocation1], 6
    %9878 = vst [vmem:[%s9877] ss:$9 sm:$0xff] %v9816
    %s9880 = scalar_lea.vmem [#allocation1], 7
    %9881 = vst [vmem:[%s9880] ss:$9 sm:$0xff] %v9817
    %v9882 = vld [vmem:[#allocation1] sm:$0xff]
    %v9883 = vld [vmem:[#allocation1 + $0x9] sm:$0xff]
    %9885 = vst [vmem:[#allocation1] ss:$9 sm:$0xff] %v9818
    %9887 = vst [vmem:[%s9862] ss:$9 sm:$0xff] %v9819
    %9889 = vst [vmem:[%s9865] ss:$9 sm:$0xff] %v9820
    %9891 = vst [vmem:[%s9868] ss:$9 sm:$0xff] %v9821
    %9893 = vst [vmem:[%s9871] ss:$9 sm:$0xff] %v9822
    %9895 = vst [vmem:[%s9874] ss:$9 sm:$0xff] %v9823
    %9897 = vst [vmem:[%s9877] ss:$9 sm:$0xff] %v9824
    %9899 = vst [vmem:[%s9880] ss:$9 sm:$0xff] %v9825
    %v9900 = vld [vmem:[#allocation1] sm:$0xff]
    %v9901 = vld [vmem:[#allocation1 + $0x9] sm:$0xff]
    %v9938 = vunpack.c.l.b16 %v9827
    %v9939 = vunpack.c.l.b16 %v9828
    %v9940 = vunpack.c.l.b16 %v9829
    %v9941 = vunpack.c.l.b16 %v9830
    %v9942 = vunpack.c.l.b16 %v9831
    %v9943 = vunpack.c.l.b16 %v9832
    %v9944 = vunpack.c.l.b16 %v9833
    %v9945 = vunpack.c.l.b16 %v9834
    %v9946 = vunpack.c.l.b16 %v9835
    %v9947 = vunpack.c.l.b16 %v9836
    %v9948 = vunpack.c.l.b16 %v9837
    %v9949 = vunpack.c.l.b16 %v9838
    %v9950 = vunpack.c.l.b16 %v9839
    %v9951 = vunpack.c.l.b16 %v9840
    %v9952 = vunpack.c.l.b16 %v9841
    %v9953 = vunpack.c.l.b16 %v9842
    %v9954 = vunpack.c.l.b16 %v9843
    %v9955 = vunpack.c.l.b16 %v9844
    %v9956 = vunpack.c.l.b16 %v9845
    %v9957 = vunpack.c.l.b16 %v9846
    %v9958 = vunpack.c.l.b16 %v9847
    %v9959 = vunpack.c.l.b16 %v9848
    %v9960 = vunpack.c.l.b16 %v9849
    %v9961 = vunpack.c.l.b16 %v9850
    %v9962 = vunpack.c.l.b16 %v9851
    %v9963 = vunpack.c.l.b16 %v9852
    %v9964 = vunpack.c.l.b16 %v9853
    %v9965 = vunpack.c.l.b16 %v9854
    %v9966 = vunpack.c.l.b16 %v9855
    %v9967 = vunpack.c.l.b16 %v9856
    %v9968 = vunpack.c.l.b16 %v9857
    %v9969 = vunpack.c.l.b16 %v9858
    %v9970 = vpack.c.b16 %v9939, %v9938
    %v9971 = vpack.c.b16 %v9941, %v9940
    %v9972 = vpack.c.b16 %v9943, %v9942
    %v9973 = vpack.c.b16 %v9945, %v9944
    %v9974 = vpack.c.b16 %v9947, %v9946
    %v9975 = vpack.c.b16 %v9949, %v9948
    %v9976 = vpack.c.b16 %v9951, %v9950
    %v9977 = vpack.c.b16 %v9953, %v9952
    %v9978 = vpack.c.b16 %v9955, %v9954
    %v9979 = vpack.c.b16 %v9957, %v9956
    %v9980 = vpack.c.b16 %v9959, %v9958
    %v9981 = vpack.c.b16 %v9961, %v9960
    %v9982 = vpack.c.b16 %v9963, %v9962
    %v9983 = vpack.c.b16 %v9965, %v9964
    %v9984 = vpack.c.b16 %v9967, %v9966
    %v9985 = vpack.c.b16 %v9969, %v9968
    %10002 = vmatpush.bf16.msra.mxu0 %v9977
    %10003 = vmatpush.bf16.msra.mxu0 %v9976
    %10004 = vmatpush.bf16.msra.mxu0 %v9975
    %10005 = vmatpush.bf16.msra.mxu0 %v9974
    %10006 = vmatpush.bf16.msra.mxu0 %v9973
    %10007 = vmatpush.bf16.msra.mxu0 %v9972
    %10008 = vmatpush.bf16.msra.mxu0 %v9971
    %10009 = vmatpush.bf16.msra.mxu0 %v9970
    %10010 = vmatmul.bf16.gmra.mxu0 %v9882
    %v10011 = vpop.f32.mrf.mxu0
    %v10012 = vadd.f32 0.0, %v10011
    %v10013 = vpop.f32.mrf.mxu0
    %v10014 = vadd.f32 0.0, %v10013
    %10015 = vmatmul.bf16.gmra.mxu0 %v9900
    %v10016 = vpop.f32.mrf.mxu0
    %v10017 = vadd.f32 0.0, %v10016
    %v10018 = vpop.f32.mrf.mxu0
    %v10019 = vadd.f32 0.0, %v10018
    %10020 = vdwg.mxu0
    %10021 = vmatpush.bf16.msra.mxu0 %v9985
    %10022 = vmatpush.bf16.msra.mxu0 %v9984
    %10023 = vmatpush.bf16.msra.mxu0 %v9983
    %10024 = vmatpush.bf16.msra.mxu0 %v9982
    %10025 = vmatpush.bf16.msra.mxu0 %v9981
    %10026 = vmatpush.bf16.msra.mxu0 %v9980
    %10027 = vmatpush.bf16.msra.mxu0 %v9979
    %10028 = vmatpush.bf16.msra.mxu0 %v9978
    %10029 = vmatmul.bf16.gmra.mxu0 %v9883
    %v10030 = vpop.f32.mrf.mxu0
    %v10031 = vadd.f32 %v10012, %v10030
    %v10032 = vpop.f32.mrf.mxu0
    %v10033 = vadd.f32 %v10014, %v10032
    %10034 = vmatmul.bf16.gmra.mxu0 %v9901
    %v10035 = vpop.f32.mrf.mxu0
    %v10036 = vadd.f32 %v10017, %v10035
    %v10037 = vpop.f32.mrf.mxu0
    %v10038 = vadd.f32 %v10019, %v10037
    %10039 = vdwg.mxu0
    %v10040 = vadd.f32 %v9806, %v10031
    %v10041 = vadd.f32 %v9807, %v10033
    %v10042 = vadd.f32 %v9808, %v10036
    %v10043 = vadd.f32 %v9809, %v10038
    %v10044 = vld [vmem:[%s8159] sm:$0x3]
    %v10045 = vld [vmem:[%s8159 + $0x2] sm:$0x3]
    %v10046 = vld [vmem:[%s8159 + $0x4] sm:$0x3]
    %v10047 = vld [vmem:[%s8159 + $0x6] sm:$0x3]
    %v10048 = vld [vmem:[%s8159 + $0xa] sm:$0x3]
    %v10049 = vld [vmem:[%s8159 + $0xc] sm:$0x3]
    %v10050 = vld [vmem:[%s8159 + $0xe] sm:$0x3]
    %v10051 = vld [vmem:[%s8159 + $0x10] sm:$0x3]
    %v10052 = vld [vmem:[%s8159 + $0x14] sm:$0x3]
    %v10053 = vld [vmem:[%s8159 + $0x16] sm:$0x3]
    %v10054 = vld [vmem:[%s8159 + $0x18] sm:$0x3]
    %v10055 = vld [vmem:[%s8159 + $0x1a] sm:$0x3]
    %v10056 = vld [vmem:[%s8159 + $0x1e] sm:$0x3]
    %v10057 = vld [vmem:[%s8159 + $0x20] sm:$0x3]
    %v10058 = vld [vmem:[%s8159 + $0x22] sm:$0x3]
    %v10059 = vld [vmem:[%s8159 + $0x24] sm:$0x3]
    %s10060 = scalar_lea.vmem %s4, 1024
    %v10061 = vld [vmem:[%s10060] sm:$0xf]
    %v10062 = vld [vmem:[%s10060 + $0x4] sm:$0xf]
    %v10063 = vld [vmem:[%s10060 + $0x8] sm:$0xf]
    %v10064 = vld [vmem:[%s10060 + $0xc] sm:$0xf]
    %v10065 = vld [vmem:[%s10060 + $0x10] sm:$0xf]
    %v10066 = vld [vmem:[%s10060 + $0x14] sm:$0xf]
    %v10067 = vld [vmem:[%s10060 + $0x18] sm:$0xf]
    %v10068 = vld [vmem:[%s10060 + $0x1c] sm:$0xf]
    %v10069 = vld [vmem:[%s10060 + $0x20] sm:$0xf]
    %v10070 = vld [vmem:[%s10060 + $0x24] sm:$0xf]
    %v10071 = vld [vmem:[%s10060 + $0x28] sm:$0xf]
    %v10072 = vld [vmem:[%s10060 + $0x2c] sm:$0xf]
    %v10073 = vld [vmem:[%s10060 + $0x30] sm:$0xf]
    %v10074 = vld [vmem:[%s10060 + $0x34] sm:$0xf]
    %v10075 = vld [vmem:[%s10060 + $0x38] sm:$0xf]
    %v10076 = vld [vmem:[%s10060 + $0x3c] sm:$0xf]
    %v10077 = vld [vmem:[%s10060 + $0x40] sm:$0xf]
    %v10078 = vld [vmem:[%s10060 + $0x44] sm:$0xf]
    %v10079 = vld [vmem:[%s10060 + $0x48] sm:$0xf]
    %v10080 = vld [vmem:[%s10060 + $0x4c] sm:$0xf]
    %v10081 = vld [vmem:[%s10060 + $0x50] sm:$0xf]
    %v10082 = vld [vmem:[%s10060 + $0x54] sm:$0xf]
    %v10083 = vld [vmem:[%s10060 + $0x58] sm:$0xf]
    %v10084 = vld [vmem:[%s10060 + $0x5c] sm:$0xf]
    %v10085 = vld [vmem:[%s10060 + $0x60] sm:$0xf]
    %v10086 = vld [vmem:[%s10060 + $0x64] sm:$0xf]
    %v10087 = vld [vmem:[%s10060 + $0x68] sm:$0xf]
    %v10088 = vld [vmem:[%s10060 + $0x6c] sm:$0xf]
    %v10089 = vld [vmem:[%s10060 + $0x70] sm:$0xf]
    %v10090 = vld [vmem:[%s10060 + $0x74] sm:$0xf]
    %v10091 = vld [vmem:[%s10060 + $0x78] sm:$0xf]
    %v10092 = vld [vmem:[%s10060 + $0x7c] sm:$0xf]
    %10094 = vst [vmem:[#allocation1] ss:$9 sm:$0xff] %v10044
    %s10096 = scalar_lea.vmem [#allocation1], 1
    %10097 = vst [vmem:[%s10096] ss:$9 sm:$0xff] %v10045
    %s10099 = scalar_lea.vmem [#allocation1], 2
    %10100 = vst [vmem:[%s10099] ss:$9 sm:$0xff] %v10046
    %s10102 = scalar_lea.vmem [#allocation1], 3
    %10103 = vst [vmem:[%s10102] ss:$9 sm:$0xff] %v10047
    %s10105 = scalar_lea.vmem [#allocation1], 4
    %10106 = vst [vmem:[%s10105] ss:$9 sm:$0xff] %v10048
    %s10108 = scalar_lea.vmem [#allocation1], 5
    %10109 = vst [vmem:[%s10108] ss:$9 sm:$0xff] %v10049
    %s10111 = scalar_lea.vmem [#allocation1], 6
    %10112 = vst [vmem:[%s10111] ss:$9 sm:$0xff] %v10050
    %s10114 = scalar_lea.vmem [#allocation1], 7
    %10115 = vst [vmem:[%s10114] ss:$9 sm:$0xff] %v10051
    %v10116 = vld [vmem:[#allocation1] sm:$0xff]
    %v10117 = vld [vmem:[#allocation1 + $0x9] sm:$0xff]
    %10119 = vst [vmem:[#allocation1] ss:$9 sm:$0xff] %v10052
    %10121 = vst [vmem:[%s10096] ss:$9 sm:$0xff] %v10053
    %10123 = vst [vmem:[%s10099] ss:$9 sm:$0xff] %v10054
    %10125 = vst [vmem:[%s10102] ss:$9 sm:$0xff] %v10055
    %10127 = vst [vmem:[%s10105] ss:$9 sm:$0xff] %v10056
    %10129 = vst [vmem:[%s10108] ss:$9 sm:$0xff] %v10057
    %10131 = vst [vmem:[%s10111] ss:$9 sm:$0xff] %v10058
    %10133 = vst [vmem:[%s10114] ss:$9 sm:$0xff] %v10059
    %v10134 = vld [vmem:[#allocation1] sm:$0xff]
    %v10135 = vld [vmem:[#allocation1 + $0x9] sm:$0xff]
    %v10172 = vunpack.c.l.b16 %v10061
    %v10173 = vunpack.c.l.b16 %v10062
    %v10174 = vunpack.c.l.b16 %v10063
    %v10175 = vunpack.c.l.b16 %v10064
    %v10176 = vunpack.c.l.b16 %v10065
    %v10177 = vunpack.c.l.b16 %v10066
    %v10178 = vunpack.c.l.b16 %v10067
    %v10179 = vunpack.c.l.b16 %v10068
    %v10180 = vunpack.c.l.b16 %v10069
    %v10181 = vunpack.c.l.b16 %v10070
    %v10182 = vunpack.c.l.b16 %v10071
    %v10183 = vunpack.c.l.b16 %v10072
    %v10184 = vunpack.c.l.b16 %v10073
    %v10185 = vunpack.c.l.b16 %v10074
    %v10186 = vunpack.c.l.b16 %v10075
    %v10187 = vunpack.c.l.b16 %v10076
    %v10188 = vunpack.c.l.b16 %v10077
    %v10189 = vunpack.c.l.b16 %v10078
    %v10190 = vunpack.c.l.b16 %v10079
    %v10191 = vunpack.c.l.b16 %v10080
    %v10192 = vunpack.c.l.b16 %v10081
    %v10193 = vunpack.c.l.b16 %v10082
    %v10194 = vunpack.c.l.b16 %v10083
    %v10195 = vunpack.c.l.b16 %v10084
    %v10196 = vunpack.c.l.b16 %v10085
    %v10197 = vunpack.c.l.b16 %v10086
    %v10198 = vunpack.c.l.b16 %v10087
    %v10199 = vunpack.c.l.b16 %v10088
    %v10200 = vunpack.c.l.b16 %v10089
    %v10201 = vunpack.c.l.b16 %v10090
    %v10202 = vunpack.c.l.b16 %v10091
    %v10203 = vunpack.c.l.b16 %v10092
    %v10204 = vpack.c.b16 %v10173, %v10172
    %v10205 = vpack.c.b16 %v10175, %v10174
    %v10206 = vpack.c.b16 %v10177, %v10176
    %v10207 = vpack.c.b16 %v10179, %v10178
    %v10208 = vpack.c.b16 %v10181, %v10180
    %v10209 = vpack.c.b16 %v10183, %v10182
    %v10210 = vpack.c.b16 %v10185, %v10184
    %v10211 = vpack.c.b16 %v10187, %v10186
    %v10212 = vpack.c.b16 %v10189, %v10188
    %v10213 = vpack.c.b16 %v10191, %v10190
    %v10214 = vpack.c.b16 %v10193, %v10192
    %v10215 = vpack.c.b16 %v10195, %v10194
    %v10216 = vpack.c.b16 %v10197, %v10196
    %v10217 = vpack.c.b16 %v10199, %v10198
    %v10218 = vpack.c.b16 %v10201, %v10200
    %v10219 = vpack.c.b16 %v10203, %v10202
    %10236 = vmatpush.bf16.msra.mxu0 %v10211
    %10237 = vmatpush.bf16.msra.mxu0 %v10210
    %10238 = vmatpush.bf16.msra.mxu0 %v10209
    %10239 = vmatpush.bf16.msra.mxu0 %v10208
    %10240 = vmatpush.bf16.msra.mxu0 %v10207
    %10241 = vmatpush.bf16.msra.mxu0 %v10206
    %10242 = vmatpush.bf16.msra.mxu0 %v10205
    %10243 = vmatpush.bf16.msra.mxu0 %v10204
    %10244 = vmatmul.bf16.gmra.mxu0 %v10116
    %v10245 = vpop.f32.mrf.mxu0
    %v10246 = vadd.f32 0.0, %v10245
    %v10247 = vpop.f32.mrf.mxu0
    %v10248 = vadd.f32 0.0, %v10247
    %10249 = vmatmul.bf16.gmra.mxu0 %v10134
    %v10250 = vpop.f32.mrf.mxu0
    %v10251 = vadd.f32 0.0, %v10250
    %v10252 = vpop.f32.mrf.mxu0
    %v10253 = vadd.f32 0.0, %v10252
    %10254 = vdwg.mxu0
    %10255 = vmatpush.bf16.msra.mxu0 %v10219
    %10256 = vmatpush.bf16.msra.mxu0 %v10218
    %10257 = vmatpush.bf16.msra.mxu0 %v10217
    %10258 = vmatpush.bf16.msra.mxu0 %v10216
    %10259 = vmatpush.bf16.msra.mxu0 %v10215
    %10260 = vmatpush.bf16.msra.mxu0 %v10214
    %10261 = vmatpush.bf16.msra.mxu0 %v10213
    %10262 = vmatpush.bf16.msra.mxu0 %v10212
    %10263 = vmatmul.bf16.gmra.mxu0 %v10117
    %v10264 = vpop.f32.mrf.mxu0
    %v10265 = vadd.f32 %v10246, %v10264
    %v10266 = vpop.f32.mrf.mxu0
    %v10267 = vadd.f32 %v10248, %v10266
    %10268 = vmatmul.bf16.gmra.mxu0 %v10135
    %v10269 = vpop.f32.mrf.mxu0
    %v10270 = vadd.f32 %v10251, %v10269
    %v10271 = vpop.f32.mrf.mxu0
    %v10272 = vadd.f32 %v10253, %v10271
    %10273 = vdwg.mxu0
    %v10274 = vadd.f32 %v10040, %v10265
    %v10275 = vadd.f32 %v10041, %v10267
    %v10276 = vadd.f32 %v10042, %v10270
    %v10277 = vadd.f32 %v10043, %v10272
    %v10278 = vld [vmem:[%s5] sm:$0x1]
    %v10279 = vperm.slane %v10278, 0
    %v10280 = vmul.f32 %v10274, %v10279
    %v10281 = vmul.f32 %v10275, %v10279
    %v10282 = vmul.f32 %v10276, %v10279
    %v10283 = vmul.f32 %v10277, %v10279
    %v10284 = vld [vmem:[%s5 + $0x1] sm:$0x1]
    %v10285 = vperm.slane %v10284, 0
    %v10286 = vadd.f32 %v10280, %v10285
    %v10287 = vadd.f32 %v10281, %v10285
    %v10288 = vadd.f32 %v10282, %v10285
    %v10289 = vadd.f32 %v10283, %v10285
    %v10290 = vmax.f32 %v10286, 0.0
    %v10291 = vmax.f32 %v10287, 0.0
    %v10292 = vmax.f32 %v10288, 0.0
    %v10293 = vmax.f32 %v10289, 0.0
    %v10294 = vpack.c.bf16 %v10290, %v10290
    %v10295 = vpack.c.bf16 %v10291, %v10291
    %v10296 = vpack.c.bf16 %v10292, %v10292
    %v10297 = vpack.c.bf16 %v10293, %v10293
    %v10298 = vld [vmem:[%s6] sm:$0xf]
    %v10299 = vld [vmem:[%s6 + $0x4] sm:$0xf]
    %v10300 = vld [vmem:[%s6 + $0x8] sm:$0xf]
    %v10301 = vld [vmem:[%s6 + $0xc] sm:$0xf]
    %v10302 = vld [vmem:[%s6 + $0x10] sm:$0xf]
    %v10303 = vld [vmem:[%s6 + $0x14] sm:$0xf]
    %v10304 = vld [vmem:[%s6 + $0x18] sm:$0xf]
    %v10305 = vld [vmem:[%s6 + $0x1c] sm:$0xf]
    %s10306 = scalar_lea.vmem %s6, 32
    %v10307 = vld [vmem:[%s10306] sm:$0xf]
    %v10308 = vld [vmem:[%s10306 + $0x4] sm:$0xf]
    %v10309 = vld [vmem:[%s10306 + $0x8] sm:$0xf]
    %v10310 = vld [vmem:[%s10306 + $0xc] sm:$0xf]
    %v10311 = vld [vmem:[%s10306 + $0x10] sm:$0xf]
    %v10312 = vld [vmem:[%s10306 + $0x14] sm:$0xf]
    %v10313 = vld [vmem:[%s10306 + $0x18] sm:$0xf]
    %v10314 = vld [vmem:[%s10306 + $0x1c] sm:$0xf]
    %v10316 = vunpack.c.l.b16 %v10294
    %v10317 = vpack.c.b16 %v10316, %v10316
    %v10318 = vrot.slane %v10317, 1
    %v10327 = vunpack.c.l.b16 %v10307
    %v10328 = vunpack.c.l.b16 %v10308
    %v10329 = vunpack.c.l.b16 %v10309
    %v10330 = vunpack.c.l.b16 %v10310
    %v10331 = vunpack.c.l.b16 %v10311
    %v10332 = vunpack.c.l.b16 %v10312
    %v10333 = vunpack.c.l.b16 %v10313
    %v10334 = vunpack.c.l.b16 %v10314
    %v10335 = vpack.c.b16 %v10328, %v10327
    %v10336 = vpack.c.b16 %v10330, %v10329
    %v10337 = vpack.c.b16 %v10332, %v10331
    %v10338 = vpack.c.b16 %v10334, %v10333
    %vm10343 = vcmask 523264
    %v10345 = vsel %vm10343, %v10318, 0
    %10347 = vmatpush.bf16.msra.mxu0 0
    %10348 = vmatpush.bf16.msra.mxu0 0
    %10349 = vmatpush.bf16.msra.mxu0 0
    %10350 = vmatpush.bf16.msra.mxu0 0
    %10351 = vmatpush.bf16.msra.mxu0 %v10338
    %10352 = vmatpush.bf16.msra.mxu0 %v10337
    %10353 = vmatpush.bf16.msra.mxu0 %v10336
    %10354 = vmatpush.bf16.msra.mxu0 %v10335
    %10355 = vmatmul.bf16.gmra.mxu0 %v10345
    %v10356 = vpop.f32.mrf.mxu0
    %v10357 = vadd.f32 0.0, %v10356
    %v10358 = vpop.f32.mrf.mxu0
    %10359 = vdwg.mxu0
    %v10368 = vunpack.c.l.b16 %v10298
    %v10369 = vunpack.c.l.b16 %v10299
    %v10370 = vunpack.c.l.b16 %v10300
    %v10371 = vunpack.c.l.b16 %v10301
    %v10372 = vunpack.c.l.b16 %v10302
    %v10373 = vunpack.c.l.b16 %v10303
    %v10374 = vunpack.c.l.b16 %v10304
    %v10375 = vunpack.c.l.b16 %v10305
    %v10376 = vpack.c.b16 %v10369, %v10368
    %v10377 = vpack.c.b16 %v10371, %v10370
    %v10378 = vpack.c.b16 %v10373, %v10372
    %v10379 = vpack.c.b16 %v10375, %v10374
    %v10385 = vsel %vm10343, %v10294, 0
    %10387 = vmatpush.bf16.msra.mxu0 0
    %10388 = vmatpush.bf16.msra.mxu0 0
    %10389 = vmatpush.bf16.msra.mxu0 0
    %10390 = vmatpush.bf16.msra.mxu0 0
    %10391 = vmatpush.bf16.msra.mxu0 %v10379
    %10392 = vmatpush.bf16.msra.mxu0 %v10378
    %10393 = vmatpush.bf16.msra.mxu0 %v10377
    %10394 = vmatpush.bf16.msra.mxu0 %v10376
    %10395 = vmatmul.bf16.gmra.mxu0 %v10385
    %v10396 = vpop.f32.mrf.mxu0
    %v10397 = vadd.f32 %v10357, %v10396
    %v10398 = vpop.f32.mrf.mxu0
    %10399 = vdwg.mxu0
    %s10400 = scalar_lea.vmem %s6, 64
    %v10401 = vld [vmem:[%s10400] sm:$0xf]
    %v10402 = vld [vmem:[%s10400 + $0x4] sm:$0xf]
    %v10403 = vld [vmem:[%s10400 + $0x8] sm:$0xf]
    %v10404 = vld [vmem:[%s10400 + $0xc] sm:$0xf]
    %v10405 = vld [vmem:[%s10400 + $0x10] sm:$0xf]
    %v10406 = vld [vmem:[%s10400 + $0x14] sm:$0xf]
    %v10407 = vld [vmem:[%s10400 + $0x18] sm:$0xf]
    %v10408 = vld [vmem:[%s10400 + $0x1c] sm:$0xf]
    %v10409 = vrot.slane %v10317, 2
    %v10418 = vunpack.c.l.b16 %v10401
    %v10419 = vunpack.c.l.b16 %v10402
    %v10420 = vunpack.c.l.b16 %v10403
    %v10421 = vunpack.c.l.b16 %v10404
    %v10422 = vunpack.c.l.b16 %v10405
    %v10423 = vunpack.c.l.b16 %v10406
    %v10424 = vunpack.c.l.b16 %v10407
    %v10425 = vunpack.c.l.b16 %v10408
    %v10426 = vpack.c.b16 %v10419, %v10418
    %v10427 = vpack.c.b16 %v10421, %v10420
    %v10428 = vpack.c.b16 %v10423, %v10422
    %v10429 = vpack.c.b16 %v10425, %v10424
    %v10435 = vsel %vm10343, %v10409, 0
    %10437 = vmatpush.bf16.msra.mxu0 0
    %10438 = vmatpush.bf16.msra.mxu0 0
    %10439 = vmatpush.bf16.msra.mxu0 0
    %10440 = vmatpush.bf16.msra.mxu0 0
    %10441 = vmatpush.bf16.msra.mxu0 %v10429
    %10442 = vmatpush.bf16.msra.mxu0 %v10428
    %10443 = vmatpush.bf16.msra.mxu0 %v10427
    %10444 = vmatpush.bf16.msra.mxu0 %v10426
    %10445 = vmatmul.bf16.gmra.mxu0 %v10435
    %v10446 = vpop.f32.mrf.mxu0
    %v10447 = vadd.f32 0.0, %v10446
    %v10448 = vpop.f32.mrf.mxu0
    %10449 = vdwg.mxu0
    %v10450 = vadd.f32 %v10397, %v10447
    %s10451 = scalar_lea.vmem %s6, 96
    %v10452 = vld [vmem:[%s10451] sm:$0xf]
    %v10453 = vld [vmem:[%s10451 + $0x4] sm:$0xf]
    %v10454 = vld [vmem:[%s10451 + $0x8] sm:$0xf]
    %v10455 = vld [vmem:[%s10451 + $0xc] sm:$0xf]
    %v10456 = vld [vmem:[%s10451 + $0x10] sm:$0xf]
    %v10457 = vld [vmem:[%s10451 + $0x14] sm:$0xf]
    %v10458 = vld [vmem:[%s10451 + $0x18] sm:$0xf]
    %v10459 = vld [vmem:[%s10451 + $0x1c] sm:$0xf]
    %v10460 = vrot.slane %v10317, 3
    %v10469 = vunpack.c.l.b16 %v10452
    %v10470 = vunpack.c.l.b16 %v10453
    %v10471 = vunpack.c.l.b16 %v10454
    %v10472 = vunpack.c.l.b16 %v10455
    %v10473 = vunpack.c.l.b16 %v10456
    %v10474 = vunpack.c.l.b16 %v10457
    %v10475 = vunpack.c.l.b16 %v10458
    %v10476 = vunpack.c.l.b16 %v10459
    %v10477 = vpack.c.b16 %v10470, %v10469
    %v10478 = vpack.c.b16 %v10472, %v10471
    %v10479 = vpack.c.b16 %v10474, %v10473
    %v10480 = vpack.c.b16 %v10476, %v10475
    %v10486 = vsel %vm10343, %v10460, 0
    %10488 = vmatpush.bf16.msra.mxu0 0
    %10489 = vmatpush.bf16.msra.mxu0 0
    %10490 = vmatpush.bf16.msra.mxu0 0
    %10491 = vmatpush.bf16.msra.mxu0 0
    %10492 = vmatpush.bf16.msra.mxu0 %v10480
    %10493 = vmatpush.bf16.msra.mxu0 %v10479
    %10494 = vmatpush.bf16.msra.mxu0 %v10478
    %10495 = vmatpush.bf16.msra.mxu0 %v10477
    %10496 = vmatmul.bf16.gmra.mxu0 %v10486
    %v10497 = vpop.f32.mrf.mxu0
    %v10498 = vadd.f32 0.0, %v10497
    %v10499 = vpop.f32.mrf.mxu0
    %10500 = vdwg.mxu0
    %v10501 = vadd.f32 %v10450, %v10498
    %s10502 = scalar_lea.vmem %s6, 128
    %v10503 = vld [vmem:[%s10502] sm:$0xf]
    %v10504 = vld [vmem:[%s10502 + $0x4] sm:$0xf]
    %v10505 = vld [vmem:[%s10502 + $0x8] sm:$0xf]
    %v10506 = vld [vmem:[%s10502 + $0xc] sm:$0xf]
    %v10507 = vld [vmem:[%s10502 + $0x10] sm:$0xf]
    %v10508 = vld [vmem:[%s10502 + $0x14] sm:$0xf]
    %v10509 = vld [vmem:[%s10502 + $0x18] sm:$0xf]
    %v10510 = vld [vmem:[%s10502 + $0x1c] sm:$0xf]
    %v10519 = vunpack.c.l.b16 %v10503
    %v10520 = vunpack.c.l.b16 %v10504
    %v10521 = vunpack.c.l.b16 %v10505
    %v10522 = vunpack.c.l.b16 %v10506
    %v10523 = vunpack.c.l.b16 %v10507
    %v10524 = vunpack.c.l.b16 %v10508
    %v10525 = vunpack.c.l.b16 %v10509
    %v10526 = vunpack.c.l.b16 %v10510
    %v10527 = vpack.c.b16 %v10520, %v10519
    %v10528 = vpack.c.b16 %v10522, %v10521
    %v10529 = vpack.c.b16 %v10524, %v10523
    %v10530 = vpack.c.b16 %v10526, %v10525
    %v10536 = vsel %vm10343, %v10295, 0
    %10538 = vmatpush.bf16.msra.mxu0 0
    %10539 = vmatpush.bf16.msra.mxu0 0
    %10540 = vmatpush.bf16.msra.mxu0 0
    %10541 = vmatpush.bf16.msra.mxu0 0
    %10542 = vmatpush.bf16.msra.mxu0 %v10530
    %10543 = vmatpush.bf16.msra.mxu0 %v10529
    %10544 = vmatpush.bf16.msra.mxu0 %v10528
    %10545 = vmatpush.bf16.msra.mxu0 %v10527
    %10546 = vmatmul.bf16.gmra.mxu0 %v10536
    %v10547 = vpop.f32.mrf.mxu0
    %v10548 = vadd.f32 0.0, %v10547
    %v10549 = vpop.f32.mrf.mxu0
    %10550 = vdwg.mxu0
    %v10551 = vadd.f32 %v10501, %v10548
    %s10552 = scalar_lea.vmem %s6, 160
    %v10553 = vld [vmem:[%s10552] sm:$0xf]
    %v10554 = vld [vmem:[%s10552 + $0x4] sm:$0xf]
    %v10555 = vld [vmem:[%s10552 + $0x8] sm:$0xf]
    %v10556 = vld [vmem:[%s10552 + $0xc] sm:$0xf]
    %v10557 = vld [vmem:[%s10552 + $0x10] sm:$0xf]
    %v10558 = vld [vmem:[%s10552 + $0x14] sm:$0xf]
    %v10559 = vld [vmem:[%s10552 + $0x18] sm:$0xf]
    %v10560 = vld [vmem:[%s10552 + $0x1c] sm:$0xf]
    %v10562 = vunpack.c.l.b16 %v10295
    %v10563 = vpack.c.b16 %v10562, %v10562
    %v10564 = vrot.slane %v10563, 1
    %v10573 = vunpack.c.l.b16 %v10553
    %v10574 = vunpack.c.l.b16 %v10554
    %v10575 = vunpack.c.l.b16 %v10555
    %v10576 = vunpack.c.l.b16 %v10556
    %v10577 = vunpack.c.l.b16 %v10557
    %v10578 = vunpack.c.l.b16 %v10558
    %v10579 = vunpack.c.l.b16 %v10559
    %v10580 = vunpack.c.l.b16 %v10560
    %v10581 = vpack.c.b16 %v10574, %v10573
    %v10582 = vpack.c.b16 %v10576, %v10575
    %v10583 = vpack.c.b16 %v10578, %v10577
    %v10584 = vpack.c.b16 %v10580, %v10579
    %v10590 = vsel %vm10343, %v10564, 0
    %10592 = vmatpush.bf16.msra.mxu0 0
    %10593 = vmatpush.bf16.msra.mxu0 0
    %10594 = vmatpush.bf16.msra.mxu0 0
    %10595 = vmatpush.bf16.msra.mxu0 0
    %10596 = vmatpush.bf16.msra.mxu0 %v10584
    %10597 = vmatpush.bf16.msra.mxu0 %v10583
    %10598 = vmatpush.bf16.msra.mxu0 %v10582
    %10599 = vmatpush.bf16.msra.mxu0 %v10581
    %10600 = vmatmul.bf16.gmra.mxu0 %v10590
    %v10601 = vpop.f32.mrf.mxu0
    %v10602 = vadd.f32 0.0, %v10601
    %v10603 = vpop.f32.mrf.mxu0
    %10604 = vdwg.mxu0
    %v10605 = vadd.f32 %v10551, %v10602
    %s10606 = scalar_lea.vmem %s6, 192
    %v10607 = vld [vmem:[%s10606] sm:$0xf]
    %v10608 = vld [vmem:[%s10606 + $0x4] sm:$0xf]
    %v10609 = vld [vmem:[%s10606 + $0x8] sm:$0xf]
    %v10610 = vld [vmem:[%s10606 + $0xc] sm:$0xf]
    %v10611 = vld [vmem:[%s10606 + $0x10] sm:$0xf]
    %v10612 = vld [vmem:[%s10606 + $0x14] sm:$0xf]
    %v10613 = vld [vmem:[%s10606 + $0x18] sm:$0xf]
    %v10614 = vld [vmem:[%s10606 + $0x1c] sm:$0xf]
    %v10615 = vrot.slane %v10563, 2
    %v10624 = vunpack.c.l.b16 %v10607
    %v10625 = vunpack.c.l.b16 %v10608
    %v10626 = vunpack.c.l.b16 %v10609
    %v10627 = vunpack.c.l.b16 %v10610
    %v10628 = vunpack.c.l.b16 %v10611
    %v10629 = vunpack.c.l.b16 %v10612
    %v10630 = vunpack.c.l.b16 %v10613
    %v10631 = vunpack.c.l.b16 %v10614
    %v10632 = vpack.c.b16 %v10625, %v10624
    %v10633 = vpack.c.b16 %v10627, %v10626
    %v10634 = vpack.c.b16 %v10629, %v10628
    %v10635 = vpack.c.b16 %v10631, %v10630
    %v10641 = vsel %vm10343, %v10615, 0
    %10643 = vmatpush.bf16.msra.mxu0 0
    %10644 = vmatpush.bf16.msra.mxu0 0
    %10645 = vmatpush.bf16.msra.mxu0 0
    %10646 = vmatpush.bf16.msra.mxu0 0
    %10647 = vmatpush.bf16.msra.mxu0 %v10635
    %10648 = vmatpush.bf16.msra.mxu0 %v10634
    %10649 = vmatpush.bf16.msra.mxu0 %v10633
    %10650 = vmatpush.bf16.msra.mxu0 %v10632
    %10651 = vmatmul.bf16.gmra.mxu0 %v10641
    %v10652 = vpop.f32.mrf.mxu0
    %v10653 = vadd.f32 0.0, %v10652
    %v10654 = vpop.f32.mrf.mxu0
    %10655 = vdwg.mxu0
    %v10656 = vadd.f32 %v10605, %v10653
    %s10657 = scalar_lea.vmem %s6, 224
    %v10658 = vld [vmem:[%s10657] sm:$0xf]
    %v10659 = vld [vmem:[%s10657 + $0x4] sm:$0xf]
    %v10660 = vld [vmem:[%s10657 + $0x8] sm:$0xf]
    %v10661 = vld [vmem:[%s10657 + $0xc] sm:$0xf]
    %v10662 = vld [vmem:[%s10657 + $0x10] sm:$0xf]
    %v10663 = vld [vmem:[%s10657 + $0x14] sm:$0xf]
    %v10664 = vld [vmem:[%s10657 + $0x18] sm:$0xf]
    %v10665 = vld [vmem:[%s10657 + $0x1c] sm:$0xf]
    %v10666 = vrot.slane %v10563, 3
    %v10675 = vunpack.c.l.b16 %v10658
    %v10676 = vunpack.c.l.b16 %v10659
    %v10677 = vunpack.c.l.b16 %v10660
    %v10678 = vunpack.c.l.b16 %v10661
    %v10679 = vunpack.c.l.b16 %v10662
    %v10680 = vunpack.c.l.b16 %v10663
    %v10681 = vunpack.c.l.b16 %v10664
    %v10682 = vunpack.c.l.b16 %v10665
    %v10683 = vpack.c.b16 %v10676, %v10675
    %v10684 = vpack.c.b16 %v10678, %v10677
    %v10685 = vpack.c.b16 %v10680, %v10679
    %v10686 = vpack.c.b16 %v10682, %v10681
    %v10692 = vsel %vm10343, %v10666, 0
    %10694 = vmatpush.bf16.msra.mxu0 0
    %10695 = vmatpush.bf16.msra.mxu0 0
    %10696 = vmatpush.bf16.msra.mxu0 0
    %10697 = vmatpush.bf16.msra.mxu0 0
    %10698 = vmatpush.bf16.msra.mxu0 %v10686
    %10699 = vmatpush.bf16.msra.mxu0 %v10685
    %10700 = vmatpush.bf16.msra.mxu0 %v10684
    %10701 = vmatpush.bf16.msra.mxu0 %v10683
    %10702 = vmatmul.bf16.gmra.mxu0 %v10692
    %v10703 = vpop.f32.mrf.mxu0
    %v10704 = vadd.f32 0.0, %v10703
    %v10705 = vpop.f32.mrf.mxu0
    %10706 = vdwg.mxu0
    %v10707 = vadd.f32 %v10656, %v10704
    %s10708 = scalar_lea.vmem %s6, 256
    %v10709 = vld [vmem:[%s10708] sm:$0xf]
    %v10710 = vld [vmem:[%s10708 + $0x4] sm:$0xf]
    %v10711 = vld [vmem:[%s10708 + $0x8] sm:$0xf]
    %v10712 = vld [vmem:[%s10708 + $0xc] sm:$0xf]
    %v10713 = vld [vmem:[%s10708 + $0x10] sm:$0xf]
    %v10714 = vld [vmem:[%s10708 + $0x14] sm:$0xf]
    %v10715 = vld [vmem:[%s10708 + $0x18] sm:$0xf]
    %v10716 = vld [vmem:[%s10708 + $0x1c] sm:$0xf]
    %v10725 = vunpack.c.l.b16 %v10709
    %v10726 = vunpack.c.l.b16 %v10710
    %v10727 = vunpack.c.l.b16 %v10711
    %v10728 = vunpack.c.l.b16 %v10712
    %v10729 = vunpack.c.l.b16 %v10713
    %v10730 = vunpack.c.l.b16 %v10714
    %v10731 = vunpack.c.l.b16 %v10715
    %v10732 = vunpack.c.l.b16 %v10716
    %v10733 = vpack.c.b16 %v10726, %v10725
    %v10734 = vpack.c.b16 %v10728, %v10727
    %v10735 = vpack.c.b16 %v10730, %v10729
    %v10736 = vpack.c.b16 %v10732, %v10731
    %v10742 = vsel %vm10343, %v10296, 0
    %10744 = vmatpush.bf16.msra.mxu0 0
    %10745 = vmatpush.bf16.msra.mxu0 0
    %10746 = vmatpush.bf16.msra.mxu0 0
    %10747 = vmatpush.bf16.msra.mxu0 0
    %10748 = vmatpush.bf16.msra.mxu0 %v10736
    %10749 = vmatpush.bf16.msra.mxu0 %v10735
    %10750 = vmatpush.bf16.msra.mxu0 %v10734
    %10751 = vmatpush.bf16.msra.mxu0 %v10733
    %10752 = vmatmul.bf16.gmra.mxu0 %v10742
    %v10753 = vpop.f32.mrf.mxu0
    %v10754 = vadd.f32 0.0, %v10753
    %v10755 = vpop.f32.mrf.mxu0
    %10756 = vdwg.mxu0
    %v10757 = vadd.f32 %v10707, %v10754
    %s10758 = scalar_lea.vmem %s6, 288
    %v10759 = vld [vmem:[%s10758] sm:$0xf]
    %v10760 = vld [vmem:[%s10758 + $0x4] sm:$0xf]
    %v10761 = vld [vmem:[%s10758 + $0x8] sm:$0xf]
    %v10762 = vld [vmem:[%s10758 + $0xc] sm:$0xf]
    %v10763 = vld [vmem:[%s10758 + $0x10] sm:$0xf]
    %v10764 = vld [vmem:[%s10758 + $0x14] sm:$0xf]
    %v10765 = vld [vmem:[%s10758 + $0x18] sm:$0xf]
    %v10766 = vld [vmem:[%s10758 + $0x1c] sm:$0xf]
    %v10768 = vunpack.c.l.b16 %v10296
    %v10769 = vpack.c.b16 %v10768, %v10768
    %v10770 = vrot.slane %v10769, 1
    %v10779 = vunpack.c.l.b16 %v10759
    %v10780 = vunpack.c.l.b16 %v10760
    %v10781 = vunpack.c.l.b16 %v10761
    %v10782 = vunpack.c.l.b16 %v10762
    %v10783 = vunpack.c.l.b16 %v10763
    %v10784 = vunpack.c.l.b16 %v10764
    %v10785 = vunpack.c.l.b16 %v10765
    %v10786 = vunpack.c.l.b16 %v10766
    %v10787 = vpack.c.b16 %v10780, %v10779
    %v10788 = vpack.c.b16 %v10782, %v10781
    %v10789 = vpack.c.b16 %v10784, %v10783
    %v10790 = vpack.c.b16 %v10786, %v10785
    %v10796 = vsel %vm10343, %v10770, 0
    %10798 = vmatpush.bf16.msra.mxu0 0
    %10799 = vmatpush.bf16.msra.mxu0 0
    %10800 = vmatpush.bf16.msra.mxu0 0
    %10801 = vmatpush.bf16.msra.mxu0 0
    %10802 = vmatpush.bf16.msra.mxu0 %v10790
    %10803 = vmatpush.bf16.msra.mxu0 %v10789
    %10804 = vmatpush.bf16.msra.mxu0 %v10788
    %10805 = vmatpush.bf16.msra.mxu0 %v10787
    %10806 = vmatmul.bf16.gmra.mxu0 %v10796
    %v10807 = vpop.f32.mrf.mxu0
    %v10808 = vadd.f32 0.0, %v10807
    %v10809 = vpop.f32.mrf.mxu0
    %10810 = vdwg.mxu0
    %v10811 = vadd.f32 %v10757, %v10808
    %s10812 = scalar_lea.vmem %s6, 320
    %v10813 = vld [vmem:[%s10812] sm:$0xf]
    %v10814 = vld [vmem:[%s10812 + $0x4] sm:$0xf]
    %v10815 = vld [vmem:[%s10812 + $0x8] sm:$0xf]
    %v10816 = vld [vmem:[%s10812 + $0xc] sm:$0xf]
    %v10817 = vld [vmem:[%s10812 + $0x10] sm:$0xf]
    %v10818 = vld [vmem:[%s10812 + $0x14] sm:$0xf]
    %v10819 = vld [vmem:[%s10812 + $0x18] sm:$0xf]
    %v10820 = vld [vmem:[%s10812 + $0x1c] sm:$0xf]
    %v10821 = vrot.slane %v10769, 2
    %v10830 = vunpack.c.l.b16 %v10813
    %v10831 = vunpack.c.l.b16 %v10814
    %v10832 = vunpack.c.l.b16 %v10815
    %v10833 = vunpack.c.l.b16 %v10816
    %v10834 = vunpack.c.l.b16 %v10817
    %v10835 = vunpack.c.l.b16 %v10818
    %v10836 = vunpack.c.l.b16 %v10819
    %v10837 = vunpack.c.l.b16 %v10820
    %v10838 = vpack.c.b16 %v10831, %v10830
    %v10839 = vpack.c.b16 %v10833, %v10832
    %v10840 = vpack.c.b16 %v10835, %v10834
    %v10841 = vpack.c.b16 %v10837, %v10836
    %v10847 = vsel %vm10343, %v10821, 0
    %10849 = vmatpush.bf16.msra.mxu0 0
    %10850 = vmatpush.bf16.msra.mxu0 0
    %10851 = vmatpush.bf16.msra.mxu0 0
    %10852 = vmatpush.bf16.msra.mxu0 0
    %10853 = vmatpush.bf16.msra.mxu0 %v10841
    %10854 = vmatpush.bf16.msra.mxu0 %v10840
    %10855 = vmatpush.bf16.msra.mxu0 %v10839
    %10856 = vmatpush.bf16.msra.mxu0 %v10838
    %10857 = vmatmul.bf16.gmra.mxu0 %v10847
    %v10858 = vpop.f32.mrf.mxu0
    %v10859 = vadd.f32 0.0, %v10858
    %v10860 = vpop.f32.mrf.mxu0
    %10861 = vdwg.mxu0
    %v10862 = vadd.f32 %v10811, %v10859
    %s10863 = scalar_lea.vmem %s6, 352
    %v10864 = vld [vmem:[%s10863] sm:$0xf]
    %v10865 = vld [vmem:[%s10863 + $0x4] sm:$0xf]
    %v10866 = vld [vmem:[%s10863 + $0x8] sm:$0xf]
    %v10867 = vld [vmem:[%s10863 + $0xc] sm:$0xf]
    %v10868 = vld [vmem:[%s10863 + $0x10] sm:$0xf]
    %v10869 = vld [vmem:[%s10863 + $0x14] sm:$0xf]
    %v10870 = vld [vmem:[%s10863 + $0x18] sm:$0xf]
    %v10871 = vld [vmem:[%s10863 + $0x1c] sm:$0xf]
    %v10872 = vrot.slane %v10769, 3
    %v10881 = vunpack.c.l.b16 %v10864
    %v10882 = vunpack.c.l.b16 %v10865
    %v10883 = vunpack.c.l.b16 %v10866
    %v10884 = vunpack.c.l.b16 %v10867
    %v10885 = vunpack.c.l.b16 %v10868
    %v10886 = vunpack.c.l.b16 %v10869
    %v10887 = vunpack.c.l.b16 %v10870
    %v10888 = vunpack.c.l.b16 %v10871
    %v10889 = vpack.c.b16 %v10882, %v10881
    %v10890 = vpack.c.b16 %v10884, %v10883
    %v10891 = vpack.c.b16 %v10886, %v10885
    %v10892 = vpack.c.b16 %v10888, %v10887
    %v10898 = vsel %vm10343, %v10872, 0
    %10900 = vmatpush.bf16.msra.mxu0 0
    %10901 = vmatpush.bf16.msra.mxu0 0
    %10902 = vmatpush.bf16.msra.mxu0 0
    %10903 = vmatpush.bf16.msra.mxu0 0
    %10904 = vmatpush.bf16.msra.mxu0 %v10892
    %10905 = vmatpush.bf16.msra.mxu0 %v10891
    %10906 = vmatpush.bf16.msra.mxu0 %v10890
    %10907 = vmatpush.bf16.msra.mxu0 %v10889
    %10908 = vmatmul.bf16.gmra.mxu0 %v10898
    %v10909 = vpop.f32.mrf.mxu0
    %v10910 = vadd.f32 0.0, %v10909
    %v10911 = vpop.f32.mrf.mxu0
    %10912 = vdwg.mxu0
    %v10913 = vadd.f32 %v10862, %v10910
    %s10914 = scalar_lea.vmem %s6, 384
    %v10915 = vld [vmem:[%s10914] sm:$0xf]
    %v10916 = vld [vmem:[%s10914 + $0x4] sm:$0xf]
    %v10917 = vld [vmem:[%s10914 + $0x8] sm:$0xf]
    %v10918 = vld [vmem:[%s10914 + $0xc] sm:$0xf]
    %v10919 = vld [vmem:[%s10914 + $0x10] sm:$0xf]
    %v10920 = vld [vmem:[%s10914 + $0x14] sm:$0xf]
    %v10921 = vld [vmem:[%s10914 + $0x18] sm:$0xf]
    %v10922 = vld [vmem:[%s10914 + $0x1c] sm:$0xf]
    %v10931 = vunpack.c.l.b16 %v10915
    %v10932 = vunpack.c.l.b16 %v10916
    %v10933 = vunpack.c.l.b16 %v10917
    %v10934 = vunpack.c.l.b16 %v10918
    %v10935 = vunpack.c.l.b16 %v10919
    %v10936 = vunpack.c.l.b16 %v10920
    %v10937 = vunpack.c.l.b16 %v10921
    %v10938 = vunpack.c.l.b16 %v10922
    %v10939 = vpack.c.b16 %v10932, %v10931
    %v10940 = vpack.c.b16 %v10934, %v10933
    %v10941 = vpack.c.b16 %v10936, %v10935
    %v10942 = vpack.c.b16 %v10938, %v10937
    %v10948 = vsel %vm10343, %v10297, 0
    %10950 = vmatpush.bf16.msra.mxu0 0
    %10951 = vmatpush.bf16.msra.mxu0 0
    %10952 = vmatpush.bf16.msra.mxu0 0
    %10953 = vmatpush.bf16.msra.mxu0 0
    %10954 = vmatpush.bf16.msra.mxu0 %v10942
    %10955 = vmatpush.bf16.msra.mxu0 %v10941
    %10956 = vmatpush.bf16.msra.mxu0 %v10940
    %10957 = vmatpush.bf16.msra.mxu0 %v10939
    %10958 = vmatmul.bf16.gmra.mxu0 %v10948
    %v10959 = vpop.f32.mrf.mxu0
    %v10960 = vadd.f32 0.0, %v10959
    %v10961 = vpop.f32.mrf.mxu0
    %10962 = vdwg.mxu0
    %v10963 = vadd.f32 %v10913, %v10960
    %s10964 = scalar_lea.vmem %s6, 416
    %v10965 = vld [vmem:[%s10964] sm:$0xf]
    %v10966 = vld [vmem:[%s10964 + $0x4] sm:$0xf]
    %v10967 = vld [vmem:[%s10964 + $0x8] sm:$0xf]
    %v10968 = vld [vmem:[%s10964 + $0xc] sm:$0xf]
    %v10969 = vld [vmem:[%s10964 + $0x10] sm:$0xf]
    %v10970 = vld [vmem:[%s10964 + $0x14] sm:$0xf]
    %v10971 = vld [vmem:[%s10964 + $0x18] sm:$0xf]
    %v10972 = vld [vmem:[%s10964 + $0x1c] sm:$0xf]
    %v10974 = vunpack.c.l.b16 %v10297
    %v10975 = vpack.c.b16 %v10974, %v10974
    %v10976 = vrot.slane %v10975, 1
    %v10985 = vunpack.c.l.b16 %v10965
    %v10986 = vunpack.c.l.b16 %v10966
    %v10987 = vunpack.c.l.b16 %v10967
    %v10988 = vunpack.c.l.b16 %v10968
    %v10989 = vunpack.c.l.b16 %v10969
    %v10990 = vunpack.c.l.b16 %v10970
    %v10991 = vunpack.c.l.b16 %v10971
    %v10992 = vunpack.c.l.b16 %v10972
    %v10993 = vpack.c.b16 %v10986, %v10985
    %v10994 = vpack.c.b16 %v10988, %v10987
    %v10995 = vpack.c.b16 %v10990, %v10989
    %v10996 = vpack.c.b16 %v10992, %v10991
    %v11002 = vsel %vm10343, %v10976, 0
    %11004 = vmatpush.bf16.msra.mxu0 0
    %11005 = vmatpush.bf16.msra.mxu0 0
    %11006 = vmatpush.bf16.msra.mxu0 0
    %11007 = vmatpush.bf16.msra.mxu0 0
    %11008 = vmatpush.bf16.msra.mxu0 %v10996
    %11009 = vmatpush.bf16.msra.mxu0 %v10995
    %11010 = vmatpush.bf16.msra.mxu0 %v10994
    %11011 = vmatpush.bf16.msra.mxu0 %v10993
    %11012 = vmatmul.bf16.gmra.mxu0 %v11002
    %v11013 = vpop.f32.mrf.mxu0
    %v11014 = vadd.f32 0.0, %v11013
    %v11015 = vpop.f32.mrf.mxu0
    %11016 = vdwg.mxu0
    %v11017 = vadd.f32 %v10963, %v11014
    %s11018 = scalar_lea.vmem %s6, 448
    %v11019 = vld [vmem:[%s11018] sm:$0xf]
    %v11020 = vld [vmem:[%s11018 + $0x4] sm:$0xf]
    %v11021 = vld [vmem:[%s11018 + $0x8] sm:$0xf]
    %v11022 = vld [vmem:[%s11018 + $0xc] sm:$0xf]
    %v11023 = vld [vmem:[%s11018 + $0x10] sm:$0xf]
    %v11024 = vld [vmem:[%s11018 + $0x14] sm:$0xf]
    %v11025 = vld [vmem:[%s11018 + $0x18] sm:$0xf]
    %v11026 = vld [vmem:[%s11018 + $0x1c] sm:$0xf]
    %v11027 = vrot.slane %v10975, 2
    %v11036 = vunpack.c.l.b16 %v11019
    %v11037 = vunpack.c.l.b16 %v11020
    %v11038 = vunpack.c.l.b16 %v11021
    %v11039 = vunpack.c.l.b16 %v11022
    %v11040 = vunpack.c.l.b16 %v11023
    %v11041 = vunpack.c.l.b16 %v11024
    %v11042 = vunpack.c.l.b16 %v11025
    %v11043 = vunpack.c.l.b16 %v11026
    %v11044 = vpack.c.b16 %v11037, %v11036
    %v11045 = vpack.c.b16 %v11039, %v11038
    %v11046 = vpack.c.b16 %v11041, %v11040
    %v11047 = vpack.c.b16 %v11043, %v11042
    %v11053 = vsel %vm10343, %v11027, 0
    %11055 = vmatpush.bf16.msra.mxu0 0
    %11056 = vmatpush.bf16.msra.mxu0 0
    %11057 = vmatpush.bf16.msra.mxu0 0
    %11058 = vmatpush.bf16.msra.mxu0 0
    %11059 = vmatpush.bf16.msra.mxu0 %v11047
    %11060 = vmatpush.bf16.msra.mxu0 %v11046
    %11061 = vmatpush.bf16.msra.mxu0 %v11045
    %11062 = vmatpush.bf16.msra.mxu0 %v11044
    %11063 = vmatmul.bf16.gmra.mxu0 %v11053
    %v11064 = vpop.f32.mrf.mxu0
    %v11065 = vadd.f32 0.0, %v11064
    %v11066 = vpop.f32.mrf.mxu0
    %11067 = vdwg.mxu0
    %v11068 = vadd.f32 %v11017, %v11065
    %s11069 = scalar_lea.vmem %s6, 480
    %v11070 = vld [vmem:[%s11069] sm:$0xf]
    %v11071 = vld [vmem:[%s11069 + $0x4] sm:$0xf]
    %v11072 = vld [vmem:[%s11069 + $0x8] sm:$0xf]
    %v11073 = vld [vmem:[%s11069 + $0xc] sm:$0xf]
    %v11074 = vld [vmem:[%s11069 + $0x10] sm:$0xf]
    %v11075 = vld [vmem:[%s11069 + $0x14] sm:$0xf]
    %v11076 = vld [vmem:[%s11069 + $0x18] sm:$0xf]
    %v11077 = vld [vmem:[%s11069 + $0x1c] sm:$0xf]
    %v11078 = vrot.slane %v10975, 3
    %v11087 = vunpack.c.l.b16 %v11070
    %v11088 = vunpack.c.l.b16 %v11071
    %v11089 = vunpack.c.l.b16 %v11072
    %v11090 = vunpack.c.l.b16 %v11073
    %v11091 = vunpack.c.l.b16 %v11074
    %v11092 = vunpack.c.l.b16 %v11075
    %v11093 = vunpack.c.l.b16 %v11076
    %v11094 = vunpack.c.l.b16 %v11077
    %v11095 = vpack.c.b16 %v11088, %v11087
    %v11096 = vpack.c.b16 %v11090, %v11089
    %v11097 = vpack.c.b16 %v11092, %v11091
    %v11098 = vpack.c.b16 %v11094, %v11093
    %v11104 = vsel %vm10343, %v11078, 0
    %11106 = vmatpush.bf16.msra.mxu0 0
    %11107 = vmatpush.bf16.msra.mxu0 0
    %11108 = vmatpush.bf16.msra.mxu0 0
    %11109 = vmatpush.bf16.msra.mxu0 0
    %11110 = vmatpush.bf16.msra.mxu0 %v11098
    %11111 = vmatpush.bf16.msra.mxu0 %v11097
    %11112 = vmatpush.bf16.msra.mxu0 %v11096
    %11113 = vmatpush.bf16.msra.mxu0 %v11095
    %11114 = vmatmul.bf16.gmra.mxu0 %v11104
    %v11115 = vpop.f32.mrf.mxu0
    %v11116 = vadd.f32 0.0, %v11115
    %v11117 = vpop.f32.mrf.mxu0
    %11118 = vdwg.mxu0
    %v11119 = vadd.f32 %v11068, %v11116
    %v11120 = vld [vmem:[%s7] sm:$0x1]
    %v11122 = vperm.slane %v11120, 0
    %v11124 = vadd.f32 %v11119, %v11122
    %vm11125 = vcmask 1041408
    %v11126 = vsel %vm11125, %v11124, -inf
    %11127 = vmax.xlane.f32.xlu0 %v11126
    %v11128 = vpop.xlane.xlu0 %11127
    %v11129 = vsub.f32 %v11124, %v11128
    %v11130 = vmul.f32 %v11129, 1.442695
    %v11131 = vpow.pop %v11130
    %v11132 = vsel %vm11125, %v11131, 0.0
    %11133 = vadd.xlane.f32.xlu0 %v11132
    %v11134 = vpop.xlane.xlu0 %11133
    %v11135 = vrcp.pop %v11134
    %v11136 = vmul.f32 %v11134, %v11135
    %v11137 = vsub.f32 1.0, %v11136
    %v11138 = vmul.f32 %v11135, %v11137
    %v11139 = vadd.f32 %v11135, %v11138
    %vm11140 = vweird.f32 %v11134
    %vm11141 = vweird.f32 %v11135
    %vm11142 = vmor %vm11140, %vm11141
    %v11143 = vsel %vm11142, %v11135, %v11139
    %v11144 = vand.u32 2147483647, %v11134
    %vm11145 = vcmp.eq.f32.partialorder %v11144, 8.507059e+37
    %v11146 = vand.u32 %v11134, 2147483648
    %v11147 = vor.u32 1.1754944e-38, %v11146
    %v11148 = vsel %vm11145, %v11147, %v11143
    %v11149 = vmul.f32 %v11131, %v11148
    %11150 = vst [vmem:[#allocation3] sm:$0x3] %v11149
    // Predicated region
    $region34: #{classifier2_forward.1} parent=1 // pred_check
      _
    $region35: #{classifier2_forward.1} parent=1 // pred_check_branch
      %11152 = sbr.rel (0) target = $region37
    $region36: #{classifier2_forward.1} parent=1 // pred_region
      %11154 = vsyncadd [#allocation4], 0
      %s11156 = sshll.u32 [#allocation3], 4
      %s11157 = int_to_ptr.vmem [resolvable:$true] %s11156
      %s11158 = sshll.u32 %s8, 4
      %s11159 = int_to_ptr.hbm [resolvable:$true] %s11158
      %11161 = dma.vmem_to_hbm [thread:$0]  %s11157, 32, %s11159, [#allocation4]
    $region37: #{classifier2_forward.1} parent=1 // pred_fallthru
      _
    // Predicated region
    $region38: #{classifier2_forward.1} parent=1 // pred_check
      _
    $region39: #{classifier2_forward.1} parent=1 // pred_check_branch
      %11163 = sbr.rel (0) target = $region41
    $region40: #{classifier2_forward.1} parent=1 // pred_region
      %11165 = dma.done [#allocation4], 32
    $region41: #{classifier2_forward.1} parent=1 // pred_fallthru
      _
    %11166 = vsyncpa [#allocation4], 1

</llo_original>
